<compile_context>
chip_gen: v7x
topology: tpu7x:2x2x1
jax: 0.10.0
libtpu: 0.0.40
codegen_flags: <defaults>
</compile_context>

<pallas_src>
import functools

import jax
import jax.numpy as jnp
from jax import lax
from jax.experimental import pallas as pl
from jax.experimental.pallas import tpu as pltpu

_EPS = 1e-5                      # nn.BatchNorm2d default eps
LAYER_CONFIG = ((64, 2), (64, 1), (128, 2), (128, 1))
NUM_CLASSES = 10
_LANES = 128                     # every channel dim is padded to one lane tile


def _round_up(x, m):
    return (x + m - 1) // m * m


def _make_plan(h, w):
    """Static per-layer geometry (sizes + sublane paddings) for the fused kernel."""
    layers = []
    ch_in = 1
    for ch_out, stride in LAYER_CONFIG:
        ho = (h - 3) // stride + 1
        wo = (w - 3) // stride + 1
        layers.append(dict(stride=stride, h_in=h, w_in=w, ho=ho, wo=wo,
                           c_in=ch_in, c_out=ch_out))
        h, w, ch_in = ho, wo, ch_out
    for i, lyr in enumerate(layers):
        lyr["slab_w"] = _round_up(lyr["wo"], 8)      # width each layer writes
        if lyr["stride"] == 2 and i > 0:
            # in-kernel stride-2 conv: evaluate stride-1 over this window, then
            # subsample rows (2i, 2j) with a constant 0/1 matmul
            lyr["full_h"] = 2 * lyr["ho"] - 1
            lyr["full_w"] = _round_up(2 * lyr["wo"] - 1, 8)
    for i, lyr in enumerate(layers[:-1]):
        nxt = layers[i + 1]
        need = (nxt["full_w"] if nxt["stride"] == 2 else nxt["slab_w"]) + 2
        lyr["buf_w"] = _round_up(max(need, lyr["slab_w"]), 8)  # zero-padded buffer width
    return layers


# -------------------- the single fused Pallas kernel --------------------

def _fused_net_kernel(plan,
                      p1_ref, w1_ref, b1_ref,
                      w2_ref, b2_ref,
                      w3_ref, b3_ref, sel3_ref,
                      w4_ref, b4_ref,
                      pool_ref, hw_ref, hb_ref,
                      out_ref,
                      buf1, buf2, buf3):
    L1, L2, L3, L4 = plan

    # Zero the padded activation buffers so every column a later layer may read is
    # finite (valid output windows only ever read valid or zero columns).
    buf1[...] = jnp.zeros(buf1.shape, buf1.dtype)
    buf2[...] = jnp.zeros(buf2.shape, buf2.dtype)
    buf3[...] = jnp.zeros(buf3.shape, buf3.dtype)

    # ---- layer 1: 3x3 stride-2 conv, Cin=1 (K=9) -> 9 VPU multiply-accumulates ----
    p1 = p1_ref[0]                                   # (Ho1*slab_w1, 9) f32 patches
    w1 = w1_ref[...]                                 # (9, 128) f32, BN-folded
    m1 = L1["ho"] * L1["slab_w"]
    acc = jnp.zeros((m1, _LANES), jnp.float32)
    for t in range(9):
        acc = acc + p1[:, t:t + 1] * w1[t:t + 1, :]
    act = jnp.maximum(acc + b1_ref[...], 0.0)
    buf1[:, 0:L1["slab_w"], :] = (
        act.reshape(L1["ho"], L1["slab_w"], _LANES).astype(buf1.dtype))

    # ---- layers 2-4: 3x3 conv = 9 shifted-window MXU matmuls over VMEM acts ----
    def conv9(src_ref, h_ext, w_ext, w_taps_ref):
        a = jnp.zeros((h_ext * w_ext, _LANES), jnp.float32)
        for kh in range(3):
            for kw in range(3):
                tap = src_ref[kh:kh + h_ext, kw:kw + w_ext, :]
                tap = tap.reshape(h_ext * w_ext, _LANES)
                a = a + jnp.dot(tap, w_taps_ref[kh * 3 + kw],
                                preferred_element_type=jnp.float32)
        return a

    # layer 2 (stride 1)
    acc = conv9(buf1, L2["ho"], L2["slab_w"], w2_ref)
    act = jnp.maximum(acc + b2_ref[...], 0.0)
    buf2[:, 0:L2["slab_w"], :] = (
        act.reshape(L2["ho"], L2["slab_w"], _LANES).astype(buf2.dtype))

    # layer 3 (stride 2): stride-1 conv over the full window, then pick rows
    # (2i, 2j) with a constant 0/1 selection matmul (no strided VMEM access)
    acc = conv9(buf2, L3["full_h"], L3["full_w"], w3_ref)
    acc = jnp.dot(sel3_ref[...], acc, preferred_element_type=jnp.float32)
    act = jnp.maximum(acc + b3_ref[...], 0.0)
    buf3[:, 0:L3["slab_w"], :] = (
        act.reshape(L3["ho"], L3["slab_w"], _LANES).astype(buf3.dtype))

    # layer 4 (stride 1): output stays in registers for pooling / head
    acc = conv9(buf3, L4["ho"], L4["slab_w"], w4_ref)
    act4 = jnp.maximum(acc + b4_ref[...], 0.0)       # (Ho4*slab_w4, 128) f32

    # ---- adaptive_avg_pool2d(1,1) + Linear head, both as matmuls ----
    pooled = jnp.dot(pool_ref[...], act4, preferred_element_type=jnp.float32)  # (1,128)
    logits = jnp.dot(pooled.astype(jnp.bfloat16), hw_ref[...],
                     preferred_element_type=jnp.float32) + hb_ref[...]
    out_ref[...] = logits.reshape(1, 1, _LANES).astype(out_ref.dtype)


# -------------------- wrappers --------------------

def _fold_bn(blk):
    """Fold eval-mode BatchNorm (and the conv bias) into a weight scale + bias."""
    scale = blk["gamma"] * lax.rsqrt(blk["var"] + _EPS)
    bias = blk["beta"] + scale * (blk["b"] - blk["mean"])
    return blk["w"] * scale, bias


def neural_net_forward(x_nchw, params):
    """Forward pass matching NeuralNet.forward (BatchNorm in eval mode)."""
    n, c_in, h, w = x_nchw.shape
    assert c_in == 1, "first ConvBlock expects a single input channel"
    plan = _make_plan(h, w)
    L1, L2, L3, L4 = plan

    x = jnp.transpose(x_nchw, (0, 2, 3, 1)).astype(jnp.float32)   # NCHW -> NHWC

    # layer-1 im2col at the HBM boundary (Cin=1 -> only 9 values per output pixel),
    # padded to (Ho1, slab_w1) so the in-kernel store is sublane aligned.
    s = L1["stride"]
    taps = []
    for kh in range(3):
        for kw in range(3):
            taps.append(x[:, kh:kh + (L1["ho"] - 1) * s + 1:s,
                          kw:kw + (L1["wo"] - 1) * s + 1:s, 0])
    p1 = jnp.stack(taps, axis=-1)                                  # (N, Ho1, Wo1, 9)
    p1 = jnp.pad(p1, ((0, 0), (0, 0), (0, L1["slab_w"] - L1["wo"]), (0, 0)))
    p1 = p1.reshape(n, L1["ho"] * L1["slab_w"], 9)

    # BN-folded, channel-padded (-> 128 lanes) weights / biases
    w1, b1 = _fold_bn(params["blocks"][0])
    w1 = jnp.pad(w1.reshape(9, L1["c_out"]), ((0, 0), (0, _LANES - L1["c_out"])))
    b1 = jnp.pad(b1, (0, _LANES - L1["c_out"])).reshape(1, _LANES)

    def conv_prep(i, lyr):
        wl, bl = _fold_bn(params["blocks"][i])
        wl = jnp.pad(wl, ((0, 0), (0, 0),
                          (0, _LANES - lyr["c_in"]), (0, _LANES - lyr["c_out"])))
        wl = wl.reshape(9, _LANES, _LANES).astype(jnp.bfloat16)
        bl = jnp.pad(bl, (0, _LANES - lyr["c_out"])).reshape(1, _LANES)
        return wl, bl

    w2, b2 = conv_prep(1, L2)
    w3, b3 = conv_prep(2, L3)
    w4, b4 = conv_prep(3, L4)

    # stride-2 subsampling of layer 3 as a constant 0/1 row-selection matrix
    m_sel_out = L3["ho"] * L3["slab_w"]
    m_sel_in = L3["full_h"] * L3["full_w"]
    r = jnp.arange(m_sel_out)
    i_idx, j_idx = r // L3["slab_w"], r % L3["slab_w"]
    src = 2 * i_idx * L3["full_w"] + 2 * j_idx
    ok = (j_idx < L3["wo"]) & (2 * j_idx < L3["full_w"]) & (2 * i_idx < L3["full_h"])
    sel3 = ((jnp.arange(m_sel_in)[None, :] == src[:, None]) & ok[:, None]
            ).astype(jnp.float32)                                  # (m_sel_out, m_sel_in)

    # adaptive avg-pool over the valid window as a masked-mean row vector
    m4 = L4["ho"] * L4["slab_w"]
    r4 = jnp.arange(m4)
    pool = (((r4 % L4["slab_w"]) < L4["wo"]).astype(jnp.float32)
            / float(L4["ho"] * L4["wo"])).reshape(1, m4)

    hw = jnp.pad(params["head_w"],
                 ((0, 0), (0, _LANES - NUM_CLASSES))).astype(jnp.bfloat16)
    hb = jnp.pad(params["head_b"], (0, _LANES - NUM_CLASSES)).reshape(1, _LANES)

    kernel = functools.partial(_fused_net_kernel, plan)
    grid_spec = pltpu.PrefetchScalarGridSpec(
        num_scalar_prefetch=0,
        grid=(n,),                 # one sample per step; "parallel" -> 2 TCs on v7x
        in_specs=[
            pl.BlockSpec((1, L1["ho"] * L1["slab_w"], 9), lambda b: (b, 0, 0)),
            pl.BlockSpec((9, _LANES), lambda b: (0, 0)),
            pl.BlockSpec((1, _LANES), lambda b: (0, 0)),
            pl.BlockSpec((9, _LANES, _LANES), lambda b: (0, 0, 0)),
            pl.BlockSpec((1, _LANES), lambda b: (0, 0)),
            pl.BlockSpec((9, _LANES, _LANES), lambda b: (0, 0, 0)),
            pl.BlockSpec((1, _LANES), lambda b: (0, 0)),
            pl.BlockSpec((m_sel_out, m_sel_in), lambda b: (0, 0)),
            pl.BlockSpec((9, _LANES, _LANES), lambda b: (0, 0, 0)),
            pl.BlockSpec((1, _LANES), lambda b: (0, 0)),
            pl.BlockSpec((1, m4), lambda b: (0, 0)),
            pl.BlockSpec((_LANES, _LANES), lambda b: (0, 0)),
            pl.BlockSpec((1, _LANES), lambda b: (0, 0)),
        ],
        out_specs=pl.BlockSpec((1, 1, _LANES), lambda b: (b, 0, 0)),
        scratch_shapes=[
            pltpu.VMEM((L1["ho"], L1["buf_w"], _LANES), jnp.bfloat16),
            pltpu.VMEM((L2["ho"], L2["buf_w"], _LANES), jnp.bfloat16),
            pltpu.VMEM((L3["ho"], L3["buf_w"], _LANES), jnp.bfloat16),
        ],
    )
    out = pl.pallas_call(
        kernel,
        out_shape=jax.ShapeDtypeStruct((n, 1, _LANES), jnp.float32),
        grid_spec=grid_spec,
        compiler_params=pltpu.CompilerParams(
            dimension_semantics=("parallel",)),
    )(p1, w1, b1, w2, b2, w3, b3, sel3, w4, b4, pool, hw, hb)
    return out[:, 0, :NUM_CLASSES]


# -------------------- test harness --------------------

def init_params(key):
    """Deterministic synthetic parameters matching the module's shapes."""
    params = {"blocks": []}
    ch_in = 1
    for i, (ch_out, _) in enumerate(LAYER_CONFIG):
        k = jax.random.fold_in(key, i)
        kw_, kb, kg, kbeta, km, kv = jax.random.split(k, 6)
        fan_in = 9 * ch_in
        params["blocks"].append({
            # conv weight stored as (kh, kw, cin, cout)  (HWIO)
            "w": jax.random.normal(kw_, (3, 3, ch_in, ch_out), jnp.float32)
                 / jnp.sqrt(float(fan_in)),
            "b": 0.01 * jax.random.normal(kb, (ch_out,), jnp.float32),
            # BatchNorm (eval mode: uses running stats)
            "gamma": 1.0 + 0.1 * jax.random.normal(kg, (ch_out,), jnp.float32),
            "beta": 0.1 * jax.random.normal(kbeta, (ch_out,), jnp.float32),
            "mean": 0.1 * jax.random.normal(km, (ch_out,), jnp.float32),
            "var": jnp.abs(jax.random.normal(kv, (ch_out,), jnp.float32)) + 0.5,
        })
        ch_in = ch_out
    khw, khb = jax.random.split(jax.random.fold_in(key, 100))
    params["head_w"] = jax.random.normal(khw, (ch_in, NUM_CLASSES), jnp.float32) \
        / jnp.sqrt(float(ch_in))
    params["head_b"] = 0.01 * jax.random.normal(khb, (NUM_CLASSES,), jnp.float32)
    return params


def _reference_forward(x_nchw, params):
    """Pure-JAX f32 reference (no Pallas) used only to validate the kernel."""
    x = jnp.transpose(x_nchw, (0, 2, 3, 1)).astype(jnp.float32)
    for blk, (_, stride) in zip(params["blocks"], LAYER_CONFIG):
        y = lax.conv_general_dilated(
            x, blk["w"], (stride, stride), "VALID",
            dimension_numbers=("NHWC", "HWIO", "NHWC"))
        y = y + blk["b"]
        scale = blk["gamma"] / jnp.sqrt(blk["var"] + _EPS)
        y = scale * (y - blk["mean"]) + blk["beta"]
        x = jnp.maximum(y, 0.0)
    pooled = jnp.mean(x, axis=(1, 2))
    return pooled @ params["head_w"] + params["head_b"]


if __name__ == "__main__":
    key = jax.random.PRNGKey(0)
    # MNIST-like input (1 channel), NCHW like the PyTorch module expects.
    x = jax.random.normal(key, (2, 1, 28, 28), jnp.float32)
    params = init_params(jax.random.PRNGKey(42))

    fwd = jax.jit(neural_net_forward)
    pred = fwd(x, params)
    jax.block_until_ready(pred)
    assert pred.shape == (2, NUM_CLASSES), pred.shape

    ref = _reference_forward(x, params)
    err = float(jnp.max(jnp.abs(pred - ref)))
    # bf16 weights/activations inside the kernel -> compare with a loose tolerance
    assert jnp.allclose(pred, ref, atol=5e-2, rtol=5e-2), f"max abs diff {err}"

    print("KERNEL_OK")
</pallas_src>

<mosaic_0001>
module attributes {stable_mosaic.version = 11 : i64} {
  func.func @_fused_net_kernel(%arg0: i32, %arg1: memref<1x208x9xf32, #tpu.memory_space<vmem>>, %arg2: memref<9x128xf32, #tpu.memory_space<vmem>>, %arg3: memref<1x128xf32, #tpu.memory_space<vmem>>, %arg4: memref<9x128x128xbf16, #tpu.memory_space<vmem>>, %arg5: memref<1x128xf32, #tpu.memory_space<vmem>>, %arg6: memref<9x128x128xbf16, #tpu.memory_space<vmem>>, %arg7: memref<1x128xf32, #tpu.memory_space<vmem>>, %arg8: memref<40x144xf32, #tpu.memory_space<vmem>>, %arg9: memref<9x128x128xbf16, #tpu.memory_space<vmem>>, %arg10: memref<1x128xf32, #tpu.memory_space<vmem>>, %arg11: memref<1x24xf32, #tpu.memory_space<vmem>>, %arg12: memref<128x128xbf16, #tpu.memory_space<vmem>>, %arg13: memref<1x128xf32, #tpu.memory_space<vmem>>, %arg14: memref<1x1x128xf32, #tpu.memory_space<vmem>>, %arg15: memref<13x24x128xbf16, #tpu.memory_space<vmem>>, %arg16: memref<11x24x128xbf16, #tpu.memory_space<vmem>>, %arg17: memref<5x16x128xbf16, #tpu.memory_space<vmem>>) attributes {dimension_semantics = [#tpu.dimension_semantics<parallel>], iteration_bounds = array<i64: 2>, scalar_prefetch = 0 : i64, scratch_operands = 3 : i64, tpu.core_type = #tpu.core_type<tc>, window_params = [{transform_indices = @transform_0, window_bounds = array<i64: 1, 208, 9>}, {pipeline_mode = #tpu.pipeline_mode<synchronous>, transform_indices = @transform_1, window_bounds = array<i64: 9, 128>}, {pipeline_mode = #tpu.pipeline_mode<synchronous>, transform_indices = @transform_2, window_bounds = array<i64: 1, 128>}, {pipeline_mode = #tpu.pipeline_mode<synchronous>, transform_indices = @transform_3, window_bounds = array<i64: 9, 128, 128>}, {pipeline_mode = #tpu.pipeline_mode<synchronous>, transform_indices = @transform_4, window_bounds = array<i64: 1, 128>}, {pipeline_mode = #tpu.pipeline_mode<synchronous>, transform_indices = @transform_5, window_bounds = array<i64: 9, 128, 128>}, {pipeline_mode = #tpu.pipeline_mode<synchronous>, transform_indices = @transform_6, window_bounds = array<i64: 1, 128>}, {pipeline_mode = #tpu.pipeline_mode<synchronous>, transform_indices = @transform_7, window_bounds = array<i64: 40, 144>}, {pipeline_mode = #tpu.pipeline_mode<synchronous>, transform_indices = @transform_8, window_bounds = array<i64: 9, 128, 128>}, {pipeline_mode = #tpu.pipeline_mode<synchronous>, transform_indices = @transform_9, window_bounds = array<i64: 1, 128>}, {pipeline_mode = #tpu.pipeline_mode<synchronous>, transform_indices = @transform_10, window_bounds = array<i64: 1, 24>}, {pipeline_mode = #tpu.pipeline_mode<synchronous>, transform_indices = @transform_11, window_bounds = array<i64: 128, 128>}, {pipeline_mode = #tpu.pipeline_mode<synchronous>, transform_indices = @transform_12, window_bounds = array<i64: 1, 128>}, {transform_indices = @transform_13, window_bounds = array<i64: 1, 1, 128>}]} {
    %cst = arith.constant 0.000000e+00 : bf16
    %0 = vector.broadcast %cst : bf16 to vector<13x24x128xbf16>
    %c0 = arith.constant 0 : index
    %c0_0 = arith.constant 0 : index
    %c0_1 = arith.constant 0 : index
    %1 = vector.load %arg15[%c0, %c0_0, %c0_1] : memref<13x24x128xbf16, #tpu.memory_space<vmem>>, vector<13x24x128xbf16>
    tpu.vector_store %arg15[%c0, %c0_0, %c0_1], %0 {strides = array<i32>} : memref<13x24x128xbf16, #tpu.memory_space<vmem>>, vector<13x24x128xbf16>,
    %cst_2 = arith.constant 0.000000e+00 : bf16
    %2 = vector.broadcast %cst_2 : bf16 to vector<11x24x128xbf16>
    %c0_3 = arith.constant 0 : index
    %c0_4 = arith.constant 0 : index
    %c0_5 = arith.constant 0 : index
    %3 = vector.load %arg16[%c0_3, %c0_4, %c0_5] : memref<11x24x128xbf16, #tpu.memory_space<vmem>>, vector<11x24x128xbf16>
    tpu.vector_store %arg16[%c0_3, %c0_4, %c0_5], %2 {strides = array<i32>} : memref<11x24x128xbf16, #tpu.memory_space<vmem>>, vector<11x24x128xbf16>,
    %cst_6 = arith.constant 0.000000e+00 : bf16
    %4 = vector.broadcast %cst_6 : bf16 to vector<5x16x128xbf16>
    %c0_7 = arith.constant 0 : index
    %c0_8 = arith.constant 0 : index
    %c0_9 = arith.constant 0 : index
    %5 = vector.load %arg17[%c0_7, %c0_8, %c0_9] : memref<5x16x128xbf16, #tpu.memory_space<vmem>>, vector<5x16x128xbf16>
    tpu.vector_store %arg17[%c0_7, %c0_8, %c0_9], %4 {strides = array<i32>} : memref<5x16x128xbf16, #tpu.memory_space<vmem>>, vector<5x16x128xbf16>,
    %c0_10 = arith.constant 0 : index
    %c0_11 = arith.constant 0 : index
    %c0_12 = arith.constant 0 : index
    %6 = vector.load %arg1[%c0_10, %c0_11, %c0_12] : memref<1x208x9xf32, #tpu.memory_space<vmem>>, vector<1x208x9xf32>
    %7 = vector.shape_cast %6 : vector<1x208x9xf32> to vector<208x9xf32>
    %c0_13 = arith.constant 0 : index
    %c0_14 = arith.constant 0 : index
    %8 = vector.load %arg2[%c0_13, %c0_14] : memref<9x128xf32, #tpu.memory_space<vmem>>, vector<9x128xf32>
    %cst_15 = arith.constant 0.000000e+00 : f32
    %9 = vector.broadcast %cst_15 : f32 to vector<208x128xf32>
    %10 = vector.extract_strided_slice %7 {offsets = [0, 0], sizes = [208, 1], strides = [1, 1]} : vector<208x9xf32> to vector<208x1xf32>
    %11 = vector.extract_strided_slice %8 {offsets = [0, 0], sizes = [1, 128], strides = [1, 1]} : vector<9x128xf32> to vector<1x128xf32>
    %12 = vector.broadcast %10 : vector<208x1xf32> to vector<208x128xf32>
    %13 = vector.broadcast %11 : vector<1x128xf32> to vector<208x128xf32>
    %14 = arith.mulf %12, %13 : vector<208x128xf32>
    %15 = arith.addf %9, %14 : vector<208x128xf32>
    %16 = vector.extract_strided_slice %7 {offsets = [0, 1], sizes = [208, 1], strides = [1, 1]} : vector<208x9xf32> to vector<208x1xf32>
    %17 = vector.extract_strided_slice %8 {offsets = [1, 0], sizes = [1, 128], strides = [1, 1]} : vector<9x128xf32> to vector<1x128xf32>
    %18 = vector.broadcast %16 : vector<208x1xf32> to vector<208x128xf32>
    %19 = vector.broadcast %17 : vector<1x128xf32> to vector<208x128xf32>
    %20 = arith.mulf %18, %19 : vector<208x128xf32>
    %21 = arith.addf %15, %20 : vector<208x128xf32>
    %22 = vector.extract_strided_slice %7 {offsets = [0, 2], sizes = [208, 1], strides = [1, 1]} : vector<208x9xf32> to vector<208x1xf32>
    %23 = vector.extract_strided_slice %8 {offsets = [2, 0], sizes = [1, 128], strides = [1, 1]} : vector<9x128xf32> to vector<1x128xf32>
    %24 = vector.broadcast %22 : vector<208x1xf32> to vector<208x128xf32>
    %25 = vector.broadcast %23 : vector<1x128xf32> to vector<208x128xf32>
    %26 = arith.mulf %24, %25 : vector<208x128xf32>
    %27 = arith.addf %21, %26 : vector<208x128xf32>
    %28 = vector.extract_strided_slice %7 {offsets = [0, 3], sizes = [208, 1], strides = [1, 1]} : vector<208x9xf32> to vector<208x1xf32>
    %29 = vector.extract_strided_slice %8 {offsets = [3, 0], sizes = [1, 128], strides = [1, 1]} : vector<9x128xf32> to vector<1x128xf32>
    %30 = vector.broadcast %28 : vector<208x1xf32> to vector<208x128xf32>
    %31 = vector.broadcast %29 : vector<1x128xf32> to vector<208x128xf32>
    %32 = arith.mulf %30, %31 : vector<208x128xf32>
    %33 = arith.addf %27, %32 : vector<208x128xf32>
    %34 = vector.extract_strided_slice %7 {offsets = [0, 4], sizes = [208, 1], strides = [1, 1]} : vector<208x9xf32> to vector<208x1xf32>
    %35 = vector.extract_strided_slice %8 {offsets = [4, 0], sizes = [1, 128], strides = [1, 1]} : vector<9x128xf32> to vector<1x128xf32>
    %36 = vector.broadcast %34 : vector<208x1xf32> to vector<208x128xf32>
    %37 = vector.broadcast %35 : vector<1x128xf32> to vector<208x128xf32>
    %38 = arith.mulf %36, %37 : vector<208x128xf32>
    %39 = arith.addf %33, %38 : vector<208x128xf32>
    %40 = vector.extract_strided_slice %7 {offsets = [0, 5], sizes = [208, 1], strides = [1, 1]} : vector<208x9xf32> to vector<208x1xf32>
    %41 = vector.extract_strided_slice %8 {offsets = [5, 0], sizes = [1, 128], strides = [1, 1]} : vector<9x128xf32> to vector<1x128xf32>
    %42 = vector.broadcast %40 : vector<208x1xf32> to vector<208x128xf32>
    %43 = vector.broadcast %41 : vector<1x128xf32> to vector<208x128xf32>
    %44 = arith.mulf %42, %43 : vector<208x128xf32>
    %45 = arith.addf %39, %44 : vector<208x128xf32>
    %46 = vector.extract_strided_slice %7 {offsets = [0, 6], sizes = [208, 1], strides = [1, 1]} : vector<208x9xf32> to vector<208x1xf32>
    %47 = vector.extract_strided_slice %8 {offsets = [6, 0], sizes = [1, 128], strides = [1, 1]} : vector<9x128xf32> to vector<1x128xf32>
    %48 = vector.broadcast %46 : vector<208x1xf32> to vector<208x128xf32>
    %49 = vector.broadcast %47 : vector<1x128xf32> to vector<208x128xf32>
    %50 = arith.mulf %48, %49 : vector<208x128xf32>
    %51 = arith.addf %45, %50 : vector<208x128xf32>
    %52 = vector.extract_strided_slice %7 {offsets = [0, 7], sizes = [208, 1], strides = [1, 1]} : vector<208x9xf32> to vector<208x1xf32>
    %53 = vector.extract_strided_slice %8 {offsets = [7, 0], sizes = [1, 128], strides = [1, 1]} : vector<9x128xf32> to vector<1x128xf32>
    %54 = vector.broadcast %52 : vector<208x1xf32> to vector<208x128xf32>
    %55 = vector.broadcast %53 : vector<1x128xf32> to vector<208x128xf32>
    %56 = arith.mulf %54, %55 : vector<208x128xf32>
    %57 = arith.addf %51, %56 : vector<208x128xf32>
    %58 = vector.extract_strided_slice %7 {offsets = [0, 8], sizes = [208, 1], strides = [1, 1]} : vector<208x9xf32> to vector<208x1xf32>
    %59 = vector.extract_strided_slice %8 {offsets = [8, 0], sizes = [1, 128], strides = [1, 1]} : vector<9x128xf32> to vector<1x128xf32>
    %60 = vector.broadcast %58 : vector<208x1xf32> to vector<208x128xf32>
    %61 = vector.broadcast %59 : vector<1x128xf32> to vector<208x128xf32>
    %62 = arith.mulf %60, %61 : vector<208x128xf32>
    %63 = arith.addf %57, %62 : vector<208x128xf32>
    %c0_16 = arith.constant 0 : index
    %c0_17 = arith.constant 0 : index
    %64 = vector.load %arg3[%c0_16, %c0_17] : memref<1x128xf32, #tpu.memory_space<vmem>>, vector<1x128xf32>
    %65 = vector.broadcast %64 : vector<1x128xf32> to vector<208x128xf32>
    %66 = arith.addf %63, %65 : vector<208x128xf32>
    %cst_18 = arith.constant 0.000000e+00 : f32
    %67 = vector.broadcast %cst_18 : f32 to vector<208x128xf32>
    %68 = arith.maximumf %66, %67 : vector<208x128xf32>
    %69 = vector.shape_cast %68 : vector<208x128xf32> to vector<13x16x128xf32>
    %70 = arith.truncf %69 : vector<13x16x128xf32> to vector<13x16x128xbf16>
    %c0_19 = arith.constant 0 : index
    %c0_20 = arith.constant 0 : index
    %c0_21 = arith.constant 0 : index
    %71 = vector.load %arg15[%c0_19, %c0_20, %c0_21] : memref<13x24x128xbf16, #tpu.memory_space<vmem>>, vector<13x16x128xbf16>
    tpu.vector_store %arg15[%c0_19, %c0_20, %c0_21], %70 {strides = array<i32>} : memref<13x24x128xbf16, #tpu.memory_space<vmem>>, vector<13x16x128xbf16>,
    %cst_22 = arith.constant 0.000000e+00 : f32
    %72 = vector.broadcast %cst_22 : f32 to vector<176x128xf32>
    %c0_23 = arith.constant 0 : index
    %c0_24 = arith.constant 0 : index
    %c0_25 = arith.constant 0 : index
    %73 = vector.load %arg15[%c0_23, %c0_24, %c0_25] : memref<13x24x128xbf16, #tpu.memory_space<vmem>>, vector<11x16x128xbf16>
    %74 = vector.shape_cast %73 : vector<11x16x128xbf16> to vector<176x128xbf16>
    %c0_26 = arith.constant 0 : index
    %c0_27 = arith.constant 0 : index
    %c0_28 = arith.constant 0 : index
    %75 = vector.load %arg4[%c0_26, %c0_27, %c0_28] : memref<9x128x128xbf16, #tpu.memory_space<vmem>>, vector<1x128x128xbf16>
    %76 = vector.shape_cast %75 : vector<1x128x128xbf16> to vector<128x128xbf16>
    %cst_29 = arith.constant dense<0.000000e+00> : vector<176x128xf32>
    %77 = tpu.matmul %74, %76, %cst_29 {dimension_numbers = #tpu.dot_dimension_numbers<[1], [0], [0], [1], [0, 0, 1, 1], [], []>} : vector<176x128xbf16>, vector<128x128xbf16>, vector<176x128xf32> -> vector<176x128xf32>
    %78 = arith.addf %72, %77 : vector<176x128xf32>
    %c0_30 = arith.constant 0 : index
    %c1 = arith.constant 1 : index
    %c0_31 = arith.constant 0 : index
    %79 = vector.load %arg15[%c0_30, %c1, %c0_31] : memref<13x24x128xbf16, #tpu.memory_space<vmem>>, vector<11x16x128xbf16>
    %80 = vector.shape_cast %79 : vector<11x16x128xbf16> to vector<176x128xbf16>
    %c1_32 = arith.constant 1 : index
    %c0_33 = arith.constant 0 : index
    %c0_34 = arith.constant 0 : index
    %81 = vector.load %arg4[%c1_32, %c0_33, %c0_34] : memref<9x128x128xbf16, #tpu.memory_space<vmem>>, vector<1x128x128xbf16>
    %82 = vector.shape_cast %81 : vector<1x128x128xbf16> to vector<128x128xbf16>
    %cst_35 = arith.constant dense<0.000000e+00> : vector<176x128xf32>
    %83 = tpu.matmul %80, %82, %cst_35 {dimension_numbers = #tpu.dot_dimension_numbers<[1], [0], [0], [1], [0, 0, 1, 1], [], []>} : vector<176x128xbf16>, vector<128x128xbf16>, vector<176x128xf32> -> vector<176x128xf32>
    %84 = arith.addf %78, %83 : vector<176x128xf32>
    %c0_36 = arith.constant 0 : index
    %c2 = arith.constant 2 : index
    %c0_37 = arith.constant 0 : index
    %85 = vector.load %arg15[%c0_36, %c2, %c0_37] : memref<13x24x128xbf16, #tpu.memory_space<vmem>>, vector<11x16x128xbf16>
    %86 = vector.shape_cast %85 : vector<11x16x128xbf16> to vector<176x128xbf16>
    %c2_38 = arith.constant 2 : index
    %c0_39 = arith.constant 0 : index
    %c0_40 = arith.constant 0 : index
    %87 = vector.load %arg4[%c2_38, %c0_39, %c0_40] : memref<9x128x128xbf16, #tpu.memory_space<vmem>>, vector<1x128x128xbf16>
    %88 = vector.shape_cast %87 : vector<1x128x128xbf16> to vector<128x128xbf16>
    %cst_41 = arith.constant dense<0.000000e+00> : vector<176x128xf32>
    %89 = tpu.matmul %86, %88, %cst_41 {dimension_numbers = #tpu.dot_dimension_numbers<[1], [0], [0], [1], [0, 0, 1, 1], [], []>} : vector<176x128xbf16>, vector<128x128xbf16>, vector<176x128xf32> -> vector<176x128xf32>
    %90 = arith.addf %84, %89 : vector<176x128xf32>
    %c1_42 = arith.constant 1 : index
    %c0_43 = arith.constant 0 : index
    %c0_44 = arith.constant 0 : index
    %91 = vector.load %arg15[%c1_42, %c0_43, %c0_44] : memref<13x24x128xbf16, #tpu.memory_space<vmem>>, vector<11x16x128xbf16>
    %92 = vector.shape_cast %91 : vector<11x16x128xbf16> to vector<176x128xbf16>
    %c3 = arith.constant 3 : index
    %c0_45 = arith.constant 0 : index
    %c0_46 = arith.constant 0 : index
    %93 = vector.load %arg4[%c3, %c0_45, %c0_46] : memref<9x128x128xbf16, #tpu.memory_space<vmem>>, vector<1x128x128xbf16>
    %94 = vector.shape_cast %93 : vector<1x128x128xbf16> to vector<128x128xbf16>
    %cst_47 = arith.constant dense<0.000000e+00> : vector<176x128xf32>
    %95 = tpu.matmul %92, %94, %cst_47 {dimension_numbers = #tpu.dot_dimension_numbers<[1], [0], [0], [1], [0, 0, 1, 1], [], []>} : vector<176x128xbf16>, vector<128x128xbf16>, vector<176x128xf32> -> vector<176x128xf32>
    %96 = arith.addf %90, %95 : vector<176x128xf32>
    %c1_48 = arith.constant 1 : index
    %c1_49 = arith.constant 1 : index
    %c0_50 = arith.constant 0 : index
    %97 = vector.load %arg15[%c1_48, %c1_49, %c0_50] : memref<13x24x128xbf16, #tpu.memory_space<vmem>>, vector<11x16x128xbf16>
    %98 = vector.shape_cast %97 : vector<11x16x128xbf16> to vector<176x128xbf16>
    %c4 = arith.constant 4 : index
    %c0_51 = arith.constant 0 : index
    %c0_52 = arith.constant 0 : index
    %99 = vector.load %arg4[%c4, %c0_51, %c0_52] : memref<9x128x128xbf16, #tpu.memory_space<vmem>>, vector<1x128x128xbf16>
    %100 = vector.shape_cast %99 : vector<1x128x128xbf16> to vector<128x128xbf16>
    %cst_53 = arith.constant dense<0.000000e+00> : vector<176x128xf32>
    %101 = tpu.matmul %98, %100, %cst_53 {dimension_numbers = #tpu.dot_dimension_numbers<[1], [0], [0], [1], [0, 0, 1, 1], [], []>} : vector<176x128xbf16>, vector<128x128xbf16>, vector<176x128xf32> -> vector<176x128xf32>
    %102 = arith.addf %96, %101 : vector<176x128xf32>
    %c1_54 = arith.constant 1 : index
    %c2_55 = arith.constant 2 : index
    %c0_56 = arith.constant 0 : index
    %103 = vector.load %arg15[%c1_54, %c2_55, %c0_56] : memref<13x24x128xbf16, #tpu.memory_space<vmem>>, vector<11x16x128xbf16>
    %104 = vector.shape_cast %103 : vector<11x16x128xbf16> to vector<176x128xbf16>
    %c5 = arith.constant 5 : index
    %c0_57 = arith.constant 0 : index
    %c0_58 = arith.constant 0 : index
    %105 = vector.load %arg4[%c5, %c0_57, %c0_58] : memref<9x128x128xbf16, #tpu.memory_space<vmem>>, vector<1x128x128xbf16>
    %106 = vector.shape_cast %105 : vector<1x128x128xbf16> to vector<128x128xbf16>
    %cst_59 = arith.constant dense<0.000000e+00> : vector<176x128xf32>
    %107 = tpu.matmul %104, %106, %cst_59 {dimension_numbers = #tpu.dot_dimension_numbers<[1], [0], [0], [1], [0, 0, 1, 1], [], []>} : vector<176x128xbf16>, vector<128x128xbf16>, vector<176x128xf32> -> vector<176x128xf32>
    %108 = arith.addf %102, %107 : vector<176x128xf32>
    %c2_60 = arith.constant 2 : index
    %c0_61 = arith.constant 0 : index
    %c0_62 = arith.constant 0 : index
    %109 = vector.load %arg15[%c2_60, %c0_61, %c0_62] : memref<13x24x128xbf16, #tpu.memory_space<vmem>>, vector<11x16x128xbf16>
    %110 = vector.shape_cast %109 : vector<11x16x128xbf16> to vector<176x128xbf16>
    %c6 = arith.constant 6 : index
    %c0_63 = arith.constant 0 : index
    %c0_64 = arith.constant 0 : index
    %111 = vector.load %arg4[%c6, %c0_63, %c0_64] : memref<9x128x128xbf16, #tpu.memory_space<vmem>>, vector<1x128x128xbf16>
    %112 = vector.shape_cast %111 : vector<1x128x128xbf16> to vector<128x128xbf16>
    %cst_65 = arith.constant dense<0.000000e+00> : vector<176x128xf32>
    %113 = tpu.matmul %110, %112, %cst_65 {dimension_numbers = #tpu.dot_dimension_numbers<[1], [0], [0], [1], [0, 0, 1, 1], [], []>} : vector<176x128xbf16>, vector<128x128xbf16>, vector<176x128xf32> -> vector<176x128xf32>
    %114 = arith.addf %108, %113 : vector<176x128xf32>
    %c2_66 = arith.constant 2 : index
    %c1_67 = arith.constant 1 : index
    %c0_68 = arith.constant 0 : index
    %115 = vector.load %arg15[%c2_66, %c1_67, %c0_68] : memref<13x24x128xbf16, #tpu.memory_space<vmem>>, vector<11x16x128xbf16>
    %116 = vector.shape_cast %115 : vector<11x16x128xbf16> to vector<176x128xbf16>
    %c7 = arith.constant 7 : index
    %c0_69 = arith.constant 0 : index
    %c0_70 = arith.constant 0 : index
    %117 = vector.load %arg4[%c7, %c0_69, %c0_70] : memref<9x128x128xbf16, #tpu.memory_space<vmem>>, vector<1x128x128xbf16>
    %118 = vector.shape_cast %117 : vector<1x128x128xbf16> to vector<128x128xbf16>
    %cst_71 = arith.constant dense<0.000000e+00> : vector<176x128xf32>
    %119 = tpu.matmul %116, %118, %cst_71 {dimension_numbers = #tpu.dot_dimension_numbers<[1], [0], [0], [1], [0, 0, 1, 1], [], []>} : vector<176x128xbf16>, vector<128x128xbf16>, vector<176x128xf32> -> vector<176x128xf32>
    %120 = arith.addf %114, %119 : vector<176x128xf32>
    %c2_72 = arith.constant 2 : index
    %c2_73 = arith.constant 2 : index
    %c0_74 = arith.constant 0 : index
    %121 = vector.load %arg15[%c2_72, %c2_73, %c0_74] : memref<13x24x128xbf16, #tpu.memory_space<vmem>>, vector<11x16x128xbf16>
    %122 = vector.shape_cast %121 : vector<11x16x128xbf16> to vector<176x128xbf16>
    %c8 = arith.constant 8 : index
    %c0_75 = arith.constant 0 : index
    %c0_76 = arith.constant 0 : index
    %123 = vector.load %arg4[%c8, %c0_75, %c0_76] : memref<9x128x128xbf16, #tpu.memory_space<vmem>>, vector<1x128x128xbf16>
    %124 = vector.shape_cast %123 : vector<1x128x128xbf16> to vector<128x128xbf16>
    %cst_77 = arith.constant dense<0.000000e+00> : vector<176x128xf32>
    %125 = tpu.matmul %122, %124, %cst_77 {dimension_numbers = #tpu.dot_dimension_numbers<[1], [0], [0], [1], [0, 0, 1, 1], [], []>} : vector<176x128xbf16>, vector<128x128xbf16>, vector<176x128xf32> -> vector<176x128xf32>
    %126 = arith.addf %120, %125 : vector<176x128xf32>
    %c0_78 = arith.constant 0 : index
    %c0_79 = arith.constant 0 : index
    %127 = vector.load %arg5[%c0_78, %c0_79] : memref<1x128xf32, #tpu.memory_space<vmem>>, vector<1x128xf32>
    %128 = vector.broadcast %127 : vector<1x128xf32> to vector<176x128xf32>
    %129 = arith.addf %126, %128 : vector<176x128xf32>
    %cst_80 = arith.constant 0.000000e+00 : f32
    %130 = vector.broadcast %cst_80 : f32 to vector<176x128xf32>
    %131 = arith.maximumf %129, %130 : vector<176x128xf32>
    %132 = vector.shape_cast %131 : vector<176x128xf32> to vector<11x16x128xf32>
    %133 = arith.truncf %132 : vector<11x16x128xf32> to vector<11x16x128xbf16>
    %c0_81 = arith.constant 0 : index
    %c0_82 = arith.constant 0 : index
    %c0_83 = arith.constant 0 : index
    %134 = vector.load %arg16[%c0_81, %c0_82, %c0_83] : memref<11x24x128xbf16, #tpu.memory_space<vmem>>, vector<11x16x128xbf16>
    tpu.vector_store %arg16[%c0_81, %c0_82, %c0_83], %133 {strides = array<i32>} : memref<11x24x128xbf16, #tpu.memory_space<vmem>>, vector<11x16x128xbf16>,
    %cst_84 = arith.constant 0.000000e+00 : f32
    %135 = vector.broadcast %cst_84 : f32 to vector<144x128xf32>
    %c0_85 = arith.constant 0 : index
    %c0_86 = arith.constant 0 : index
    %c0_87 = arith.constant 0 : index
    %136 = vector.load %arg16[%c0_85, %c0_86, %c0_87] : memref<11x24x128xbf16, #tpu.memory_space<vmem>>, vector<9x16x128xbf16>
    %137 = vector.shape_cast %136 : vector<9x16x128xbf16> to vector<144x128xbf16>
    %c0_88 = arith.constant 0 : index
    %c0_89 = arith.constant 0 : index
    %c0_90 = arith.constant 0 : index
    %138 = vector.load %arg6[%c0_88, %c0_89, %c0_90] : memref<9x128x128xbf16, #tpu.memory_space<vmem>>, vector<1x128x128xbf16>
    %139 = vector.shape_cast %138 : vector<1x128x128xbf16> to vector<128x128xbf16>
    %cst_91 = arith.constant dense<0.000000e+00> : vector<144x128xf32>
    %140 = tpu.matmul %137, %139, %cst_91 {dimension_numbers = #tpu.dot_dimension_numbers<[1], [0], [0], [1], [0, 0, 1, 1], [], []>} : vector<144x128xbf16>, vector<128x128xbf16>, vector<144x128xf32> -> vector<144x128xf32>
    %141 = arith.addf %135, %140 : vector<144x128xf32>
    %c0_92 = arith.constant 0 : index
    %c1_93 = arith.constant 1 : index
    %c0_94 = arith.constant 0 : index
    %142 = vector.load %arg16[%c0_92, %c1_93, %c0_94] : memref<11x24x128xbf16, #tpu.memory_space<vmem>>, vector<9x16x128xbf16>
    %143 = vector.shape_cast %142 : vector<9x16x128xbf16> to vector<144x128xbf16>
    %c1_95 = arith.constant 1 : index
    %c0_96 = arith.constant 0 : index
    %c0_97 = arith.constant 0 : index
    %144 = vector.load %arg6[%c1_95, %c0_96, %c0_97] : memref<9x128x128xbf16, #tpu.memory_space<vmem>>, vector<1x128x128xbf16>
    %145 = vector.shape_cast %144 : vector<1x128x128xbf16> to vector<128x128xbf16>
    %cst_98 = arith.constant dense<0.000000e+00> : vector<144x128xf32>
    %146 = tpu.matmul %143, %145, %cst_98 {dimension_numbers = #tpu.dot_dimension_numbers<[1], [0], [0], [1], [0, 0, 1, 1], [], []>} : vector<144x128xbf16>, vector<128x128xbf16>, vector<144x128xf32> -> vector<144x128xf32>
    %147 = arith.addf %141, %146 : vector<144x128xf32>
    %c0_99 = arith.constant 0 : index
    %c2_100 = arith.constant 2 : index
    %c0_101 = arith.constant 0 : index
    %148 = vector.load %arg16[%c0_99, %c2_100, %c0_101] : memref<11x24x128xbf16, #tpu.memory_space<vmem>>, vector<9x16x128xbf16>
    %149 = vector.shape_cast %148 : vector<9x16x128xbf16> to vector<144x128xbf16>
    %c2_102 = arith.constant 2 : index
    %c0_103 = arith.constant 0 : index
    %c0_104 = arith.constant 0 : index
    %150 = vector.load %arg6[%c2_102, %c0_103, %c0_104] : memref<9x128x128xbf16, #tpu.memory_space<vmem>>, vector<1x128x128xbf16>
    %151 = vector.shape_cast %150 : vector<1x128x128xbf16> to vector<128x128xbf16>
    %cst_105 = arith.constant dense<0.000000e+00> : vector<144x128xf32>
    %152 = tpu.matmul %149, %151, %cst_105 {dimension_numbers = #tpu.dot_dimension_numbers<[1], [0], [0], [1], [0, 0, 1, 1], [], []>} : vector<144x128xbf16>, vector<128x128xbf16>, vector<144x128xf32> -> vector<144x128xf32>
    %153 = arith.addf %147, %152 : vector<144x128xf32>
    %c1_106 = arith.constant 1 : index
    %c0_107 = arith.constant 0 : index
    %c0_108 = arith.constant 0 : index
    %154 = vector.load %arg16[%c1_106, %c0_107, %c0_108] : memref<11x24x128xbf16, #tpu.memory_space<vmem>>, vector<9x16x128xbf16>
    %155 = vector.shape_cast %154 : vector<9x16x128xbf16> to vector<144x128xbf16>
    %c3_109 = arith.constant 3 : index
    %c0_110 = arith.constant 0 : index
    %c0_111 = arith.constant 0 : index
    %156 = vector.load %arg6[%c3_109, %c0_110, %c0_111] : memref<9x128x128xbf16, #tpu.memory_space<vmem>>, vector<1x128x128xbf16>
    %157 = vector.shape_cast %156 : vector<1x128x128xbf16> to vector<128x128xbf16>
    %cst_112 = arith.constant dense<0.000000e+00> : vector<144x128xf32>
    %158 = tpu.matmul %155, %157, %cst_112 {dimension_numbers = #tpu.dot_dimension_numbers<[1], [0], [0], [1], [0, 0, 1, 1], [], []>} : vector<144x128xbf16>, vector<128x128xbf16>, vector<144x128xf32> -> vector<144x128xf32>
    %159 = arith.addf %153, %158 : vector<144x128xf32>
    %c1_113 = arith.constant 1 : index
    %c1_114 = arith.constant 1 : index
    %c0_115 = arith.constant 0 : index
    %160 = vector.load %arg16[%c1_113, %c1_114, %c0_115] : memref<11x24x128xbf16, #tpu.memory_space<vmem>>, vector<9x16x128xbf16>
    %161 = vector.shape_cast %160 : vector<9x16x128xbf16> to vector<144x128xbf16>
    %c4_116 = arith.constant 4 : index
    %c0_117 = arith.constant 0 : index
    %c0_118 = arith.constant 0 : index
    %162 = vector.load %arg6[%c4_116, %c0_117, %c0_118] : memref<9x128x128xbf16, #tpu.memory_space<vmem>>, vector<1x128x128xbf16>
    %163 = vector.shape_cast %162 : vector<1x128x128xbf16> to vector<128x128xbf16>
    %cst_119 = arith.constant dense<0.000000e+00> : vector<144x128xf32>
    %164 = tpu.matmul %161, %163, %cst_119 {dimension_numbers = #tpu.dot_dimension_numbers<[1], [0], [0], [1], [0, 0, 1, 1], [], []>} : vector<144x128xbf16>, vector<128x128xbf16>, vector<144x128xf32> -> vector<144x128xf32>
    %165 = arith.addf %159, %164 : vector<144x128xf32>
    %c1_120 = arith.constant 1 : index
    %c2_121 = arith.constant 2 : index
    %c0_122 = arith.constant 0 : index
    %166 = vector.load %arg16[%c1_120, %c2_121, %c0_122] : memref<11x24x128xbf16, #tpu.memory_space<vmem>>, vector<9x16x128xbf16>
    %167 = vector.shape_cast %166 : vector<9x16x128xbf16> to vector<144x128xbf16>
    %c5_123 = arith.constant 5 : index
    %c0_124 = arith.constant 0 : index
    %c0_125 = arith.constant 0 : index
    %168 = vector.load %arg6[%c5_123, %c0_124, %c0_125] : memref<9x128x128xbf16, #tpu.memory_space<vmem>>, vector<1x128x128xbf16>
    %169 = vector.shape_cast %168 : vector<1x128x128xbf16> to vector<128x128xbf16>
    %cst_126 = arith.constant dense<0.000000e+00> : vector<144x128xf32>
    %170 = tpu.matmul %167, %169, %cst_126 {dimension_numbers = #tpu.dot_dimension_numbers<[1], [0], [0], [1], [0, 0, 1, 1], [], []>} : vector<144x128xbf16>, vector<128x128xbf16>, vector<144x128xf32> -> vector<144x128xf32>
    %171 = arith.addf %165, %170 : vector<144x128xf32>
    %c2_127 = arith.constant 2 : index
    %c0_128 = arith.constant 0 : index
    %c0_129 = arith.constant 0 : index
    %172 = vector.load %arg16[%c2_127, %c0_128, %c0_129] : memref<11x24x128xbf16, #tpu.memory_space<vmem>>, vector<9x16x128xbf16>
    %173 = vector.shape_cast %172 : vector<9x16x128xbf16> to vector<144x128xbf16>
    %c6_130 = arith.constant 6 : index
    %c0_131 = arith.constant 0 : index
    %c0_132 = arith.constant 0 : index
    %174 = vector.load %arg6[%c6_130, %c0_131, %c0_132] : memref<9x128x128xbf16, #tpu.memory_space<vmem>>, vector<1x128x128xbf16>
    %175 = vector.shape_cast %174 : vector<1x128x128xbf16> to vector<128x128xbf16>
    %cst_133 = arith.constant dense<0.000000e+00> : vector<144x128xf32>
    %176 = tpu.matmul %173, %175, %cst_133 {dimension_numbers = #tpu.dot_dimension_numbers<[1], [0], [0], [1], [0, 0, 1, 1], [], []>} : vector<144x128xbf16>, vector<128x128xbf16>, vector<144x128xf32> -> vector<144x128xf32>
    %177 = arith.addf %171, %176 : vector<144x128xf32>
    %c2_134 = arith.constant 2 : index
    %c1_135 = arith.constant 1 : index
    %c0_136 = arith.constant 0 : index
    %178 = vector.load %arg16[%c2_134, %c1_135, %c0_136] : memref<11x24x128xbf16, #tpu.memory_space<vmem>>, vector<9x16x128xbf16>
    %179 = vector.shape_cast %178 : vector<9x16x128xbf16> to vector<144x128xbf16>
    %c7_137 = arith.constant 7 : index
    %c0_138 = arith.constant 0 : index
    %c0_139 = arith.constant 0 : index
    %180 = vector.load %arg6[%c7_137, %c0_138, %c0_139] : memref<9x128x128xbf16, #tpu.memory_space<vmem>>, vector<1x128x128xbf16>
    %181 = vector.shape_cast %180 : vector<1x128x128xbf16> to vector<128x128xbf16>
    %cst_140 = arith.constant dense<0.000000e+00> : vector<144x128xf32>
    %182 = tpu.matmul %179, %181, %cst_140 {dimension_numbers = #tpu.dot_dimension_numbers<[1], [0], [0], [1], [0, 0, 1, 1], [], []>} : vector<144x128xbf16>, vector<128x128xbf16>, vector<144x128xf32> -> vector<144x128xf32>
    %183 = arith.addf %177, %182 : vector<144x128xf32>
    %c2_141 = arith.constant 2 : index
    %c2_142 = arith.constant 2 : index
    %c0_143 = arith.constant 0 : index
    %184 = vector.load %arg16[%c2_141, %c2_142, %c0_143] : memref<11x24x128xbf16, #tpu.memory_space<vmem>>, vector<9x16x128xbf16>
    %185 = vector.shape_cast %184 : vector<9x16x128xbf16> to vector<144x128xbf16>
    %c8_144 = arith.constant 8 : index
    %c0_145 = arith.constant 0 : index
    %c0_146 = arith.constant 0 : index
    %186 = vector.load %arg6[%c8_144, %c0_145, %c0_146] : memref<9x128x128xbf16, #tpu.memory_space<vmem>>, vector<1x128x128xbf16>
    %187 = vector.shape_cast %186 : vector<1x128x128xbf16> to vector<128x128xbf16>
    %cst_147 = arith.constant dense<0.000000e+00> : vector<144x128xf32>
    %188 = tpu.matmul %185, %187, %cst_147 {dimension_numbers = #tpu.dot_dimension_numbers<[1], [0], [0], [1], [0, 0, 1, 1], [], []>} : vector<144x128xbf16>, vector<128x128xbf16>, vector<144x128xf32> -> vector<144x128xf32>
    %189 = arith.addf %183, %188 : vector<144x128xf32>
    %c0_148 = arith.constant 0 : index
    %c0_149 = arith.constant 0 : index
    %190 = vector.load %arg8[%c0_148, %c0_149] : memref<40x144xf32, #tpu.memory_space<vmem>>, vector<40x144xf32>
    %cst_150 = arith.constant dense<0.000000e+00> : vector<40x128xf32>
    %191 = tpu.matmul %190, %189, %cst_150 {dimension_numbers = #tpu.dot_dimension_numbers<[1], [0], [0], [1], [0, 0, 1, 1], [], []>} : vector<40x144xf32>, vector<144x128xf32>, vector<40x128xf32> -> vector<40x128xf32>
    %c0_151 = arith.constant 0 : index
    %c0_152 = arith.constant 0 : index
    %192 = vector.load %arg7[%c0_151, %c0_152] : memref<1x128xf32, #tpu.memory_space<vmem>>, vector<1x128xf32>
    %193 = vector.broadcast %192 : vector<1x128xf32> to vector<40x128xf32>
    %194 = arith.addf %191, %193 : vector<40x128xf32>
    %cst_153 = arith.constant 0.000000e+00 : f32
    %195 = vector.broadcast %cst_153 : f32 to vector<40x128xf32>
    %196 = arith.maximumf %194, %195 : vector<40x128xf32>
    %197 = vector.shape_cast %196 : vector<40x128xf32> to vector<5x8x128xf32>
    %198 = arith.truncf %197 : vector<5x8x128xf32> to vector<5x8x128xbf16>
    %c0_154 = arith.constant 0 : index
    %c0_155 = arith.constant 0 : index
    %c0_156 = arith.constant 0 : index
    %199 = vector.load %arg17[%c0_154, %c0_155, %c0_156] : memref<5x16x128xbf16, #tpu.memory_space<vmem>>, vector<5x8x128xbf16>
    tpu.vector_store %arg17[%c0_154, %c0_155, %c0_156], %198 {strides = array<i32>} : memref<5x16x128xbf16, #tpu.memory_space<vmem>>, vector<5x8x128xbf16>,
    %cst_157 = arith.constant 0.000000e+00 : f32
    %200 = vector.broadcast %cst_157 : f32 to vector<24x128xf32>
    %c0_158 = arith.constant 0 : index
    %c0_159 = arith.constant 0 : index
    %c0_160 = arith.constant 0 : index
    %201 = vector.load %arg17[%c0_158, %c0_159, %c0_160] : memref<5x16x128xbf16, #tpu.memory_space<vmem>>, vector<3x8x128xbf16>
    %202 = vector.shape_cast %201 : vector<3x8x128xbf16> to vector<24x128xbf16>
    %c0_161 = arith.constant 0 : index
    %c0_162 = arith.constant 0 : index
    %c0_163 = arith.constant 0 : index
    %203 = vector.load %arg9[%c0_161, %c0_162, %c0_163] : memref<9x128x128xbf16, #tpu.memory_space<vmem>>, vector<1x128x128xbf16>
    %204 = vector.shape_cast %203 : vector<1x128x128xbf16> to vector<128x128xbf16>
    %cst_164 = arith.constant dense<0.000000e+00> : vector<24x128xf32>
    %205 = tpu.matmul %202, %204, %cst_164 {dimension_numbers = #tpu.dot_dimension_numbers<[1], [0], [0], [1], [0, 0, 1, 1], [], []>} : vector<24x128xbf16>, vector<128x128xbf16>, vector<24x128xf32> -> vector<24x128xf32>
    %206 = arith.addf %200, %205 : vector<24x128xf32>
    %c0_165 = arith.constant 0 : index
    %c1_166 = arith.constant 1 : index
    %c0_167 = arith.constant 0 : index
    %207 = vector.load %arg17[%c0_165, %c1_166, %c0_167] : memref<5x16x128xbf16, #tpu.memory_space<vmem>>, vector<3x8x128xbf16>
    %208 = vector.shape_cast %207 : vector<3x8x128xbf16> to vector<24x128xbf16>
    %c1_168 = arith.constant 1 : index
    %c0_169 = arith.constant 0 : index
    %c0_170 = arith.constant 0 : index
    %209 = vector.load %arg9[%c1_168, %c0_169, %c0_170] : memref<9x128x128xbf16, #tpu.memory_space<vmem>>, vector<1x128x128xbf16>
    %210 = vector.shape_cast %209 : vector<1x128x128xbf16> to vector<128x128xbf16>
    %cst_171 = arith.constant dense<0.000000e+00> : vector<24x128xf32>
    %211 = tpu.matmul %208, %210, %cst_171 {dimension_numbers = #tpu.dot_dimension_numbers<[1], [0], [0], [1], [0, 0, 1, 1], [], []>} : vector<24x128xbf16>, vector<128x128xbf16>, vector<24x128xf32> -> vector<24x128xf32>
    %212 = arith.addf %206, %211 : vector<24x128xf32>
    %c0_172 = arith.constant 0 : index
    %c2_173 = arith.constant 2 : index
    %c0_174 = arith.constant 0 : index
    %213 = vector.load %arg17[%c0_172, %c2_173, %c0_174] : memref<5x16x128xbf16, #tpu.memory_space<vmem>>, vector<3x8x128xbf16>
    %214 = vector.shape_cast %213 : vector<3x8x128xbf16> to vector<24x128xbf16>
    %c2_175 = arith.constant 2 : index
    %c0_176 = arith.constant 0 : index
    %c0_177 = arith.constant 0 : index
    %215 = vector.load %arg9[%c2_175, %c0_176, %c0_177] : memref<9x128x128xbf16, #tpu.memory_space<vmem>>, vector<1x128x128xbf16>
    %216 = vector.shape_cast %215 : vector<1x128x128xbf16> to vector<128x128xbf16>
    %cst_178 = arith.constant dense<0.000000e+00> : vector<24x128xf32>
    %217 = tpu.matmul %214, %216, %cst_178 {dimension_numbers = #tpu.dot_dimension_numbers<[1], [0], [0], [1], [0, 0, 1, 1], [], []>} : vector<24x128xbf16>, vector<128x128xbf16>, vector<24x128xf32> -> vector<24x128xf32>
    %218 = arith.addf %212, %217 : vector<24x128xf32>
    %c1_179 = arith.constant 1 : index
    %c0_180 = arith.constant 0 : index
    %c0_181 = arith.constant 0 : index
    %219 = vector.load %arg17[%c1_179, %c0_180, %c0_181] : memref<5x16x128xbf16, #tpu.memory_space<vmem>>, vector<3x8x128xbf16>
    %220 = vector.shape_cast %219 : vector<3x8x128xbf16> to vector<24x128xbf16>
    %c3_182 = arith.constant 3 : index
    %c0_183 = arith.constant 0 : index
    %c0_184 = arith.constant 0 : index
    %221 = vector.load %arg9[%c3_182, %c0_183, %c0_184] : memref<9x128x128xbf16, #tpu.memory_space<vmem>>, vector<1x128x128xbf16>
    %222 = vector.shape_cast %221 : vector<1x128x128xbf16> to vector<128x128xbf16>
    %cst_185 = arith.constant dense<0.000000e+00> : vector<24x128xf32>
    %223 = tpu.matmul %220, %222, %cst_185 {dimension_numbers = #tpu.dot_dimension_numbers<[1], [0], [0], [1], [0, 0, 1, 1], [], []>} : vector<24x128xbf16>, vector<128x128xbf16>, vector<24x128xf32> -> vector<24x128xf32>
    %224 = arith.addf %218, %223 : vector<24x128xf32>
    %c1_186 = arith.constant 1 : index
    %c1_187 = arith.constant 1 : index
    %c0_188 = arith.constant 0 : index
    %225 = vector.load %arg17[%c1_186, %c1_187, %c0_188] : memref<5x16x128xbf16, #tpu.memory_space<vmem>>, vector<3x8x128xbf16>
    %226 = vector.shape_cast %225 : vector<3x8x128xbf16> to vector<24x128xbf16>
    %c4_189 = arith.constant 4 : index
    %c0_190 = arith.constant 0 : index
    %c0_191 = arith.constant 0 : index
    %227 = vector.load %arg9[%c4_189, %c0_190, %c0_191] : memref<9x128x128xbf16, #tpu.memory_space<vmem>>, vector<1x128x128xbf16>
    %228 = vector.shape_cast %227 : vector<1x128x128xbf16> to vector<128x128xbf16>
    %cst_192 = arith.constant dense<0.000000e+00> : vector<24x128xf32>
    %229 = tpu.matmul %226, %228, %cst_192 {dimension_numbers = #tpu.dot_dimension_numbers<[1], [0], [0], [1], [0, 0, 1, 1], [], []>} : vector<24x128xbf16>, vector<128x128xbf16>, vector<24x128xf32> -> vector<24x128xf32>
    %230 = arith.addf %224, %229 : vector<24x128xf32>
    %c1_193 = arith.constant 1 : index
    %c2_194 = arith.constant 2 : index
    %c0_195 = arith.constant 0 : index
    %231 = vector.load %arg17[%c1_193, %c2_194, %c0_195] : memref<5x16x128xbf16, #tpu.memory_space<vmem>>, vector<3x8x128xbf16>
    %232 = vector.shape_cast %231 : vector<3x8x128xbf16> to vector<24x128xbf16>
    %c5_196 = arith.constant 5 : index
    %c0_197 = arith.constant 0 : index
    %c0_198 = arith.constant 0 : index
    %233 = vector.load %arg9[%c5_196, %c0_197, %c0_198] : memref<9x128x128xbf16, #tpu.memory_space<vmem>>, vector<1x128x128xbf16>
    %234 = vector.shape_cast %233 : vector<1x128x128xbf16> to vector<128x128xbf16>
    %cst_199 = arith.constant dense<0.000000e+00> : vector<24x128xf32>
    %235 = tpu.matmul %232, %234, %cst_199 {dimension_numbers = #tpu.dot_dimension_numbers<[1], [0], [0], [1], [0, 0, 1, 1], [], []>} : vector<24x128xbf16>, vector<128x128xbf16>, vector<24x128xf32> -> vector<24x128xf32>
    %236 = arith.addf %230, %235 : vector<24x128xf32>
    %c2_200 = arith.constant 2 : index
    %c0_201 = arith.constant 0 : index
    %c0_202 = arith.constant 0 : index
    %237 = vector.load %arg17[%c2_200, %c0_201, %c0_202] : memref<5x16x128xbf16, #tpu.memory_space<vmem>>, vector<3x8x128xbf16>
    %238 = vector.shape_cast %237 : vector<3x8x128xbf16> to vector<24x128xbf16>
    %c6_203 = arith.constant 6 : index
    %c0_204 = arith.constant 0 : index
    %c0_205 = arith.constant 0 : index
    %239 = vector.load %arg9[%c6_203, %c0_204, %c0_205] : memref<9x128x128xbf16, #tpu.memory_space<vmem>>, vector<1x128x128xbf16>
    %240 = vector.shape_cast %239 : vector<1x128x128xbf16> to vector<128x128xbf16>
    %cst_206 = arith.constant dense<0.000000e+00> : vector<24x128xf32>
    %241 = tpu.matmul %238, %240, %cst_206 {dimension_numbers = #tpu.dot_dimension_numbers<[1], [0], [0], [1], [0, 0, 1, 1], [], []>} : vector<24x128xbf16>, vector<128x128xbf16>, vector<24x128xf32> -> vector<24x128xf32>
    %242 = arith.addf %236, %241 : vector<24x128xf32>
    %c2_207 = arith.constant 2 : index
    %c1_208 = arith.constant 1 : index
    %c0_209 = arith.constant 0 : index
    %243 = vector.load %arg17[%c2_207, %c1_208, %c0_209] : memref<5x16x128xbf16, #tpu.memory_space<vmem>>, vector<3x8x128xbf16>
    %244 = vector.shape_cast %243 : vector<3x8x128xbf16> to vector<24x128xbf16>
    %c7_210 = arith.constant 7 : index
    %c0_211 = arith.constant 0 : index
    %c0_212 = arith.constant 0 : index
    %245 = vector.load %arg9[%c7_210, %c0_211, %c0_212] : memref<9x128x128xbf16, #tpu.memory_space<vmem>>, vector<1x128x128xbf16>
    %246 = vector.shape_cast %245 : vector<1x128x128xbf16> to vector<128x128xbf16>
    %cst_213 = arith.constant dense<0.000000e+00> : vector<24x128xf32>
    %247 = tpu.matmul %244, %246, %cst_213 {dimension_numbers = #tpu.dot_dimension_numbers<[1], [0], [0], [1], [0, 0, 1, 1], [], []>} : vector<24x128xbf16>, vector<128x128xbf16>, vector<24x128xf32> -> vector<24x128xf32>
    %248 = arith.addf %242, %247 : vector<24x128xf32>
    %c2_214 = arith.constant 2 : index
    %c2_215 = arith.constant 2 : index
    %c0_216 = arith.constant 0 : index
    %249 = vector.load %arg17[%c2_214, %c2_215, %c0_216] : memref<5x16x128xbf16, #tpu.memory_space<vmem>>, vector<3x8x128xbf16>
    %250 = vector.shape_cast %249 : vector<3x8x128xbf16> to vector<24x128xbf16>
    %c8_217 = arith.constant 8 : index
    %c0_218 = arith.constant 0 : index
    %c0_219 = arith.constant 0 : index
    %251 = vector.load %arg9[%c8_217, %c0_218, %c0_219] : memref<9x128x128xbf16, #tpu.memory_space<vmem>>, vector<1x128x128xbf16>
    %252 = vector.shape_cast %251 : vector<1x128x128xbf16> to vector<128x128xbf16>
    %cst_220 = arith.constant dense<0.000000e+00> : vector<24x128xf32>
    %253 = tpu.matmul %250, %252, %cst_220 {dimension_numbers = #tpu.dot_dimension_numbers<[1], [0], [0], [1], [0, 0, 1, 1], [], []>} : vector<24x128xbf16>, vector<128x128xbf16>, vector<24x128xf32> -> vector<24x128xf32>
    %254 = arith.addf %248, %253 : vector<24x128xf32>
    %c0_221 = arith.constant 0 : index
    %c0_222 = arith.constant 0 : index
    %255 = vector.load %arg10[%c0_221, %c0_222] : memref<1x128xf32, #tpu.memory_space<vmem>>, vector<1x128xf32>
    %256 = vector.broadcast %255 : vector<1x128xf32> to vector<24x128xf32>
    %257 = arith.addf %254, %256 : vector<24x128xf32>
    %cst_223 = arith.constant 0.000000e+00 : f32
    %258 = vector.broadcast %cst_223 : f32 to vector<24x128xf32>
    %259 = arith.maximumf %257, %258 : vector<24x128xf32>
    %c0_224 = arith.constant 0 : index
    %c0_225 = arith.constant 0 : index
    %260 = vector.load %arg11[%c0_224, %c0_225] : memref<1x24xf32, #tpu.memory_space<vmem>>, vector<1x24xf32>
    %cst_226 = arith.constant dense<0.000000e+00> : vector<1x128xf32>
    %261 = tpu.matmul %260, %259, %cst_226 {dimension_numbers = #tpu.dot_dimension_numbers<[1], [0], [0], [1], [0, 0, 1, 1], [], []>} : vector<1x24xf32>, vector<24x128xf32>, vector<1x128xf32> -> vector<1x128xf32>
    %262 = arith.truncf %261 : vector<1x128xf32> to vector<1x128xbf16>
    %c0_227 = arith.constant 0 : index
    %c0_228 = arith.constant 0 : index
    %263 = vector.load %arg12[%c0_227, %c0_228] : memref<128x128xbf16, #tpu.memory_space<vmem>>, vector<128x128xbf16>
    %cst_229 = arith.constant dense<0.000000e+00> : vector<1x128xf32>
    %264 = tpu.matmul %262, %263, %cst_229 {dimension_numbers = #tpu.dot_dimension_numbers<[1], [0], [0], [1], [0, 0, 1, 1], [], []>} : vector<1x128xbf16>, vector<128x128xbf16>, vector<1x128xf32> -> vector<1x128xf32>
    %c0_230 = arith.constant 0 : index
    %c0_231 = arith.constant 0 : index
    %265 = vector.load %arg13[%c0_230, %c0_231] : memref<1x128xf32, #tpu.memory_space<vmem>>, vector<1x128xf32>
    %266 = arith.addf %264, %265 : vector<1x128xf32>
    %267 = vector.shape_cast %266 : vector<1x128xf32> to vector<1x1x128xf32>
    %c0_232 = arith.constant 0 : index
    %c0_233 = arith.constant 0 : index
    %c0_234 = arith.constant 0 : index
    %268 = vector.load %arg14[%c0_232, %c0_233, %c0_234] : memref<1x1x128xf32, #tpu.memory_space<vmem>>, vector<1x1x128xf32>
    tpu.vector_store %arg14[%c0_232, %c0_233, %c0_234], %267 {strides = array<i32>} : memref<1x1x128xf32, #tpu.memory_space<vmem>>, vector<1x1x128xf32>,
    return
  }
  func.func @transform_0(%arg0: i32) -> (i32, i32, i32) {
    %c0_i32 = arith.constant 0 : i32
    %c0_i32_0 = arith.constant 0 : i32
    %c0_i32_1 = arith.constant 0 : i32
    return %arg0, %c0_i32, %c0_i32_0 : i32, i32, i32
  }
  func.func @transform_1(%arg0: i32) -> (i32, i32) {
    %c0_i32 = arith.constant 0 : i32
    %c0_i32_0 = arith.constant 0 : i32
    %c0_i32_1 = arith.constant 0 : i32
    return %c0_i32, %c0_i32_0 : i32, i32
  }
  func.func @transform_2(%arg0: i32) -> (i32, i32) {
    %c0_i32 = arith.constant 0 : i32
    %c0_i32_0 = arith.constant 0 : i32
    %c0_i32_1 = arith.constant 0 : i32
    return %c0_i32, %c0_i32_0 : i32, i32
  }
  func.func @transform_3(%arg0: i32) -> (i32, i32, i32) {
    %c0_i32 = arith.constant 0 : i32
    %c0_i32_0 = arith.constant 0 : i32
    %c0_i32_1 = arith.constant 0 : i32
    %c0_i32_2 = arith.constant 0 : i32
    return %c0_i32, %c0_i32_0, %c0_i32_1 : i32, i32, i32
  }
  func.func @transform_4(%arg0: i32) -> (i32, i32) {
    %c0_i32 = arith.constant 0 : i32
    %c0_i32_0 = arith.constant 0 : i32
    %c0_i32_1 = arith.constant 0 : i32
    return %c0_i32, %c0_i32_0 : i32, i32
  }
  func.func @transform_5(%arg0: i32) -> (i32, i32, i32) {
    %c0_i32 = arith.constant 0 : i32
    %c0_i32_0 = arith.constant 0 : i32
    %c0_i32_1 = arith.constant 0 : i32
    %c0_i32_2 = arith.constant 0 : i32
    return %c0_i32, %c0_i32_0, %c0_i32_1 : i32, i32, i32
  }
  func.func @transform_6(%arg0: i32) -> (i32, i32) {
    %c0_i32 = arith.constant 0 : i32
    %c0_i32_0 = arith.constant 0 : i32
    %c0_i32_1 = arith.constant 0 : i32
    return %c0_i32, %c0_i32_0 : i32, i32
  }
  func.func @transform_7(%arg0: i32) -> (i32, i32) {
    %c0_i32 = arith.constant 0 : i32
    %c0_i32_0 = arith.constant 0 : i32
    %c0_i32_1 = arith.constant 0 : i32
    return %c0_i32, %c0_i32_0 : i32, i32
  }
  func.func @transform_8(%arg0: i32) -> (i32, i32, i32) {
    %c0_i32 = arith.constant 0 : i32
    %c0_i32_0 = arith.constant 0 : i32
    %c0_i32_1 = arith.constant 0 : i32
    %c0_i32_2 = arith.constant 0 : i32
    return %c0_i32, %c0_i32_0, %c0_i32_1 : i32, i32, i32
  }
  func.func @transform_9(%arg0: i32) -> (i32, i32) {
    %c0_i32 = arith.constant 0 : i32
    %c0_i32_0 = arith.constant 0 : i32
    %c0_i32_1 = arith.constant 0 : i32
    return %c0_i32, %c0_i32_0 : i32, i32
  }
  func.func @transform_10(%arg0: i32) -> (i32, i32) {
    %c0_i32 = arith.constant 0 : i32
    %c0_i32_0 = arith.constant 0 : i32
    %c0_i32_1 = arith.constant 0 : i32
    return %c0_i32, %c0_i32_0 : i32, i32
  }
  func.func @transform_11(%arg0: i32) -> (i32, i32) {
    %c0_i32 = arith.constant 0 : i32
    %c0_i32_0 = arith.constant 0 : i32
    %c0_i32_1 = arith.constant 0 : i32
    return %c0_i32, %c0_i32_0 : i32, i32
  }
  func.func @transform_12(%arg0: i32) -> (i32, i32) {
    %c0_i32 = arith.constant 0 : i32
    %c0_i32_0 = arith.constant 0 : i32
    %c0_i32_1 = arith.constant 0 : i32
    return %c0_i32, %c0_i32_0 : i32, i32
  }
  func.func @transform_13(%arg0: i32) -> (i32, i32, i32) {
    %c0_i32 = arith.constant 0 : i32
    %c0_i32_0 = arith.constant 0 : i32
    %c0_i32_1 = arith.constant 0 : i32
    return %arg0, %c0_i32, %c0_i32_0 : i32, i32, i32
  }
}

</mosaic_0001>

<llo_original>
// kernel: neural_net_forward.1
$region0: #{neural_net_forward.1}
  #allocation0 [shape = 'u32[]', space=smem, size = 0x4, offset = 0x4, fixed_abs, tag = 'smem constant byte address 0x4 - core index']
  #allocation1 [shape = 'u32[144,128]{1,0:T(1,128)}', space=vmem, size = 0x12000, scoped, tag = 'internal scratch']
  #allocation2 [shape = 'bf16[13,24,128]{2,1,0:T(8,128)(2,1)}', space=vmem, size = 0x13800, scoped, tag = 'scratch operand']
  #allocation3 [shape = 'bf16[11,24,128]{2,1,0:T(8,128)(2,1)}', space=vmem, size = 0x10800, scoped, tag = 'scratch operand']
  #allocation4 [shape = 'bf16[5,16,128]{2,1,0:T(16,128)(2,1)}', space=vmem, size = 0x5000, scoped, tag = 'scratch operand']
  %s0 = inlined_call_operand.vmem [shape: f32[2,208,9], index: 0, kind: input, shape index: {}]
  %s1 = inlined_call_operand.vmem [shape: f32[9,128], index: 1, kind: input, shape index: {}]
  %s2 = inlined_call_operand.vmem [shape: f32[1,128], index: 2, kind: input, shape index: {}]
  %s3 = inlined_call_operand.vmem [shape: bf16[9,128,128], index: 3, kind: input, shape index: {}]
  %s4 = inlined_call_operand.vmem [shape: f32[1,128], index: 4, kind: input, shape index: {}]
  %s5 = inlined_call_operand.vmem [shape: bf16[9,128,128], index: 5, kind: input, shape index: {}]
  %s6 = inlined_call_operand.vmem [shape: f32[1,128], index: 6, kind: input, shape index: {}]
  %s7 = inlined_call_operand.vmem [shape: f32[40,144], index: 7, kind: input, shape index: {}]
  %s8 = inlined_call_operand.vmem [shape: bf16[9,128,128], index: 8, kind: input, shape index: {}]
  %s9 = inlined_call_operand.vmem [shape: f32[1,128], index: 9, kind: input, shape index: {}]
  %s10 = inlined_call_operand.vmem [shape: f32[1,24], index: 10, kind: input, shape index: {}]
  %s11 = inlined_call_operand.vmem [shape: bf16[128,128], index: 11, kind: input, shape index: {}]
  %s12 = inlined_call_operand.vmem [shape: f32[1,128], index: 12, kind: input, shape index: {}]
  %s13 = inlined_call_operand.hbm [shape: f32[2,1,128], index: 13, kind: output, shape index: {}]
  %s14 = sld [smem:[#allocation0]]
  $region85: #{neural_net_forward.1} parent=0
    _
  %s16 = ssub.s32 1, %s14
  %s17 = scalar_select 0, %s16, %s14
  $region1: #{neural_net_forward.1} parent=0
    #allocation5 [shape = 'u8[1024]{0}', space=vmem, size = 0x400, scoped, tag = 'output window, operand 0']
    #allocation6 [shape = 's32[2]{0}', space=sflag, size = 0x8, scoped, tag = 'scoped memory for neural_net_forward.1']
    %18 = vsyncpa [#allocation6], 0
    %s19 = scalar_lea.sflag [#allocation6], 1
    %20 = vsyncpa %s19, 0
    loop: start=0, step=1, limit=4
    $region2: #{neural_net_forward.1} parent=1 // loop_pre_header
      _
    $region3: #{neural_net_forward.1} parent=1 // loop_header
      %s22 = sphi 0, %s26
      %p23 = scmp.ge.s32.totalorder %s22, 4
      %s32 = sphi 0, %s34
      %s35 = sphi 0, %s32
      %s36 = sphi 0, %s35
      %s52 = sphi 0, %s36
      %s56 = sphi 0, %s56
      %s58 = sphi 0, %s56
      %s59 = sphi 0, %s58
      %s73 = sphi 0, %s59
      %s77 = sphi 0, %s77
      %s79 = sphi 0, %s77
      %s80 = sphi 0, %s79
      %s94 = sphi 0, %s80
      %s98 = sphi 0, %s98
      %s100 = sphi 0, %s98
      %s101 = sphi 0, %s100
      %s115 = sphi 0, %s101
      %s119 = sphi 0, %s119
      %s121 = sphi 0, %s119
      %s122 = sphi 0, %s121
      %s136 = sphi 0, %s122
      %s140 = sphi 0, %s140
      %s142 = sphi 0, %s140
      %s143 = sphi 0, %s142
      %s157 = sphi 0, %s143
      %s161 = sphi 0, %s161
      %s163 = sphi 0, %s161
      %s164 = sphi 0, %s163
      %s178 = sphi 0, %s164
      %s182 = sphi 0, %s182
      %s184 = sphi 0, %s182
      %s185 = sphi 0, %s184
      %s199 = sphi 0, %s185
      %s203 = sphi 0, %s203
      %s205 = sphi 0, %s203
      %s206 = sphi 0, %s205
      %s220 = sphi 0, %s206
      %s224 = sphi 0, %s224
      %s226 = sphi 0, %s224
      %s227 = sphi 0, %s226
      %s241 = sphi 0, %s227
      %s245 = sphi 0, %s245
      %s247 = sphi 0, %s245
      %s248 = sphi 0, %s247
      %s262 = sphi 0, %s248
      %s266 = sphi 0, %s266
      %s268 = sphi 0, %s266
      %s269 = sphi 0, %s268
      %s283 = sphi 0, %s269
      %s287 = sphi 0, %s287
      %s289 = sphi 0, %s287
      %s290 = sphi 0, %s289
      %s304 = sphi 0, %s290
      %s310 = sphi 0, %s312
      %s313 = sphi 0, %s310
      %s314 = sphi 0, %s313
      %s330 = sphi 0, %s314
    $region4: #{neural_net_forward.1} parent=1 // loop_header_branch
      %25 = sbr.rel (%p23) target = $region8
    $region5: #{neural_net_forward.1} parent=1 // loop_body
      %s27 = ssub.s32 %s22, 1
      %s28 = ssub.s32 %s22, 2
      %s29 = sadd.s32 %s22, 1
      %s30 = ssub.s32 %s22, %s29
      %p31 = scmp.eq.s32.totalorder %s30, 0
      %s33 = sadd.s32 %s32, 1
      %s34 = scalar_select %p31, %s32, %s33
      %p37 = pneg %p31
      %p38 = scmp.eq.s32.totalorder %s22, 1
      %p39 = por %p37, %p38
      %p40 = scmp.ne.s32.totalorder %s32, %s35
      %p41 = scmp.eq.s32.totalorder %s22, 0
      %p42 = por %p40, %p41
      %p43 = scmp.ne.s32.totalorder %s32, %s35
      %p44 = scmp.eq.s32.totalorder %s27, 1
      %p45 = por %p43, %p44
      %p46 = scmp.ne.s32.totalorder %s35, %s36
      %p47 = scmp.eq.s32.totalorder %s27, 0
      %p48 = por %p46, %p47
      %p49 = scmp.ne.s32.totalorder %s35, %s36
      %p50 = scmp.eq.s32.totalorder %s28, 1
      %p51 = por %p49, %p50
      %p53 = scmp.ne.s32.totalorder %s36, %s52
      %p54 = scmp.eq.s32.totalorder %s28, 0
      %p55 = por %p53, %p54
      %s57 = sadd.s32 %s56, 1
      %p60 = scmp.eq.s32.totalorder %s22, 1
      %p61 = scmp.ne.s32.totalorder %s56, %s58
      %p62 = scmp.eq.s32.totalorder %s22, 0
      %p63 = por %p61, %p62
      %p64 = scmp.ne.s32.totalorder %s56, %s58
      %p65 = scmp.eq.s32.totalorder %s27, 1
      %p66 = por %p64, %p65
      %p67 = scmp.ne.s32.totalorder %s58, %s59
      %p68 = scmp.eq.s32.totalorder %s27, 0
      %p69 = por %p67, %p68
      %p70 = scmp.ne.s32.totalorder %s58, %s59
      %p71 = scmp.eq.s32.totalorder %s28, 1
      %p72 = por %p70, %p71
      %p74 = scmp.ne.s32.totalorder %s59, %s73
      %p75 = scmp.eq.s32.totalorder %s28, 0
      %p76 = por %p74, %p75
      %s78 = sadd.s32 %s77, 1
      %p81 = scmp.eq.s32.totalorder %s22, 1
      %p82 = scmp.ne.s32.totalorder %s77, %s79
      %p83 = scmp.eq.s32.totalorder %s22, 0
      %p84 = por %p82, %p83
      %p85 = scmp.ne.s32.totalorder %s77, %s79
      %p86 = scmp.eq.s32.totalorder %s27, 1
      %p87 = por %p85, %p86
      %p88 = scmp.ne.s32.totalorder %s79, %s80
      %p89 = scmp.eq.s32.totalorder %s27, 0
      %p90 = por %p88, %p89
      %p91 = scmp.ne.s32.totalorder %s79, %s80
      %p92 = scmp.eq.s32.totalorder %s28, 1
      %p93 = por %p91, %p92
      %p95 = scmp.ne.s32.totalorder %s80, %s94
      %p96 = scmp.eq.s32.totalorder %s28, 0
      %p97 = por %p95, %p96
      %s99 = sadd.s32 %s98, 1
      %p102 = scmp.eq.s32.totalorder %s22, 1
      %p103 = scmp.ne.s32.totalorder %s98, %s100
      %p104 = scmp.eq.s32.totalorder %s22, 0
      %p105 = por %p103, %p104
      %p106 = scmp.ne.s32.totalorder %s98, %s100
      %p107 = scmp.eq.s32.totalorder %s27, 1
      %p108 = por %p106, %p107
      %p109 = scmp.ne.s32.totalorder %s100, %s101
      %p110 = scmp.eq.s32.totalorder %s27, 0
      %p111 = por %p109, %p110
      %p112 = scmp.ne.s32.totalorder %s100, %s101
      %p113 = scmp.eq.s32.totalorder %s28, 1
      %p114 = por %p112, %p113
      %p116 = scmp.ne.s32.totalorder %s101, %s115
      %p117 = scmp.eq.s32.totalorder %s28, 0
      %p118 = por %p116, %p117
      %s120 = sadd.s32 %s119, 1
      %p123 = scmp.eq.s32.totalorder %s22, 1
      %p124 = scmp.ne.s32.totalorder %s119, %s121
      %p125 = scmp.eq.s32.totalorder %s22, 0
      %p126 = por %p124, %p125
      %p127 = scmp.ne.s32.totalorder %s119, %s121
      %p128 = scmp.eq.s32.totalorder %s27, 1
      %p129 = por %p127, %p128
      %p130 = scmp.ne.s32.totalorder %s121, %s122
      %p131 = scmp.eq.s32.totalorder %s27, 0
      %p132 = por %p130, %p131
      %p133 = scmp.ne.s32.totalorder %s121, %s122
      %p134 = scmp.eq.s32.totalorder %s28, 1
      %p135 = por %p133, %p134
      %p137 = scmp.ne.s32.totalorder %s122, %s136
      %p138 = scmp.eq.s32.totalorder %s28, 0
      %p139 = por %p137, %p138
      %s141 = sadd.s32 %s140, 1
      %p144 = scmp.eq.s32.totalorder %s22, 1
      %p145 = scmp.ne.s32.totalorder %s140, %s142
      %p146 = scmp.eq.s32.totalorder %s22, 0
      %p147 = por %p145, %p146
      %p148 = scmp.ne.s32.totalorder %s140, %s142
      %p149 = scmp.eq.s32.totalorder %s27, 1
      %p150 = por %p148, %p149
      %p151 = scmp.ne.s32.totalorder %s142, %s143
      %p152 = scmp.eq.s32.totalorder %s27, 0
      %p153 = por %p151, %p152
      %p154 = scmp.ne.s32.totalorder %s142, %s143
      %p155 = scmp.eq.s32.totalorder %s28, 1
      %p156 = por %p154, %p155
      %p158 = scmp.ne.s32.totalorder %s143, %s157
      %p159 = scmp.eq.s32.totalorder %s28, 0
      %p160 = por %p158, %p159
      %s162 = sadd.s32 %s161, 1
      %p165 = scmp.eq.s32.totalorder %s22, 1
      %p166 = scmp.ne.s32.totalorder %s161, %s163
      %p167 = scmp.eq.s32.totalorder %s22, 0
      %p168 = por %p166, %p167
      %p169 = scmp.ne.s32.totalorder %s161, %s163
      %p170 = scmp.eq.s32.totalorder %s27, 1
      %p171 = por %p169, %p170
      %p172 = scmp.ne.s32.totalorder %s163, %s164
      %p173 = scmp.eq.s32.totalorder %s27, 0
      %p174 = por %p172, %p173
      %p175 = scmp.ne.s32.totalorder %s163, %s164
      %p176 = scmp.eq.s32.totalorder %s28, 1
      %p177 = por %p175, %p176
      %p179 = scmp.ne.s32.totalorder %s164, %s178
      %p180 = scmp.eq.s32.totalorder %s28, 0
      %p181 = por %p179, %p180
      %s183 = sadd.s32 %s182, 1
      %p186 = scmp.eq.s32.totalorder %s22, 1
      %p187 = scmp.ne.s32.totalorder %s182, %s184
      %p188 = scmp.eq.s32.totalorder %s22, 0
      %p189 = por %p187, %p188
      %p190 = scmp.ne.s32.totalorder %s182, %s184
      %p191 = scmp.eq.s32.totalorder %s27, 1
      %p192 = por %p190, %p191
      %p193 = scmp.ne.s32.totalorder %s184, %s185
      %p194 = scmp.eq.s32.totalorder %s27, 0
      %p195 = por %p193, %p194
      %p196 = scmp.ne.s32.totalorder %s184, %s185
      %p197 = scmp.eq.s32.totalorder %s28, 1
      %p198 = por %p196, %p197
      %p200 = scmp.ne.s32.totalorder %s185, %s199
      %p201 = scmp.eq.s32.totalorder %s28, 0
      %p202 = por %p200, %p201
      %s204 = sadd.s32 %s203, 1
      %p207 = scmp.eq.s32.totalorder %s22, 1
      %p208 = scmp.ne.s32.totalorder %s203, %s205
      %p209 = scmp.eq.s32.totalorder %s22, 0
      %p210 = por %p208, %p209
      %p211 = scmp.ne.s32.totalorder %s203, %s205
      %p212 = scmp.eq.s32.totalorder %s27, 1
      %p213 = por %p211, %p212
      %p214 = scmp.ne.s32.totalorder %s205, %s206
      %p215 = scmp.eq.s32.totalorder %s27, 0
      %p216 = por %p214, %p215
      %p217 = scmp.ne.s32.totalorder %s205, %s206
      %p218 = scmp.eq.s32.totalorder %s28, 1
      %p219 = por %p217, %p218
      %p221 = scmp.ne.s32.totalorder %s206, %s220
      %p222 = scmp.eq.s32.totalorder %s28, 0
      %p223 = por %p221, %p222
      %s225 = sadd.s32 %s224, 1
      %p228 = scmp.eq.s32.totalorder %s22, 1
      %p229 = scmp.ne.s32.totalorder %s224, %s226
      %p230 = scmp.eq.s32.totalorder %s22, 0
      %p231 = por %p229, %p230
      %p232 = scmp.ne.s32.totalorder %s224, %s226
      %p233 = scmp.eq.s32.totalorder %s27, 1
      %p234 = por %p232, %p233
      %p235 = scmp.ne.s32.totalorder %s226, %s227
      %p236 = scmp.eq.s32.totalorder %s27, 0
      %p237 = por %p235, %p236
      %p238 = scmp.ne.s32.totalorder %s226, %s227
      %p239 = scmp.eq.s32.totalorder %s28, 1
      %p240 = por %p238, %p239
      %p242 = scmp.ne.s32.totalorder %s227, %s241
      %p243 = scmp.eq.s32.totalorder %s28, 0
      %p244 = por %p242, %p243
      %s246 = sadd.s32 %s245, 1
      %p249 = scmp.eq.s32.totalorder %s22, 1
      %p250 = scmp.ne.s32.totalorder %s245, %s247
      %p251 = scmp.eq.s32.totalorder %s22, 0
      %p252 = por %p250, %p251
      %p253 = scmp.ne.s32.totalorder %s245, %s247
      %p254 = scmp.eq.s32.totalorder %s27, 1
      %p255 = por %p253, %p254
      %p256 = scmp.ne.s32.totalorder %s247, %s248
      %p257 = scmp.eq.s32.totalorder %s27, 0
      %p258 = por %p256, %p257
      %p259 = scmp.ne.s32.totalorder %s247, %s248
      %p260 = scmp.eq.s32.totalorder %s28, 1
      %p261 = por %p259, %p260
      %p263 = scmp.ne.s32.totalorder %s248, %s262
      %p264 = scmp.eq.s32.totalorder %s28, 0
      %p265 = por %p263, %p264
      %s267 = sadd.s32 %s266, 1
      %p270 = scmp.eq.s32.totalorder %s22, 1
      %p271 = scmp.ne.s32.totalorder %s266, %s268
      %p272 = scmp.eq.s32.totalorder %s22, 0
      %p273 = por %p271, %p272
      %p274 = scmp.ne.s32.totalorder %s266, %s268
      %p275 = scmp.eq.s32.totalorder %s27, 1
      %p276 = por %p274, %p275
      %p277 = scmp.ne.s32.totalorder %s268, %s269
      %p278 = scmp.eq.s32.totalorder %s27, 0
      %p279 = por %p277, %p278
      %p280 = scmp.ne.s32.totalorder %s268, %s269
      %p281 = scmp.eq.s32.totalorder %s28, 1
      %p282 = por %p280, %p281
      %p284 = scmp.ne.s32.totalorder %s269, %s283
      %p285 = scmp.eq.s32.totalorder %s28, 0
      %p286 = por %p284, %p285
      %s288 = sadd.s32 %s287, 1
      %p291 = scmp.eq.s32.totalorder %s22, 1
      %p292 = scmp.ne.s32.totalorder %s287, %s289
      %p293 = scmp.eq.s32.totalorder %s22, 0
      %p294 = por %p292, %p293
      %p295 = scmp.ne.s32.totalorder %s287, %s289
      %p296 = scmp.eq.s32.totalorder %s27, 1
      %p297 = por %p295, %p296
      %p298 = scmp.ne.s32.totalorder %s289, %s290
      %p299 = scmp.eq.s32.totalorder %s27, 0
      %p300 = por %p298, %p299
      %p301 = scmp.ne.s32.totalorder %s289, %s290
      %p302 = scmp.eq.s32.totalorder %s28, 1
      %p303 = por %p301, %p302
      %p305 = scmp.ne.s32.totalorder %s290, %s304
      %p306 = scmp.eq.s32.totalorder %s28, 0
      %p307 = por %p305, %p306
      %s308 = ssub.s32 %s22, %s29
      %p309 = scmp.eq.s32.totalorder %s308, 0
      %s311 = sadd.s32 %s310, 1
      %s312 = scalar_select %p309, %s310, %s311
      %p315 = pneg %p309
      %p316 = scmp.eq.s32.totalorder %s22, 1
      %p317 = por %p315, %p316
      %p318 = scmp.ne.s32.totalorder %s310, %s313
      %p319 = scmp.eq.s32.totalorder %s22, 0
      %p320 = por %p318, %p319
      %p321 = scmp.ne.s32.totalorder %s310, %s313
      %p322 = scmp.eq.s32.totalorder %s27, 1
      %p323 = por %p321, %p322
      %p324 = scmp.ne.s32.totalorder %s313, %s314
      %p325 = scmp.eq.s32.totalorder %s27, 0
      %p326 = por %p324, %p325
      %p327 = scmp.ne.s32.totalorder %s313, %s314
      %p328 = scmp.eq.s32.totalorder %s28, 1
      %p329 = por %p327, %p328
      %p331 = scmp.ne.s32.totalorder %s314, %s330
      %p332 = scmp.eq.s32.totalorder %s28, 0
      %p333 = por %p331, %p332
      %p334 = scmp.le.s32.totalorder 1, %s22
      %p335 = scmp.lt.s32.totalorder %s22, 3
      %p336 = pnand %p334, %p335
      %p337 = pneg %p336
      // Predicated region
      $region9: #{neural_net_forward.1} parent=5 // pred_check
        _
      $region10: #{neural_net_forward.1} parent=5 // pred_check_branch
        %339 = sbr.rel (%p336) target = $region12
      $region11: #{neural_net_forward.1} parent=5 // pred_region
        %s340 = ssub.s32 %s22, 1
        // Predicated region
        $region13: #{neural_net_forward.1} parent=11 // pred_check
          %p341 = pneg %p69
        $region14: #{neural_net_forward.1} parent=11 // pred_check_branch
          %343 = sbr.rel (%p341) target = $region16
        $region15: #{neural_net_forward.1} parent=11 // pred_region
          _
        $region16: #{neural_net_forward.1} parent=11 // pred_fallthru
          _
        // Predicated region
        $region17: #{neural_net_forward.1} parent=11 // pred_check
          %p344 = pneg %p90
        $region18: #{neural_net_forward.1} parent=11 // pred_check_branch
          %346 = sbr.rel (%p344) target = $region20
        $region19: #{neural_net_forward.1} parent=11 // pred_region
          _
        $region20: #{neural_net_forward.1} parent=11 // pred_fallthru
          _
        // Predicated region
        $region21: #{neural_net_forward.1} parent=11 // pred_check
          %p347 = pneg %p111
        $region22: #{neural_net_forward.1} parent=11 // pred_check_branch
          %349 = sbr.rel (%p347) target = $region24
        $region23: #{neural_net_forward.1} parent=11 // pred_region
          _
        $region24: #{neural_net_forward.1} parent=11 // pred_fallthru
          _
        // Predicated region
        $region25: #{neural_net_forward.1} parent=11 // pred_check
          %p350 = pneg %p132
        $region26: #{neural_net_forward.1} parent=11 // pred_check_branch
          %352 = sbr.rel (%p350) target = $region28
        $region27: #{neural_net_forward.1} parent=11 // pred_region
          _
        $region28: #{neural_net_forward.1} parent=11 // pred_fallthru
          _
        // Predicated region
        $region29: #{neural_net_forward.1} parent=11 // pred_check
          %p353 = pneg %p153
        $region30: #{neural_net_forward.1} parent=11 // pred_check_branch
          %355 = sbr.rel (%p353) target = $region32
        $region31: #{neural_net_forward.1} parent=11 // pred_region
          _
        $region32: #{neural_net_forward.1} parent=11 // pred_fallthru
          _
        // Predicated region
        $region33: #{neural_net_forward.1} parent=11 // pred_check
          %p356 = pneg %p174
        $region34: #{neural_net_forward.1} parent=11 // pred_check_branch
          %358 = sbr.rel (%p356) target = $region36
        $region35: #{neural_net_forward.1} parent=11 // pred_region
          _
        $region36: #{neural_net_forward.1} parent=11 // pred_fallthru
          _
        // Predicated region
        $region37: #{neural_net_forward.1} parent=11 // pred_check
          %p359 = pneg %p195
        $region38: #{neural_net_forward.1} parent=11 // pred_check_branch
          %361 = sbr.rel (%p359) target = $region40
        $region39: #{neural_net_forward.1} parent=11 // pred_region
          _
        $region40: #{neural_net_forward.1} parent=11 // pred_fallthru
          _
        // Predicated region
        $region41: #{neural_net_forward.1} parent=11 // pred_check
          %p362 = pneg %p216
        $region42: #{neural_net_forward.1} parent=11 // pred_check_branch
          %364 = sbr.rel (%p362) target = $region44
        $region43: #{neural_net_forward.1} parent=11 // pred_region
          _
        $region44: #{neural_net_forward.1} parent=11 // pred_fallthru
          _
        // Predicated region
        $region45: #{neural_net_forward.1} parent=11 // pred_check
          %p365 = pneg %p237
        $region46: #{neural_net_forward.1} parent=11 // pred_check_branch
          %367 = sbr.rel (%p365) target = $region48
        $region47: #{neural_net_forward.1} parent=11 // pred_region
          _
        $region48: #{neural_net_forward.1} parent=11 // pred_fallthru
          _
        // Predicated region
        $region49: #{neural_net_forward.1} parent=11 // pred_check
          %p368 = pneg %p258
        $region50: #{neural_net_forward.1} parent=11 // pred_check_branch
          %370 = sbr.rel (%p368) target = $region52
        $region51: #{neural_net_forward.1} parent=11 // pred_region
          _
        $region52: #{neural_net_forward.1} parent=11 // pred_fallthru
          _
        // Predicated region
        $region53: #{neural_net_forward.1} parent=11 // pred_check
          %p371 = pneg %p279
        $region54: #{neural_net_forward.1} parent=11 // pred_check_branch
          %373 = sbr.rel (%p371) target = $region56
        $region55: #{neural_net_forward.1} parent=11 // pred_region
          _
        $region56: #{neural_net_forward.1} parent=11 // pred_fallthru
          _
        // Predicated region
        $region57: #{neural_net_forward.1} parent=11 // pred_check
          %p374 = pneg %p300
        $region58: #{neural_net_forward.1} parent=11 // pred_check_branch
          %376 = sbr.rel (%p374) target = $region60
        $region59: #{neural_net_forward.1} parent=11 // pred_region
          _
        $region60: #{neural_net_forward.1} parent=11 // pred_fallthru
          _
      $region12: #{neural_net_forward.1} parent=5 // pred_fallthru
        _
      %p377 = scmp.lt.s32.totalorder %s22, 2
      // Predicated region
      $region61: #{neural_net_forward.1} parent=5 // pred_check
        %p378 = pneg %p377
      $region62: #{neural_net_forward.1} parent=5 // pred_check_branch
        %380 = sbr.rel (%p378) target = $region64
      $region63: #{neural_net_forward.1} parent=5 // pred_region
        // Predicated region
        $region65: #{neural_net_forward.1} parent=63 // pred_check
          %p381 = pneg %p42
        $region66: #{neural_net_forward.1} parent=63 // pred_check_branch
          %383 = sbr.rel (%p381) target = $region68
        $region67: #{neural_net_forward.1} parent=63 // pred_region
          %p384 = scmp.lt.s32.totalorder %s22, 1
          %s385 = scalar_select %p384, %s22, 1
          %s386 = smul.addr %s385, 26
          %s387 = smul.addr %s386, 8
          %s388 = scalar_lea.vmem %s0, %s387
        $region68: #{neural_net_forward.1} parent=63 // pred_fallthru
          _
      $region64: #{neural_net_forward.1} parent=5 // pred_fallthru
        _
      %p389 = scmp.le.s32.totalorder 1, %s22
      %p390 = scmp.lt.s32.totalorder %s22, 3
      %p391 = pnand %p389, %p390
      %p392 = pneg %p391
      // Predicated region
      $region69: #{neural_net_forward.1} parent=5 // pred_check
        _
      $region70: #{neural_net_forward.1} parent=5 // pred_check_branch
        %394 = sbr.rel (%p391) target = $region72
      $region71: #{neural_net_forward.1} parent=5 // pred_region
        %s395 = ssub.s32 %s22, 1
        %p396 = scmp.lt.s32.totalorder %s27, 1
        %s397 = scalar_select %p396, %s27, 1
        %s398 = smul.addr %s397, 26
        %s399 = smul.addr %s398, 8
        %s400 = scalar_lea.vmem %s0, %s399
        %p401 = pneg %p48
        %p402 = pneg %p45
        %p403 = pneg %p69
        %p404 = pneg %p66
        %p405 = pneg %p90
        %p406 = pneg %p87
        %p407 = pneg %p111
        %p408 = pneg %p108
        %p409 = pneg %p132
        %p410 = pneg %p129
        %p411 = pneg %p153
        %p412 = pneg %p150
        %p413 = pneg %p174
        %p414 = pneg %p171
        %p415 = pneg %p195
        %p416 = pneg %p192
        %p417 = pneg %p216
        %p418 = pneg %p213
        %p419 = pneg %p237
        %p420 = pneg %p234
        %p421 = pneg %p258
        %p422 = pneg %p255
        %p423 = pneg %p279
        %p424 = pneg %p276
        %p425 = pneg %p300
        %p426 = pneg %p297
        %p427 = pneg %p326
        %p428 = pneg %p323
        %s429 = sand.u32 %s313, 1
        %s430 = scalar_lea.sflag [#allocation6], %s429
        %s431 = sand.u32 %s313, 1
        %s432 = scalar_lea.vmem [#allocation5], %s431
        %p433 = scmp.lt.s32.totalorder %s27, 1
        %s434 = scalar_select %p433, %s27, 1
        %s435 = smul.addr %s434, 26
        %s436 = smul.addr %s435, 8
        %s437 = scalar_lea.vmem %s0, %s436
        %439 = vst [vmem:[#allocation2] sm:$0xf] 0
        %440 = vst [vmem:[#allocation2 + $0x4] sm:$0xf] 0
        %441 = vst [vmem:[#allocation2 + $0x8] sm:$0xf] 0
        %442 = vst [vmem:[#allocation2 + $0xc] sm:$0xf] 0
        %443 = vst [vmem:[#allocation2 + $0x10] sm:$0xf] 0
        %444 = vst [vmem:[#allocation2 + $0x14] sm:$0xf] 0
        %445 = vst [vmem:[#allocation2 + $0x18] sm:$0xf] 0
        %446 = vst [vmem:[#allocation2 + $0x1c] sm:$0xf] 0
        %447 = vst [vmem:[#allocation2 + $0x20] sm:$0xf] 0
        %448 = vst [vmem:[#allocation2 + $0x24] sm:$0xf] 0
        %449 = vst [vmem:[#allocation2 + $0x28] sm:$0xf] 0
        %450 = vst [vmem:[#allocation2 + $0x2c] sm:$0xf] 0
        %451 = vst [vmem:[#allocation2 + $0x30] sm:$0xf] 0
        %452 = vst [vmem:[#allocation2 + $0x34] sm:$0xf] 0
        %453 = vst [vmem:[#allocation2 + $0x38] sm:$0xf] 0
        %454 = vst [vmem:[#allocation2 + $0x3c] sm:$0xf] 0
        %455 = vst [vmem:[#allocation2 + $0x40] sm:$0xf] 0
        %456 = vst [vmem:[#allocation2 + $0x44] sm:$0xf] 0
        %457 = vst [vmem:[#allocation2 + $0x48] sm:$0xf] 0
        %458 = vst [vmem:[#allocation2 + $0x4c] sm:$0xf] 0
        %459 = vst [vmem:[#allocation2 + $0x50] sm:$0xf] 0
        %460 = vst [vmem:[#allocation2 + $0x54] sm:$0xf] 0
        %461 = vst [vmem:[#allocation2 + $0x58] sm:$0xf] 0
        %462 = vst [vmem:[#allocation2 + $0x5c] sm:$0xf] 0
        %463 = vst [vmem:[#allocation2 + $0x60] sm:$0xf] 0
        %464 = vst [vmem:[#allocation2 + $0x64] sm:$0xf] 0
        %465 = vst [vmem:[#allocation2 + $0x68] sm:$0xf] 0
        %466 = vst [vmem:[#allocation2 + $0x6c] sm:$0xf] 0
        %467 = vst [vmem:[#allocation2 + $0x70] sm:$0xf] 0
        %468 = vst [vmem:[#allocation2 + $0x74] sm:$0xf] 0
        %469 = vst [vmem:[#allocation2 + $0x78] sm:$0xf] 0
        %470 = vst [vmem:[#allocation2 + $0x7c] sm:$0xf] 0
        %471 = vst [vmem:[#allocation2 + $0x80] sm:$0xf] 0
        %472 = vst [vmem:[#allocation2 + $0x84] sm:$0xf] 0
        %473 = vst [vmem:[#allocation2 + $0x88] sm:$0xf] 0
        %474 = vst [vmem:[#allocation2 + $0x8c] sm:$0xf] 0
        %475 = vst [vmem:[#allocation2 + $0x90] sm:$0xf] 0
        %476 = vst [vmem:[#allocation2 + $0x94] sm:$0xf] 0
        %477 = vst [vmem:[#allocation2 + $0x98] sm:$0xf] 0
        %478 = vst [vmem:[#allocation3] sm:$0xf] 0
        %479 = vst [vmem:[#allocation3 + $0x4] sm:$0xf] 0
        %480 = vst [vmem:[#allocation3 + $0x8] sm:$0xf] 0
        %481 = vst [vmem:[#allocation3 + $0xc] sm:$0xf] 0
        %482 = vst [vmem:[#allocation3 + $0x10] sm:$0xf] 0
        %483 = vst [vmem:[#allocation3 + $0x14] sm:$0xf] 0
        %484 = vst [vmem:[#allocation3 + $0x18] sm:$0xf] 0
        %485 = vst [vmem:[#allocation3 + $0x1c] sm:$0xf] 0
        %486 = vst [vmem:[#allocation3 + $0x20] sm:$0xf] 0
        %487 = vst [vmem:[#allocation3 + $0x24] sm:$0xf] 0
        %488 = vst [vmem:[#allocation3 + $0x28] sm:$0xf] 0
        %489 = vst [vmem:[#allocation3 + $0x2c] sm:$0xf] 0
        %490 = vst [vmem:[#allocation3 + $0x30] sm:$0xf] 0
        %491 = vst [vmem:[#allocation3 + $0x34] sm:$0xf] 0
        %492 = vst [vmem:[#allocation3 + $0x38] sm:$0xf] 0
        %493 = vst [vmem:[#allocation3 + $0x3c] sm:$0xf] 0
        %494 = vst [vmem:[#allocation3 + $0x40] sm:$0xf] 0
        %495 = vst [vmem:[#allocation3 + $0x44] sm:$0xf] 0
        %496 = vst [vmem:[#allocation3 + $0x48] sm:$0xf] 0
        %497 = vst [vmem:[#allocation3 + $0x4c] sm:$0xf] 0
        %498 = vst [vmem:[#allocation3 + $0x50] sm:$0xf] 0
        %499 = vst [vmem:[#allocation3 + $0x54] sm:$0xf] 0
        %500 = vst [vmem:[#allocation3 + $0x58] sm:$0xf] 0
        %501 = vst [vmem:[#allocation3 + $0x5c] sm:$0xf] 0
        %502 = vst [vmem:[#allocation3 + $0x60] sm:$0xf] 0
        %503 = vst [vmem:[#allocation3 + $0x64] sm:$0xf] 0
        %504 = vst [vmem:[#allocation3 + $0x68] sm:$0xf] 0
        %505 = vst [vmem:[#allocation3 + $0x6c] sm:$0xf] 0
        %506 = vst [vmem:[#allocation3 + $0x70] sm:$0xf] 0
        %507 = vst [vmem:[#allocation3 + $0x74] sm:$0xf] 0
        %508 = vst [vmem:[#allocation3 + $0x78] sm:$0xf] 0
        %509 = vst [vmem:[#allocation3 + $0x7c] sm:$0xf] 0
        %510 = vst [vmem:[#allocation3 + $0x80] sm:$0xf] 0
        %511 = vst [vmem:[#allocation4] sm:$0xff] 0
        %512 = vst [vmem:[#allocation4 + $0x8] sm:$0xff] 0
        %513 = vst [vmem:[#allocation4 + $0x10] sm:$0xff] 0
        %514 = vst [vmem:[#allocation4 + $0x18] sm:$0xff] 0
        %515 = vst [vmem:[#allocation4 + $0x20] sm:$0xff] 0
        %v516 = vld [vmem:[%s437] sm:$0xff]
        %v517 = vld [vmem:[%s437 + $0x8] sm:$0xff]
        %v518 = vld [vmem:[%s437 + $0x10] sm:$0xff]
        %v519 = vld [vmem:[%s437 + $0x18] sm:$0xff]
        %v520 = vld [vmem:[%s437 + $0x20] sm:$0xff]
        %v521 = vld [vmem:[%s437 + $0x28] sm:$0xff]
        %v522 = vld [vmem:[%s437 + $0x30] sm:$0xff]
        %v523 = vld [vmem:[%s437 + $0x38] sm:$0xff]
        %v524 = vld [vmem:[%s437 + $0x40] sm:$0xff]
        %v525 = vld [vmem:[%s437 + $0x48] sm:$0xff]
        %v526 = vld [vmem:[%s437 + $0x50] sm:$0xff]
        %v527 = vld [vmem:[%s437 + $0x58] sm:$0xff]
        %v528 = vld [vmem:[%s437 + $0x60] sm:$0xff]
        %v529 = vld [vmem:[%s437 + $0x68] sm:$0xff]
        %v530 = vld [vmem:[%s437 + $0x70] sm:$0xff]
        %v531 = vld [vmem:[%s437 + $0x78] sm:$0xff]
        %v532 = vld [vmem:[%s437 + $0x80] sm:$0xff]
        %v533 = vld [vmem:[%s437 + $0x88] sm:$0xff]
        %v534 = vld [vmem:[%s437 + $0x90] sm:$0xff]
        %v535 = vld [vmem:[%s437 + $0x98] sm:$0xff]
        %v536 = vld [vmem:[%s437 + $0xa0] sm:$0xff]
        %v537 = vld [vmem:[%s437 + $0xa8] sm:$0xff]
        %v538 = vld [vmem:[%s437 + $0xb0] sm:$0xff]
        %v539 = vld [vmem:[%s437 + $0xb8] sm:$0xff]
        %v540 = vld [vmem:[%s437 + $0xc0] sm:$0xff]
        %v541 = vld [vmem:[%s437 + $0xc8] sm:$0xff]
        %v542 = vld [vmem:[%s1] sm:$0xff]
        %v543 = vld [vmem:[%s1 + $0x8] sm:$0x1]
        %545 = vset.pattern.permute.xlu0 0
        %546 = vperm.xlu0 %545, %v516
        %v547 = vpop.permute.xlu0 %546
        %550 = vset.pattern.permute.xlu0 0
        %551 = vperm.xlu0 %550, %v517
        %v552 = vpop.permute.xlu0 %551
        %555 = vset.pattern.permute.xlu0 0
        %556 = vperm.xlu0 %555, %v518
        %v557 = vpop.permute.xlu0 %556
        %560 = vset.pattern.permute.xlu0 0
        %561 = vperm.xlu0 %560, %v519
        %v562 = vpop.permute.xlu0 %561
        %565 = vset.pattern.permute.xlu0 0
        %566 = vperm.xlu0 %565, %v520
        %v567 = vpop.permute.xlu0 %566
        %570 = vset.pattern.permute.xlu0 0
        %571 = vperm.xlu0 %570, %v521
        %v572 = vpop.permute.xlu0 %571
        %575 = vset.pattern.permute.xlu0 0
        %576 = vperm.xlu0 %575, %v522
        %v577 = vpop.permute.xlu0 %576
        %580 = vset.pattern.permute.xlu0 0
        %581 = vperm.xlu0 %580, %v523
        %v582 = vpop.permute.xlu0 %581
        %585 = vset.pattern.permute.xlu0 0
        %586 = vperm.xlu0 %585, %v524
        %v587 = vpop.permute.xlu0 %586
        %590 = vset.pattern.permute.xlu0 0
        %591 = vperm.xlu0 %590, %v525
        %v592 = vpop.permute.xlu0 %591
        %595 = vset.pattern.permute.xlu0 0
        %596 = vperm.xlu0 %595, %v526
        %v597 = vpop.permute.xlu0 %596
        %600 = vset.pattern.permute.xlu0 0
        %601 = vperm.xlu0 %600, %v527
        %v602 = vpop.permute.xlu0 %601
        %605 = vset.pattern.permute.xlu0 0
        %606 = vperm.xlu0 %605, %v528
        %v607 = vpop.permute.xlu0 %606
        %610 = vset.pattern.permute.xlu0 0
        %611 = vperm.xlu0 %610, %v529
        %v612 = vpop.permute.xlu0 %611
        %615 = vset.pattern.permute.xlu0 0
        %616 = vperm.xlu0 %615, %v530
        %v617 = vpop.permute.xlu0 %616
        %620 = vset.pattern.permute.xlu0 0
        %621 = vperm.xlu0 %620, %v531
        %v622 = vpop.permute.xlu0 %621
        %625 = vset.pattern.permute.xlu0 0
        %626 = vperm.xlu0 %625, %v532
        %v627 = vpop.permute.xlu0 %626
        %630 = vset.pattern.permute.xlu0 0
        %631 = vperm.xlu0 %630, %v533
        %v632 = vpop.permute.xlu0 %631
        %635 = vset.pattern.permute.xlu0 0
        %636 = vperm.xlu0 %635, %v534
        %v637 = vpop.permute.xlu0 %636
        %640 = vset.pattern.permute.xlu0 0
        %641 = vperm.xlu0 %640, %v535
        %v642 = vpop.permute.xlu0 %641
        %645 = vset.pattern.permute.xlu0 0
        %646 = vperm.xlu0 %645, %v536
        %v647 = vpop.permute.xlu0 %646
        %650 = vset.pattern.permute.xlu0 0
        %651 = vperm.xlu0 %650, %v537
        %v652 = vpop.permute.xlu0 %651
        %655 = vset.pattern.permute.xlu0 0
        %656 = vperm.xlu0 %655, %v538
        %v657 = vpop.permute.xlu0 %656
        %660 = vset.pattern.permute.xlu0 0
        %661 = vperm.xlu0 %660, %v539
        %v662 = vpop.permute.xlu0 %661
        %665 = vset.pattern.permute.xlu0 0
        %666 = vperm.xlu0 %665, %v540
        %v667 = vpop.permute.xlu0 %666
        %670 = vset.pattern.permute.xlu0 0
        %671 = vperm.xlu0 %670, %v541
        %v672 = vpop.permute.xlu0 %671
        %v674 = vlaneseq
        %v675 = vshrl.u32 %v674, 7
        %v676 = vsub.s32 0, %v675
        %v677 = vrot.slane %v542, %v676
        %v678 = vmul.f32 %v547, %v677
        %v679 = vmul.f32 %v552, %v677
        %v680 = vmul.f32 %v557, %v677
        %v681 = vmul.f32 %v562, %v677
        %v682 = vmul.f32 %v567, %v677
        %v683 = vmul.f32 %v572, %v677
        %v684 = vmul.f32 %v577, %v677
        %v685 = vmul.f32 %v582, %v677
        %v686 = vmul.f32 %v587, %v677
        %v687 = vmul.f32 %v592, %v677
        %v688 = vmul.f32 %v597, %v677
        %v689 = vmul.f32 %v602, %v677
        %v690 = vmul.f32 %v607, %v677
        %v691 = vmul.f32 %v612, %v677
        %v692 = vmul.f32 %v617, %v677
        %v693 = vmul.f32 %v622, %v677
        %v694 = vmul.f32 %v627, %v677
        %v695 = vmul.f32 %v632, %v677
        %v696 = vmul.f32 %v637, %v677
        %v697 = vmul.f32 %v642, %v677
        %v698 = vmul.f32 %v647, %v677
        %v699 = vmul.f32 %v652, %v677
        %v700 = vmul.f32 %v657, %v677
        %v701 = vmul.f32 %v662, %v677
        %v702 = vmul.f32 %v667, %v677
        %v703 = vmul.f32 %v672, %v677
        %v704 = vadd.f32 %v678, 0.0
        %v705 = vadd.f32 %v679, 0.0
        %v706 = vadd.f32 %v680, 0.0
        %v707 = vadd.f32 %v681, 0.0
        %v708 = vadd.f32 %v682, 0.0
        %v709 = vadd.f32 %v683, 0.0
        %v710 = vadd.f32 %v684, 0.0
        %v711 = vadd.f32 %v685, 0.0
        %v712 = vadd.f32 %v686, 0.0
        %v713 = vadd.f32 %v687, 0.0
        %v714 = vadd.f32 %v688, 0.0
        %v715 = vadd.f32 %v689, 0.0
        %v716 = vadd.f32 %v690, 0.0
        %v717 = vadd.f32 %v691, 0.0
        %v718 = vadd.f32 %v692, 0.0
        %v719 = vadd.f32 %v693, 0.0
        %v720 = vadd.f32 %v694, 0.0
        %v721 = vadd.f32 %v695, 0.0
        %v722 = vadd.f32 %v696, 0.0
        %v723 = vadd.f32 %v697, 0.0
        %v724 = vadd.f32 %v698, 0.0
        %v725 = vadd.f32 %v699, 0.0
        %v726 = vadd.f32 %v700, 0.0
        %v727 = vadd.f32 %v701, 0.0
        %v728 = vadd.f32 %v702, 0.0
        %v729 = vadd.f32 %v703, 0.0
        %730 = vset.pattern.permute.xlu0 1
        %731 = vperm.xlu0 %730, %v516
        %v732 = vpop.permute.xlu0 %731
        %734 = vset.pattern.permute.xlu0 1
        %735 = vperm.xlu0 %734, %v517
        %v736 = vpop.permute.xlu0 %735
        %738 = vset.pattern.permute.xlu0 1
        %739 = vperm.xlu0 %738, %v518
        %v740 = vpop.permute.xlu0 %739
        %742 = vset.pattern.permute.xlu0 1
        %743 = vperm.xlu0 %742, %v519
        %v744 = vpop.permute.xlu0 %743
        %746 = vset.pattern.permute.xlu0 1
        %747 = vperm.xlu0 %746, %v520
        %v748 = vpop.permute.xlu0 %747
        %750 = vset.pattern.permute.xlu0 1
        %751 = vperm.xlu0 %750, %v521
        %v752 = vpop.permute.xlu0 %751
        %754 = vset.pattern.permute.xlu0 1
        %755 = vperm.xlu0 %754, %v522
        %v756 = vpop.permute.xlu0 %755
        %758 = vset.pattern.permute.xlu0 1
        %759 = vperm.xlu0 %758, %v523
        %v760 = vpop.permute.xlu0 %759
        %762 = vset.pattern.permute.xlu0 1
        %763 = vperm.xlu0 %762, %v524
        %v764 = vpop.permute.xlu0 %763
        %766 = vset.pattern.permute.xlu0 1
        %767 = vperm.xlu0 %766, %v525
        %v768 = vpop.permute.xlu0 %767
        %770 = vset.pattern.permute.xlu0 1
        %771 = vperm.xlu0 %770, %v526
        %v772 = vpop.permute.xlu0 %771
        %774 = vset.pattern.permute.xlu0 1
        %775 = vperm.xlu0 %774, %v527
        %v776 = vpop.permute.xlu0 %775
        %778 = vset.pattern.permute.xlu0 1
        %779 = vperm.xlu0 %778, %v528
        %v780 = vpop.permute.xlu0 %779
        %782 = vset.pattern.permute.xlu0 1
        %783 = vperm.xlu0 %782, %v529
        %v784 = vpop.permute.xlu0 %783
        %786 = vset.pattern.permute.xlu0 1
        %787 = vperm.xlu0 %786, %v530
        %v788 = vpop.permute.xlu0 %787
        %790 = vset.pattern.permute.xlu0 1
        %791 = vperm.xlu0 %790, %v531
        %v792 = vpop.permute.xlu0 %791
        %794 = vset.pattern.permute.xlu0 1
        %795 = vperm.xlu0 %794, %v532
        %v796 = vpop.permute.xlu0 %795
        %798 = vset.pattern.permute.xlu0 1
        %799 = vperm.xlu0 %798, %v533
        %v800 = vpop.permute.xlu0 %799
        %802 = vset.pattern.permute.xlu0 1
        %803 = vperm.xlu0 %802, %v534
        %v804 = vpop.permute.xlu0 %803
        %806 = vset.pattern.permute.xlu0 1
        %807 = vperm.xlu0 %806, %v535
        %v808 = vpop.permute.xlu0 %807
        %810 = vset.pattern.permute.xlu0 1
        %811 = vperm.xlu0 %810, %v536
        %v812 = vpop.permute.xlu0 %811
        %814 = vset.pattern.permute.xlu0 1
        %815 = vperm.xlu0 %814, %v537
        %v816 = vpop.permute.xlu0 %815
        %818 = vset.pattern.permute.xlu0 1
        %819 = vperm.xlu0 %818, %v538
        %v820 = vpop.permute.xlu0 %819
        %822 = vset.pattern.permute.xlu0 1
        %823 = vperm.xlu0 %822, %v539
        %v824 = vpop.permute.xlu0 %823
        %826 = vset.pattern.permute.xlu0 1
        %827 = vperm.xlu0 %826, %v540
        %v828 = vpop.permute.xlu0 %827
        %830 = vset.pattern.permute.xlu0 1
        %831 = vperm.xlu0 %830, %v541
        %v832 = vpop.permute.xlu0 %831
        %v834 = vlaneseq
        %v835 = vshrl.u32 %v834, 7
        %v836 = vsub.s32 1, %v835
        %v837 = vrot.slane %v542, %v836
        %v838 = vmul.f32 %v732, %v837
        %v839 = vmul.f32 %v736, %v837
        %v840 = vmul.f32 %v740, %v837
        %v841 = vmul.f32 %v744, %v837
        %v842 = vmul.f32 %v748, %v837
        %v843 = vmul.f32 %v752, %v837
        %v844 = vmul.f32 %v756, %v837
        %v845 = vmul.f32 %v760, %v837
        %v846 = vmul.f32 %v764, %v837
        %v847 = vmul.f32 %v768, %v837
        %v848 = vmul.f32 %v772, %v837
        %v849 = vmul.f32 %v776, %v837
        %v850 = vmul.f32 %v780, %v837
        %v851 = vmul.f32 %v784, %v837
        %v852 = vmul.f32 %v788, %v837
        %v853 = vmul.f32 %v792, %v837
        %v854 = vmul.f32 %v796, %v837
        %v855 = vmul.f32 %v800, %v837
        %v856 = vmul.f32 %v804, %v837
        %v857 = vmul.f32 %v808, %v837
        %v858 = vmul.f32 %v812, %v837
        %v859 = vmul.f32 %v816, %v837
        %v860 = vmul.f32 %v820, %v837
        %v861 = vmul.f32 %v824, %v837
        %v862 = vmul.f32 %v828, %v837
        %v863 = vmul.f32 %v832, %v837
        %v864 = vadd.f32 %v704, %v838
        %v865 = vadd.f32 %v705, %v839
        %v866 = vadd.f32 %v706, %v840
        %v867 = vadd.f32 %v707, %v841
        %v868 = vadd.f32 %v708, %v842
        %v869 = vadd.f32 %v709, %v843
        %v870 = vadd.f32 %v710, %v844
        %v871 = vadd.f32 %v711, %v845
        %v872 = vadd.f32 %v712, %v846
        %v873 = vadd.f32 %v713, %v847
        %v874 = vadd.f32 %v714, %v848
        %v875 = vadd.f32 %v715, %v849
        %v876 = vadd.f32 %v716, %v850
        %v877 = vadd.f32 %v717, %v851
        %v878 = vadd.f32 %v718, %v852
        %v879 = vadd.f32 %v719, %v853
        %v880 = vadd.f32 %v720, %v854
        %v881 = vadd.f32 %v721, %v855
        %v882 = vadd.f32 %v722, %v856
        %v883 = vadd.f32 %v723, %v857
        %v884 = vadd.f32 %v724, %v858
        %v885 = vadd.f32 %v725, %v859
        %v886 = vadd.f32 %v726, %v860
        %v887 = vadd.f32 %v727, %v861
        %v888 = vadd.f32 %v728, %v862
        %v889 = vadd.f32 %v729, %v863
        %890 = vset.pattern.permute.xlu0 2
        %891 = vperm.xlu0 %890, %v516
        %v892 = vpop.permute.xlu0 %891
        %894 = vset.pattern.permute.xlu0 2
        %895 = vperm.xlu0 %894, %v517
        %v896 = vpop.permute.xlu0 %895
        %898 = vset.pattern.permute.xlu0 2
        %899 = vperm.xlu0 %898, %v518
        %v900 = vpop.permute.xlu0 %899
        %902 = vset.pattern.permute.xlu0 2
        %903 = vperm.xlu0 %902, %v519
        %v904 = vpop.permute.xlu0 %903
        %906 = vset.pattern.permute.xlu0 2
        %907 = vperm.xlu0 %906, %v520
        %v908 = vpop.permute.xlu0 %907
        %910 = vset.pattern.permute.xlu0 2
        %911 = vperm.xlu0 %910, %v521
        %v912 = vpop.permute.xlu0 %911
        %914 = vset.pattern.permute.xlu0 2
        %915 = vperm.xlu0 %914, %v522
        %v916 = vpop.permute.xlu0 %915
        %918 = vset.pattern.permute.xlu0 2
        %919 = vperm.xlu0 %918, %v523
        %v920 = vpop.permute.xlu0 %919
        %922 = vset.pattern.permute.xlu0 2
        %923 = vperm.xlu0 %922, %v524
        %v924 = vpop.permute.xlu0 %923
        %926 = vset.pattern.permute.xlu0 2
        %927 = vperm.xlu0 %926, %v525
        %v928 = vpop.permute.xlu0 %927
        %930 = vset.pattern.permute.xlu0 2
        %931 = vperm.xlu0 %930, %v526
        %v932 = vpop.permute.xlu0 %931
        %934 = vset.pattern.permute.xlu0 2
        %935 = vperm.xlu0 %934, %v527
        %v936 = vpop.permute.xlu0 %935
        %938 = vset.pattern.permute.xlu0 2
        %939 = vperm.xlu0 %938, %v528
        %v940 = vpop.permute.xlu0 %939
        %942 = vset.pattern.permute.xlu0 2
        %943 = vperm.xlu0 %942, %v529
        %v944 = vpop.permute.xlu0 %943
        %946 = vset.pattern.permute.xlu0 2
        %947 = vperm.xlu0 %946, %v530
        %v948 = vpop.permute.xlu0 %947
        %950 = vset.pattern.permute.xlu0 2
        %951 = vperm.xlu0 %950, %v531
        %v952 = vpop.permute.xlu0 %951
        %954 = vset.pattern.permute.xlu0 2
        %955 = vperm.xlu0 %954, %v532
        %v956 = vpop.permute.xlu0 %955
        %958 = vset.pattern.permute.xlu0 2
        %959 = vperm.xlu0 %958, %v533
        %v960 = vpop.permute.xlu0 %959
        %962 = vset.pattern.permute.xlu0 2
        %963 = vperm.xlu0 %962, %v534
        %v964 = vpop.permute.xlu0 %963
        %966 = vset.pattern.permute.xlu0 2
        %967 = vperm.xlu0 %966, %v535
        %v968 = vpop.permute.xlu0 %967
        %970 = vset.pattern.permute.xlu0 2
        %971 = vperm.xlu0 %970, %v536
        %v972 = vpop.permute.xlu0 %971
        %974 = vset.pattern.permute.xlu0 2
        %975 = vperm.xlu0 %974, %v537
        %v976 = vpop.permute.xlu0 %975
        %978 = vset.pattern.permute.xlu0 2
        %979 = vperm.xlu0 %978, %v538
        %v980 = vpop.permute.xlu0 %979
        %982 = vset.pattern.permute.xlu0 2
        %983 = vperm.xlu0 %982, %v539
        %v984 = vpop.permute.xlu0 %983
        %986 = vset.pattern.permute.xlu0 2
        %987 = vperm.xlu0 %986, %v540
        %v988 = vpop.permute.xlu0 %987
        %990 = vset.pattern.permute.xlu0 2
        %991 = vperm.xlu0 %990, %v541
        %v992 = vpop.permute.xlu0 %991
        %v994 = vlaneseq
        %v995 = vshrl.u32 %v994, 7
        %v996 = vsub.s32 2, %v995
        %v997 = vrot.slane %v542, %v996
        %v998 = vmul.f32 %v892, %v997
        %v999 = vmul.f32 %v896, %v997
        %v1000 = vmul.f32 %v900, %v997
        %v1001 = vmul.f32 %v904, %v997
        %v1002 = vmul.f32 %v908, %v997
        %v1003 = vmul.f32 %v912, %v997
        %v1004 = vmul.f32 %v916, %v997
        %v1005 = vmul.f32 %v920, %v997
        %v1006 = vmul.f32 %v924, %v997
        %v1007 = vmul.f32 %v928, %v997
        %v1008 = vmul.f32 %v932, %v997
        %v1009 = vmul.f32 %v936, %v997
        %v1010 = vmul.f32 %v940, %v997
        %v1011 = vmul.f32 %v944, %v997
        %v1012 = vmul.f32 %v948, %v997
        %v1013 = vmul.f32 %v952, %v997
        %v1014 = vmul.f32 %v956, %v997
        %v1015 = vmul.f32 %v960, %v997
        %v1016 = vmul.f32 %v964, %v997
        %v1017 = vmul.f32 %v968, %v997
        %v1018 = vmul.f32 %v972, %v997
        %v1019 = vmul.f32 %v976, %v997
        %v1020 = vmul.f32 %v980, %v997
        %v1021 = vmul.f32 %v984, %v997
        %v1022 = vmul.f32 %v988, %v997
        %v1023 = vmul.f32 %v992, %v997
        %v1024 = vadd.f32 %v864, %v998
        %v1025 = vadd.f32 %v865, %v999
        %v1026 = vadd.f32 %v866, %v1000
        %v1027 = vadd.f32 %v867, %v1001
        %v1028 = vadd.f32 %v868, %v1002
        %v1029 = vadd.f32 %v869, %v1003
        %v1030 = vadd.f32 %v870, %v1004
        %v1031 = vadd.f32 %v871, %v1005
        %v1032 = vadd.f32 %v872, %v1006
        %v1033 = vadd.f32 %v873, %v1007
        %v1034 = vadd.f32 %v874, %v1008
        %v1035 = vadd.f32 %v875, %v1009
        %v1036 = vadd.f32 %v876, %v1010
        %v1037 = vadd.f32 %v877, %v1011
        %v1038 = vadd.f32 %v878, %v1012
        %v1039 = vadd.f32 %v879, %v1013
        %v1040 = vadd.f32 %v880, %v1014
        %v1041 = vadd.f32 %v881, %v1015
        %v1042 = vadd.f32 %v882, %v1016
        %v1043 = vadd.f32 %v883, %v1017
        %v1044 = vadd.f32 %v884, %v1018
        %v1045 = vadd.f32 %v885, %v1019
        %v1046 = vadd.f32 %v886, %v1020
        %v1047 = vadd.f32 %v887, %v1021
        %v1048 = vadd.f32 %v888, %v1022
        %v1049 = vadd.f32 %v889, %v1023
        %1050 = vset.pattern.permute.xlu0 3
        %1051 = vperm.xlu0 %1050, %v516
        %v1052 = vpop.permute.xlu0 %1051
        %1054 = vset.pattern.permute.xlu0 3
        %1055 = vperm.xlu0 %1054, %v517
        %v1056 = vpop.permute.xlu0 %1055
        %1058 = vset.pattern.permute.xlu0 3
        %1059 = vperm.xlu0 %1058, %v518
        %v1060 = vpop.permute.xlu0 %1059
        %1062 = vset.pattern.permute.xlu0 3
        %1063 = vperm.xlu0 %1062, %v519
        %v1064 = vpop.permute.xlu0 %1063
        %1066 = vset.pattern.permute.xlu0 3
        %1067 = vperm.xlu0 %1066, %v520
        %v1068 = vpop.permute.xlu0 %1067
        %1070 = vset.pattern.permute.xlu0 3
        %1071 = vperm.xlu0 %1070, %v521
        %v1072 = vpop.permute.xlu0 %1071
        %1074 = vset.pattern.permute.xlu0 3
        %1075 = vperm.xlu0 %1074, %v522
        %v1076 = vpop.permute.xlu0 %1075
        %1078 = vset.pattern.permute.xlu0 3
        %1079 = vperm.xlu0 %1078, %v523
        %v1080 = vpop.permute.xlu0 %1079
        %1082 = vset.pattern.permute.xlu0 3
        %1083 = vperm.xlu0 %1082, %v524
        %v1084 = vpop.permute.xlu0 %1083
        %1086 = vset.pattern.permute.xlu0 3
        %1087 = vperm.xlu0 %1086, %v525
        %v1088 = vpop.permute.xlu0 %1087
        %1090 = vset.pattern.permute.xlu0 3
        %1091 = vperm.xlu0 %1090, %v526
        %v1092 = vpop.permute.xlu0 %1091
        %1094 = vset.pattern.permute.xlu0 3
        %1095 = vperm.xlu0 %1094, %v527
        %v1096 = vpop.permute.xlu0 %1095
        %1098 = vset.pattern.permute.xlu0 3
        %1099 = vperm.xlu0 %1098, %v528
        %v1100 = vpop.permute.xlu0 %1099
        %1102 = vset.pattern.permute.xlu0 3
        %1103 = vperm.xlu0 %1102, %v529
        %v1104 = vpop.permute.xlu0 %1103
        %1106 = vset.pattern.permute.xlu0 3
        %1107 = vperm.xlu0 %1106, %v530
        %v1108 = vpop.permute.xlu0 %1107
        %1110 = vset.pattern.permute.xlu0 3
        %1111 = vperm.xlu0 %1110, %v531
        %v1112 = vpop.permute.xlu0 %1111
        %1114 = vset.pattern.permute.xlu0 3
        %1115 = vperm.xlu0 %1114, %v532
        %v1116 = vpop.permute.xlu0 %1115
        %1118 = vset.pattern.permute.xlu0 3
        %1119 = vperm.xlu0 %1118, %v533
        %v1120 = vpop.permute.xlu0 %1119
        %1122 = vset.pattern.permute.xlu0 3
        %1123 = vperm.xlu0 %1122, %v534
        %v1124 = vpop.permute.xlu0 %1123
        %1126 = vset.pattern.permute.xlu0 3
        %1127 = vperm.xlu0 %1126, %v535
        %v1128 = vpop.permute.xlu0 %1127
        %1130 = vset.pattern.permute.xlu0 3
        %1131 = vperm.xlu0 %1130, %v536
        %v1132 = vpop.permute.xlu0 %1131
        %1134 = vset.pattern.permute.xlu0 3
        %1135 = vperm.xlu0 %1134, %v537
        %v1136 = vpop.permute.xlu0 %1135
        %1138 = vset.pattern.permute.xlu0 3
        %1139 = vperm.xlu0 %1138, %v538
        %v1140 = vpop.permute.xlu0 %1139
        %1142 = vset.pattern.permute.xlu0 3
        %1143 = vperm.xlu0 %1142, %v539
        %v1144 = vpop.permute.xlu0 %1143
        %1146 = vset.pattern.permute.xlu0 3
        %1147 = vperm.xlu0 %1146, %v540
        %v1148 = vpop.permute.xlu0 %1147
        %1150 = vset.pattern.permute.xlu0 3
        %1151 = vperm.xlu0 %1150, %v541
        %v1152 = vpop.permute.xlu0 %1151
        %v1154 = vlaneseq
        %v1155 = vshrl.u32 %v1154, 7
        %v1156 = vsub.s32 3, %v1155
        %v1157 = vrot.slane %v542, %v1156
        %v1158 = vmul.f32 %v1052, %v1157
        %v1159 = vmul.f32 %v1056, %v1157
        %v1160 = vmul.f32 %v1060, %v1157
        %v1161 = vmul.f32 %v1064, %v1157
        %v1162 = vmul.f32 %v1068, %v1157
        %v1163 = vmul.f32 %v1072, %v1157
        %v1164 = vmul.f32 %v1076, %v1157
        %v1165 = vmul.f32 %v1080, %v1157
        %v1166 = vmul.f32 %v1084, %v1157
        %v1167 = vmul.f32 %v1088, %v1157
        %v1168 = vmul.f32 %v1092, %v1157
        %v1169 = vmul.f32 %v1096, %v1157
        %v1170 = vmul.f32 %v1100, %v1157
        %v1171 = vmul.f32 %v1104, %v1157
        %v1172 = vmul.f32 %v1108, %v1157
        %v1173 = vmul.f32 %v1112, %v1157
        %v1174 = vmul.f32 %v1116, %v1157
        %v1175 = vmul.f32 %v1120, %v1157
        %v1176 = vmul.f32 %v1124, %v1157
        %v1177 = vmul.f32 %v1128, %v1157
        %v1178 = vmul.f32 %v1132, %v1157
        %v1179 = vmul.f32 %v1136, %v1157
        %v1180 = vmul.f32 %v1140, %v1157
        %v1181 = vmul.f32 %v1144, %v1157
        %v1182 = vmul.f32 %v1148, %v1157
        %v1183 = vmul.f32 %v1152, %v1157
        %v1184 = vadd.f32 %v1024, %v1158
        %v1185 = vadd.f32 %v1025, %v1159
        %v1186 = vadd.f32 %v1026, %v1160
        %v1187 = vadd.f32 %v1027, %v1161
        %v1188 = vadd.f32 %v1028, %v1162
        %v1189 = vadd.f32 %v1029, %v1163
        %v1190 = vadd.f32 %v1030, %v1164
        %v1191 = vadd.f32 %v1031, %v1165
        %v1192 = vadd.f32 %v1032, %v1166
        %v1193 = vadd.f32 %v1033, %v1167
        %v1194 = vadd.f32 %v1034, %v1168
        %v1195 = vadd.f32 %v1035, %v1169
        %v1196 = vadd.f32 %v1036, %v1170
        %v1197 = vadd.f32 %v1037, %v1171
        %v1198 = vadd.f32 %v1038, %v1172
        %v1199 = vadd.f32 %v1039, %v1173
        %v1200 = vadd.f32 %v1040, %v1174
        %v1201 = vadd.f32 %v1041, %v1175
        %v1202 = vadd.f32 %v1042, %v1176
        %v1203 = vadd.f32 %v1043, %v1177
        %v1204 = vadd.f32 %v1044, %v1178
        %v1205 = vadd.f32 %v1045, %v1179
        %v1206 = vadd.f32 %v1046, %v1180
        %v1207 = vadd.f32 %v1047, %v1181
        %v1208 = vadd.f32 %v1048, %v1182
        %v1209 = vadd.f32 %v1049, %v1183
        %1210 = vset.pattern.permute.xlu0 4
        %1211 = vperm.xlu0 %1210, %v516
        %v1212 = vpop.permute.xlu0 %1211
        %1214 = vset.pattern.permute.xlu0 4
        %1215 = vperm.xlu0 %1214, %v517
        %v1216 = vpop.permute.xlu0 %1215
        %1218 = vset.pattern.permute.xlu0 4
        %1219 = vperm.xlu0 %1218, %v518
        %v1220 = vpop.permute.xlu0 %1219
        %1222 = vset.pattern.permute.xlu0 4
        %1223 = vperm.xlu0 %1222, %v519
        %v1224 = vpop.permute.xlu0 %1223
        %1226 = vset.pattern.permute.xlu0 4
        %1227 = vperm.xlu0 %1226, %v520
        %v1228 = vpop.permute.xlu0 %1227
        %1230 = vset.pattern.permute.xlu0 4
        %1231 = vperm.xlu0 %1230, %v521
        %v1232 = vpop.permute.xlu0 %1231
        %1234 = vset.pattern.permute.xlu0 4
        %1235 = vperm.xlu0 %1234, %v522
        %v1236 = vpop.permute.xlu0 %1235
        %1238 = vset.pattern.permute.xlu0 4
        %1239 = vperm.xlu0 %1238, %v523
        %v1240 = vpop.permute.xlu0 %1239
        %1242 = vset.pattern.permute.xlu0 4
        %1243 = vperm.xlu0 %1242, %v524
        %v1244 = vpop.permute.xlu0 %1243
        %1246 = vset.pattern.permute.xlu0 4
        %1247 = vperm.xlu0 %1246, %v525
        %v1248 = vpop.permute.xlu0 %1247
        %1250 = vset.pattern.permute.xlu0 4
        %1251 = vperm.xlu0 %1250, %v526
        %v1252 = vpop.permute.xlu0 %1251
        %1254 = vset.pattern.permute.xlu0 4
        %1255 = vperm.xlu0 %1254, %v527
        %v1256 = vpop.permute.xlu0 %1255
        %1258 = vset.pattern.permute.xlu0 4
        %1259 = vperm.xlu0 %1258, %v528
        %v1260 = vpop.permute.xlu0 %1259
        %1262 = vset.pattern.permute.xlu0 4
        %1263 = vperm.xlu0 %1262, %v529
        %v1264 = vpop.permute.xlu0 %1263
        %1266 = vset.pattern.permute.xlu0 4
        %1267 = vperm.xlu0 %1266, %v530
        %v1268 = vpop.permute.xlu0 %1267
        %1270 = vset.pattern.permute.xlu0 4
        %1271 = vperm.xlu0 %1270, %v531
        %v1272 = vpop.permute.xlu0 %1271
        %1274 = vset.pattern.permute.xlu0 4
        %1275 = vperm.xlu0 %1274, %v532
        %v1276 = vpop.permute.xlu0 %1275
        %1278 = vset.pattern.permute.xlu0 4
        %1279 = vperm.xlu0 %1278, %v533
        %v1280 = vpop.permute.xlu0 %1279
        %1282 = vset.pattern.permute.xlu0 4
        %1283 = vperm.xlu0 %1282, %v534
        %v1284 = vpop.permute.xlu0 %1283
        %1286 = vset.pattern.permute.xlu0 4
        %1287 = vperm.xlu0 %1286, %v535
        %v1288 = vpop.permute.xlu0 %1287
        %1290 = vset.pattern.permute.xlu0 4
        %1291 = vperm.xlu0 %1290, %v536
        %v1292 = vpop.permute.xlu0 %1291
        %1294 = vset.pattern.permute.xlu0 4
        %1295 = vperm.xlu0 %1294, %v537
        %v1296 = vpop.permute.xlu0 %1295
        %1298 = vset.pattern.permute.xlu0 4
        %1299 = vperm.xlu0 %1298, %v538
        %v1300 = vpop.permute.xlu0 %1299
        %1302 = vset.pattern.permute.xlu0 4
        %1303 = vperm.xlu0 %1302, %v539
        %v1304 = vpop.permute.xlu0 %1303
        %1306 = vset.pattern.permute.xlu0 4
        %1307 = vperm.xlu0 %1306, %v540
        %v1308 = vpop.permute.xlu0 %1307
        %1310 = vset.pattern.permute.xlu0 4
        %1311 = vperm.xlu0 %1310, %v541
        %v1312 = vpop.permute.xlu0 %1311
        %v1314 = vlaneseq
        %v1315 = vshrl.u32 %v1314, 7
        %v1316 = vsub.s32 4, %v1315
        %v1317 = vrot.slane %v542, %v1316
        %v1318 = vmul.f32 %v1212, %v1317
        %v1319 = vmul.f32 %v1216, %v1317
        %v1320 = vmul.f32 %v1220, %v1317
        %v1321 = vmul.f32 %v1224, %v1317
        %v1322 = vmul.f32 %v1228, %v1317
        %v1323 = vmul.f32 %v1232, %v1317
        %v1324 = vmul.f32 %v1236, %v1317
        %v1325 = vmul.f32 %v1240, %v1317
        %v1326 = vmul.f32 %v1244, %v1317
        %v1327 = vmul.f32 %v1248, %v1317
        %v1328 = vmul.f32 %v1252, %v1317
        %v1329 = vmul.f32 %v1256, %v1317
        %v1330 = vmul.f32 %v1260, %v1317
        %v1331 = vmul.f32 %v1264, %v1317
        %v1332 = vmul.f32 %v1268, %v1317
        %v1333 = vmul.f32 %v1272, %v1317
        %v1334 = vmul.f32 %v1276, %v1317
        %v1335 = vmul.f32 %v1280, %v1317
        %v1336 = vmul.f32 %v1284, %v1317
        %v1337 = vmul.f32 %v1288, %v1317
        %v1338 = vmul.f32 %v1292, %v1317
        %v1339 = vmul.f32 %v1296, %v1317
        %v1340 = vmul.f32 %v1300, %v1317
        %v1341 = vmul.f32 %v1304, %v1317
        %v1342 = vmul.f32 %v1308, %v1317
        %v1343 = vmul.f32 %v1312, %v1317
        %v1344 = vadd.f32 %v1184, %v1318
        %v1345 = vadd.f32 %v1185, %v1319
        %v1346 = vadd.f32 %v1186, %v1320
        %v1347 = vadd.f32 %v1187, %v1321
        %v1348 = vadd.f32 %v1188, %v1322
        %v1349 = vadd.f32 %v1189, %v1323
        %v1350 = vadd.f32 %v1190, %v1324
        %v1351 = vadd.f32 %v1191, %v1325
        %v1352 = vadd.f32 %v1192, %v1326
        %v1353 = vadd.f32 %v1193, %v1327
        %v1354 = vadd.f32 %v1194, %v1328
        %v1355 = vadd.f32 %v1195, %v1329
        %v1356 = vadd.f32 %v1196, %v1330
        %v1357 = vadd.f32 %v1197, %v1331
        %v1358 = vadd.f32 %v1198, %v1332
        %v1359 = vadd.f32 %v1199, %v1333
        %v1360 = vadd.f32 %v1200, %v1334
        %v1361 = vadd.f32 %v1201, %v1335
        %v1362 = vadd.f32 %v1202, %v1336
        %v1363 = vadd.f32 %v1203, %v1337
        %v1364 = vadd.f32 %v1204, %v1338
        %v1365 = vadd.f32 %v1205, %v1339
        %v1366 = vadd.f32 %v1206, %v1340
        %v1367 = vadd.f32 %v1207, %v1341
        %v1368 = vadd.f32 %v1208, %v1342
        %v1369 = vadd.f32 %v1209, %v1343
        %1370 = vset.pattern.permute.xlu0 5
        %1371 = vperm.xlu0 %1370, %v516
        %v1372 = vpop.permute.xlu0 %1371
        %1374 = vset.pattern.permute.xlu0 5
        %1375 = vperm.xlu0 %1374, %v517
        %v1376 = vpop.permute.xlu0 %1375
        %1378 = vset.pattern.permute.xlu0 5
        %1379 = vperm.xlu0 %1378, %v518
        %v1380 = vpop.permute.xlu0 %1379
        %1382 = vset.pattern.permute.xlu0 5
        %1383 = vperm.xlu0 %1382, %v519
        %v1384 = vpop.permute.xlu0 %1383
        %1386 = vset.pattern.permute.xlu0 5
        %1387 = vperm.xlu0 %1386, %v520
        %v1388 = vpop.permute.xlu0 %1387
        %1390 = vset.pattern.permute.xlu0 5
        %1391 = vperm.xlu0 %1390, %v521
        %v1392 = vpop.permute.xlu0 %1391
        %1394 = vset.pattern.permute.xlu0 5
        %1395 = vperm.xlu0 %1394, %v522
        %v1396 = vpop.permute.xlu0 %1395
        %1398 = vset.pattern.permute.xlu0 5
        %1399 = vperm.xlu0 %1398, %v523
        %v1400 = vpop.permute.xlu0 %1399
        %1402 = vset.pattern.permute.xlu0 5
        %1403 = vperm.xlu0 %1402, %v524
        %v1404 = vpop.permute.xlu0 %1403
        %1406 = vset.pattern.permute.xlu0 5
        %1407 = vperm.xlu0 %1406, %v525
        %v1408 = vpop.permute.xlu0 %1407
        %1410 = vset.pattern.permute.xlu0 5
        %1411 = vperm.xlu0 %1410, %v526
        %v1412 = vpop.permute.xlu0 %1411
        %1414 = vset.pattern.permute.xlu0 5
        %1415 = vperm.xlu0 %1414, %v527
        %v1416 = vpop.permute.xlu0 %1415
        %1418 = vset.pattern.permute.xlu0 5
        %1419 = vperm.xlu0 %1418, %v528
        %v1420 = vpop.permute.xlu0 %1419
        %1422 = vset.pattern.permute.xlu0 5
        %1423 = vperm.xlu0 %1422, %v529
        %v1424 = vpop.permute.xlu0 %1423
        %1426 = vset.pattern.permute.xlu0 5
        %1427 = vperm.xlu0 %1426, %v530
        %v1428 = vpop.permute.xlu0 %1427
        %1430 = vset.pattern.permute.xlu0 5
        %1431 = vperm.xlu0 %1430, %v531
        %v1432 = vpop.permute.xlu0 %1431
        %1434 = vset.pattern.permute.xlu0 5
        %1435 = vperm.xlu0 %1434, %v532
        %v1436 = vpop.permute.xlu0 %1435
        %1438 = vset.pattern.permute.xlu0 5
        %1439 = vperm.xlu0 %1438, %v533
        %v1440 = vpop.permute.xlu0 %1439
        %1442 = vset.pattern.permute.xlu0 5
        %1443 = vperm.xlu0 %1442, %v534
        %v1444 = vpop.permute.xlu0 %1443
        %1446 = vset.pattern.permute.xlu0 5
        %1447 = vperm.xlu0 %1446, %v535
        %v1448 = vpop.permute.xlu0 %1447
        %1450 = vset.pattern.permute.xlu0 5
        %1451 = vperm.xlu0 %1450, %v536
        %v1452 = vpop.permute.xlu0 %1451
        %1454 = vset.pattern.permute.xlu0 5
        %1455 = vperm.xlu0 %1454, %v537
        %v1456 = vpop.permute.xlu0 %1455
        %1458 = vset.pattern.permute.xlu0 5
        %1459 = vperm.xlu0 %1458, %v538
        %v1460 = vpop.permute.xlu0 %1459
        %1462 = vset.pattern.permute.xlu0 5
        %1463 = vperm.xlu0 %1462, %v539
        %v1464 = vpop.permute.xlu0 %1463
        %1466 = vset.pattern.permute.xlu0 5
        %1467 = vperm.xlu0 %1466, %v540
        %v1468 = vpop.permute.xlu0 %1467
        %1470 = vset.pattern.permute.xlu0 5
        %1471 = vperm.xlu0 %1470, %v541
        %v1472 = vpop.permute.xlu0 %1471
        %v1474 = vlaneseq
        %v1475 = vshrl.u32 %v1474, 7
        %v1476 = vsub.s32 5, %v1475
        %v1477 = vrot.slane %v542, %v1476
        %v1478 = vmul.f32 %v1372, %v1477
        %v1479 = vmul.f32 %v1376, %v1477
        %v1480 = vmul.f32 %v1380, %v1477
        %v1481 = vmul.f32 %v1384, %v1477
        %v1482 = vmul.f32 %v1388, %v1477
        %v1483 = vmul.f32 %v1392, %v1477
        %v1484 = vmul.f32 %v1396, %v1477
        %v1485 = vmul.f32 %v1400, %v1477
        %v1486 = vmul.f32 %v1404, %v1477
        %v1487 = vmul.f32 %v1408, %v1477
        %v1488 = vmul.f32 %v1412, %v1477
        %v1489 = vmul.f32 %v1416, %v1477
        %v1490 = vmul.f32 %v1420, %v1477
        %v1491 = vmul.f32 %v1424, %v1477
        %v1492 = vmul.f32 %v1428, %v1477
        %v1493 = vmul.f32 %v1432, %v1477
        %v1494 = vmul.f32 %v1436, %v1477
        %v1495 = vmul.f32 %v1440, %v1477
        %v1496 = vmul.f32 %v1444, %v1477
        %v1497 = vmul.f32 %v1448, %v1477
        %v1498 = vmul.f32 %v1452, %v1477
        %v1499 = vmul.f32 %v1456, %v1477
        %v1500 = vmul.f32 %v1460, %v1477
        %v1501 = vmul.f32 %v1464, %v1477
        %v1502 = vmul.f32 %v1468, %v1477
        %v1503 = vmul.f32 %v1472, %v1477
        %v1504 = vadd.f32 %v1344, %v1478
        %v1505 = vadd.f32 %v1345, %v1479
        %v1506 = vadd.f32 %v1346, %v1480
        %v1507 = vadd.f32 %v1347, %v1481
        %v1508 = vadd.f32 %v1348, %v1482
        %v1509 = vadd.f32 %v1349, %v1483
        %v1510 = vadd.f32 %v1350, %v1484
        %v1511 = vadd.f32 %v1351, %v1485
        %v1512 = vadd.f32 %v1352, %v1486
        %v1513 = vadd.f32 %v1353, %v1487
        %v1514 = vadd.f32 %v1354, %v1488
        %v1515 = vadd.f32 %v1355, %v1489
        %v1516 = vadd.f32 %v1356, %v1490
        %v1517 = vadd.f32 %v1357, %v1491
        %v1518 = vadd.f32 %v1358, %v1492
        %v1519 = vadd.f32 %v1359, %v1493
        %v1520 = vadd.f32 %v1360, %v1494
        %v1521 = vadd.f32 %v1361, %v1495
        %v1522 = vadd.f32 %v1362, %v1496
        %v1523 = vadd.f32 %v1363, %v1497
        %v1524 = vadd.f32 %v1364, %v1498
        %v1525 = vadd.f32 %v1365, %v1499
        %v1526 = vadd.f32 %v1366, %v1500
        %v1527 = vadd.f32 %v1367, %v1501
        %v1528 = vadd.f32 %v1368, %v1502
        %v1529 = vadd.f32 %v1369, %v1503
        %1530 = vset.pattern.permute.xlu0 6
        %1531 = vperm.xlu0 %1530, %v516
        %v1532 = vpop.permute.xlu0 %1531
        %1534 = vset.pattern.permute.xlu0 6
        %1535 = vperm.xlu0 %1534, %v517
        %v1536 = vpop.permute.xlu0 %1535
        %1538 = vset.pattern.permute.xlu0 6
        %1539 = vperm.xlu0 %1538, %v518
        %v1540 = vpop.permute.xlu0 %1539
        %1542 = vset.pattern.permute.xlu0 6
        %1543 = vperm.xlu0 %1542, %v519
        %v1544 = vpop.permute.xlu0 %1543
        %1546 = vset.pattern.permute.xlu0 6
        %1547 = vperm.xlu0 %1546, %v520
        %v1548 = vpop.permute.xlu0 %1547
        %1550 = vset.pattern.permute.xlu0 6
        %1551 = vperm.xlu0 %1550, %v521
        %v1552 = vpop.permute.xlu0 %1551
        %1554 = vset.pattern.permute.xlu0 6
        %1555 = vperm.xlu0 %1554, %v522
        %v1556 = vpop.permute.xlu0 %1555
        %1558 = vset.pattern.permute.xlu0 6
        %1559 = vperm.xlu0 %1558, %v523
        %v1560 = vpop.permute.xlu0 %1559
        %1562 = vset.pattern.permute.xlu0 6
        %1563 = vperm.xlu0 %1562, %v524
        %v1564 = vpop.permute.xlu0 %1563
        %1566 = vset.pattern.permute.xlu0 6
        %1567 = vperm.xlu0 %1566, %v525
        %v1568 = vpop.permute.xlu0 %1567
        %1570 = vset.pattern.permute.xlu0 6
        %1571 = vperm.xlu0 %1570, %v526
        %v1572 = vpop.permute.xlu0 %1571
        %1574 = vset.pattern.permute.xlu0 6
        %1575 = vperm.xlu0 %1574, %v527
        %v1576 = vpop.permute.xlu0 %1575
        %1578 = vset.pattern.permute.xlu0 6
        %1579 = vperm.xlu0 %1578, %v528
        %v1580 = vpop.permute.xlu0 %1579
        %1582 = vset.pattern.permute.xlu0 6
        %1583 = vperm.xlu0 %1582, %v529
        %v1584 = vpop.permute.xlu0 %1583
        %1586 = vset.pattern.permute.xlu0 6
        %1587 = vperm.xlu0 %1586, %v530
        %v1588 = vpop.permute.xlu0 %1587
        %1590 = vset.pattern.permute.xlu0 6
        %1591 = vperm.xlu0 %1590, %v531
        %v1592 = vpop.permute.xlu0 %1591
        %1594 = vset.pattern.permute.xlu0 6
        %1595 = vperm.xlu0 %1594, %v532
        %v1596 = vpop.permute.xlu0 %1595
        %1598 = vset.pattern.permute.xlu0 6
        %1599 = vperm.xlu0 %1598, %v533
        %v1600 = vpop.permute.xlu0 %1599
        %1602 = vset.pattern.permute.xlu0 6
        %1603 = vperm.xlu0 %1602, %v534
        %v1604 = vpop.permute.xlu0 %1603
        %1606 = vset.pattern.permute.xlu0 6
        %1607 = vperm.xlu0 %1606, %v535
        %v1608 = vpop.permute.xlu0 %1607
        %1610 = vset.pattern.permute.xlu0 6
        %1611 = vperm.xlu0 %1610, %v536
        %v1612 = vpop.permute.xlu0 %1611
        %1614 = vset.pattern.permute.xlu0 6
        %1615 = vperm.xlu0 %1614, %v537
        %v1616 = vpop.permute.xlu0 %1615
        %1618 = vset.pattern.permute.xlu0 6
        %1619 = vperm.xlu0 %1618, %v538
        %v1620 = vpop.permute.xlu0 %1619
        %1622 = vset.pattern.permute.xlu0 6
        %1623 = vperm.xlu0 %1622, %v539
        %v1624 = vpop.permute.xlu0 %1623
        %1626 = vset.pattern.permute.xlu0 6
        %1627 = vperm.xlu0 %1626, %v540
        %v1628 = vpop.permute.xlu0 %1627
        %1630 = vset.pattern.permute.xlu0 6
        %1631 = vperm.xlu0 %1630, %v541
        %v1632 = vpop.permute.xlu0 %1631
        %v1634 = vlaneseq
        %v1635 = vshrl.u32 %v1634, 7
        %v1636 = vsub.s32 6, %v1635
        %v1637 = vrot.slane %v542, %v1636
        %v1638 = vmul.f32 %v1532, %v1637
        %v1639 = vmul.f32 %v1536, %v1637
        %v1640 = vmul.f32 %v1540, %v1637
        %v1641 = vmul.f32 %v1544, %v1637
        %v1642 = vmul.f32 %v1548, %v1637
        %v1643 = vmul.f32 %v1552, %v1637
        %v1644 = vmul.f32 %v1556, %v1637
        %v1645 = vmul.f32 %v1560, %v1637
        %v1646 = vmul.f32 %v1564, %v1637
        %v1647 = vmul.f32 %v1568, %v1637
        %v1648 = vmul.f32 %v1572, %v1637
        %v1649 = vmul.f32 %v1576, %v1637
        %v1650 = vmul.f32 %v1580, %v1637
        %v1651 = vmul.f32 %v1584, %v1637
        %v1652 = vmul.f32 %v1588, %v1637
        %v1653 = vmul.f32 %v1592, %v1637
        %v1654 = vmul.f32 %v1596, %v1637
        %v1655 = vmul.f32 %v1600, %v1637
        %v1656 = vmul.f32 %v1604, %v1637
        %v1657 = vmul.f32 %v1608, %v1637
        %v1658 = vmul.f32 %v1612, %v1637
        %v1659 = vmul.f32 %v1616, %v1637
        %v1660 = vmul.f32 %v1620, %v1637
        %v1661 = vmul.f32 %v1624, %v1637
        %v1662 = vmul.f32 %v1628, %v1637
        %v1663 = vmul.f32 %v1632, %v1637
        %v1664 = vadd.f32 %v1504, %v1638
        %v1665 = vadd.f32 %v1505, %v1639
        %v1666 = vadd.f32 %v1506, %v1640
        %v1667 = vadd.f32 %v1507, %v1641
        %v1668 = vadd.f32 %v1508, %v1642
        %v1669 = vadd.f32 %v1509, %v1643
        %v1670 = vadd.f32 %v1510, %v1644
        %v1671 = vadd.f32 %v1511, %v1645
        %v1672 = vadd.f32 %v1512, %v1646
        %v1673 = vadd.f32 %v1513, %v1647
        %v1674 = vadd.f32 %v1514, %v1648
        %v1675 = vadd.f32 %v1515, %v1649
        %v1676 = vadd.f32 %v1516, %v1650
        %v1677 = vadd.f32 %v1517, %v1651
        %v1678 = vadd.f32 %v1518, %v1652
        %v1679 = vadd.f32 %v1519, %v1653
        %v1680 = vadd.f32 %v1520, %v1654
        %v1681 = vadd.f32 %v1521, %v1655
        %v1682 = vadd.f32 %v1522, %v1656
        %v1683 = vadd.f32 %v1523, %v1657
        %v1684 = vadd.f32 %v1524, %v1658
        %v1685 = vadd.f32 %v1525, %v1659
        %v1686 = vadd.f32 %v1526, %v1660
        %v1687 = vadd.f32 %v1527, %v1661
        %v1688 = vadd.f32 %v1528, %v1662
        %v1689 = vadd.f32 %v1529, %v1663
        %1690 = vset.pattern.permute.xlu0 7
        %1691 = vperm.xlu0 %1690, %v516
        %v1692 = vpop.permute.xlu0 %1691
        %1694 = vset.pattern.permute.xlu0 7
        %1695 = vperm.xlu0 %1694, %v517
        %v1696 = vpop.permute.xlu0 %1695
        %1698 = vset.pattern.permute.xlu0 7
        %1699 = vperm.xlu0 %1698, %v518
        %v1700 = vpop.permute.xlu0 %1699
        %1702 = vset.pattern.permute.xlu0 7
        %1703 = vperm.xlu0 %1702, %v519
        %v1704 = vpop.permute.xlu0 %1703
        %1706 = vset.pattern.permute.xlu0 7
        %1707 = vperm.xlu0 %1706, %v520
        %v1708 = vpop.permute.xlu0 %1707
        %1710 = vset.pattern.permute.xlu0 7
        %1711 = vperm.xlu0 %1710, %v521
        %v1712 = vpop.permute.xlu0 %1711
        %1714 = vset.pattern.permute.xlu0 7
        %1715 = vperm.xlu0 %1714, %v522
        %v1716 = vpop.permute.xlu0 %1715
        %1718 = vset.pattern.permute.xlu0 7
        %1719 = vperm.xlu0 %1718, %v523
        %v1720 = vpop.permute.xlu0 %1719
        %1722 = vset.pattern.permute.xlu0 7
        %1723 = vperm.xlu0 %1722, %v524
        %v1724 = vpop.permute.xlu0 %1723
        %1726 = vset.pattern.permute.xlu0 7
        %1727 = vperm.xlu0 %1726, %v525
        %v1728 = vpop.permute.xlu0 %1727
        %1730 = vset.pattern.permute.xlu0 7
        %1731 = vperm.xlu0 %1730, %v526
        %v1732 = vpop.permute.xlu0 %1731
        %1734 = vset.pattern.permute.xlu0 7
        %1735 = vperm.xlu0 %1734, %v527
        %v1736 = vpop.permute.xlu0 %1735
        %1738 = vset.pattern.permute.xlu0 7
        %1739 = vperm.xlu0 %1738, %v528
        %v1740 = vpop.permute.xlu0 %1739
        %1742 = vset.pattern.permute.xlu0 7
        %1743 = vperm.xlu0 %1742, %v529
        %v1744 = vpop.permute.xlu0 %1743
        %1746 = vset.pattern.permute.xlu0 7
        %1747 = vperm.xlu0 %1746, %v530
        %v1748 = vpop.permute.xlu0 %1747
        %1750 = vset.pattern.permute.xlu0 7
        %1751 = vperm.xlu0 %1750, %v531
        %v1752 = vpop.permute.xlu0 %1751
        %1754 = vset.pattern.permute.xlu0 7
        %1755 = vperm.xlu0 %1754, %v532
        %v1756 = vpop.permute.xlu0 %1755
        %1758 = vset.pattern.permute.xlu0 7
        %1759 = vperm.xlu0 %1758, %v533
        %v1760 = vpop.permute.xlu0 %1759
        %1762 = vset.pattern.permute.xlu0 7
        %1763 = vperm.xlu0 %1762, %v534
        %v1764 = vpop.permute.xlu0 %1763
        %1766 = vset.pattern.permute.xlu0 7
        %1767 = vperm.xlu0 %1766, %v535
        %v1768 = vpop.permute.xlu0 %1767
        %1770 = vset.pattern.permute.xlu0 7
        %1771 = vperm.xlu0 %1770, %v536
        %v1772 = vpop.permute.xlu0 %1771
        %1774 = vset.pattern.permute.xlu0 7
        %1775 = vperm.xlu0 %1774, %v537
        %v1776 = vpop.permute.xlu0 %1775
        %1778 = vset.pattern.permute.xlu0 7
        %1779 = vperm.xlu0 %1778, %v538
        %v1780 = vpop.permute.xlu0 %1779
        %1782 = vset.pattern.permute.xlu0 7
        %1783 = vperm.xlu0 %1782, %v539
        %v1784 = vpop.permute.xlu0 %1783
        %1786 = vset.pattern.permute.xlu0 7
        %1787 = vperm.xlu0 %1786, %v540
        %v1788 = vpop.permute.xlu0 %1787
        %1790 = vset.pattern.permute.xlu0 7
        %1791 = vperm.xlu0 %1790, %v541
        %v1792 = vpop.permute.xlu0 %1791
        %v1794 = vlaneseq
        %v1795 = vshrl.u32 %v1794, 7
        %v1796 = vsub.s32 7, %v1795
        %v1797 = vrot.slane %v542, %v1796
        %v1798 = vmul.f32 %v1692, %v1797
        %v1799 = vmul.f32 %v1696, %v1797
        %v1800 = vmul.f32 %v1700, %v1797
        %v1801 = vmul.f32 %v1704, %v1797
        %v1802 = vmul.f32 %v1708, %v1797
        %v1803 = vmul.f32 %v1712, %v1797
        %v1804 = vmul.f32 %v1716, %v1797
        %v1805 = vmul.f32 %v1720, %v1797
        %v1806 = vmul.f32 %v1724, %v1797
        %v1807 = vmul.f32 %v1728, %v1797
        %v1808 = vmul.f32 %v1732, %v1797
        %v1809 = vmul.f32 %v1736, %v1797
        %v1810 = vmul.f32 %v1740, %v1797
        %v1811 = vmul.f32 %v1744, %v1797
        %v1812 = vmul.f32 %v1748, %v1797
        %v1813 = vmul.f32 %v1752, %v1797
        %v1814 = vmul.f32 %v1756, %v1797
        %v1815 = vmul.f32 %v1760, %v1797
        %v1816 = vmul.f32 %v1764, %v1797
        %v1817 = vmul.f32 %v1768, %v1797
        %v1818 = vmul.f32 %v1772, %v1797
        %v1819 = vmul.f32 %v1776, %v1797
        %v1820 = vmul.f32 %v1780, %v1797
        %v1821 = vmul.f32 %v1784, %v1797
        %v1822 = vmul.f32 %v1788, %v1797
        %v1823 = vmul.f32 %v1792, %v1797
        %v1824 = vadd.f32 %v1664, %v1798
        %v1825 = vadd.f32 %v1665, %v1799
        %v1826 = vadd.f32 %v1666, %v1800
        %v1827 = vadd.f32 %v1667, %v1801
        %v1828 = vadd.f32 %v1668, %v1802
        %v1829 = vadd.f32 %v1669, %v1803
        %v1830 = vadd.f32 %v1670, %v1804
        %v1831 = vadd.f32 %v1671, %v1805
        %v1832 = vadd.f32 %v1672, %v1806
        %v1833 = vadd.f32 %v1673, %v1807
        %v1834 = vadd.f32 %v1674, %v1808
        %v1835 = vadd.f32 %v1675, %v1809
        %v1836 = vadd.f32 %v1676, %v1810
        %v1837 = vadd.f32 %v1677, %v1811
        %v1838 = vadd.f32 %v1678, %v1812
        %v1839 = vadd.f32 %v1679, %v1813
        %v1840 = vadd.f32 %v1680, %v1814
        %v1841 = vadd.f32 %v1681, %v1815
        %v1842 = vadd.f32 %v1682, %v1816
        %v1843 = vadd.f32 %v1683, %v1817
        %v1844 = vadd.f32 %v1684, %v1818
        %v1845 = vadd.f32 %v1685, %v1819
        %v1846 = vadd.f32 %v1686, %v1820
        %v1847 = vadd.f32 %v1687, %v1821
        %v1848 = vadd.f32 %v1688, %v1822
        %v1849 = vadd.f32 %v1689, %v1823
        %1850 = vset.pattern.permute.xlu0 8
        %1851 = vperm.xlu0 %1850, %v516
        %v1852 = vpop.permute.xlu0 %1851
        %1854 = vset.pattern.permute.xlu0 8
        %1855 = vperm.xlu0 %1854, %v517
        %v1856 = vpop.permute.xlu0 %1855
        %1858 = vset.pattern.permute.xlu0 8
        %1859 = vperm.xlu0 %1858, %v518
        %v1860 = vpop.permute.xlu0 %1859
        %1862 = vset.pattern.permute.xlu0 8
        %1863 = vperm.xlu0 %1862, %v519
        %v1864 = vpop.permute.xlu0 %1863
        %1866 = vset.pattern.permute.xlu0 8
        %1867 = vperm.xlu0 %1866, %v520
        %v1868 = vpop.permute.xlu0 %1867
        %1870 = vset.pattern.permute.xlu0 8
        %1871 = vperm.xlu0 %1870, %v521
        %v1872 = vpop.permute.xlu0 %1871
        %1874 = vset.pattern.permute.xlu0 8
        %1875 = vperm.xlu0 %1874, %v522
        %v1876 = vpop.permute.xlu0 %1875
        %1878 = vset.pattern.permute.xlu0 8
        %1879 = vperm.xlu0 %1878, %v523
        %v1880 = vpop.permute.xlu0 %1879
        %1882 = vset.pattern.permute.xlu0 8
        %1883 = vperm.xlu0 %1882, %v524
        %v1884 = vpop.permute.xlu0 %1883
        %1886 = vset.pattern.permute.xlu0 8
        %1887 = vperm.xlu0 %1886, %v525
        %v1888 = vpop.permute.xlu0 %1887
        %1890 = vset.pattern.permute.xlu0 8
        %1891 = vperm.xlu0 %1890, %v526
        %v1892 = vpop.permute.xlu0 %1891
        %1894 = vset.pattern.permute.xlu0 8
        %1895 = vperm.xlu0 %1894, %v527
        %v1896 = vpop.permute.xlu0 %1895
        %1898 = vset.pattern.permute.xlu0 8
        %1899 = vperm.xlu0 %1898, %v528
        %v1900 = vpop.permute.xlu0 %1899
        %1902 = vset.pattern.permute.xlu0 8
        %1903 = vperm.xlu0 %1902, %v529
        %v1904 = vpop.permute.xlu0 %1903
        %1906 = vset.pattern.permute.xlu0 8
        %1907 = vperm.xlu0 %1906, %v530
        %v1908 = vpop.permute.xlu0 %1907
        %1910 = vset.pattern.permute.xlu0 8
        %1911 = vperm.xlu0 %1910, %v531
        %v1912 = vpop.permute.xlu0 %1911
        %1914 = vset.pattern.permute.xlu0 8
        %1915 = vperm.xlu0 %1914, %v532
        %v1916 = vpop.permute.xlu0 %1915
        %1918 = vset.pattern.permute.xlu0 8
        %1919 = vperm.xlu0 %1918, %v533
        %v1920 = vpop.permute.xlu0 %1919
        %1922 = vset.pattern.permute.xlu0 8
        %1923 = vperm.xlu0 %1922, %v534
        %v1924 = vpop.permute.xlu0 %1923
        %1926 = vset.pattern.permute.xlu0 8
        %1927 = vperm.xlu0 %1926, %v535
        %v1928 = vpop.permute.xlu0 %1927
        %1930 = vset.pattern.permute.xlu0 8
        %1931 = vperm.xlu0 %1930, %v536
        %v1932 = vpop.permute.xlu0 %1931
        %1934 = vset.pattern.permute.xlu0 8
        %1935 = vperm.xlu0 %1934, %v537
        %v1936 = vpop.permute.xlu0 %1935
        %1938 = vset.pattern.permute.xlu0 8
        %1939 = vperm.xlu0 %1938, %v538
        %v1940 = vpop.permute.xlu0 %1939
        %1942 = vset.pattern.permute.xlu0 8
        %1943 = vperm.xlu0 %1942, %v539
        %v1944 = vpop.permute.xlu0 %1943
        %1946 = vset.pattern.permute.xlu0 8
        %1947 = vperm.xlu0 %1946, %v540
        %v1948 = vpop.permute.xlu0 %1947
        %1950 = vset.pattern.permute.xlu0 8
        %1951 = vperm.xlu0 %1950, %v541
        %v1952 = vpop.permute.xlu0 %1951
        %v1954 = vlaneseq
        %v1955 = vshrl.u32 %v1954, 7
        %v1956 = vsub.s32 0, %v1955
        %v1957 = vrot.slane %v543, %v1956
        %v1958 = vmul.f32 %v1852, %v1957
        %v1959 = vmul.f32 %v1856, %v1957
        %v1960 = vmul.f32 %v1860, %v1957
        %v1961 = vmul.f32 %v1864, %v1957
        %v1962 = vmul.f32 %v1868, %v1957
        %v1963 = vmul.f32 %v1872, %v1957
        %v1964 = vmul.f32 %v1876, %v1957
        %v1965 = vmul.f32 %v1880, %v1957
        %v1966 = vmul.f32 %v1884, %v1957
        %v1967 = vmul.f32 %v1888, %v1957
        %v1968 = vmul.f32 %v1892, %v1957
        %v1969 = vmul.f32 %v1896, %v1957
        %v1970 = vmul.f32 %v1900, %v1957
        %v1971 = vmul.f32 %v1904, %v1957
        %v1972 = vmul.f32 %v1908, %v1957
        %v1973 = vmul.f32 %v1912, %v1957
        %v1974 = vmul.f32 %v1916, %v1957
        %v1975 = vmul.f32 %v1920, %v1957
        %v1976 = vmul.f32 %v1924, %v1957
        %v1977 = vmul.f32 %v1928, %v1957
        %v1978 = vmul.f32 %v1932, %v1957
        %v1979 = vmul.f32 %v1936, %v1957
        %v1980 = vmul.f32 %v1940, %v1957
        %v1981 = vmul.f32 %v1944, %v1957
        %v1982 = vmul.f32 %v1948, %v1957
        %v1983 = vmul.f32 %v1952, %v1957
        %v1984 = vadd.f32 %v1824, %v1958
        %v1985 = vadd.f32 %v1825, %v1959
        %v1986 = vadd.f32 %v1826, %v1960
        %v1987 = vadd.f32 %v1827, %v1961
        %v1988 = vadd.f32 %v1828, %v1962
        %v1989 = vadd.f32 %v1829, %v1963
        %v1990 = vadd.f32 %v1830, %v1964
        %v1991 = vadd.f32 %v1831, %v1965
        %v1992 = vadd.f32 %v1832, %v1966
        %v1993 = vadd.f32 %v1833, %v1967
        %v1994 = vadd.f32 %v1834, %v1968
        %v1995 = vadd.f32 %v1835, %v1969
        %v1996 = vadd.f32 %v1836, %v1970
        %v1997 = vadd.f32 %v1837, %v1971
        %v1998 = vadd.f32 %v1838, %v1972
        %v1999 = vadd.f32 %v1839, %v1973
        %v2000 = vadd.f32 %v1840, %v1974
        %v2001 = vadd.f32 %v1841, %v1975
        %v2002 = vadd.f32 %v1842, %v1976
        %v2003 = vadd.f32 %v1843, %v1977
        %v2004 = vadd.f32 %v1844, %v1978
        %v2005 = vadd.f32 %v1845, %v1979
        %v2006 = vadd.f32 %v1846, %v1980
        %v2007 = vadd.f32 %v1847, %v1981
        %v2008 = vadd.f32 %v1848, %v1982
        %v2009 = vadd.f32 %v1849, %v1983
        %v2010 = vld [vmem:[%s2] sm:$0x1]
        %v2012 = vlaneseq
        %v2013 = vshrl.u32 %v2012, 7
        %v2014 = vsub.s32 0, %v2013
        %v2015 = vrot.slane %v2010, %v2014
        %v2017 = vadd.f32 %v1984, %v2015
        %v2018 = vadd.f32 %v1985, %v2015
        %v2019 = vadd.f32 %v1986, %v2015
        %v2020 = vadd.f32 %v1987, %v2015
        %v2021 = vadd.f32 %v1988, %v2015
        %v2022 = vadd.f32 %v1989, %v2015
        %v2023 = vadd.f32 %v1990, %v2015
        %v2024 = vadd.f32 %v1991, %v2015
        %v2025 = vadd.f32 %v1992, %v2015
        %v2026 = vadd.f32 %v1993, %v2015
        %v2027 = vadd.f32 %v1994, %v2015
        %v2028 = vadd.f32 %v1995, %v2015
        %v2029 = vadd.f32 %v1996, %v2015
        %v2030 = vadd.f32 %v1997, %v2015
        %v2031 = vadd.f32 %v1998, %v2015
        %v2032 = vadd.f32 %v1999, %v2015
        %v2033 = vadd.f32 %v2000, %v2015
        %v2034 = vadd.f32 %v2001, %v2015
        %v2035 = vadd.f32 %v2002, %v2015
        %v2036 = vadd.f32 %v2003, %v2015
        %v2037 = vadd.f32 %v2004, %v2015
        %v2038 = vadd.f32 %v2005, %v2015
        %v2039 = vadd.f32 %v2006, %v2015
        %v2040 = vadd.f32 %v2007, %v2015
        %v2041 = vadd.f32 %v2008, %v2015
        %v2042 = vadd.f32 %v2009, %v2015
        %v2043 = vmax.f32 %v2017, 0.0
        %v2044 = vmax.f32 %v2018, 0.0
        %v2045 = vmax.f32 %v2019, 0.0
        %v2046 = vmax.f32 %v2020, 0.0
        %v2047 = vmax.f32 %v2021, 0.0
        %v2048 = vmax.f32 %v2022, 0.0
        %v2049 = vmax.f32 %v2023, 0.0
        %v2050 = vmax.f32 %v2024, 0.0
        %v2051 = vmax.f32 %v2025, 0.0
        %v2052 = vmax.f32 %v2026, 0.0
        %v2053 = vmax.f32 %v2027, 0.0
        %v2054 = vmax.f32 %v2028, 0.0
        %v2055 = vmax.f32 %v2029, 0.0
        %v2056 = vmax.f32 %v2030, 0.0
        %v2057 = vmax.f32 %v2031, 0.0
        %v2058 = vmax.f32 %v2032, 0.0
        %v2059 = vmax.f32 %v2033, 0.0
        %v2060 = vmax.f32 %v2034, 0.0
        %v2061 = vmax.f32 %v2035, 0.0
        %v2062 = vmax.f32 %v2036, 0.0
        %v2063 = vmax.f32 %v2037, 0.0
        %v2064 = vmax.f32 %v2038, 0.0
        %v2065 = vmax.f32 %v2039, 0.0
        %v2066 = vmax.f32 %v2040, 0.0
        %v2067 = vmax.f32 %v2041, 0.0
        %v2068 = vmax.f32 %v2042, 0.0
        %v2069 = vpack.c.bf16 %v2044, %v2043
        %v2070 = vpack.c.bf16 %v2046, %v2045
        %v2071 = vpack.c.bf16 %v2048, %v2047
        %v2072 = vpack.c.bf16 %v2050, %v2049
        %v2073 = vpack.c.bf16 %v2052, %v2051
        %v2074 = vpack.c.bf16 %v2054, %v2053
        %v2075 = vpack.c.bf16 %v2056, %v2055
        %v2076 = vpack.c.bf16 %v2058, %v2057
        %v2077 = vpack.c.bf16 %v2060, %v2059
        %v2078 = vpack.c.bf16 %v2062, %v2061
        %v2079 = vpack.c.bf16 %v2064, %v2063
        %v2080 = vpack.c.bf16 %v2066, %v2065
        %v2081 = vpack.c.bf16 %v2068, %v2067
        %v2095 = vunpack.c.l.b16 %v2069
        %v2096 = vunpack.c.h.b16 %v2069
        %v2097 = vunpack.c.l.b16 %v2070
        %v2098 = vunpack.c.h.b16 %v2070
        %v2099 = vunpack.c.l.b16 %v2071
        %v2100 = vunpack.c.h.b16 %v2071
        %v2101 = vunpack.c.l.b16 %v2072
        %v2102 = vunpack.c.h.b16 %v2072
        %v2103 = vunpack.c.l.b16 %v2073
        %v2104 = vunpack.c.h.b16 %v2073
        %v2105 = vunpack.c.l.b16 %v2074
        %v2106 = vunpack.c.h.b16 %v2074
        %v2107 = vunpack.c.l.b16 %v2075
        %v2108 = vunpack.c.h.b16 %v2075
        %v2109 = vunpack.c.l.b16 %v2076
        %v2110 = vunpack.c.h.b16 %v2076
        %v2111 = vunpack.c.l.b16 %v2077
        %v2112 = vunpack.c.h.b16 %v2077
        %v2113 = vunpack.c.l.b16 %v2078
        %v2114 = vunpack.c.h.b16 %v2078
        %v2115 = vunpack.c.l.b16 %v2079
        %v2116 = vunpack.c.h.b16 %v2079
        %v2117 = vunpack.c.l.b16 %v2080
        %v2118 = vunpack.c.h.b16 %v2080
        %v2119 = vunpack.c.l.b16 %v2081
        %v2120 = vunpack.c.h.b16 %v2081
        %v2121 = vpack.c.b16 %v2095, %v2095
        %v2122 = vpack.c.b16 %v2096, %v2096
        %v2123 = vpack.c.b16 %v2097, %v2097
        %v2124 = vpack.c.b16 %v2098, %v2098
        %v2125 = vpack.c.b16 %v2099, %v2099
        %v2126 = vpack.c.b16 %v2100, %v2100
        %v2127 = vpack.c.b16 %v2101, %v2101
        %v2128 = vpack.c.b16 %v2102, %v2102
        %v2129 = vpack.c.b16 %v2103, %v2103
        %v2130 = vpack.c.b16 %v2104, %v2104
        %v2131 = vpack.c.b16 %v2105, %v2105
        %v2132 = vpack.c.b16 %v2106, %v2106
        %v2133 = vpack.c.b16 %v2107, %v2107
        %v2134 = vpack.c.b16 %v2108, %v2108
        %v2135 = vpack.c.b16 %v2109, %v2109
        %v2136 = vpack.c.b16 %v2110, %v2110
        %v2137 = vpack.c.b16 %v2111, %v2111
        %v2138 = vpack.c.b16 %v2112, %v2112
        %v2139 = vpack.c.b16 %v2113, %v2113
        %v2140 = vpack.c.b16 %v2114, %v2114
        %v2141 = vpack.c.b16 %v2115, %v2115
        %v2142 = vpack.c.b16 %v2116, %v2116
        %v2143 = vpack.c.b16 %v2117, %v2117
        %v2144 = vpack.c.b16 %v2118, %v2118
        %v2145 = vpack.c.b16 %v2119, %v2119
        %v2146 = vpack.c.b16 %v2120, %v2120
        %2173 = vst [vmem:[#allocation2] sm:$0xf] %v2121
        %2174 = vst [vmem:[#allocation2 + $0x4] sm:$0xf] %v2122
        %2175 = vst [vmem:[#allocation2 + $0xc] sm:$0xf] %v2123
        %2176 = vst [vmem:[#allocation2 + $0x10] sm:$0xf] %v2124
        %2177 = vst [vmem:[#allocation2 + $0x18] sm:$0xf] %v2125
        %2178 = vst [vmem:[#allocation2 + $0x1c] sm:$0xf] %v2126
        %2179 = vst [vmem:[#allocation2 + $0x24] sm:$0xf] %v2127
        %2180 = vst [vmem:[#allocation2 + $0x28] sm:$0xf] %v2128
        %2181 = vst [vmem:[#allocation2 + $0x30] sm:$0xf] %v2129
        %2182 = vst [vmem:[#allocation2 + $0x34] sm:$0xf] %v2130
        %2183 = vst [vmem:[#allocation2 + $0x3c] sm:$0xf] %v2131
        %2184 = vst [vmem:[#allocation2 + $0x40] sm:$0xf] %v2132
        %2185 = vst [vmem:[#allocation2 + $0x48] sm:$0xf] %v2133
        %2186 = vst [vmem:[#allocation2 + $0x4c] sm:$0xf] %v2134
        %2187 = vst [vmem:[#allocation2 + $0x54] sm:$0xf] %v2135
        %2188 = vst [vmem:[#allocation2 + $0x58] sm:$0xf] %v2136
        %2189 = vst [vmem:[#allocation2 + $0x60] sm:$0xf] %v2137
        %2190 = vst [vmem:[#allocation2 + $0x64] sm:$0xf] %v2138
        %2191 = vst [vmem:[#allocation2 + $0x6c] sm:$0xf] %v2139
        %2192 = vst [vmem:[#allocation2 + $0x70] sm:$0xf] %v2140
        %2193 = vst [vmem:[#allocation2 + $0x78] sm:$0xf] %v2141
        %2194 = vst [vmem:[#allocation2 + $0x7c] sm:$0xf] %v2142
        %2195 = vst [vmem:[#allocation2 + $0x84] sm:$0xf] %v2143
        %2196 = vst [vmem:[#allocation2 + $0x88] sm:$0xf] %v2144
        %2197 = vst [vmem:[#allocation2 + $0x90] sm:$0xf] %v2145
        %2198 = vst [vmem:[#allocation2 + $0x94] sm:$0xf] %v2146
        %v2199 = vld [vmem:[#allocation2] sm:$0xf]
        %v2200 = vld [vmem:[#allocation2 + $0x4] sm:$0xf]
        %v2201 = vld [vmem:[#allocation2 + $0xc] sm:$0xf]
        %v2202 = vld [vmem:[#allocation2 + $0x10] sm:$0xf]
        %v2203 = vld [vmem:[#allocation2 + $0x18] sm:$0xf]
        %v2204 = vld [vmem:[#allocation2 + $0x1c] sm:$0xf]
        %v2205 = vld [vmem:[#allocation2 + $0x24] sm:$0xf]
        %v2206 = vld [vmem:[#allocation2 + $0x28] sm:$0xf]
        %v2207 = vld [vmem:[#allocation2 + $0x30] sm:$0xf]
        %v2208 = vld [vmem:[#allocation2 + $0x34] sm:$0xf]
        %v2209 = vld [vmem:[#allocation2 + $0x3c] sm:$0xf]
        %v2210 = vld [vmem:[#allocation2 + $0x40] sm:$0xf]
        %v2211 = vld [vmem:[#allocation2 + $0x48] sm:$0xf]
        %v2212 = vld [vmem:[#allocation2 + $0x4c] sm:$0xf]
        %v2213 = vld [vmem:[#allocation2 + $0x54] sm:$0xf]
        %v2214 = vld [vmem:[#allocation2 + $0x58] sm:$0xf]
        %v2215 = vld [vmem:[#allocation2 + $0x60] sm:$0xf]
        %v2216 = vld [vmem:[#allocation2 + $0x64] sm:$0xf]
        %v2217 = vld [vmem:[#allocation2 + $0x6c] sm:$0xf]
        %v2218 = vld [vmem:[#allocation2 + $0x70] sm:$0xf]
        %v2219 = vld [vmem:[#allocation2 + $0x78] sm:$0xf]
        %v2220 = vld [vmem:[#allocation2 + $0x7c] sm:$0xf]
        %v2221 = vld [vmem:[%s3] sm:$0xf]
        %v2222 = vld [vmem:[%s3 + $0x4] sm:$0xf]
        %v2223 = vld [vmem:[%s3 + $0x8] sm:$0xf]
        %v2224 = vld [vmem:[%s3 + $0xc] sm:$0xf]
        %v2225 = vld [vmem:[%s3 + $0x10] sm:$0xf]
        %v2226 = vld [vmem:[%s3 + $0x14] sm:$0xf]
        %v2227 = vld [vmem:[%s3 + $0x18] sm:$0xf]
        %v2228 = vld [vmem:[%s3 + $0x1c] sm:$0xf]
        %v2229 = vld [vmem:[%s3 + $0x20] sm:$0xf]
        %v2230 = vld [vmem:[%s3 + $0x24] sm:$0xf]
        %v2231 = vld [vmem:[%s3 + $0x28] sm:$0xf]
        %v2232 = vld [vmem:[%s3 + $0x2c] sm:$0xf]
        %v2233 = vld [vmem:[%s3 + $0x30] sm:$0xf]
        %v2234 = vld [vmem:[%s3 + $0x34] sm:$0xf]
        %v2235 = vld [vmem:[%s3 + $0x38] sm:$0xf]
        %v2236 = vld [vmem:[%s3 + $0x3c] sm:$0xf]
        %v2237 = vld [vmem:[#allocation2 + $0x8] sm:$0x1]
        %v2238 = vld [vmem:[#allocation2 + $0x14] sm:$0x1]
        %v2239 = vld [vmem:[#allocation2 + $0x20] sm:$0x1]
        %v2240 = vld [vmem:[#allocation2 + $0x2c] sm:$0x1]
        %v2241 = vld [vmem:[#allocation2 + $0x38] sm:$0x1]
        %v2242 = vld [vmem:[#allocation2 + $0x44] sm:$0x1]
        %v2243 = vld [vmem:[#allocation2 + $0x50] sm:$0x1]
        %v2244 = vld [vmem:[#allocation2 + $0x5c] sm:$0x1]
        %v2245 = vld [vmem:[#allocation2 + $0x68] sm:$0x1]
        %v2246 = vld [vmem:[#allocation2 + $0x74] sm:$0x1]
        %v2247 = vld [vmem:[#allocation2 + $0x80] sm:$0x1]
        %vm2248 = vsmask.f32 3328
        %vm2249 = vsmask.f32 7440
        %vm2250 = vmor %vm2248, %vm2249
        %v2252 = vshrl.u32 %v2199, 16
        %v2254 = vrot.slane %v2252, 4
        %v2255 = vshll.u32 %v2199, 16
        %v2257 = vrot.slane %v2255, 5
        %v2258 = vor.u32 %v2254, %v2257
        %v2259 = vrot.slane %v2258, 4
        %v2261 = vshll.u32 %v2200, 16
        %v2263 = vrot.slane %v2261, 5
        %v2264 = vsel %vm2250, %v2259, %v2263
        %v2265 = vshrl.u32 %v2200, 16
        %v2267 = vrot.slane %v2265, 4
        %v2268 = vor.u32 %v2267, %v2263
        %v2269 = vrot.slane %v2268, 4
        %v2271 = vshll.u32 %v2237, 16
        %v2273 = vrot.slane %v2271, 5
        %v2274 = vsel %vm2250, %v2269, %v2273
        %v2276 = vshrl.u32 %v2201, 16
        %v2278 = vrot.slane %v2276, 4
        %v2279 = vshll.u32 %v2201, 16
        %v2281 = vrot.slane %v2279, 5
        %v2282 = vor.u32 %v2278, %v2281
        %v2283 = vrot.slane %v2282, 4
        %v2285 = vshll.u32 %v2202, 16
        %v2287 = vrot.slane %v2285, 5
        %v2288 = vsel %vm2250, %v2283, %v2287
        %v2289 = vshrl.u32 %v2202, 16
        %v2291 = vrot.slane %v2289, 4
        %v2292 = vor.u32 %v2291, %v2287
        %v2293 = vrot.slane %v2292, 4
        %v2295 = vshll.u32 %v2238, 16
        %v2297 = vrot.slane %v2295, 5
        %v2298 = vsel %vm2250, %v2293, %v2297
        %v2300 = vshrl.u32 %v2203, 16
        %v2302 = vrot.slane %v2300, 4
        %v2303 = vshll.u32 %v2203, 16
        %v2305 = vrot.slane %v2303, 5
        %v2306 = vor.u32 %v2302, %v2305
        %v2307 = vrot.slane %v2306, 4
        %v2309 = vshll.u32 %v2204, 16
        %v2311 = vrot.slane %v2309, 5
        %v2312 = vsel %vm2250, %v2307, %v2311
        %v2313 = vshrl.u32 %v2204, 16
        %v2315 = vrot.slane %v2313, 4
        %v2316 = vor.u32 %v2315, %v2311
        %v2317 = vrot.slane %v2316, 4
        %v2319 = vshll.u32 %v2239, 16
        %v2321 = vrot.slane %v2319, 5
        %v2322 = vsel %vm2250, %v2317, %v2321
        %v2324 = vshrl.u32 %v2205, 16
        %v2326 = vrot.slane %v2324, 4
        %v2327 = vshll.u32 %v2205, 16
        %v2329 = vrot.slane %v2327, 5
        %v2330 = vor.u32 %v2326, %v2329
        %v2331 = vrot.slane %v2330, 4
        %v2333 = vshll.u32 %v2206, 16
        %v2335 = vrot.slane %v2333, 5
        %v2336 = vsel %vm2250, %v2331, %v2335
        %v2337 = vshrl.u32 %v2206, 16
        %v2339 = vrot.slane %v2337, 4
        %v2340 = vor.u32 %v2339, %v2335
        %v2341 = vrot.slane %v2340, 4
        %v2343 = vshll.u32 %v2240, 16
        %v2345 = vrot.slane %v2343, 5
        %v2346 = vsel %vm2250, %v2341, %v2345
        %v2348 = vshrl.u32 %v2207, 16
        %v2350 = vrot.slane %v2348, 4
        %v2351 = vshll.u32 %v2207, 16
        %v2353 = vrot.slane %v2351, 5
        %v2354 = vor.u32 %v2350, %v2353
        %v2355 = vrot.slane %v2354, 4
        %v2357 = vshll.u32 %v2208, 16
        %v2359 = vrot.slane %v2357, 5
        %v2360 = vsel %vm2250, %v2355, %v2359
        %v2361 = vshrl.u32 %v2208, 16
        %v2363 = vrot.slane %v2361, 4
        %v2364 = vor.u32 %v2363, %v2359
        %v2365 = vrot.slane %v2364, 4
        %v2367 = vshll.u32 %v2241, 16
        %v2369 = vrot.slane %v2367, 5
        %v2370 = vsel %vm2250, %v2365, %v2369
        %v2372 = vshrl.u32 %v2209, 16
        %v2374 = vrot.slane %v2372, 4
        %v2375 = vshll.u32 %v2209, 16
        %v2377 = vrot.slane %v2375, 5
        %v2378 = vor.u32 %v2374, %v2377
        %v2379 = vrot.slane %v2378, 4
        %v2381 = vshll.u32 %v2210, 16
        %v2383 = vrot.slane %v2381, 5
        %v2384 = vsel %vm2250, %v2379, %v2383
        %v2385 = vshrl.u32 %v2210, 16
        %v2387 = vrot.slane %v2385, 4
        %v2388 = vor.u32 %v2387, %v2383
        %v2389 = vrot.slane %v2388, 4
        %v2391 = vshll.u32 %v2242, 16
        %v2393 = vrot.slane %v2391, 5
        %v2394 = vsel %vm2250, %v2389, %v2393
        %v2396 = vshrl.u32 %v2211, 16
        %v2398 = vrot.slane %v2396, 4
        %v2399 = vshll.u32 %v2211, 16
        %v2401 = vrot.slane %v2399, 5
        %v2402 = vor.u32 %v2398, %v2401
        %v2403 = vrot.slane %v2402, 4
        %v2405 = vshll.u32 %v2212, 16
        %v2407 = vrot.slane %v2405, 5
        %v2408 = vsel %vm2250, %v2403, %v2407
        %v2409 = vshrl.u32 %v2212, 16
        %v2411 = vrot.slane %v2409, 4
        %v2412 = vor.u32 %v2411, %v2407
        %v2413 = vrot.slane %v2412, 4
        %v2415 = vshll.u32 %v2243, 16
        %v2417 = vrot.slane %v2415, 5
        %v2418 = vsel %vm2250, %v2413, %v2417
        %v2420 = vshrl.u32 %v2213, 16
        %v2422 = vrot.slane %v2420, 4
        %v2423 = vshll.u32 %v2213, 16
        %v2425 = vrot.slane %v2423, 5
        %v2426 = vor.u32 %v2422, %v2425
        %v2427 = vrot.slane %v2426, 4
        %v2429 = vshll.u32 %v2214, 16
        %v2431 = vrot.slane %v2429, 5
        %v2432 = vsel %vm2250, %v2427, %v2431
        %v2433 = vshrl.u32 %v2214, 16
        %v2435 = vrot.slane %v2433, 4
        %v2436 = vor.u32 %v2435, %v2431
        %v2437 = vrot.slane %v2436, 4
        %v2439 = vshll.u32 %v2244, 16
        %v2441 = vrot.slane %v2439, 5
        %v2442 = vsel %vm2250, %v2437, %v2441
        %v2444 = vshrl.u32 %v2215, 16
        %v2446 = vrot.slane %v2444, 4
        %v2447 = vshll.u32 %v2215, 16
        %v2449 = vrot.slane %v2447, 5
        %v2450 = vor.u32 %v2446, %v2449
        %v2451 = vrot.slane %v2450, 4
        %v2453 = vshll.u32 %v2216, 16
        %v2455 = vrot.slane %v2453, 5
        %v2456 = vsel %vm2250, %v2451, %v2455
        %v2457 = vshrl.u32 %v2216, 16
        %v2459 = vrot.slane %v2457, 4
        %v2460 = vor.u32 %v2459, %v2455
        %v2461 = vrot.slane %v2460, 4
        %v2463 = vshll.u32 %v2245, 16
        %v2465 = vrot.slane %v2463, 5
        %v2466 = vsel %vm2250, %v2461, %v2465
        %v2468 = vshrl.u32 %v2217, 16
        %v2470 = vrot.slane %v2468, 4
        %v2471 = vshll.u32 %v2217, 16
        %v2473 = vrot.slane %v2471, 5
        %v2474 = vor.u32 %v2470, %v2473
        %v2475 = vrot.slane %v2474, 4
        %v2477 = vshll.u32 %v2218, 16
        %v2479 = vrot.slane %v2477, 5
        %v2480 = vsel %vm2250, %v2475, %v2479
        %v2481 = vshrl.u32 %v2218, 16
        %v2483 = vrot.slane %v2481, 4
        %v2484 = vor.u32 %v2483, %v2479
        %v2485 = vrot.slane %v2484, 4
        %v2487 = vshll.u32 %v2246, 16
        %v2489 = vrot.slane %v2487, 5
        %v2490 = vsel %vm2250, %v2485, %v2489
        %v2492 = vshrl.u32 %v2219, 16
        %v2494 = vrot.slane %v2492, 4
        %v2495 = vshll.u32 %v2219, 16
        %v2497 = vrot.slane %v2495, 5
        %v2498 = vor.u32 %v2494, %v2497
        %v2499 = vrot.slane %v2498, 4
        %v2501 = vshll.u32 %v2220, 16
        %v2503 = vrot.slane %v2501, 5
        %v2504 = vsel %vm2250, %v2499, %v2503
        %v2505 = vshrl.u32 %v2220, 16
        %v2507 = vrot.slane %v2505, 4
        %v2508 = vor.u32 %v2507, %v2503
        %v2509 = vrot.slane %v2508, 4
        %v2511 = vshll.u32 %v2247, 16
        %v2513 = vrot.slane %v2511, 5
        %v2514 = vsel %vm2250, %v2509, %v2513
        %s2515 = scalar_lea.vmem %s3, 64
        %v2516 = vld [vmem:[%s2515] sm:$0xf]
        %v2517 = vld [vmem:[%s2515 + $0x4] sm:$0xf]
        %v2518 = vld [vmem:[%s2515 + $0x8] sm:$0xf]
        %v2519 = vld [vmem:[%s2515 + $0xc] sm:$0xf]
        %v2520 = vld [vmem:[%s2515 + $0x10] sm:$0xf]
        %v2521 = vld [vmem:[%s2515 + $0x14] sm:$0xf]
        %v2522 = vld [vmem:[%s2515 + $0x18] sm:$0xf]
        %v2523 = vld [vmem:[%s2515 + $0x1c] sm:$0xf]
        %v2524 = vld [vmem:[%s2515 + $0x20] sm:$0xf]
        %v2525 = vld [vmem:[%s2515 + $0x24] sm:$0xf]
        %v2526 = vld [vmem:[%s2515 + $0x28] sm:$0xf]
        %v2527 = vld [vmem:[%s2515 + $0x2c] sm:$0xf]
        %v2528 = vld [vmem:[%s2515 + $0x30] sm:$0xf]
        %v2529 = vld [vmem:[%s2515 + $0x34] sm:$0xf]
        %v2530 = vld [vmem:[%s2515 + $0x38] sm:$0xf]
        %v2531 = vld [vmem:[%s2515 + $0x3c] sm:$0xf]
        %v2532 = vunpack.c.l.b16 %v2264
        %v2533 = vunpack.c.l.b16 %v2274
        %v2534 = vunpack.c.l.b16 %v2288
        %v2535 = vunpack.c.l.b16 %v2298
        %v2536 = vunpack.c.l.b16 %v2312
        %v2537 = vunpack.c.l.b16 %v2322
        %v2538 = vunpack.c.l.b16 %v2336
        %v2539 = vunpack.c.l.b16 %v2346
        %v2540 = vunpack.c.l.b16 %v2360
        %v2541 = vunpack.c.l.b16 %v2370
        %v2542 = vunpack.c.l.b16 %v2384
        %v2543 = vunpack.c.l.b16 %v2394
        %v2544 = vunpack.c.l.b16 %v2408
        %v2545 = vunpack.c.l.b16 %v2418
        %v2546 = vunpack.c.l.b16 %v2432
        %v2547 = vunpack.c.l.b16 %v2442
        %v2548 = vunpack.c.l.b16 %v2456
        %v2549 = vunpack.c.l.b16 %v2466
        %v2550 = vunpack.c.l.b16 %v2480
        %v2551 = vunpack.c.l.b16 %v2490
        %v2552 = vunpack.c.l.b16 %v2504
        %v2553 = vunpack.c.l.b16 %v2514
        %v2554 = vpack.c.b16 %v2533, %v2532
        %v2555 = vpack.c.b16 %v2535, %v2534
        %v2556 = vpack.c.b16 %v2537, %v2536
        %v2557 = vpack.c.b16 %v2539, %v2538
        %v2558 = vpack.c.b16 %v2541, %v2540
        %v2559 = vpack.c.b16 %v2543, %v2542
        %v2560 = vpack.c.b16 %v2545, %v2544
        %v2561 = vpack.c.b16 %v2547, %v2546
        %v2562 = vpack.c.b16 %v2549, %v2548
        %v2563 = vpack.c.b16 %v2551, %v2550
        %v2564 = vpack.c.b16 %v2553, %v2552
        %v2592 = vunpack.c.l.b16 %v2516
        %v2593 = vunpack.c.l.b16 %v2517
        %v2594 = vunpack.c.l.b16 %v2518
        %v2595 = vunpack.c.l.b16 %v2519
        %v2596 = vunpack.c.l.b16 %v2520
        %v2597 = vunpack.c.l.b16 %v2521
        %v2598 = vunpack.c.l.b16 %v2522
        %v2599 = vunpack.c.l.b16 %v2523
        %v2600 = vunpack.c.l.b16 %v2524
        %v2601 = vunpack.c.l.b16 %v2525
        %v2602 = vunpack.c.l.b16 %v2526
        %v2603 = vunpack.c.l.b16 %v2527
        %v2604 = vunpack.c.l.b16 %v2528
        %v2605 = vunpack.c.l.b16 %v2529
        %v2606 = vunpack.c.l.b16 %v2530
        %v2607 = vunpack.c.l.b16 %v2531
        %v2608 = vpack.c.b16 %v2593, %v2592
        %v2609 = vpack.c.b16 %v2595, %v2594
        %v2610 = vpack.c.b16 %v2597, %v2596
        %v2611 = vpack.c.b16 %v2599, %v2598
        %v2612 = vpack.c.b16 %v2601, %v2600
        %v2613 = vpack.c.b16 %v2603, %v2602
        %v2614 = vpack.c.b16 %v2605, %v2604
        %v2615 = vpack.c.b16 %v2607, %v2606
        %2624 = vmatprep.subr.bf16.mxu0 0
        %2625 = vmatpush1.bf16.msra.mxu0 %v2608
        %2626 = vmatprep.subr.bf16.mxu0 0
        %2627 = vmatpush1.bf16.msra.mxu0 %v2609
        %2628 = vmatprep.subr.bf16.mxu0 0
        %2629 = vmatpush1.bf16.msra.mxu0 %v2610
        %2630 = vmatprep.subr.bf16.mxu0 0
        %2631 = vmatpush1.bf16.msra.mxu0 %v2611
        %2632 = vmatprep.subr.bf16.mxu0 0
        %2633 = vmatpush1.bf16.msra.mxu0 %v2612
        %2634 = vmatprep.subr.bf16.mxu0 0
        %2635 = vmatpush1.bf16.msra.mxu0 %v2613
        %2636 = vmatprep.subr.bf16.mxu0 0
        %2637 = vmatpush1.bf16.msra.mxu0 %v2614
        %2638 = vmatprep.subr.bf16.mxu0 0
        %2639 = vmatpush1.bf16.msra.mxu0 %v2615
        %2640 = vmatprep.subr.bf16.mxu0 0
        %2641 = vmatpush1.bf16.msra.mxu0 0
        %2642 = vmatprep.subr.bf16.mxu0 0
        %2643 = vmatpush1.bf16.msra.mxu0 0
        %2644 = vmatprep.subr.bf16.mxu0 0
        %2645 = vmatpush1.bf16.msra.mxu0 0
        %2646 = vmatprep.subr.bf16.mxu0 0
        %2647 = vmatpush1.bf16.msra.mxu0 0
        %2648 = vmatprep.subr.bf16.mxu0 0
        %2649 = vmatpush1.bf16.msra.mxu0 0
        %2650 = vmatprep.subr.bf16.mxu0 0
        %2651 = vmatpush1.bf16.msra.mxu0 0
        %2652 = vmatprep.subr.bf16.mxu0 0
        %2653 = vmatpush1.bf16.msra.mxu0 0
        %2654 = vmatprep.subr.bf16.mxu0 0
        %2655 = vmatpush1.bf16.msra.mxu0 0
        %2656 = vmatprep.mubr.bf16.mxu0 0
        %2657 = vmatmul.mubr.bf16.gmra.mrb[0].mxu0 %v2554
        %v2658 = vpop.f32.mrb[0].mxu0
        %v2659 = vadd.f32 0.0, %v2658
        %v2660 = vpop.f32.mrb[0].mxu0
        %v2661 = vpop.f32.mrb[0].mxu0
        %v2662 = vadd.f32 0.0, %v2661
        %v2663 = vpop.f32.mrb[0].mxu0
        %2664 = vmatprep.mubr.bf16.mxu0 0
        %2665 = vmatmul.mubr.bf16.gmra.mrb[0].mxu0 %v2555
        %v2666 = vpop.f32.mrb[0].mxu0
        %v2667 = vadd.f32 0.0, %v2666
        %v2668 = vpop.f32.mrb[0].mxu0
        %v2669 = vpop.f32.mrb[0].mxu0
        %v2670 = vadd.f32 0.0, %v2669
        %v2671 = vpop.f32.mrb[0].mxu0
        %2672 = vmatprep.mubr.bf16.mxu0 0
        %2673 = vmatmul.mubr.bf16.gmra.mrb[0].mxu0 %v2556
        %v2674 = vpop.f32.mrb[0].mxu0
        %v2675 = vadd.f32 0.0, %v2674
        %v2676 = vpop.f32.mrb[0].mxu0
        %v2677 = vpop.f32.mrb[0].mxu0
        %v2678 = vadd.f32 0.0, %v2677
        %v2679 = vpop.f32.mrb[0].mxu0
        %2680 = vmatprep.mubr.bf16.mxu0 0
        %2681 = vmatmul.mubr.bf16.gmra.mrb[0].mxu0 %v2557
        %v2682 = vpop.f32.mrb[0].mxu0
        %v2683 = vadd.f32 0.0, %v2682
        %v2684 = vpop.f32.mrb[0].mxu0
        %v2685 = vpop.f32.mrb[0].mxu0
        %v2686 = vadd.f32 0.0, %v2685
        %v2687 = vpop.f32.mrb[0].mxu0
        %2688 = vmatprep.mubr.bf16.mxu0 0
        %2689 = vmatmul.mubr.bf16.gmra.mrb[0].mxu0 %v2558
        %v2690 = vpop.f32.mrb[0].mxu0
        %v2691 = vadd.f32 0.0, %v2690
        %v2692 = vpop.f32.mrb[0].mxu0
        %v2693 = vpop.f32.mrb[0].mxu0
        %v2694 = vadd.f32 0.0, %v2693
        %v2695 = vpop.f32.mrb[0].mxu0
        %2696 = vmatprep.mubr.bf16.mxu0 0
        %2697 = vmatmul.mubr.bf16.gmra.mrb[0].mxu0 %v2559
        %v2698 = vpop.f32.mrb[0].mxu0
        %v2699 = vadd.f32 0.0, %v2698
        %v2700 = vpop.f32.mrb[0].mxu0
        %v2701 = vpop.f32.mrb[0].mxu0
        %v2702 = vadd.f32 0.0, %v2701
        %v2703 = vpop.f32.mrb[0].mxu0
        %2704 = vmatprep.mubr.bf16.mxu0 0
        %2705 = vmatmul.mubr.bf16.gmra.mrb[0].mxu0 %v2560
        %v2706 = vpop.f32.mrb[0].mxu0
        %v2707 = vadd.f32 0.0, %v2706
        %v2708 = vpop.f32.mrb[0].mxu0
        %v2709 = vpop.f32.mrb[0].mxu0
        %v2710 = vadd.f32 0.0, %v2709
        %v2711 = vpop.f32.mrb[0].mxu0
        %2712 = vmatprep.mubr.bf16.mxu0 0
        %2713 = vmatmul.mubr.bf16.gmra.mrb[0].mxu0 %v2561
        %v2714 = vpop.f32.mrb[0].mxu0
        %v2715 = vadd.f32 0.0, %v2714
        %v2716 = vpop.f32.mrb[0].mxu0
        %v2717 = vpop.f32.mrb[0].mxu0
        %v2718 = vadd.f32 0.0, %v2717
        %v2719 = vpop.f32.mrb[0].mxu0
        %2720 = vmatprep.mubr.bf16.mxu0 0
        %2721 = vmatmul.mubr.bf16.gmra.mrb[0].mxu0 %v2562
        %v2722 = vpop.f32.mrb[0].mxu0
        %v2723 = vadd.f32 0.0, %v2722
        %v2724 = vpop.f32.mrb[0].mxu0
        %v2725 = vpop.f32.mrb[0].mxu0
        %v2726 = vadd.f32 0.0, %v2725
        %v2727 = vpop.f32.mrb[0].mxu0
        %2728 = vmatprep.mubr.bf16.mxu0 0
        %2729 = vmatmul.mubr.bf16.gmra.mrb[0].mxu0 %v2563
        %v2730 = vpop.f32.mrb[0].mxu0
        %v2731 = vadd.f32 0.0, %v2730
        %v2732 = vpop.f32.mrb[0].mxu0
        %v2733 = vpop.f32.mrb[0].mxu0
        %v2734 = vadd.f32 0.0, %v2733
        %v2735 = vpop.f32.mrb[0].mxu0
        %2736 = vmatprep.mubr.bf16.mxu0 0
        %2737 = vmatmul.mubr.bf16.gmra.mrb[0].mxu0 %v2564
        %v2738 = vpop.f32.mrb[0].mxu0
        %v2739 = vadd.f32 0.0, %v2738
        %v2740 = vpop.f32.mrb[0].mxu0
        %v2741 = vpop.f32.mrb[0].mxu0
        %v2742 = vadd.f32 0.0, %v2741
        %v2743 = vpop.f32.mrb[0].mxu0
        %2744 = vdwg.mxu0
        %v2767 = vunpack.c.l.b16 %v2199
        %v2768 = vunpack.c.l.b16 %v2200
        %v2769 = vunpack.c.l.b16 %v2201
        %v2770 = vunpack.c.l.b16 %v2202
        %v2771 = vunpack.c.l.b16 %v2203
        %v2772 = vunpack.c.l.b16 %v2204
        %v2773 = vunpack.c.l.b16 %v2205
        %v2774 = vunpack.c.l.b16 %v2206
        %v2775 = vunpack.c.l.b16 %v2207
        %v2776 = vunpack.c.l.b16 %v2208
        %v2777 = vunpack.c.l.b16 %v2209
        %v2778 = vunpack.c.l.b16 %v2210
        %v2779 = vunpack.c.l.b16 %v2211
        %v2780 = vunpack.c.l.b16 %v2212
        %v2781 = vunpack.c.l.b16 %v2213
        %v2782 = vunpack.c.l.b16 %v2214
        %v2783 = vunpack.c.l.b16 %v2215
        %v2784 = vunpack.c.l.b16 %v2216
        %v2785 = vunpack.c.l.b16 %v2217
        %v2786 = vunpack.c.l.b16 %v2218
        %v2787 = vunpack.c.l.b16 %v2219
        %v2788 = vunpack.c.l.b16 %v2220
        %v2789 = vpack.c.b16 %v2768, %v2767
        %v2790 = vpack.c.b16 %v2770, %v2769
        %v2791 = vpack.c.b16 %v2772, %v2771
        %v2792 = vpack.c.b16 %v2774, %v2773
        %v2793 = vpack.c.b16 %v2776, %v2775
        %v2794 = vpack.c.b16 %v2778, %v2777
        %v2795 = vpack.c.b16 %v2780, %v2779
        %v2796 = vpack.c.b16 %v2782, %v2781
        %v2797 = vpack.c.b16 %v2784, %v2783
        %v2798 = vpack.c.b16 %v2786, %v2785
        %v2799 = vpack.c.b16 %v2788, %v2787
        %v2827 = vunpack.c.l.b16 %v2221
        %v2828 = vunpack.c.l.b16 %v2222
        %v2829 = vunpack.c.l.b16 %v2223
        %v2830 = vunpack.c.l.b16 %v2224
        %v2831 = vunpack.c.l.b16 %v2225
        %v2832 = vunpack.c.l.b16 %v2226
        %v2833 = vunpack.c.l.b16 %v2227
        %v2834 = vunpack.c.l.b16 %v2228
        %v2835 = vunpack.c.l.b16 %v2229
        %v2836 = vunpack.c.l.b16 %v2230
        %v2837 = vunpack.c.l.b16 %v2231
        %v2838 = vunpack.c.l.b16 %v2232
        %v2839 = vunpack.c.l.b16 %v2233
        %v2840 = vunpack.c.l.b16 %v2234
        %v2841 = vunpack.c.l.b16 %v2235
        %v2842 = vunpack.c.l.b16 %v2236
        %v2843 = vpack.c.b16 %v2828, %v2827
        %v2844 = vpack.c.b16 %v2830, %v2829
        %v2845 = vpack.c.b16 %v2832, %v2831
        %v2846 = vpack.c.b16 %v2834, %v2833
        %v2847 = vpack.c.b16 %v2836, %v2835
        %v2848 = vpack.c.b16 %v2838, %v2837
        %v2849 = vpack.c.b16 %v2840, %v2839
        %v2850 = vpack.c.b16 %v2842, %v2841
        %2859 = vmatprep.subr.bf16.mxu0 0
        %2860 = vmatpush1.bf16.msra.mxu0 %v2843
        %2861 = vmatprep.subr.bf16.mxu0 0
        %2862 = vmatpush1.bf16.msra.mxu0 %v2844
        %2863 = vmatprep.subr.bf16.mxu0 0
        %2864 = vmatpush1.bf16.msra.mxu0 %v2845
        %2865 = vmatprep.subr.bf16.mxu0 0
        %2866 = vmatpush1.bf16.msra.mxu0 %v2846
        %2867 = vmatprep.subr.bf16.mxu0 0
        %2868 = vmatpush1.bf16.msra.mxu0 %v2847
        %2869 = vmatprep.subr.bf16.mxu0 0
        %2870 = vmatpush1.bf16.msra.mxu0 %v2848
        %2871 = vmatprep.subr.bf16.mxu0 0
        %2872 = vmatpush1.bf16.msra.mxu0 %v2849
        %2873 = vmatprep.subr.bf16.mxu0 0
        %2874 = vmatpush1.bf16.msra.mxu0 %v2850
        %2875 = vmatprep.subr.bf16.mxu0 0
        %2876 = vmatpush1.bf16.msra.mxu0 0
        %2877 = vmatprep.subr.bf16.mxu0 0
        %2878 = vmatpush1.bf16.msra.mxu0 0
        %2879 = vmatprep.subr.bf16.mxu0 0
        %2880 = vmatpush1.bf16.msra.mxu0 0
        %2881 = vmatprep.subr.bf16.mxu0 0
        %2882 = vmatpush1.bf16.msra.mxu0 0
        %2883 = vmatprep.subr.bf16.mxu0 0
        %2884 = vmatpush1.bf16.msra.mxu0 0
        %2885 = vmatprep.subr.bf16.mxu0 0
        %2886 = vmatpush1.bf16.msra.mxu0 0
        %2887 = vmatprep.subr.bf16.mxu0 0
        %2888 = vmatpush1.bf16.msra.mxu0 0
        %2889 = vmatprep.subr.bf16.mxu0 0
        %2890 = vmatpush1.bf16.msra.mxu0 0
        %2891 = vmatprep.mubr.bf16.mxu0 0
        %2892 = vmatmul.mubr.bf16.gmra.mrb[0].mxu0 %v2789
        %v2893 = vpop.f32.mrb[0].mxu0
        %v2894 = vadd.f32 %v2659, %v2893
        %v2895 = vpop.f32.mrb[0].mxu0
        %v2896 = vpop.f32.mrb[0].mxu0
        %v2897 = vadd.f32 %v2662, %v2896
        %v2898 = vpop.f32.mrb[0].mxu0
        %2899 = vmatprep.mubr.bf16.mxu0 0
        %2900 = vmatmul.mubr.bf16.gmra.mrb[0].mxu0 %v2790
        %v2901 = vpop.f32.mrb[0].mxu0
        %v2902 = vadd.f32 %v2667, %v2901
        %v2903 = vpop.f32.mrb[0].mxu0
        %v2904 = vpop.f32.mrb[0].mxu0
        %v2905 = vadd.f32 %v2670, %v2904
        %v2906 = vpop.f32.mrb[0].mxu0
        %2907 = vmatprep.mubr.bf16.mxu0 0
        %2908 = vmatmul.mubr.bf16.gmra.mrb[0].mxu0 %v2791
        %v2909 = vpop.f32.mrb[0].mxu0
        %v2910 = vadd.f32 %v2675, %v2909
        %v2911 = vpop.f32.mrb[0].mxu0
        %v2912 = vpop.f32.mrb[0].mxu0
        %v2913 = vadd.f32 %v2678, %v2912
        %v2914 = vpop.f32.mrb[0].mxu0
        %2915 = vmatprep.mubr.bf16.mxu0 0
        %2916 = vmatmul.mubr.bf16.gmra.mrb[0].mxu0 %v2792
        %v2917 = vpop.f32.mrb[0].mxu0
        %v2918 = vadd.f32 %v2683, %v2917
        %v2919 = vpop.f32.mrb[0].mxu0
        %v2920 = vpop.f32.mrb[0].mxu0
        %v2921 = vadd.f32 %v2686, %v2920
        %v2922 = vpop.f32.mrb[0].mxu0
        %2923 = vmatprep.mubr.bf16.mxu0 0
        %2924 = vmatmul.mubr.bf16.gmra.mrb[0].mxu0 %v2793
        %v2925 = vpop.f32.mrb[0].mxu0
        %v2926 = vadd.f32 %v2691, %v2925
        %v2927 = vpop.f32.mrb[0].mxu0
        %v2928 = vpop.f32.mrb[0].mxu0
        %v2929 = vadd.f32 %v2694, %v2928
        %v2930 = vpop.f32.mrb[0].mxu0
        %2931 = vmatprep.mubr.bf16.mxu0 0
        %2932 = vmatmul.mubr.bf16.gmra.mrb[0].mxu0 %v2794
        %v2933 = vpop.f32.mrb[0].mxu0
        %v2934 = vadd.f32 %v2699, %v2933
        %v2935 = vpop.f32.mrb[0].mxu0
        %v2936 = vpop.f32.mrb[0].mxu0
        %v2937 = vadd.f32 %v2702, %v2936
        %v2938 = vpop.f32.mrb[0].mxu0
        %2939 = vmatprep.mubr.bf16.mxu0 0
        %2940 = vmatmul.mubr.bf16.gmra.mrb[0].mxu0 %v2795
        %v2941 = vpop.f32.mrb[0].mxu0
        %v2942 = vadd.f32 %v2707, %v2941
        %v2943 = vpop.f32.mrb[0].mxu0
        %v2944 = vpop.f32.mrb[0].mxu0
        %v2945 = vadd.f32 %v2710, %v2944
        %v2946 = vpop.f32.mrb[0].mxu0
        %2947 = vmatprep.mubr.bf16.mxu0 0
        %2948 = vmatmul.mubr.bf16.gmra.mrb[0].mxu0 %v2796
        %v2949 = vpop.f32.mrb[0].mxu0
        %v2950 = vadd.f32 %v2715, %v2949
        %v2951 = vpop.f32.mrb[0].mxu0
        %v2952 = vpop.f32.mrb[0].mxu0
        %v2953 = vadd.f32 %v2718, %v2952
        %v2954 = vpop.f32.mrb[0].mxu0
        %2955 = vmatprep.mubr.bf16.mxu0 0
        %2956 = vmatmul.mubr.bf16.gmra.mrb[0].mxu0 %v2797
        %v2957 = vpop.f32.mrb[0].mxu0
        %v2958 = vadd.f32 %v2723, %v2957
        %v2959 = vpop.f32.mrb[0].mxu0
        %v2960 = vpop.f32.mrb[0].mxu0
        %v2961 = vadd.f32 %v2726, %v2960
        %v2962 = vpop.f32.mrb[0].mxu0
        %2963 = vmatprep.mubr.bf16.mxu0 0
        %2964 = vmatmul.mubr.bf16.gmra.mrb[0].mxu0 %v2798
        %v2965 = vpop.f32.mrb[0].mxu0
        %v2966 = vadd.f32 %v2731, %v2965
        %v2967 = vpop.f32.mrb[0].mxu0
        %v2968 = vpop.f32.mrb[0].mxu0
        %v2969 = vadd.f32 %v2734, %v2968
        %v2970 = vpop.f32.mrb[0].mxu0
        %2971 = vmatprep.mubr.bf16.mxu0 0
        %2972 = vmatmul.mubr.bf16.gmra.mrb[0].mxu0 %v2799
        %v2973 = vpop.f32.mrb[0].mxu0
        %v2974 = vadd.f32 %v2739, %v2973
        %v2975 = vpop.f32.mrb[0].mxu0
        %v2976 = vpop.f32.mrb[0].mxu0
        %v2977 = vadd.f32 %v2742, %v2976
        %v2978 = vpop.f32.mrb[0].mxu0
        %2979 = vdwg.mxu0
        %v2980 = vld [vmem:[#allocation2] sm:$0xe]
        %v2981 = vld [vmem:[#allocation2 + $0xc] sm:$0xe]
        %v2982 = vld [vmem:[#allocation2 + $0x18] sm:$0xe]
        %v2983 = vld [vmem:[#allocation2 + $0x24] sm:$0xe]
        %v2984 = vld [vmem:[#allocation2 + $0x30] sm:$0xe]
        %v2985 = vld [vmem:[#allocation2 + $0x3c] sm:$0xe]
        %v2986 = vld [vmem:[#allocation2 + $0x48] sm:$0xe]
        %v2987 = vld [vmem:[#allocation2 + $0x54] sm:$0xe]
        %v2988 = vld [vmem:[#allocation2 + $0x60] sm:$0xe]
        %v2989 = vld [vmem:[#allocation2 + $0x6c] sm:$0xe]
        %v2990 = vld [vmem:[#allocation2 + $0x78] sm:$0xe]
        %vm3013 = vcmask 1042432
        %vm3014 = vcmask 1046532
        %vm3015 = vmor %vm3013, %vm3014
        %v3016 = vrot.slane %v2980, 5
        %v3017 = vrot.slane %v3016, 4
        %v3018 = vrot.slane %v2200, 5
        %v3019 = vsel %vm3015, %v3017, %v3018
        %v3020 = vrot.slane %v3018, 4
        %v3021 = vrot.slane %v2237, 5
        %v3022 = vsel %vm3015, %v3020, %v3021
        %v3023 = vrot.slane %v2981, 5
        %v3024 = vrot.slane %v3023, 4
        %v3025 = vrot.slane %v2202, 5
        %v3026 = vsel %vm3015, %v3024, %v3025
        %v3027 = vrot.slane %v3025, 4
        %v3028 = vrot.slane %v2238, 5
        %v3029 = vsel %vm3015, %v3027, %v3028
        %v3030 = vrot.slane %v2982, 5
        %v3031 = vrot.slane %v3030, 4
        %v3032 = vrot.slane %v2204, 5
        %v3033 = vsel %vm3015, %v3031, %v3032
        %v3034 = vrot.slane %v3032, 4
        %v3035 = vrot.slane %v2239, 5
        %v3036 = vsel %vm3015, %v3034, %v3035
        %v3037 = vrot.slane %v2983, 5
        %v3038 = vrot.slane %v3037, 4
        %v3039 = vrot.slane %v2206, 5
        %v3040 = vsel %vm3015, %v3038, %v3039
        %v3041 = vrot.slane %v3039, 4
        %v3042 = vrot.slane %v2240, 5
        %v3043 = vsel %vm3015, %v3041, %v3042
        %v3044 = vrot.slane %v2984, 5
        %v3045 = vrot.slane %v3044, 4
        %v3046 = vrot.slane %v2208, 5
        %v3047 = vsel %vm3015, %v3045, %v3046
        %v3048 = vrot.slane %v3046, 4
        %v3049 = vrot.slane %v2241, 5
        %v3050 = vsel %vm3015, %v3048, %v3049
        %v3051 = vrot.slane %v2985, 5
        %v3052 = vrot.slane %v3051, 4
        %v3053 = vrot.slane %v2210, 5
        %v3054 = vsel %vm3015, %v3052, %v3053
        %v3055 = vrot.slane %v3053, 4
        %v3056 = vrot.slane %v2242, 5
        %v3057 = vsel %vm3015, %v3055, %v3056
        %v3058 = vrot.slane %v2986, 5
        %v3059 = vrot.slane %v3058, 4
        %v3060 = vrot.slane %v2212, 5
        %v3061 = vsel %vm3015, %v3059, %v3060
        %v3062 = vrot.slane %v3060, 4
        %v3063 = vrot.slane %v2243, 5
        %v3064 = vsel %vm3015, %v3062, %v3063
        %v3065 = vrot.slane %v2987, 5
        %v3066 = vrot.slane %v3065, 4
        %v3067 = vrot.slane %v2214, 5
        %v3068 = vsel %vm3015, %v3066, %v3067
        %v3069 = vrot.slane %v3067, 4
        %v3070 = vrot.slane %v2244, 5
        %v3071 = vsel %vm3015, %v3069, %v3070
        %v3072 = vrot.slane %v2988, 5
        %v3073 = vrot.slane %v3072, 4
        %v3074 = vrot.slane %v2216, 5
        %v3075 = vsel %vm3015, %v3073, %v3074
        %v3076 = vrot.slane %v3074, 4
        %v3077 = vrot.slane %v2245, 5
        %v3078 = vsel %vm3015, %v3076, %v3077
        %v3079 = vrot.slane %v2989, 5
        %v3080 = vrot.slane %v3079, 4
        %v3081 = vrot.slane %v2218, 5
        %v3082 = vsel %vm3015, %v3080, %v3081
        %v3083 = vrot.slane %v3081, 4
        %v3084 = vrot.slane %v2246, 5
        %v3085 = vsel %vm3015, %v3083, %v3084
        %v3086 = vrot.slane %v2990, 5
        %v3087 = vrot.slane %v3086, 4
        %v3088 = vrot.slane %v2220, 5
        %v3089 = vsel %vm3015, %v3087, %v3088
        %v3090 = vrot.slane %v3088, 4
        %v3091 = vrot.slane %v2247, 5
        %v3092 = vsel %vm3015, %v3090, %v3091
        %s3093 = scalar_lea.vmem %s3, 128
        %v3094 = vld [vmem:[%s3093] sm:$0xf]
        %v3095 = vld [vmem:[%s3093 + $0x4] sm:$0xf]
        %v3096 = vld [vmem:[%s3093 + $0x8] sm:$0xf]
        %v3097 = vld [vmem:[%s3093 + $0xc] sm:$0xf]
        %v3098 = vld [vmem:[%s3093 + $0x10] sm:$0xf]
        %v3099 = vld [vmem:[%s3093 + $0x14] sm:$0xf]
        %v3100 = vld [vmem:[%s3093 + $0x18] sm:$0xf]
        %v3101 = vld [vmem:[%s3093 + $0x1c] sm:$0xf]
        %v3102 = vld [vmem:[%s3093 + $0x20] sm:$0xf]
        %v3103 = vld [vmem:[%s3093 + $0x24] sm:$0xf]
        %v3104 = vld [vmem:[%s3093 + $0x28] sm:$0xf]
        %v3105 = vld [vmem:[%s3093 + $0x2c] sm:$0xf]
        %v3106 = vld [vmem:[%s3093 + $0x30] sm:$0xf]
        %v3107 = vld [vmem:[%s3093 + $0x34] sm:$0xf]
        %v3108 = vld [vmem:[%s3093 + $0x38] sm:$0xf]
        %v3109 = vld [vmem:[%s3093 + $0x3c] sm:$0xf]
        %v3110 = vunpack.c.l.b16 %v3019
        %v3111 = vunpack.c.l.b16 %v3022
        %v3112 = vunpack.c.l.b16 %v3026
        %v3113 = vunpack.c.l.b16 %v3029
        %v3114 = vunpack.c.l.b16 %v3033
        %v3115 = vunpack.c.l.b16 %v3036
        %v3116 = vunpack.c.l.b16 %v3040
        %v3117 = vunpack.c.l.b16 %v3043
        %v3118 = vunpack.c.l.b16 %v3047
        %v3119 = vunpack.c.l.b16 %v3050
        %v3120 = vunpack.c.l.b16 %v3054
        %v3121 = vunpack.c.l.b16 %v3057
        %v3122 = vunpack.c.l.b16 %v3061
        %v3123 = vunpack.c.l.b16 %v3064
        %v3124 = vunpack.c.l.b16 %v3068
        %v3125 = vunpack.c.l.b16 %v3071
        %v3126 = vunpack.c.l.b16 %v3075
        %v3127 = vunpack.c.l.b16 %v3078
        %v3128 = vunpack.c.l.b16 %v3082
        %v3129 = vunpack.c.l.b16 %v3085
        %v3130 = vunpack.c.l.b16 %v3089
        %v3131 = vunpack.c.l.b16 %v3092
        %v3132 = vpack.c.b16 %v3111, %v3110
        %v3133 = vpack.c.b16 %v3113, %v3112
        %v3134 = vpack.c.b16 %v3115, %v3114
        %v3135 = vpack.c.b16 %v3117, %v3116
        %v3136 = vpack.c.b16 %v3119, %v3118
        %v3137 = vpack.c.b16 %v3121, %v3120
        %v3138 = vpack.c.b16 %v3123, %v3122
        %v3139 = vpack.c.b16 %v3125, %v3124
        %v3140 = vpack.c.b16 %v3127, %v3126
        %v3141 = vpack.c.b16 %v3129, %v3128
        %v3142 = vpack.c.b16 %v3131, %v3130
        %v3170 = vunpack.c.l.b16 %v3094
        %v3171 = vunpack.c.l.b16 %v3095
        %v3172 = vunpack.c.l.b16 %v3096
        %v3173 = vunpack.c.l.b16 %v3097
        %v3174 = vunpack.c.l.b16 %v3098
        %v3175 = vunpack.c.l.b16 %v3099
        %v3176 = vunpack.c.l.b16 %v3100
        %v3177 = vunpack.c.l.b16 %v3101
        %v3178 = vunpack.c.l.b16 %v3102
        %v3179 = vunpack.c.l.b16 %v3103
        %v3180 = vunpack.c.l.b16 %v3104
        %v3181 = vunpack.c.l.b16 %v3105
        %v3182 = vunpack.c.l.b16 %v3106
        %v3183 = vunpack.c.l.b16 %v3107
        %v3184 = vunpack.c.l.b16 %v3108
        %v3185 = vunpack.c.l.b16 %v3109
        %v3186 = vpack.c.b16 %v3171, %v3170
        %v3187 = vpack.c.b16 %v3173, %v3172
        %v3188 = vpack.c.b16 %v3175, %v3174
        %v3189 = vpack.c.b16 %v3177, %v3176
        %v3190 = vpack.c.b16 %v3179, %v3178
        %v3191 = vpack.c.b16 %v3181, %v3180
        %v3192 = vpack.c.b16 %v3183, %v3182
        %v3193 = vpack.c.b16 %v3185, %v3184
        %3202 = vmatprep.subr.bf16.mxu0 0
        %3203 = vmatpush1.bf16.msra.mxu0 %v3186
        %3204 = vmatprep.subr.bf16.mxu0 0
        %3205 = vmatpush1.bf16.msra.mxu0 %v3187
        %3206 = vmatprep.subr.bf16.mxu0 0
        %3207 = vmatpush1.bf16.msra.mxu0 %v3188
        %3208 = vmatprep.subr.bf16.mxu0 0
        %3209 = vmatpush1.bf16.msra.mxu0 %v3189
        %3210 = vmatprep.subr.bf16.mxu0 0
        %3211 = vmatpush1.bf16.msra.mxu0 %v3190
        %3212 = vmatprep.subr.bf16.mxu0 0
        %3213 = vmatpush1.bf16.msra.mxu0 %v3191
        %3214 = vmatprep.subr.bf16.mxu0 0
        %3215 = vmatpush1.bf16.msra.mxu0 %v3192
        %3216 = vmatprep.subr.bf16.mxu0 0
        %3217 = vmatpush1.bf16.msra.mxu0 %v3193
        %3218 = vmatprep.subr.bf16.mxu0 0
        %3219 = vmatpush1.bf16.msra.mxu0 0
        %3220 = vmatprep.subr.bf16.mxu0 0
        %3221 = vmatpush1.bf16.msra.mxu0 0
        %3222 = vmatprep.subr.bf16.mxu0 0
        %3223 = vmatpush1.bf16.msra.mxu0 0
        %3224 = vmatprep.subr.bf16.mxu0 0
        %3225 = vmatpush1.bf16.msra.mxu0 0
        %3226 = vmatprep.subr.bf16.mxu0 0
        %3227 = vmatpush1.bf16.msra.mxu0 0
        %3228 = vmatprep.subr.bf16.mxu0 0
        %3229 = vmatpush1.bf16.msra.mxu0 0
        %3230 = vmatprep.subr.bf16.mxu0 0
        %3231 = vmatpush1.bf16.msra.mxu0 0
        %3232 = vmatprep.subr.bf16.mxu0 0
        %3233 = vmatpush1.bf16.msra.mxu0 0
        %3234 = vmatprep.mubr.bf16.mxu0 0
        %3235 = vmatmul.mubr.bf16.gmra.mrb[0].mxu0 %v3132
        %v3236 = vpop.f32.mrb[0].mxu0
        %v3237 = vadd.f32 0.0, %v3236
        %v3238 = vpop.f32.mrb[0].mxu0
        %v3239 = vpop.f32.mrb[0].mxu0
        %v3240 = vadd.f32 0.0, %v3239
        %v3241 = vpop.f32.mrb[0].mxu0
        %3242 = vmatprep.mubr.bf16.mxu0 0
        %3243 = vmatmul.mubr.bf16.gmra.mrb[0].mxu0 %v3133
        %v3244 = vpop.f32.mrb[0].mxu0
        %v3245 = vadd.f32 0.0, %v3244
        %v3246 = vpop.f32.mrb[0].mxu0
        %v3247 = vpop.f32.mrb[0].mxu0
        %v3248 = vadd.f32 0.0, %v3247
        %v3249 = vpop.f32.mrb[0].mxu0
        %3250 = vmatprep.mubr.bf16.mxu0 0
        %3251 = vmatmul.mubr.bf16.gmra.mrb[0].mxu0 %v3134
        %v3252 = vpop.f32.mrb[0].mxu0
        %v3253 = vadd.f32 0.0, %v3252
        %v3254 = vpop.f32.mrb[0].mxu0
        %v3255 = vpop.f32.mrb[0].mxu0
        %v3256 = vadd.f32 0.0, %v3255
        %v3257 = vpop.f32.mrb[0].mxu0
        %3258 = vmatprep.mubr.bf16.mxu0 0
        %3259 = vmatmul.mubr.bf16.gmra.mrb[0].mxu0 %v3135
        %v3260 = vpop.f32.mrb[0].mxu0
        %v3261 = vadd.f32 0.0, %v3260
        %v3262 = vpop.f32.mrb[0].mxu0
        %v3263 = vpop.f32.mrb[0].mxu0
        %v3264 = vadd.f32 0.0, %v3263
        %v3265 = vpop.f32.mrb[0].mxu0
        %3266 = vmatprep.mubr.bf16.mxu0 0
        %3267 = vmatmul.mubr.bf16.gmra.mrb[0].mxu0 %v3136
        %v3268 = vpop.f32.mrb[0].mxu0
        %v3269 = vadd.f32 0.0, %v3268
        %v3270 = vpop.f32.mrb[0].mxu0
        %v3271 = vpop.f32.mrb[0].mxu0
        %v3272 = vadd.f32 0.0, %v3271
        %v3273 = vpop.f32.mrb[0].mxu0
        %3274 = vmatprep.mubr.bf16.mxu0 0
        %3275 = vmatmul.mubr.bf16.gmra.mrb[0].mxu0 %v3137
        %v3276 = vpop.f32.mrb[0].mxu0
        %v3277 = vadd.f32 0.0, %v3276
        %v3278 = vpop.f32.mrb[0].mxu0
        %v3279 = vpop.f32.mrb[0].mxu0
        %v3280 = vadd.f32 0.0, %v3279
        %v3281 = vpop.f32.mrb[0].mxu0
        %3282 = vmatprep.mubr.bf16.mxu0 0
        %3283 = vmatmul.mubr.bf16.gmra.mrb[0].mxu0 %v3138
        %v3284 = vpop.f32.mrb[0].mxu0
        %v3285 = vadd.f32 0.0, %v3284
        %v3286 = vpop.f32.mrb[0].mxu0
        %v3287 = vpop.f32.mrb[0].mxu0
        %v3288 = vadd.f32 0.0, %v3287
        %v3289 = vpop.f32.mrb[0].mxu0
        %3290 = vmatprep.mubr.bf16.mxu0 0
        %3291 = vmatmul.mubr.bf16.gmra.mrb[0].mxu0 %v3139
        %v3292 = vpop.f32.mrb[0].mxu0
        %v3293 = vadd.f32 0.0, %v3292
        %v3294 = vpop.f32.mrb[0].mxu0
        %v3295 = vpop.f32.mrb[0].mxu0
        %v3296 = vadd.f32 0.0, %v3295
        %v3297 = vpop.f32.mrb[0].mxu0
        %3298 = vmatprep.mubr.bf16.mxu0 0
        %3299 = vmatmul.mubr.bf16.gmra.mrb[0].mxu0 %v3140
        %v3300 = vpop.f32.mrb[0].mxu0
        %v3301 = vadd.f32 0.0, %v3300
        %v3302 = vpop.f32.mrb[0].mxu0
        %v3303 = vpop.f32.mrb[0].mxu0
        %v3304 = vadd.f32 0.0, %v3303
        %v3305 = vpop.f32.mrb[0].mxu0
        %3306 = vmatprep.mubr.bf16.mxu0 0
        %3307 = vmatmul.mubr.bf16.gmra.mrb[0].mxu0 %v3141
        %v3308 = vpop.f32.mrb[0].mxu0
        %v3309 = vadd.f32 0.0, %v3308
        %v3310 = vpop.f32.mrb[0].mxu0
        %v3311 = vpop.f32.mrb[0].mxu0
        %v3312 = vadd.f32 0.0, %v3311
        %v3313 = vpop.f32.mrb[0].mxu0
        %3314 = vmatprep.mubr.bf16.mxu0 0
        %3315 = vmatmul.mubr.bf16.gmra.mrb[0].mxu0 %v3142
        %v3316 = vpop.f32.mrb[0].mxu0
        %v3317 = vadd.f32 0.0, %v3316
        %v3318 = vpop.f32.mrb[0].mxu0
        %v3319 = vpop.f32.mrb[0].mxu0
        %v3320 = vadd.f32 0.0, %v3319
        %v3321 = vpop.f32.mrb[0].mxu0
        %3322 = vdwg.mxu0
        %v3323 = vadd.f32 %v2894, %v3237
        %v3324 = vadd.f32 %v2897, %v3240
        %v3325 = vadd.f32 %v2902, %v3245
        %v3326 = vadd.f32 %v2905, %v3248
        %v3327 = vadd.f32 %v2910, %v3253
        %v3328 = vadd.f32 %v2913, %v3256
        %v3329 = vadd.f32 %v2918, %v3261
        %v3330 = vadd.f32 %v2921, %v3264
        %v3331 = vadd.f32 %v2926, %v3269
        %v3332 = vadd.f32 %v2929, %v3272
        %v3333 = vadd.f32 %v2934, %v3277
        %v3334 = vadd.f32 %v2937, %v3280
        %v3335 = vadd.f32 %v2942, %v3285
        %v3336 = vadd.f32 %v2945, %v3288
        %v3337 = vadd.f32 %v2950, %v3293
        %v3338 = vadd.f32 %v2953, %v3296
        %v3339 = vadd.f32 %v2958, %v3301
        %v3340 = vadd.f32 %v2961, %v3304
        %v3341 = vadd.f32 %v2966, %v3309
        %v3342 = vadd.f32 %v2969, %v3312
        %v3343 = vadd.f32 %v2974, %v3317
        %v3344 = vadd.f32 %v2977, %v3320
        %s3345 = scalar_lea.vmem [#allocation2], 12
        %v3346 = vld [vmem:[%s3345] sm:$0xf]
        %v3347 = vld [vmem:[%s3345 + $0x4] sm:$0xf]
        %v3348 = vld [vmem:[%s3345 + $0xc] sm:$0xf]
        %v3349 = vld [vmem:[%s3345 + $0x10] sm:$0xf]
        %v3350 = vld [vmem:[%s3345 + $0x18] sm:$0xf]
        %v3351 = vld [vmem:[%s3345 + $0x1c] sm:$0xf]
        %v3352 = vld [vmem:[%s3345 + $0x24] sm:$0xf]
        %v3353 = vld [vmem:[%s3345 + $0x28] sm:$0xf]
        %v3354 = vld [vmem:[%s3345 + $0x30] sm:$0xf]
        %v3355 = vld [vmem:[%s3345 + $0x34] sm:$0xf]
        %v3356 = vld [vmem:[%s3345 + $0x3c] sm:$0xf]
        %v3357 = vld [vmem:[%s3345 + $0x40] sm:$0xf]
        %v3358 = vld [vmem:[%s3345 + $0x48] sm:$0xf]
        %v3359 = vld [vmem:[%s3345 + $0x4c] sm:$0xf]
        %v3360 = vld [vmem:[%s3345 + $0x54] sm:$0xf]
        %v3361 = vld [vmem:[%s3345 + $0x58] sm:$0xf]
        %v3362 = vld [vmem:[%s3345 + $0x60] sm:$0xf]
        %v3363 = vld [vmem:[%s3345 + $0x64] sm:$0xf]
        %v3364 = vld [vmem:[%s3345 + $0x6c] sm:$0xf]
        %v3365 = vld [vmem:[%s3345 + $0x70] sm:$0xf]
        %v3366 = vld [vmem:[%s3345 + $0x78] sm:$0xf]
        %v3367 = vld [vmem:[%s3345 + $0x7c] sm:$0xf]
        %s3368 = scalar_lea.vmem %s3, 192
        %v3369 = vld [vmem:[%s3368] sm:$0xf]
        %v3370 = vld [vmem:[%s3368 + $0x4] sm:$0xf]
        %v3371 = vld [vmem:[%s3368 + $0x8] sm:$0xf]
        %v3372 = vld [vmem:[%s3368 + $0xc] sm:$0xf]
        %v3373 = vld [vmem:[%s3368 + $0x10] sm:$0xf]
        %v3374 = vld [vmem:[%s3368 + $0x14] sm:$0xf]
        %v3375 = vld [vmem:[%s3368 + $0x18] sm:$0xf]
        %v3376 = vld [vmem:[%s3368 + $0x1c] sm:$0xf]
        %v3377 = vld [vmem:[%s3368 + $0x20] sm:$0xf]
        %v3378 = vld [vmem:[%s3368 + $0x24] sm:$0xf]
        %v3379 = vld [vmem:[%s3368 + $0x28] sm:$0xf]
        %v3380 = vld [vmem:[%s3368 + $0x2c] sm:$0xf]
        %v3381 = vld [vmem:[%s3368 + $0x30] sm:$0xf]
        %v3382 = vld [vmem:[%s3368 + $0x34] sm:$0xf]
        %v3383 = vld [vmem:[%s3368 + $0x38] sm:$0xf]
        %v3384 = vld [vmem:[%s3368 + $0x3c] sm:$0xf]
        %v3407 = vunpack.c.l.b16 %v3346
        %v3408 = vunpack.c.l.b16 %v3347
        %v3409 = vunpack.c.l.b16 %v3348
        %v3410 = vunpack.c.l.b16 %v3349
        %v3411 = vunpack.c.l.b16 %v3350
        %v3412 = vunpack.c.l.b16 %v3351
        %v3413 = vunpack.c.l.b16 %v3352
        %v3414 = vunpack.c.l.b16 %v3353
        %v3415 = vunpack.c.l.b16 %v3354
        %v3416 = vunpack.c.l.b16 %v3355
        %v3417 = vunpack.c.l.b16 %v3356
        %v3418 = vunpack.c.l.b16 %v3357
        %v3419 = vunpack.c.l.b16 %v3358
        %v3420 = vunpack.c.l.b16 %v3359
        %v3421 = vunpack.c.l.b16 %v3360
        %v3422 = vunpack.c.l.b16 %v3361
        %v3423 = vunpack.c.l.b16 %v3362
        %v3424 = vunpack.c.l.b16 %v3363
        %v3425 = vunpack.c.l.b16 %v3364
        %v3426 = vunpack.c.l.b16 %v3365
        %v3427 = vunpack.c.l.b16 %v3366
        %v3428 = vunpack.c.l.b16 %v3367
        %v3429 = vpack.c.b16 %v3408, %v3407
        %v3430 = vpack.c.b16 %v3410, %v3409
        %v3431 = vpack.c.b16 %v3412, %v3411
        %v3432 = vpack.c.b16 %v3414, %v3413
        %v3433 = vpack.c.b16 %v3416, %v3415
        %v3434 = vpack.c.b16 %v3418, %v3417
        %v3435 = vpack.c.b16 %v3420, %v3419
        %v3436 = vpack.c.b16 %v3422, %v3421
        %v3437 = vpack.c.b16 %v3424, %v3423
        %v3438 = vpack.c.b16 %v3426, %v3425
        %v3439 = vpack.c.b16 %v3428, %v3427
        %v3467 = vunpack.c.l.b16 %v3369
        %v3468 = vunpack.c.l.b16 %v3370
        %v3469 = vunpack.c.l.b16 %v3371
        %v3470 = vunpack.c.l.b16 %v3372
        %v3471 = vunpack.c.l.b16 %v3373
        %v3472 = vunpack.c.l.b16 %v3374
        %v3473 = vunpack.c.l.b16 %v3375
        %v3474 = vunpack.c.l.b16 %v3376
        %v3475 = vunpack.c.l.b16 %v3377
        %v3476 = vunpack.c.l.b16 %v3378
        %v3477 = vunpack.c.l.b16 %v3379
        %v3478 = vunpack.c.l.b16 %v3380
        %v3479 = vunpack.c.l.b16 %v3381
        %v3480 = vunpack.c.l.b16 %v3382
        %v3481 = vunpack.c.l.b16 %v3383
        %v3482 = vunpack.c.l.b16 %v3384
        %v3483 = vpack.c.b16 %v3468, %v3467
        %v3484 = vpack.c.b16 %v3470, %v3469
        %v3485 = vpack.c.b16 %v3472, %v3471
        %v3486 = vpack.c.b16 %v3474, %v3473
        %v3487 = vpack.c.b16 %v3476, %v3475
        %v3488 = vpack.c.b16 %v3478, %v3477
        %v3489 = vpack.c.b16 %v3480, %v3479
        %v3490 = vpack.c.b16 %v3482, %v3481
        %3499 = vmatprep.subr.bf16.mxu0 0
        %3500 = vmatpush1.bf16.msra.mxu0 %v3483
        %3501 = vmatprep.subr.bf16.mxu0 0
        %3502 = vmatpush1.bf16.msra.mxu0 %v3484
        %3503 = vmatprep.subr.bf16.mxu0 0
        %3504 = vmatpush1.bf16.msra.mxu0 %v3485
        %3505 = vmatprep.subr.bf16.mxu0 0
        %3506 = vmatpush1.bf16.msra.mxu0 %v3486
        %3507 = vmatprep.subr.bf16.mxu0 0
        %3508 = vmatpush1.bf16.msra.mxu0 %v3487
        %3509 = vmatprep.subr.bf16.mxu0 0
        %3510 = vmatpush1.bf16.msra.mxu0 %v3488
        %3511 = vmatprep.subr.bf16.mxu0 0
        %3512 = vmatpush1.bf16.msra.mxu0 %v3489
        %3513 = vmatprep.subr.bf16.mxu0 0
        %3514 = vmatpush1.bf16.msra.mxu0 %v3490
        %3515 = vmatprep.subr.bf16.mxu0 0
        %3516 = vmatpush1.bf16.msra.mxu0 0
        %3517 = vmatprep.subr.bf16.mxu0 0
        %3518 = vmatpush1.bf16.msra.mxu0 0
        %3519 = vmatprep.subr.bf16.mxu0 0
        %3520 = vmatpush1.bf16.msra.mxu0 0
        %3521 = vmatprep.subr.bf16.mxu0 0
        %3522 = vmatpush1.bf16.msra.mxu0 0
        %3523 = vmatprep.subr.bf16.mxu0 0
        %3524 = vmatpush1.bf16.msra.mxu0 0
        %3525 = vmatprep.subr.bf16.mxu0 0
        %3526 = vmatpush1.bf16.msra.mxu0 0
        %3527 = vmatprep.subr.bf16.mxu0 0
        %3528 = vmatpush1.bf16.msra.mxu0 0
        %3529 = vmatprep.subr.bf16.mxu0 0
        %3530 = vmatpush1.bf16.msra.mxu0 0
        %3531 = vmatprep.mubr.bf16.mxu0 0
        %3532 = vmatmul.mubr.bf16.gmra.mrb[0].mxu0 %v3429
        %v3533 = vpop.f32.mrb[0].mxu0
        %v3534 = vadd.f32 0.0, %v3533
        %v3535 = vpop.f32.mrb[0].mxu0
        %v3536 = vpop.f32.mrb[0].mxu0
        %v3537 = vadd.f32 0.0, %v3536
        %v3538 = vpop.f32.mrb[0].mxu0
        %3539 = vmatprep.mubr.bf16.mxu0 0
        %3540 = vmatmul.mubr.bf16.gmra.mrb[0].mxu0 %v3430
        %v3541 = vpop.f32.mrb[0].mxu0
        %v3542 = vadd.f32 0.0, %v3541
        %v3543 = vpop.f32.mrb[0].mxu0
        %v3544 = vpop.f32.mrb[0].mxu0
        %v3545 = vadd.f32 0.0, %v3544
        %v3546 = vpop.f32.mrb[0].mxu0
        %3547 = vmatprep.mubr.bf16.mxu0 0
        %3548 = vmatmul.mubr.bf16.gmra.mrb[0].mxu0 %v3431
        %v3549 = vpop.f32.mrb[0].mxu0
        %v3550 = vadd.f32 0.0, %v3549
        %v3551 = vpop.f32.mrb[0].mxu0
        %v3552 = vpop.f32.mrb[0].mxu0
        %v3553 = vadd.f32 0.0, %v3552
        %v3554 = vpop.f32.mrb[0].mxu0
        %3555 = vmatprep.mubr.bf16.mxu0 0
        %3556 = vmatmul.mubr.bf16.gmra.mrb[0].mxu0 %v3432
        %v3557 = vpop.f32.mrb[0].mxu0
        %v3558 = vadd.f32 0.0, %v3557
        %v3559 = vpop.f32.mrb[0].mxu0
        %v3560 = vpop.f32.mrb[0].mxu0
        %v3561 = vadd.f32 0.0, %v3560
        %v3562 = vpop.f32.mrb[0].mxu0
        %3563 = vmatprep.mubr.bf16.mxu0 0
        %3564 = vmatmul.mubr.bf16.gmra.mrb[0].mxu0 %v3433
        %v3565 = vpop.f32.mrb[0].mxu0
        %v3566 = vadd.f32 0.0, %v3565
        %v3567 = vpop.f32.mrb[0].mxu0
        %v3568 = vpop.f32.mrb[0].mxu0
        %v3569 = vadd.f32 0.0, %v3568
        %v3570 = vpop.f32.mrb[0].mxu0
        %3571 = vmatprep.mubr.bf16.mxu0 0
        %3572 = vmatmul.mubr.bf16.gmra.mrb[0].mxu0 %v3434
        %v3573 = vpop.f32.mrb[0].mxu0
        %v3574 = vadd.f32 0.0, %v3573
        %v3575 = vpop.f32.mrb[0].mxu0
        %v3576 = vpop.f32.mrb[0].mxu0
        %v3577 = vadd.f32 0.0, %v3576
        %v3578 = vpop.f32.mrb[0].mxu0
        %3579 = vmatprep.mubr.bf16.mxu0 0
        %3580 = vmatmul.mubr.bf16.gmra.mrb[0].mxu0 %v3435
        %v3581 = vpop.f32.mrb[0].mxu0
        %v3582 = vadd.f32 0.0, %v3581
        %v3583 = vpop.f32.mrb[0].mxu0
        %v3584 = vpop.f32.mrb[0].mxu0
        %v3585 = vadd.f32 0.0, %v3584
        %v3586 = vpop.f32.mrb[0].mxu0
        %3587 = vmatprep.mubr.bf16.mxu0 0
        %3588 = vmatmul.mubr.bf16.gmra.mrb[0].mxu0 %v3436
        %v3589 = vpop.f32.mrb[0].mxu0
        %v3590 = vadd.f32 0.0, %v3589
        %v3591 = vpop.f32.mrb[0].mxu0
        %v3592 = vpop.f32.mrb[0].mxu0
        %v3593 = vadd.f32 0.0, %v3592
        %v3594 = vpop.f32.mrb[0].mxu0
        %3595 = vmatprep.mubr.bf16.mxu0 0
        %3596 = vmatmul.mubr.bf16.gmra.mrb[0].mxu0 %v3437
        %v3597 = vpop.f32.mrb[0].mxu0
        %v3598 = vadd.f32 0.0, %v3597
        %v3599 = vpop.f32.mrb[0].mxu0
        %v3600 = vpop.f32.mrb[0].mxu0
        %v3601 = vadd.f32 0.0, %v3600
        %v3602 = vpop.f32.mrb[0].mxu0
        %3603 = vmatprep.mubr.bf16.mxu0 0
        %3604 = vmatmul.mubr.bf16.gmra.mrb[0].mxu0 %v3438
        %v3605 = vpop.f32.mrb[0].mxu0
        %v3606 = vadd.f32 0.0, %v3605
        %v3607 = vpop.f32.mrb[0].mxu0
        %v3608 = vpop.f32.mrb[0].mxu0
        %v3609 = vadd.f32 0.0, %v3608
        %v3610 = vpop.f32.mrb[0].mxu0
        %3611 = vmatprep.mubr.bf16.mxu0 0
        %3612 = vmatmul.mubr.bf16.gmra.mrb[0].mxu0 %v3439
        %v3613 = vpop.f32.mrb[0].mxu0
        %v3614 = vadd.f32 0.0, %v3613
        %v3615 = vpop.f32.mrb[0].mxu0
        %v3616 = vpop.f32.mrb[0].mxu0
        %v3617 = vadd.f32 0.0, %v3616
        %v3618 = vpop.f32.mrb[0].mxu0
        %3619 = vdwg.mxu0
        %v3620 = vadd.f32 %v3323, %v3534
        %v3621 = vadd.f32 %v3324, %v3537
        %v3622 = vadd.f32 %v3325, %v3542
        %v3623 = vadd.f32 %v3326, %v3545
        %v3624 = vadd.f32 %v3327, %v3550
        %v3625 = vadd.f32 %v3328, %v3553
        %v3626 = vadd.f32 %v3329, %v3558
        %v3627 = vadd.f32 %v3330, %v3561
        %v3628 = vadd.f32 %v3331, %v3566
        %v3629 = vadd.f32 %v3332, %v3569
        %v3630 = vadd.f32 %v3333, %v3574
        %v3631 = vadd.f32 %v3334, %v3577
        %v3632 = vadd.f32 %v3335, %v3582
        %v3633 = vadd.f32 %v3336, %v3585
        %v3634 = vadd.f32 %v3337, %v3590
        %v3635 = vadd.f32 %v3338, %v3593
        %v3636 = vadd.f32 %v3339, %v3598
        %v3637 = vadd.f32 %v3340, %v3601
        %v3638 = vadd.f32 %v3341, %v3606
        %v3639 = vadd.f32 %v3342, %v3609
        %v3640 = vadd.f32 %v3343, %v3614
        %v3641 = vadd.f32 %v3344, %v3617
        %v3642 = vld [vmem:[%s3345] sm:$0xf]
        %v3643 = vld [vmem:[%s3345 + $0x4] sm:$0xf]
        %v3644 = vld [vmem:[%s3345 + $0x8] sm:$0x1]
        %v3645 = vld [vmem:[%s3345 + $0xc] sm:$0xf]
        %v3646 = vld [vmem:[%s3345 + $0x10] sm:$0xf]
        %v3647 = vld [vmem:[%s3345 + $0x14] sm:$0x1]
        %v3648 = vld [vmem:[%s3345 + $0x18] sm:$0xf]
        %v3649 = vld [vmem:[%s3345 + $0x1c] sm:$0xf]
        %v3650 = vld [vmem:[%s3345 + $0x20] sm:$0x1]
        %v3651 = vld [vmem:[%s3345 + $0x24] sm:$0xf]
        %v3652 = vld [vmem:[%s3345 + $0x28] sm:$0xf]
        %v3653 = vld [vmem:[%s3345 + $0x2c] sm:$0x1]
        %v3654 = vld [vmem:[%s3345 + $0x30] sm:$0xf]
        %v3655 = vld [vmem:[%s3345 + $0x34] sm:$0xf]
        %v3656 = vld [vmem:[%s3345 + $0x38] sm:$0x1]
        %v3657 = vld [vmem:[%s3345 + $0x3c] sm:$0xf]
        %v3658 = vld [vmem:[%s3345 + $0x40] sm:$0xf]
        %v3659 = vld [vmem:[%s3345 + $0x44] sm:$0x1]
        %v3660 = vld [vmem:[%s3345 + $0x48] sm:$0xf]
        %v3661 = vld [vmem:[%s3345 + $0x4c] sm:$0xf]
        %v3662 = vld [vmem:[%s3345 + $0x50] sm:$0x1]
        %v3663 = vld [vmem:[%s3345 + $0x54] sm:$0xf]
        %v3664 = vld [vmem:[%s3345 + $0x58] sm:$0xf]
        %v3665 = vld [vmem:[%s3345 + $0x5c] sm:$0x1]
        %v3666 = vld [vmem:[%s3345 + $0x60] sm:$0xf]
        %v3667 = vld [vmem:[%s3345 + $0x64] sm:$0xf]
        %v3668 = vld [vmem:[%s3345 + $0x68] sm:$0x1]
        %v3669 = vld [vmem:[%s3345 + $0x6c] sm:$0xf]
        %v3670 = vld [vmem:[%s3345 + $0x70] sm:$0xf]
        %v3671 = vld [vmem:[%s3345 + $0x74] sm:$0x1]
        %v3672 = vld [vmem:[%s3345 + $0x78] sm:$0xf]
        %v3673 = vld [vmem:[%s3345 + $0x7c] sm:$0xf]
        %v3674 = vld [vmem:[%s3345 + $0x80] sm:$0x1]
        %v3676 = vshrl.u32 %v3642, 16
        %v3678 = vrot.slane %v3676, 4
        %v3679 = vshll.u32 %v3642, 16
        %v3681 = vrot.slane %v3679, 5
        %v3682 = vor.u32 %v3678, %v3681
        %v3683 = vrot.slane %v3682, 4
        %v3685 = vshll.u32 %v3643, 16
        %v3687 = vrot.slane %v3685, 5
        %v3688 = vsel %vm2250, %v3683, %v3687
        %v3689 = vshrl.u32 %v3643, 16
        %v3691 = vrot.slane %v3689, 4
        %v3692 = vor.u32 %v3691, %v3687
        %v3693 = vrot.slane %v3692, 4
        %v3695 = vshll.u32 %v3644, 16
        %v3697 = vrot.slane %v3695, 5
        %v3698 = vsel %vm2250, %v3693, %v3697
        %v3700 = vshrl.u32 %v3645, 16
        %v3702 = vrot.slane %v3700, 4
        %v3703 = vshll.u32 %v3645, 16
        %v3705 = vrot.slane %v3703, 5
        %v3706 = vor.u32 %v3702, %v3705
        %v3707 = vrot.slane %v3706, 4
        %v3709 = vshll.u32 %v3646, 16
        %v3711 = vrot.slane %v3709, 5
        %v3712 = vsel %vm2250, %v3707, %v3711
        %v3713 = vshrl.u32 %v3646, 16
        %v3715 = vrot.slane %v3713, 4
        %v3716 = vor.u32 %v3715, %v3711
        %v3717 = vrot.slane %v3716, 4
        %v3719 = vshll.u32 %v3647, 16
        %v3721 = vrot.slane %v3719, 5
        %v3722 = vsel %vm2250, %v3717, %v3721
        %v3724 = vshrl.u32 %v3648, 16
        %v3726 = vrot.slane %v3724, 4
        %v3727 = vshll.u32 %v3648, 16
        %v3729 = vrot.slane %v3727, 5
        %v3730 = vor.u32 %v3726, %v3729
        %v3731 = vrot.slane %v3730, 4
        %v3733 = vshll.u32 %v3649, 16
        %v3735 = vrot.slane %v3733, 5
        %v3736 = vsel %vm2250, %v3731, %v3735
        %v3737 = vshrl.u32 %v3649, 16
        %v3739 = vrot.slane %v3737, 4
        %v3740 = vor.u32 %v3739, %v3735
        %v3741 = vrot.slane %v3740, 4
        %v3743 = vshll.u32 %v3650, 16
        %v3745 = vrot.slane %v3743, 5
        %v3746 = vsel %vm2250, %v3741, %v3745
        %v3748 = vshrl.u32 %v3651, 16
        %v3750 = vrot.slane %v3748, 4
        %v3751 = vshll.u32 %v3651, 16
        %v3753 = vrot.slane %v3751, 5
        %v3754 = vor.u32 %v3750, %v3753
        %v3755 = vrot.slane %v3754, 4
        %v3757 = vshll.u32 %v3652, 16
        %v3759 = vrot.slane %v3757, 5
        %v3760 = vsel %vm2250, %v3755, %v3759
        %v3761 = vshrl.u32 %v3652, 16
        %v3763 = vrot.slane %v3761, 4
        %v3764 = vor.u32 %v3763, %v3759
        %v3765 = vrot.slane %v3764, 4
        %v3767 = vshll.u32 %v3653, 16
        %v3769 = vrot.slane %v3767, 5
        %v3770 = vsel %vm2250, %v3765, %v3769
        %v3772 = vshrl.u32 %v3654, 16
        %v3774 = vrot.slane %v3772, 4
        %v3775 = vshll.u32 %v3654, 16
        %v3777 = vrot.slane %v3775, 5
        %v3778 = vor.u32 %v3774, %v3777
        %v3779 = vrot.slane %v3778, 4
        %v3781 = vshll.u32 %v3655, 16
        %v3783 = vrot.slane %v3781, 5
        %v3784 = vsel %vm2250, %v3779, %v3783
        %v3785 = vshrl.u32 %v3655, 16
        %v3787 = vrot.slane %v3785, 4
        %v3788 = vor.u32 %v3787, %v3783
        %v3789 = vrot.slane %v3788, 4
        %v3791 = vshll.u32 %v3656, 16
        %v3793 = vrot.slane %v3791, 5
        %v3794 = vsel %vm2250, %v3789, %v3793
        %v3796 = vshrl.u32 %v3657, 16
        %v3798 = vrot.slane %v3796, 4
        %v3799 = vshll.u32 %v3657, 16
        %v3801 = vrot.slane %v3799, 5
        %v3802 = vor.u32 %v3798, %v3801
        %v3803 = vrot.slane %v3802, 4
        %v3805 = vshll.u32 %v3658, 16
        %v3807 = vrot.slane %v3805, 5
        %v3808 = vsel %vm2250, %v3803, %v3807
        %v3809 = vshrl.u32 %v3658, 16
        %v3811 = vrot.slane %v3809, 4
        %v3812 = vor.u32 %v3811, %v3807
        %v3813 = vrot.slane %v3812, 4
        %v3815 = vshll.u32 %v3659, 16
        %v3817 = vrot.slane %v3815, 5
        %v3818 = vsel %vm2250, %v3813, %v3817
        %v3820 = vshrl.u32 %v3660, 16
        %v3822 = vrot.slane %v3820, 4
        %v3823 = vshll.u32 %v3660, 16
        %v3825 = vrot.slane %v3823, 5
        %v3826 = vor.u32 %v3822, %v3825
        %v3827 = vrot.slane %v3826, 4
        %v3829 = vshll.u32 %v3661, 16
        %v3831 = vrot.slane %v3829, 5
        %v3832 = vsel %vm2250, %v3827, %v3831
        %v3833 = vshrl.u32 %v3661, 16
        %v3835 = vrot.slane %v3833, 4
        %v3836 = vor.u32 %v3835, %v3831
        %v3837 = vrot.slane %v3836, 4
        %v3839 = vshll.u32 %v3662, 16
        %v3841 = vrot.slane %v3839, 5
        %v3842 = vsel %vm2250, %v3837, %v3841
        %v3844 = vshrl.u32 %v3663, 16
        %v3846 = vrot.slane %v3844, 4
        %v3847 = vshll.u32 %v3663, 16
        %v3849 = vrot.slane %v3847, 5
        %v3850 = vor.u32 %v3846, %v3849
        %v3851 = vrot.slane %v3850, 4
        %v3853 = vshll.u32 %v3664, 16
        %v3855 = vrot.slane %v3853, 5
        %v3856 = vsel %vm2250, %v3851, %v3855
        %v3857 = vshrl.u32 %v3664, 16
        %v3859 = vrot.slane %v3857, 4
        %v3860 = vor.u32 %v3859, %v3855
        %v3861 = vrot.slane %v3860, 4
        %v3863 = vshll.u32 %v3665, 16
        %v3865 = vrot.slane %v3863, 5
        %v3866 = vsel %vm2250, %v3861, %v3865
        %v3868 = vshrl.u32 %v3666, 16
        %v3870 = vrot.slane %v3868, 4
        %v3871 = vshll.u32 %v3666, 16
        %v3873 = vrot.slane %v3871, 5
        %v3874 = vor.u32 %v3870, %v3873
        %v3875 = vrot.slane %v3874, 4
        %v3877 = vshll.u32 %v3667, 16
        %v3879 = vrot.slane %v3877, 5
        %v3880 = vsel %vm2250, %v3875, %v3879
        %v3881 = vshrl.u32 %v3667, 16
        %v3883 = vrot.slane %v3881, 4
        %v3884 = vor.u32 %v3883, %v3879
        %v3885 = vrot.slane %v3884, 4
        %v3887 = vshll.u32 %v3668, 16
        %v3889 = vrot.slane %v3887, 5
        %v3890 = vsel %vm2250, %v3885, %v3889
        %v3892 = vshrl.u32 %v3669, 16
        %v3894 = vrot.slane %v3892, 4
        %v3895 = vshll.u32 %v3669, 16
        %v3897 = vrot.slane %v3895, 5
        %v3898 = vor.u32 %v3894, %v3897
        %v3899 = vrot.slane %v3898, 4
        %v3901 = vshll.u32 %v3670, 16
        %v3903 = vrot.slane %v3901, 5
        %v3904 = vsel %vm2250, %v3899, %v3903
        %v3905 = vshrl.u32 %v3670, 16
        %v3907 = vrot.slane %v3905, 4
        %v3908 = vor.u32 %v3907, %v3903
        %v3909 = vrot.slane %v3908, 4
        %v3911 = vshll.u32 %v3671, 16
        %v3913 = vrot.slane %v3911, 5
        %v3914 = vsel %vm2250, %v3909, %v3913
        %v3916 = vshrl.u32 %v3672, 16
        %v3918 = vrot.slane %v3916, 4
        %v3919 = vshll.u32 %v3672, 16
        %v3921 = vrot.slane %v3919, 5
        %v3922 = vor.u32 %v3918, %v3921
        %v3923 = vrot.slane %v3922, 4
        %v3925 = vshll.u32 %v3673, 16
        %v3927 = vrot.slane %v3925, 5
        %v3928 = vsel %vm2250, %v3923, %v3927
        %v3929 = vshrl.u32 %v3673, 16
        %v3931 = vrot.slane %v3929, 4
        %v3932 = vor.u32 %v3931, %v3927
        %v3933 = vrot.slane %v3932, 4
        %v3935 = vshll.u32 %v3674, 16
        %v3937 = vrot.slane %v3935, 5
        %v3938 = vsel %vm2250, %v3933, %v3937
        %s3939 = scalar_lea.vmem %s3, 256
        %v3940 = vld [vmem:[%s3939] sm:$0xf]
        %v3941 = vld [vmem:[%s3939 + $0x4] sm:$0xf]
        %v3942 = vld [vmem:[%s3939 + $0x8] sm:$0xf]
        %v3943 = vld [vmem:[%s3939 + $0xc] sm:$0xf]
        %v3944 = vld [vmem:[%s3939 + $0x10] sm:$0xf]
        %v3945 = vld [vmem:[%s3939 + $0x14] sm:$0xf]
        %v3946 = vld [vmem:[%s3939 + $0x18] sm:$0xf]
        %v3947 = vld [vmem:[%s3939 + $0x1c] sm:$0xf]
        %v3948 = vld [vmem:[%s3939 + $0x20] sm:$0xf]
        %v3949 = vld [vmem:[%s3939 + $0x24] sm:$0xf]
        %v3950 = vld [vmem:[%s3939 + $0x28] sm:$0xf]
        %v3951 = vld [vmem:[%s3939 + $0x2c] sm:$0xf]
        %v3952 = vld [vmem:[%s3939 + $0x30] sm:$0xf]
        %v3953 = vld [vmem:[%s3939 + $0x34] sm:$0xf]
        %v3954 = vld [vmem:[%s3939 + $0x38] sm:$0xf]
        %v3955 = vld [vmem:[%s3939 + $0x3c] sm:$0xf]
        %v3956 = vunpack.c.l.b16 %v3688
        %v3957 = vunpack.c.l.b16 %v3698
        %v3958 = vunpack.c.l.b16 %v3712
        %v3959 = vunpack.c.l.b16 %v3722
        %v3960 = vunpack.c.l.b16 %v3736
        %v3961 = vunpack.c.l.b16 %v3746
        %v3962 = vunpack.c.l.b16 %v3760
        %v3963 = vunpack.c.l.b16 %v3770
        %v3964 = vunpack.c.l.b16 %v3784
        %v3965 = vunpack.c.l.b16 %v3794
        %v3966 = vunpack.c.l.b16 %v3808
        %v3967 = vunpack.c.l.b16 %v3818
        %v3968 = vunpack.c.l.b16 %v3832
        %v3969 = vunpack.c.l.b16 %v3842
        %v3970 = vunpack.c.l.b16 %v3856
        %v3971 = vunpack.c.l.b16 %v3866
        %v3972 = vunpack.c.l.b16 %v3880
        %v3973 = vunpack.c.l.b16 %v3890
        %v3974 = vunpack.c.l.b16 %v3904
        %v3975 = vunpack.c.l.b16 %v3914
        %v3976 = vunpack.c.l.b16 %v3928
        %v3977 = vunpack.c.l.b16 %v3938
        %v3978 = vpack.c.b16 %v3957, %v3956
        %v3979 = vpack.c.b16 %v3959, %v3958
        %v3980 = vpack.c.b16 %v3961, %v3960
        %v3981 = vpack.c.b16 %v3963, %v3962
        %v3982 = vpack.c.b16 %v3965, %v3964
        %v3983 = vpack.c.b16 %v3967, %v3966
        %v3984 = vpack.c.b16 %v3969, %v3968
        %v3985 = vpack.c.b16 %v3971, %v3970
        %v3986 = vpack.c.b16 %v3973, %v3972
        %v3987 = vpack.c.b16 %v3975, %v3974
        %v3988 = vpack.c.b16 %v3977, %v3976
        %v4016 = vunpack.c.l.b16 %v3940
        %v4017 = vunpack.c.l.b16 %v3941
        %v4018 = vunpack.c.l.b16 %v3942
        %v4019 = vunpack.c.l.b16 %v3943
        %v4020 = vunpack.c.l.b16 %v3944
        %v4021 = vunpack.c.l.b16 %v3945
        %v4022 = vunpack.c.l.b16 %v3946
        %v4023 = vunpack.c.l.b16 %v3947
        %v4024 = vunpack.c.l.b16 %v3948
        %v4025 = vunpack.c.l.b16 %v3949
        %v4026 = vunpack.c.l.b16 %v3950
        %v4027 = vunpack.c.l.b16 %v3951
        %v4028 = vunpack.c.l.b16 %v3952
        %v4029 = vunpack.c.l.b16 %v3953
        %v4030 = vunpack.c.l.b16 %v3954
        %v4031 = vunpack.c.l.b16 %v3955
        %v4032 = vpack.c.b16 %v4017, %v4016
        %v4033 = vpack.c.b16 %v4019, %v4018
        %v4034 = vpack.c.b16 %v4021, %v4020
        %v4035 = vpack.c.b16 %v4023, %v4022
        %v4036 = vpack.c.b16 %v4025, %v4024
        %v4037 = vpack.c.b16 %v4027, %v4026
        %v4038 = vpack.c.b16 %v4029, %v4028
        %v4039 = vpack.c.b16 %v4031, %v4030
        %4048 = vmatprep.subr.bf16.mxu0 0
        %4049 = vmatpush1.bf16.msra.mxu0 %v4032
        %4050 = vmatprep.subr.bf16.mxu0 0
        %4051 = vmatpush1.bf16.msra.mxu0 %v4033
        %4052 = vmatprep.subr.bf16.mxu0 0
        %4053 = vmatpush1.bf16.msra.mxu0 %v4034
        %4054 = vmatprep.subr.bf16.mxu0 0
        %4055 = vmatpush1.bf16.msra.mxu0 %v4035
        %4056 = vmatprep.subr.bf16.mxu0 0
        %4057 = vmatpush1.bf16.msra.mxu0 %v4036
        %4058 = vmatprep.subr.bf16.mxu0 0
        %4059 = vmatpush1.bf16.msra.mxu0 %v4037
        %4060 = vmatprep.subr.bf16.mxu0 0
        %4061 = vmatpush1.bf16.msra.mxu0 %v4038
        %4062 = vmatprep.subr.bf16.mxu0 0
        %4063 = vmatpush1.bf16.msra.mxu0 %v4039
        %4064 = vmatprep.subr.bf16.mxu0 0
        %4065 = vmatpush1.bf16.msra.mxu0 0
        %4066 = vmatprep.subr.bf16.mxu0 0
        %4067 = vmatpush1.bf16.msra.mxu0 0
        %4068 = vmatprep.subr.bf16.mxu0 0
        %4069 = vmatpush1.bf16.msra.mxu0 0
        %4070 = vmatprep.subr.bf16.mxu0 0
        %4071 = vmatpush1.bf16.msra.mxu0 0
        %4072 = vmatprep.subr.bf16.mxu0 0
        %4073 = vmatpush1.bf16.msra.mxu0 0
        %4074 = vmatprep.subr.bf16.mxu0 0
        %4075 = vmatpush1.bf16.msra.mxu0 0
        %4076 = vmatprep.subr.bf16.mxu0 0
        %4077 = vmatpush1.bf16.msra.mxu0 0
        %4078 = vmatprep.subr.bf16.mxu0 0
        %4079 = vmatpush1.bf16.msra.mxu0 0
        %4080 = vmatprep.mubr.bf16.mxu0 0
        %4081 = vmatmul.mubr.bf16.gmra.mrb[0].mxu0 %v3978
        %v4082 = vpop.f32.mrb[0].mxu0
        %v4083 = vadd.f32 0.0, %v4082
        %v4084 = vpop.f32.mrb[0].mxu0
        %v4085 = vpop.f32.mrb[0].mxu0
        %v4086 = vadd.f32 0.0, %v4085
        %v4087 = vpop.f32.mrb[0].mxu0
        %4088 = vmatprep.mubr.bf16.mxu0 0
        %4089 = vmatmul.mubr.bf16.gmra.mrb[0].mxu0 %v3979
        %v4090 = vpop.f32.mrb[0].mxu0
        %v4091 = vadd.f32 0.0, %v4090
        %v4092 = vpop.f32.mrb[0].mxu0
        %v4093 = vpop.f32.mrb[0].mxu0
        %v4094 = vadd.f32 0.0, %v4093
        %v4095 = vpop.f32.mrb[0].mxu0
        %4096 = vmatprep.mubr.bf16.mxu0 0
        %4097 = vmatmul.mubr.bf16.gmra.mrb[0].mxu0 %v3980
        %v4098 = vpop.f32.mrb[0].mxu0
        %v4099 = vadd.f32 0.0, %v4098
        %v4100 = vpop.f32.mrb[0].mxu0
        %v4101 = vpop.f32.mrb[0].mxu0
        %v4102 = vadd.f32 0.0, %v4101
        %v4103 = vpop.f32.mrb[0].mxu0
        %4104 = vmatprep.mubr.bf16.mxu0 0
        %4105 = vmatmul.mubr.bf16.gmra.mrb[0].mxu0 %v3981
        %v4106 = vpop.f32.mrb[0].mxu0
        %v4107 = vadd.f32 0.0, %v4106
        %v4108 = vpop.f32.mrb[0].mxu0
        %v4109 = vpop.f32.mrb[0].mxu0
        %v4110 = vadd.f32 0.0, %v4109
        %v4111 = vpop.f32.mrb[0].mxu0
        %4112 = vmatprep.mubr.bf16.mxu0 0
        %4113 = vmatmul.mubr.bf16.gmra.mrb[0].mxu0 %v3982
        %v4114 = vpop.f32.mrb[0].mxu0
        %v4115 = vadd.f32 0.0, %v4114
        %v4116 = vpop.f32.mrb[0].mxu0
        %v4117 = vpop.f32.mrb[0].mxu0
        %v4118 = vadd.f32 0.0, %v4117
        %v4119 = vpop.f32.mrb[0].mxu0
        %4120 = vmatprep.mubr.bf16.mxu0 0
        %4121 = vmatmul.mubr.bf16.gmra.mrb[0].mxu0 %v3983
        %v4122 = vpop.f32.mrb[0].mxu0
        %v4123 = vadd.f32 0.0, %v4122
        %v4124 = vpop.f32.mrb[0].mxu0
        %v4125 = vpop.f32.mrb[0].mxu0
        %v4126 = vadd.f32 0.0, %v4125
        %v4127 = vpop.f32.mrb[0].mxu0
        %4128 = vmatprep.mubr.bf16.mxu0 0
        %4129 = vmatmul.mubr.bf16.gmra.mrb[0].mxu0 %v3984
        %v4130 = vpop.f32.mrb[0].mxu0
        %v4131 = vadd.f32 0.0, %v4130
        %v4132 = vpop.f32.mrb[0].mxu0
        %v4133 = vpop.f32.mrb[0].mxu0
        %v4134 = vadd.f32 0.0, %v4133
        %v4135 = vpop.f32.mrb[0].mxu0
        %4136 = vmatprep.mubr.bf16.mxu0 0
        %4137 = vmatmul.mubr.bf16.gmra.mrb[0].mxu0 %v3985
        %v4138 = vpop.f32.mrb[0].mxu0
        %v4139 = vadd.f32 0.0, %v4138
        %v4140 = vpop.f32.mrb[0].mxu0
        %v4141 = vpop.f32.mrb[0].mxu0
        %v4142 = vadd.f32 0.0, %v4141
        %v4143 = vpop.f32.mrb[0].mxu0
        %4144 = vmatprep.mubr.bf16.mxu0 0
        %4145 = vmatmul.mubr.bf16.gmra.mrb[0].mxu0 %v3986
        %v4146 = vpop.f32.mrb[0].mxu0
        %v4147 = vadd.f32 0.0, %v4146
        %v4148 = vpop.f32.mrb[0].mxu0
        %v4149 = vpop.f32.mrb[0].mxu0
        %v4150 = vadd.f32 0.0, %v4149
        %v4151 = vpop.f32.mrb[0].mxu0
        %4152 = vmatprep.mubr.bf16.mxu0 0
        %4153 = vmatmul.mubr.bf16.gmra.mrb[0].mxu0 %v3987
        %v4154 = vpop.f32.mrb[0].mxu0
        %v4155 = vadd.f32 0.0, %v4154
        %v4156 = vpop.f32.mrb[0].mxu0
        %v4157 = vpop.f32.mrb[0].mxu0
        %v4158 = vadd.f32 0.0, %v4157
        %v4159 = vpop.f32.mrb[0].mxu0
        %4160 = vmatprep.mubr.bf16.mxu0 0
        %4161 = vmatmul.mubr.bf16.gmra.mrb[0].mxu0 %v3988
        %v4162 = vpop.f32.mrb[0].mxu0
        %v4163 = vadd.f32 0.0, %v4162
        %v4164 = vpop.f32.mrb[0].mxu0
        %v4165 = vpop.f32.mrb[0].mxu0
        %v4166 = vadd.f32 0.0, %v4165
        %v4167 = vpop.f32.mrb[0].mxu0
        %4168 = vdwg.mxu0
        %v4169 = vadd.f32 %v3620, %v4083
        %v4170 = vadd.f32 %v3621, %v4086
        %v4171 = vadd.f32 %v3622, %v4091
        %v4172 = vadd.f32 %v3623, %v4094
        %v4173 = vadd.f32 %v3624, %v4099
        %v4174 = vadd.f32 %v3625, %v4102
        %v4175 = vadd.f32 %v3626, %v4107
        %v4176 = vadd.f32 %v3627, %v4110
        %v4177 = vadd.f32 %v3628, %v4115
        %v4178 = vadd.f32 %v3629, %v4118
        %v4179 = vadd.f32 %v3630, %v4123
        %v4180 = vadd.f32 %v3631, %v4126
        %v4181 = vadd.f32 %v3632, %v4131
        %v4182 = vadd.f32 %v3633, %v4134
        %v4183 = vadd.f32 %v3634, %v4139
        %v4184 = vadd.f32 %v3635, %v4142
        %v4185 = vadd.f32 %v3636, %v4147
        %v4186 = vadd.f32 %v3637, %v4150
        %v4187 = vadd.f32 %v3638, %v4155
        %v4188 = vadd.f32 %v3639, %v4158
        %v4189 = vadd.f32 %v3640, %v4163
        %v4190 = vadd.f32 %v3641, %v4166
        %v4191 = vld [vmem:[%s3345] sm:$0xe]
        %v4192 = vld [vmem:[%s3345 + $0xc] sm:$0xe]
        %v4193 = vld [vmem:[%s3345 + $0x18] sm:$0xe]
        %v4194 = vld [vmem:[%s3345 + $0x24] sm:$0xe]
        %v4195 = vld [vmem:[%s3345 + $0x30] sm:$0xe]
        %v4196 = vld [vmem:[%s3345 + $0x3c] sm:$0xe]
        %v4197 = vld [vmem:[%s3345 + $0x48] sm:$0xe]
        %v4198 = vld [vmem:[%s3345 + $0x54] sm:$0xe]
        %v4199 = vld [vmem:[%s3345 + $0x60] sm:$0xe]
        %v4200 = vld [vmem:[%s3345 + $0x6c] sm:$0xe]
        %v4201 = vld [vmem:[%s3345 + $0x78] sm:$0xe]
        %v4235 = vrot.slane %v4191, 5
        %v4236 = vrot.slane %v4235, 4
        %v4237 = vrot.slane %v3643, 5
        %v4238 = vsel %vm3015, %v4236, %v4237
        %v4239 = vrot.slane %v4237, 4
        %v4240 = vrot.slane %v3644, 5
        %v4241 = vsel %vm3015, %v4239, %v4240
        %v4242 = vrot.slane %v4192, 5
        %v4243 = vrot.slane %v4242, 4
        %v4244 = vrot.slane %v3646, 5
        %v4245 = vsel %vm3015, %v4243, %v4244
        %v4246 = vrot.slane %v4244, 4
        %v4247 = vrot.slane %v3647, 5
        %v4248 = vsel %vm3015, %v4246, %v4247
        %v4249 = vrot.slane %v4193, 5
        %v4250 = vrot.slane %v4249, 4
        %v4251 = vrot.slane %v3649, 5
        %v4252 = vsel %vm3015, %v4250, %v4251
        %v4253 = vrot.slane %v4251, 4
        %v4254 = vrot.slane %v3650, 5
        %v4255 = vsel %vm3015, %v4253, %v4254
        %v4256 = vrot.slane %v4194, 5
        %v4257 = vrot.slane %v4256, 4
        %v4258 = vrot.slane %v3652, 5
        %v4259 = vsel %vm3015, %v4257, %v4258
        %v4260 = vrot.slane %v4258, 4
        %v4261 = vrot.slane %v3653, 5
        %v4262 = vsel %vm3015, %v4260, %v4261
        %v4263 = vrot.slane %v4195, 5
        %v4264 = vrot.slane %v4263, 4
        %v4265 = vrot.slane %v3655, 5
        %v4266 = vsel %vm3015, %v4264, %v4265
        %v4267 = vrot.slane %v4265, 4
        %v4268 = vrot.slane %v3656, 5
        %v4269 = vsel %vm3015, %v4267, %v4268
        %v4270 = vrot.slane %v4196, 5
        %v4271 = vrot.slane %v4270, 4
        %v4272 = vrot.slane %v3658, 5
        %v4273 = vsel %vm3015, %v4271, %v4272
        %v4274 = vrot.slane %v4272, 4
        %v4275 = vrot.slane %v3659, 5
        %v4276 = vsel %vm3015, %v4274, %v4275
        %v4277 = vrot.slane %v4197, 5
        %v4278 = vrot.slane %v4277, 4
        %v4279 = vrot.slane %v3661, 5
        %v4280 = vsel %vm3015, %v4278, %v4279
        %v4281 = vrot.slane %v4279, 4
        %v4282 = vrot.slane %v3662, 5
        %v4283 = vsel %vm3015, %v4281, %v4282
        %v4284 = vrot.slane %v4198, 5
        %v4285 = vrot.slane %v4284, 4
        %v4286 = vrot.slane %v3664, 5
        %v4287 = vsel %vm3015, %v4285, %v4286
        %v4288 = vrot.slane %v4286, 4
        %v4289 = vrot.slane %v3665, 5
        %v4290 = vsel %vm3015, %v4288, %v4289
        %v4291 = vrot.slane %v4199, 5
        %v4292 = vrot.slane %v4291, 4
        %v4293 = vrot.slane %v3667, 5
        %v4294 = vsel %vm3015, %v4292, %v4293
        %v4295 = vrot.slane %v4293, 4
        %v4296 = vrot.slane %v3668, 5
        %v4297 = vsel %vm3015, %v4295, %v4296
        %v4298 = vrot.slane %v4200, 5
        %v4299 = vrot.slane %v4298, 4
        %v4300 = vrot.slane %v3670, 5
        %v4301 = vsel %vm3015, %v4299, %v4300
        %v4302 = vrot.slane %v4300, 4
        %v4303 = vrot.slane %v3671, 5
        %v4304 = vsel %vm3015, %v4302, %v4303
        %v4305 = vrot.slane %v4201, 5
        %v4306 = vrot.slane %v4305, 4
        %v4307 = vrot.slane %v3673, 5
        %v4308 = vsel %vm3015, %v4306, %v4307
        %v4309 = vrot.slane %v4307, 4
        %v4310 = vrot.slane %v3674, 5
        %v4311 = vsel %vm3015, %v4309, %v4310
        %s4312 = scalar_lea.vmem %s3, 320
        %v4313 = vld [vmem:[%s4312] sm:$0xf]
        %v4314 = vld [vmem:[%s4312 + $0x4] sm:$0xf]
        %v4315 = vld [vmem:[%s4312 + $0x8] sm:$0xf]
        %v4316 = vld [vmem:[%s4312 + $0xc] sm:$0xf]
        %v4317 = vld [vmem:[%s4312 + $0x10] sm:$0xf]
        %v4318 = vld [vmem:[%s4312 + $0x14] sm:$0xf]
        %v4319 = vld [vmem:[%s4312 + $0x18] sm:$0xf]
        %v4320 = vld [vmem:[%s4312 + $0x1c] sm:$0xf]
        %v4321 = vld [vmem:[%s4312 + $0x20] sm:$0xf]
        %v4322 = vld [vmem:[%s4312 + $0x24] sm:$0xf]
        %v4323 = vld [vmem:[%s4312 + $0x28] sm:$0xf]
        %v4324 = vld [vmem:[%s4312 + $0x2c] sm:$0xf]
        %v4325 = vld [vmem:[%s4312 + $0x30] sm:$0xf]
        %v4326 = vld [vmem:[%s4312 + $0x34] sm:$0xf]
        %v4327 = vld [vmem:[%s4312 + $0x38] sm:$0xf]
        %v4328 = vld [vmem:[%s4312 + $0x3c] sm:$0xf]
        %v4329 = vunpack.c.l.b16 %v4238
        %v4330 = vunpack.c.l.b16 %v4241
        %v4331 = vunpack.c.l.b16 %v4245
        %v4332 = vunpack.c.l.b16 %v4248
        %v4333 = vunpack.c.l.b16 %v4252
        %v4334 = vunpack.c.l.b16 %v4255
        %v4335 = vunpack.c.l.b16 %v4259
        %v4336 = vunpack.c.l.b16 %v4262
        %v4337 = vunpack.c.l.b16 %v4266
        %v4338 = vunpack.c.l.b16 %v4269
        %v4339 = vunpack.c.l.b16 %v4273
        %v4340 = vunpack.c.l.b16 %v4276
        %v4341 = vunpack.c.l.b16 %v4280
        %v4342 = vunpack.c.l.b16 %v4283
        %v4343 = vunpack.c.l.b16 %v4287
        %v4344 = vunpack.c.l.b16 %v4290
        %v4345 = vunpack.c.l.b16 %v4294
        %v4346 = vunpack.c.l.b16 %v4297
        %v4347 = vunpack.c.l.b16 %v4301
        %v4348 = vunpack.c.l.b16 %v4304
        %v4349 = vunpack.c.l.b16 %v4308
        %v4350 = vunpack.c.l.b16 %v4311
        %v4351 = vpack.c.b16 %v4330, %v4329
        %v4352 = vpack.c.b16 %v4332, %v4331
        %v4353 = vpack.c.b16 %v4334, %v4333
        %v4354 = vpack.c.b16 %v4336, %v4335
        %v4355 = vpack.c.b16 %v4338, %v4337
        %v4356 = vpack.c.b16 %v4340, %v4339
        %v4357 = vpack.c.b16 %v4342, %v4341
        %v4358 = vpack.c.b16 %v4344, %v4343
        %v4359 = vpack.c.b16 %v4346, %v4345
        %v4360 = vpack.c.b16 %v4348, %v4347
        %v4361 = vpack.c.b16 %v4350, %v4349
        %v4389 = vunpack.c.l.b16 %v4313
        %v4390 = vunpack.c.l.b16 %v4314
        %v4391 = vunpack.c.l.b16 %v4315
        %v4392 = vunpack.c.l.b16 %v4316
        %v4393 = vunpack.c.l.b16 %v4317
        %v4394 = vunpack.c.l.b16 %v4318
        %v4395 = vunpack.c.l.b16 %v4319
        %v4396 = vunpack.c.l.b16 %v4320
        %v4397 = vunpack.c.l.b16 %v4321
        %v4398 = vunpack.c.l.b16 %v4322
        %v4399 = vunpack.c.l.b16 %v4323
        %v4400 = vunpack.c.l.b16 %v4324
        %v4401 = vunpack.c.l.b16 %v4325
        %v4402 = vunpack.c.l.b16 %v4326
        %v4403 = vunpack.c.l.b16 %v4327
        %v4404 = vunpack.c.l.b16 %v4328
        %v4405 = vpack.c.b16 %v4390, %v4389
        %v4406 = vpack.c.b16 %v4392, %v4391
        %v4407 = vpack.c.b16 %v4394, %v4393
        %v4408 = vpack.c.b16 %v4396, %v4395
        %v4409 = vpack.c.b16 %v4398, %v4397
        %v4410 = vpack.c.b16 %v4400, %v4399
        %v4411 = vpack.c.b16 %v4402, %v4401
        %v4412 = vpack.c.b16 %v4404, %v4403
        %4421 = vmatprep.subr.bf16.mxu0 0
        %4422 = vmatpush1.bf16.msra.mxu0 %v4405
        %4423 = vmatprep.subr.bf16.mxu0 0
        %4424 = vmatpush1.bf16.msra.mxu0 %v4406
        %4425 = vmatprep.subr.bf16.mxu0 0
        %4426 = vmatpush1.bf16.msra.mxu0 %v4407
        %4427 = vmatprep.subr.bf16.mxu0 0
        %4428 = vmatpush1.bf16.msra.mxu0 %v4408
        %4429 = vmatprep.subr.bf16.mxu0 0
        %4430 = vmatpush1.bf16.msra.mxu0 %v4409
        %4431 = vmatprep.subr.bf16.mxu0 0
        %4432 = vmatpush1.bf16.msra.mxu0 %v4410
        %4433 = vmatprep.subr.bf16.mxu0 0
        %4434 = vmatpush1.bf16.msra.mxu0 %v4411
        %4435 = vmatprep.subr.bf16.mxu0 0
        %4436 = vmatpush1.bf16.msra.mxu0 %v4412
        %4437 = vmatprep.subr.bf16.mxu0 0
        %4438 = vmatpush1.bf16.msra.mxu0 0
        %4439 = vmatprep.subr.bf16.mxu0 0
        %4440 = vmatpush1.bf16.msra.mxu0 0
        %4441 = vmatprep.subr.bf16.mxu0 0
        %4442 = vmatpush1.bf16.msra.mxu0 0
        %4443 = vmatprep.subr.bf16.mxu0 0
        %4444 = vmatpush1.bf16.msra.mxu0 0
        %4445 = vmatprep.subr.bf16.mxu0 0
        %4446 = vmatpush1.bf16.msra.mxu0 0
        %4447 = vmatprep.subr.bf16.mxu0 0
        %4448 = vmatpush1.bf16.msra.mxu0 0
        %4449 = vmatprep.subr.bf16.mxu0 0
        %4450 = vmatpush1.bf16.msra.mxu0 0
        %4451 = vmatprep.subr.bf16.mxu0 0
        %4452 = vmatpush1.bf16.msra.mxu0 0
        %4453 = vmatprep.mubr.bf16.mxu0 0
        %4454 = vmatmul.mubr.bf16.gmra.mrb[0].mxu0 %v4351
        %v4455 = vpop.f32.mrb[0].mxu0
        %v4456 = vadd.f32 0.0, %v4455
        %v4457 = vpop.f32.mrb[0].mxu0
        %v4458 = vpop.f32.mrb[0].mxu0
        %v4459 = vadd.f32 0.0, %v4458
        %v4460 = vpop.f32.mrb[0].mxu0
        %4461 = vmatprep.mubr.bf16.mxu0 0
        %4462 = vmatmul.mubr.bf16.gmra.mrb[0].mxu0 %v4352
        %v4463 = vpop.f32.mrb[0].mxu0
        %v4464 = vadd.f32 0.0, %v4463
        %v4465 = vpop.f32.mrb[0].mxu0
        %v4466 = vpop.f32.mrb[0].mxu0
        %v4467 = vadd.f32 0.0, %v4466
        %v4468 = vpop.f32.mrb[0].mxu0
        %4469 = vmatprep.mubr.bf16.mxu0 0
        %4470 = vmatmul.mubr.bf16.gmra.mrb[0].mxu0 %v4353
        %v4471 = vpop.f32.mrb[0].mxu0
        %v4472 = vadd.f32 0.0, %v4471
        %v4473 = vpop.f32.mrb[0].mxu0
        %v4474 = vpop.f32.mrb[0].mxu0
        %v4475 = vadd.f32 0.0, %v4474
        %v4476 = vpop.f32.mrb[0].mxu0
        %4477 = vmatprep.mubr.bf16.mxu0 0
        %4478 = vmatmul.mubr.bf16.gmra.mrb[0].mxu0 %v4354
        %v4479 = vpop.f32.mrb[0].mxu0
        %v4480 = vadd.f32 0.0, %v4479
        %v4481 = vpop.f32.mrb[0].mxu0
        %v4482 = vpop.f32.mrb[0].mxu0
        %v4483 = vadd.f32 0.0, %v4482
        %v4484 = vpop.f32.mrb[0].mxu0
        %4485 = vmatprep.mubr.bf16.mxu0 0
        %4486 = vmatmul.mubr.bf16.gmra.mrb[0].mxu0 %v4355
        %v4487 = vpop.f32.mrb[0].mxu0
        %v4488 = vadd.f32 0.0, %v4487
        %v4489 = vpop.f32.mrb[0].mxu0
        %v4490 = vpop.f32.mrb[0].mxu0
        %v4491 = vadd.f32 0.0, %v4490
        %v4492 = vpop.f32.mrb[0].mxu0
        %4493 = vmatprep.mubr.bf16.mxu0 0
        %4494 = vmatmul.mubr.bf16.gmra.mrb[0].mxu0 %v4356
        %v4495 = vpop.f32.mrb[0].mxu0
        %v4496 = vadd.f32 0.0, %v4495
        %v4497 = vpop.f32.mrb[0].mxu0
        %v4498 = vpop.f32.mrb[0].mxu0
        %v4499 = vadd.f32 0.0, %v4498
        %v4500 = vpop.f32.mrb[0].mxu0
        %4501 = vmatprep.mubr.bf16.mxu0 0
        %4502 = vmatmul.mubr.bf16.gmra.mrb[0].mxu0 %v4357
        %v4503 = vpop.f32.mrb[0].mxu0
        %v4504 = vadd.f32 0.0, %v4503
        %v4505 = vpop.f32.mrb[0].mxu0
        %v4506 = vpop.f32.mrb[0].mxu0
        %v4507 = vadd.f32 0.0, %v4506
        %v4508 = vpop.f32.mrb[0].mxu0
        %4509 = vmatprep.mubr.bf16.mxu0 0
        %4510 = vmatmul.mubr.bf16.gmra.mrb[0].mxu0 %v4358
        %v4511 = vpop.f32.mrb[0].mxu0
        %v4512 = vadd.f32 0.0, %v4511
        %v4513 = vpop.f32.mrb[0].mxu0
        %v4514 = vpop.f32.mrb[0].mxu0
        %v4515 = vadd.f32 0.0, %v4514
        %v4516 = vpop.f32.mrb[0].mxu0
        %4517 = vmatprep.mubr.bf16.mxu0 0
        %4518 = vmatmul.mubr.bf16.gmra.mrb[0].mxu0 %v4359
        %v4519 = vpop.f32.mrb[0].mxu0
        %v4520 = vadd.f32 0.0, %v4519
        %v4521 = vpop.f32.mrb[0].mxu0
        %v4522 = vpop.f32.mrb[0].mxu0
        %v4523 = vadd.f32 0.0, %v4522
        %v4524 = vpop.f32.mrb[0].mxu0
        %4525 = vmatprep.mubr.bf16.mxu0 0
        %4526 = vmatmul.mubr.bf16.gmra.mrb[0].mxu0 %v4360
        %v4527 = vpop.f32.mrb[0].mxu0
        %v4528 = vadd.f32 0.0, %v4527
        %v4529 = vpop.f32.mrb[0].mxu0
        %v4530 = vpop.f32.mrb[0].mxu0
        %v4531 = vadd.f32 0.0, %v4530
        %v4532 = vpop.f32.mrb[0].mxu0
        %4533 = vmatprep.mubr.bf16.mxu0 0
        %4534 = vmatmul.mubr.bf16.gmra.mrb[0].mxu0 %v4361
        %v4535 = vpop.f32.mrb[0].mxu0
        %v4536 = vadd.f32 0.0, %v4535
        %v4537 = vpop.f32.mrb[0].mxu0
        %v4538 = vpop.f32.mrb[0].mxu0
        %v4539 = vadd.f32 0.0, %v4538
        %v4540 = vpop.f32.mrb[0].mxu0
        %4541 = vdwg.mxu0
        %v4542 = vadd.f32 %v4169, %v4456
        %v4543 = vadd.f32 %v4170, %v4459
        %v4544 = vadd.f32 %v4171, %v4464
        %v4545 = vadd.f32 %v4172, %v4467
        %v4546 = vadd.f32 %v4173, %v4472
        %v4547 = vadd.f32 %v4174, %v4475
        %v4548 = vadd.f32 %v4175, %v4480
        %v4549 = vadd.f32 %v4176, %v4483
        %v4550 = vadd.f32 %v4177, %v4488
        %v4551 = vadd.f32 %v4178, %v4491
        %v4552 = vadd.f32 %v4179, %v4496
        %v4553 = vadd.f32 %v4180, %v4499
        %v4554 = vadd.f32 %v4181, %v4504
        %v4555 = vadd.f32 %v4182, %v4507
        %v4556 = vadd.f32 %v4183, %v4512
        %v4557 = vadd.f32 %v4184, %v4515
        %v4558 = vadd.f32 %v4185, %v4520
        %v4559 = vadd.f32 %v4186, %v4523
        %v4560 = vadd.f32 %v4187, %v4528
        %v4561 = vadd.f32 %v4188, %v4531
        %v4562 = vadd.f32 %v4189, %v4536
        %v4563 = vadd.f32 %v4190, %v4539
        %s4564 = scalar_lea.vmem [#allocation2], 24
        %v4565 = vld [vmem:[%s4564] sm:$0xf]
        %v4566 = vld [vmem:[%s4564 + $0x4] sm:$0xf]
        %v4567 = vld [vmem:[%s4564 + $0xc] sm:$0xf]
        %v4568 = vld [vmem:[%s4564 + $0x10] sm:$0xf]
        %v4569 = vld [vmem:[%s4564 + $0x18] sm:$0xf]
        %v4570 = vld [vmem:[%s4564 + $0x1c] sm:$0xf]
        %v4571 = vld [vmem:[%s4564 + $0x24] sm:$0xf]
        %v4572 = vld [vmem:[%s4564 + $0x28] sm:$0xf]
        %v4573 = vld [vmem:[%s4564 + $0x30] sm:$0xf]
        %v4574 = vld [vmem:[%s4564 + $0x34] sm:$0xf]
        %v4575 = vld [vmem:[%s4564 + $0x3c] sm:$0xf]
        %v4576 = vld [vmem:[%s4564 + $0x40] sm:$0xf]
        %v4577 = vld [vmem:[%s4564 + $0x48] sm:$0xf]
        %v4578 = vld [vmem:[%s4564 + $0x4c] sm:$0xf]
        %v4579 = vld [vmem:[%s4564 + $0x54] sm:$0xf]
        %v4580 = vld [vmem:[%s4564 + $0x58] sm:$0xf]
        %v4581 = vld [vmem:[%s4564 + $0x60] sm:$0xf]
        %v4582 = vld [vmem:[%s4564 + $0x64] sm:$0xf]
        %v4583 = vld [vmem:[%s4564 + $0x6c] sm:$0xf]
        %v4584 = vld [vmem:[%s4564 + $0x70] sm:$0xf]
        %v4585 = vld [vmem:[%s4564 + $0x78] sm:$0xf]
        %v4586 = vld [vmem:[%s4564 + $0x7c] sm:$0xf]
        %s4587 = scalar_lea.vmem %s3, 384
        %v4588 = vld [vmem:[%s4587] sm:$0xf]
        %v4589 = vld [vmem:[%s4587 + $0x4] sm:$0xf]
        %v4590 = vld [vmem:[%s4587 + $0x8] sm:$0xf]
        %v4591 = vld [vmem:[%s4587 + $0xc] sm:$0xf]
        %v4592 = vld [vmem:[%s4587 + $0x10] sm:$0xf]
        %v4593 = vld [vmem:[%s4587 + $0x14] sm:$0xf]
        %v4594 = vld [vmem:[%s4587 + $0x18] sm:$0xf]
        %v4595 = vld [vmem:[%s4587 + $0x1c] sm:$0xf]
        %v4596 = vld [vmem:[%s4587 + $0x20] sm:$0xf]
        %v4597 = vld [vmem:[%s4587 + $0x24] sm:$0xf]
        %v4598 = vld [vmem:[%s4587 + $0x28] sm:$0xf]
        %v4599 = vld [vmem:[%s4587 + $0x2c] sm:$0xf]
        %v4600 = vld [vmem:[%s4587 + $0x30] sm:$0xf]
        %v4601 = vld [vmem:[%s4587 + $0x34] sm:$0xf]
        %v4602 = vld [vmem:[%s4587 + $0x38] sm:$0xf]
        %v4603 = vld [vmem:[%s4587 + $0x3c] sm:$0xf]
        %v4626 = vunpack.c.l.b16 %v4565
        %v4627 = vunpack.c.l.b16 %v4566
        %v4628 = vunpack.c.l.b16 %v4567
        %v4629 = vunpack.c.l.b16 %v4568
        %v4630 = vunpack.c.l.b16 %v4569
        %v4631 = vunpack.c.l.b16 %v4570
        %v4632 = vunpack.c.l.b16 %v4571
        %v4633 = vunpack.c.l.b16 %v4572
        %v4634 = vunpack.c.l.b16 %v4573
        %v4635 = vunpack.c.l.b16 %v4574
        %v4636 = vunpack.c.l.b16 %v4575
        %v4637 = vunpack.c.l.b16 %v4576
        %v4638 = vunpack.c.l.b16 %v4577
        %v4639 = vunpack.c.l.b16 %v4578
        %v4640 = vunpack.c.l.b16 %v4579
        %v4641 = vunpack.c.l.b16 %v4580
        %v4642 = vunpack.c.l.b16 %v4581
        %v4643 = vunpack.c.l.b16 %v4582
        %v4644 = vunpack.c.l.b16 %v4583
        %v4645 = vunpack.c.l.b16 %v4584
        %v4646 = vunpack.c.l.b16 %v4585
        %v4647 = vunpack.c.l.b16 %v4586
        %v4648 = vpack.c.b16 %v4627, %v4626
        %v4649 = vpack.c.b16 %v4629, %v4628
        %v4650 = vpack.c.b16 %v4631, %v4630
        %v4651 = vpack.c.b16 %v4633, %v4632
        %v4652 = vpack.c.b16 %v4635, %v4634
        %v4653 = vpack.c.b16 %v4637, %v4636
        %v4654 = vpack.c.b16 %v4639, %v4638
        %v4655 = vpack.c.b16 %v4641, %v4640
        %v4656 = vpack.c.b16 %v4643, %v4642
        %v4657 = vpack.c.b16 %v4645, %v4644
        %v4658 = vpack.c.b16 %v4647, %v4646
        %v4686 = vunpack.c.l.b16 %v4588
        %v4687 = vunpack.c.l.b16 %v4589
        %v4688 = vunpack.c.l.b16 %v4590
        %v4689 = vunpack.c.l.b16 %v4591
        %v4690 = vunpack.c.l.b16 %v4592
        %v4691 = vunpack.c.l.b16 %v4593
        %v4692 = vunpack.c.l.b16 %v4594
        %v4693 = vunpack.c.l.b16 %v4595
        %v4694 = vunpack.c.l.b16 %v4596
        %v4695 = vunpack.c.l.b16 %v4597
        %v4696 = vunpack.c.l.b16 %v4598
        %v4697 = vunpack.c.l.b16 %v4599
        %v4698 = vunpack.c.l.b16 %v4600
        %v4699 = vunpack.c.l.b16 %v4601
        %v4700 = vunpack.c.l.b16 %v4602
        %v4701 = vunpack.c.l.b16 %v4603
        %v4702 = vpack.c.b16 %v4687, %v4686
        %v4703 = vpack.c.b16 %v4689, %v4688
        %v4704 = vpack.c.b16 %v4691, %v4690
        %v4705 = vpack.c.b16 %v4693, %v4692
        %v4706 = vpack.c.b16 %v4695, %v4694
        %v4707 = vpack.c.b16 %v4697, %v4696
        %v4708 = vpack.c.b16 %v4699, %v4698
        %v4709 = vpack.c.b16 %v4701, %v4700
        %4718 = vmatprep.subr.bf16.mxu0 0
        %4719 = vmatpush1.bf16.msra.mxu0 %v4702
        %4720 = vmatprep.subr.bf16.mxu0 0
        %4721 = vmatpush1.bf16.msra.mxu0 %v4703
        %4722 = vmatprep.subr.bf16.mxu0 0
        %4723 = vmatpush1.bf16.msra.mxu0 %v4704
        %4724 = vmatprep.subr.bf16.mxu0 0
        %4725 = vmatpush1.bf16.msra.mxu0 %v4705
        %4726 = vmatprep.subr.bf16.mxu0 0
        %4727 = vmatpush1.bf16.msra.mxu0 %v4706
        %4728 = vmatprep.subr.bf16.mxu0 0
        %4729 = vmatpush1.bf16.msra.mxu0 %v4707
        %4730 = vmatprep.subr.bf16.mxu0 0
        %4731 = vmatpush1.bf16.msra.mxu0 %v4708
        %4732 = vmatprep.subr.bf16.mxu0 0
        %4733 = vmatpush1.bf16.msra.mxu0 %v4709
        %4734 = vmatprep.subr.bf16.mxu0 0
        %4735 = vmatpush1.bf16.msra.mxu0 0
        %4736 = vmatprep.subr.bf16.mxu0 0
        %4737 = vmatpush1.bf16.msra.mxu0 0
        %4738 = vmatprep.subr.bf16.mxu0 0
        %4739 = vmatpush1.bf16.msra.mxu0 0
        %4740 = vmatprep.subr.bf16.mxu0 0
        %4741 = vmatpush1.bf16.msra.mxu0 0
        %4742 = vmatprep.subr.bf16.mxu0 0
        %4743 = vmatpush1.bf16.msra.mxu0 0
        %4744 = vmatprep.subr.bf16.mxu0 0
        %4745 = vmatpush1.bf16.msra.mxu0 0
        %4746 = vmatprep.subr.bf16.mxu0 0
        %4747 = vmatpush1.bf16.msra.mxu0 0
        %4748 = vmatprep.subr.bf16.mxu0 0
        %4749 = vmatpush1.bf16.msra.mxu0 0
        %4750 = vmatprep.mubr.bf16.mxu0 0
        %4751 = vmatmul.mubr.bf16.gmra.mrb[0].mxu0 %v4648
        %v4752 = vpop.f32.mrb[0].mxu0
        %v4753 = vadd.f32 0.0, %v4752
        %v4754 = vpop.f32.mrb[0].mxu0
        %v4755 = vpop.f32.mrb[0].mxu0
        %v4756 = vadd.f32 0.0, %v4755
        %v4757 = vpop.f32.mrb[0].mxu0
        %4758 = vmatprep.mubr.bf16.mxu0 0
        %4759 = vmatmul.mubr.bf16.gmra.mrb[0].mxu0 %v4649
        %v4760 = vpop.f32.mrb[0].mxu0
        %v4761 = vadd.f32 0.0, %v4760
        %v4762 = vpop.f32.mrb[0].mxu0
        %v4763 = vpop.f32.mrb[0].mxu0
        %v4764 = vadd.f32 0.0, %v4763
        %v4765 = vpop.f32.mrb[0].mxu0
        %4766 = vmatprep.mubr.bf16.mxu0 0
        %4767 = vmatmul.mubr.bf16.gmra.mrb[0].mxu0 %v4650
        %v4768 = vpop.f32.mrb[0].mxu0
        %v4769 = vadd.f32 0.0, %v4768
        %v4770 = vpop.f32.mrb[0].mxu0
        %v4771 = vpop.f32.mrb[0].mxu0
        %v4772 = vadd.f32 0.0, %v4771
        %v4773 = vpop.f32.mrb[0].mxu0
        %4774 = vmatprep.mubr.bf16.mxu0 0
        %4775 = vmatmul.mubr.bf16.gmra.mrb[0].mxu0 %v4651
        %v4776 = vpop.f32.mrb[0].mxu0
        %v4777 = vadd.f32 0.0, %v4776
        %v4778 = vpop.f32.mrb[0].mxu0
        %v4779 = vpop.f32.mrb[0].mxu0
        %v4780 = vadd.f32 0.0, %v4779
        %v4781 = vpop.f32.mrb[0].mxu0
        %4782 = vmatprep.mubr.bf16.mxu0 0
        %4783 = vmatmul.mubr.bf16.gmra.mrb[0].mxu0 %v4652
        %v4784 = vpop.f32.mrb[0].mxu0
        %v4785 = vadd.f32 0.0, %v4784
        %v4786 = vpop.f32.mrb[0].mxu0
        %v4787 = vpop.f32.mrb[0].mxu0
        %v4788 = vadd.f32 0.0, %v4787
        %v4789 = vpop.f32.mrb[0].mxu0
        %4790 = vmatprep.mubr.bf16.mxu0 0
        %4791 = vmatmul.mubr.bf16.gmra.mrb[0].mxu0 %v4653
        %v4792 = vpop.f32.mrb[0].mxu0
        %v4793 = vadd.f32 0.0, %v4792
        %v4794 = vpop.f32.mrb[0].mxu0
        %v4795 = vpop.f32.mrb[0].mxu0
        %v4796 = vadd.f32 0.0, %v4795
        %v4797 = vpop.f32.mrb[0].mxu0
        %4798 = vmatprep.mubr.bf16.mxu0 0
        %4799 = vmatmul.mubr.bf16.gmra.mrb[0].mxu0 %v4654
        %v4800 = vpop.f32.mrb[0].mxu0
        %v4801 = vadd.f32 0.0, %v4800
        %v4802 = vpop.f32.mrb[0].mxu0
        %v4803 = vpop.f32.mrb[0].mxu0
        %v4804 = vadd.f32 0.0, %v4803
        %v4805 = vpop.f32.mrb[0].mxu0
        %4806 = vmatprep.mubr.bf16.mxu0 0
        %4807 = vmatmul.mubr.bf16.gmra.mrb[0].mxu0 %v4655
        %v4808 = vpop.f32.mrb[0].mxu0
        %v4809 = vadd.f32 0.0, %v4808
        %v4810 = vpop.f32.mrb[0].mxu0
        %v4811 = vpop.f32.mrb[0].mxu0
        %v4812 = vadd.f32 0.0, %v4811
        %v4813 = vpop.f32.mrb[0].mxu0
        %4814 = vmatprep.mubr.bf16.mxu0 0
        %4815 = vmatmul.mubr.bf16.gmra.mrb[0].mxu0 %v4656
        %v4816 = vpop.f32.mrb[0].mxu0
        %v4817 = vadd.f32 0.0, %v4816
        %v4818 = vpop.f32.mrb[0].mxu0
        %v4819 = vpop.f32.mrb[0].mxu0
        %v4820 = vadd.f32 0.0, %v4819
        %v4821 = vpop.f32.mrb[0].mxu0
        %4822 = vmatprep.mubr.bf16.mxu0 0
        %4823 = vmatmul.mubr.bf16.gmra.mrb[0].mxu0 %v4657
        %v4824 = vpop.f32.mrb[0].mxu0
        %v4825 = vadd.f32 0.0, %v4824
        %v4826 = vpop.f32.mrb[0].mxu0
        %v4827 = vpop.f32.mrb[0].mxu0
        %v4828 = vadd.f32 0.0, %v4827
        %v4829 = vpop.f32.mrb[0].mxu0
        %4830 = vmatprep.mubr.bf16.mxu0 0
        %4831 = vmatmul.mubr.bf16.gmra.mrb[0].mxu0 %v4658
        %v4832 = vpop.f32.mrb[0].mxu0
        %v4833 = vadd.f32 0.0, %v4832
        %v4834 = vpop.f32.mrb[0].mxu0
        %v4835 = vpop.f32.mrb[0].mxu0
        %v4836 = vadd.f32 0.0, %v4835
        %v4837 = vpop.f32.mrb[0].mxu0
        %4838 = vdwg.mxu0
        %v4839 = vadd.f32 %v4542, %v4753
        %v4840 = vadd.f32 %v4543, %v4756
        %v4841 = vadd.f32 %v4544, %v4761
        %v4842 = vadd.f32 %v4545, %v4764
        %v4843 = vadd.f32 %v4546, %v4769
        %v4844 = vadd.f32 %v4547, %v4772
        %v4845 = vadd.f32 %v4548, %v4777
        %v4846 = vadd.f32 %v4549, %v4780
        %v4847 = vadd.f32 %v4550, %v4785
        %v4848 = vadd.f32 %v4551, %v4788
        %v4849 = vadd.f32 %v4552, %v4793
        %v4850 = vadd.f32 %v4553, %v4796
        %v4851 = vadd.f32 %v4554, %v4801
        %v4852 = vadd.f32 %v4555, %v4804
        %v4853 = vadd.f32 %v4556, %v4809
        %v4854 = vadd.f32 %v4557, %v4812
        %v4855 = vadd.f32 %v4558, %v4817
        %v4856 = vadd.f32 %v4559, %v4820
        %v4857 = vadd.f32 %v4560, %v4825
        %v4858 = vadd.f32 %v4561, %v4828
        %v4859 = vadd.f32 %v4562, %v4833
        %v4860 = vadd.f32 %v4563, %v4836
        %v4861 = vld [vmem:[%s4564] sm:$0xf]
        %v4862 = vld [vmem:[%s4564 + $0x4] sm:$0xf]
        %v4863 = vld [vmem:[%s4564 + $0x8] sm:$0x1]
        %v4864 = vld [vmem:[%s4564 + $0xc] sm:$0xf]
        %v4865 = vld [vmem:[%s4564 + $0x10] sm:$0xf]
        %v4866 = vld [vmem:[%s4564 + $0x14] sm:$0x1]
        %v4867 = vld [vmem:[%s4564 + $0x18] sm:$0xf]
        %v4868 = vld [vmem:[%s4564 + $0x1c] sm:$0xf]
        %v4869 = vld [vmem:[%s4564 + $0x20] sm:$0x1]
        %v4870 = vld [vmem:[%s4564 + $0x24] sm:$0xf]
        %v4871 = vld [vmem:[%s4564 + $0x28] sm:$0xf]
        %v4872 = vld [vmem:[%s4564 + $0x2c] sm:$0x1]
        %v4873 = vld [vmem:[%s4564 + $0x30] sm:$0xf]
        %v4874 = vld [vmem:[%s4564 + $0x34] sm:$0xf]
        %v4875 = vld [vmem:[%s4564 + $0x38] sm:$0x1]
        %v4876 = vld [vmem:[%s4564 + $0x3c] sm:$0xf]
        %v4877 = vld [vmem:[%s4564 + $0x40] sm:$0xf]
        %v4878 = vld [vmem:[%s4564 + $0x44] sm:$0x1]
        %v4879 = vld [vmem:[%s4564 + $0x48] sm:$0xf]
        %v4880 = vld [vmem:[%s4564 + $0x4c] sm:$0xf]
        %v4881 = vld [vmem:[%s4564 + $0x50] sm:$0x1]
        %v4882 = vld [vmem:[%s4564 + $0x54] sm:$0xf]
        %v4883 = vld [vmem:[%s4564 + $0x58] sm:$0xf]
        %v4884 = vld [vmem:[%s4564 + $0x5c] sm:$0x1]
        %v4885 = vld [vmem:[%s4564 + $0x60] sm:$0xf]
        %v4886 = vld [vmem:[%s4564 + $0x64] sm:$0xf]
        %v4887 = vld [vmem:[%s4564 + $0x68] sm:$0x1]
        %v4888 = vld [vmem:[%s4564 + $0x6c] sm:$0xf]
        %v4889 = vld [vmem:[%s4564 + $0x70] sm:$0xf]
        %v4890 = vld [vmem:[%s4564 + $0x74] sm:$0x1]
        %v4891 = vld [vmem:[%s4564 + $0x78] sm:$0xf]
        %v4892 = vld [vmem:[%s4564 + $0x7c] sm:$0xf]
        %v4893 = vld [vmem:[%s4564 + $0x80] sm:$0x1]
        %v4895 = vshrl.u32 %v4861, 16
        %v4897 = vrot.slane %v4895, 4
        %v4898 = vshll.u32 %v4861, 16
        %v4900 = vrot.slane %v4898, 5
        %v4901 = vor.u32 %v4897, %v4900
        %v4902 = vrot.slane %v4901, 4
        %v4904 = vshll.u32 %v4862, 16
        %v4906 = vrot.slane %v4904, 5
        %v4907 = vsel %vm2250, %v4902, %v4906
        %v4908 = vshrl.u32 %v4862, 16
        %v4910 = vrot.slane %v4908, 4
        %v4911 = vor.u32 %v4910, %v4906
        %v4912 = vrot.slane %v4911, 4
        %v4914 = vshll.u32 %v4863, 16
        %v4916 = vrot.slane %v4914, 5
        %v4917 = vsel %vm2250, %v4912, %v4916
        %v4919 = vshrl.u32 %v4864, 16
        %v4921 = vrot.slane %v4919, 4
        %v4922 = vshll.u32 %v4864, 16
        %v4924 = vrot.slane %v4922, 5
        %v4925 = vor.u32 %v4921, %v4924
        %v4926 = vrot.slane %v4925, 4
        %v4928 = vshll.u32 %v4865, 16
        %v4930 = vrot.slane %v4928, 5
        %v4931 = vsel %vm2250, %v4926, %v4930
        %v4932 = vshrl.u32 %v4865, 16
        %v4934 = vrot.slane %v4932, 4
        %v4935 = vor.u32 %v4934, %v4930
        %v4936 = vrot.slane %v4935, 4
        %v4938 = vshll.u32 %v4866, 16
        %v4940 = vrot.slane %v4938, 5
        %v4941 = vsel %vm2250, %v4936, %v4940
        %v4943 = vshrl.u32 %v4867, 16
        %v4945 = vrot.slane %v4943, 4
        %v4946 = vshll.u32 %v4867, 16
        %v4948 = vrot.slane %v4946, 5
        %v4949 = vor.u32 %v4945, %v4948
        %v4950 = vrot.slane %v4949, 4
        %v4952 = vshll.u32 %v4868, 16
        %v4954 = vrot.slane %v4952, 5
        %v4955 = vsel %vm2250, %v4950, %v4954
        %v4956 = vshrl.u32 %v4868, 16
        %v4958 = vrot.slane %v4956, 4
        %v4959 = vor.u32 %v4958, %v4954
        %v4960 = vrot.slane %v4959, 4
        %v4962 = vshll.u32 %v4869, 16
        %v4964 = vrot.slane %v4962, 5
        %v4965 = vsel %vm2250, %v4960, %v4964
        %v4967 = vshrl.u32 %v4870, 16
        %v4969 = vrot.slane %v4967, 4
        %v4970 = vshll.u32 %v4870, 16
        %v4972 = vrot.slane %v4970, 5
        %v4973 = vor.u32 %v4969, %v4972
        %v4974 = vrot.slane %v4973, 4
        %v4976 = vshll.u32 %v4871, 16
        %v4978 = vrot.slane %v4976, 5
        %v4979 = vsel %vm2250, %v4974, %v4978
        %v4980 = vshrl.u32 %v4871, 16
        %v4982 = vrot.slane %v4980, 4
        %v4983 = vor.u32 %v4982, %v4978
        %v4984 = vrot.slane %v4983, 4
        %v4986 = vshll.u32 %v4872, 16
        %v4988 = vrot.slane %v4986, 5
        %v4989 = vsel %vm2250, %v4984, %v4988
        %v4991 = vshrl.u32 %v4873, 16
        %v4993 = vrot.slane %v4991, 4
        %v4994 = vshll.u32 %v4873, 16
        %v4996 = vrot.slane %v4994, 5
        %v4997 = vor.u32 %v4993, %v4996
        %v4998 = vrot.slane %v4997, 4
        %v5000 = vshll.u32 %v4874, 16
        %v5002 = vrot.slane %v5000, 5
        %v5003 = vsel %vm2250, %v4998, %v5002
        %v5004 = vshrl.u32 %v4874, 16
        %v5006 = vrot.slane %v5004, 4
        %v5007 = vor.u32 %v5006, %v5002
        %v5008 = vrot.slane %v5007, 4
        %v5010 = vshll.u32 %v4875, 16
        %v5012 = vrot.slane %v5010, 5
        %v5013 = vsel %vm2250, %v5008, %v5012
        %v5015 = vshrl.u32 %v4876, 16
        %v5017 = vrot.slane %v5015, 4
        %v5018 = vshll.u32 %v4876, 16
        %v5020 = vrot.slane %v5018, 5
        %v5021 = vor.u32 %v5017, %v5020
        %v5022 = vrot.slane %v5021, 4
        %v5024 = vshll.u32 %v4877, 16
        %v5026 = vrot.slane %v5024, 5
        %v5027 = vsel %vm2250, %v5022, %v5026
        %v5028 = vshrl.u32 %v4877, 16
        %v5030 = vrot.slane %v5028, 4
        %v5031 = vor.u32 %v5030, %v5026
        %v5032 = vrot.slane %v5031, 4
        %v5034 = vshll.u32 %v4878, 16
        %v5036 = vrot.slane %v5034, 5
        %v5037 = vsel %vm2250, %v5032, %v5036
        %v5039 = vshrl.u32 %v4879, 16
        %v5041 = vrot.slane %v5039, 4
        %v5042 = vshll.u32 %v4879, 16
        %v5044 = vrot.slane %v5042, 5
        %v5045 = vor.u32 %v5041, %v5044
        %v5046 = vrot.slane %v5045, 4
        %v5048 = vshll.u32 %v4880, 16
        %v5050 = vrot.slane %v5048, 5
        %v5051 = vsel %vm2250, %v5046, %v5050
        %v5052 = vshrl.u32 %v4880, 16
        %v5054 = vrot.slane %v5052, 4
        %v5055 = vor.u32 %v5054, %v5050
        %v5056 = vrot.slane %v5055, 4
        %v5058 = vshll.u32 %v4881, 16
        %v5060 = vrot.slane %v5058, 5
        %v5061 = vsel %vm2250, %v5056, %v5060
        %v5063 = vshrl.u32 %v4882, 16
        %v5065 = vrot.slane %v5063, 4
        %v5066 = vshll.u32 %v4882, 16
        %v5068 = vrot.slane %v5066, 5
        %v5069 = vor.u32 %v5065, %v5068
        %v5070 = vrot.slane %v5069, 4
        %v5072 = vshll.u32 %v4883, 16
        %v5074 = vrot.slane %v5072, 5
        %v5075 = vsel %vm2250, %v5070, %v5074
        %v5076 = vshrl.u32 %v4883, 16
        %v5078 = vrot.slane %v5076, 4
        %v5079 = vor.u32 %v5078, %v5074
        %v5080 = vrot.slane %v5079, 4
        %v5082 = vshll.u32 %v4884, 16
        %v5084 = vrot.slane %v5082, 5
        %v5085 = vsel %vm2250, %v5080, %v5084
        %v5087 = vshrl.u32 %v4885, 16
        %v5089 = vrot.slane %v5087, 4
        %v5090 = vshll.u32 %v4885, 16
        %v5092 = vrot.slane %v5090, 5
        %v5093 = vor.u32 %v5089, %v5092
        %v5094 = vrot.slane %v5093, 4
        %v5096 = vshll.u32 %v4886, 16
        %v5098 = vrot.slane %v5096, 5
        %v5099 = vsel %vm2250, %v5094, %v5098
        %v5100 = vshrl.u32 %v4886, 16
        %v5102 = vrot.slane %v5100, 4
        %v5103 = vor.u32 %v5102, %v5098
        %v5104 = vrot.slane %v5103, 4
        %v5106 = vshll.u32 %v4887, 16
        %v5108 = vrot.slane %v5106, 5
        %v5109 = vsel %vm2250, %v5104, %v5108
        %v5111 = vshrl.u32 %v4888, 16
        %v5113 = vrot.slane %v5111, 4
        %v5114 = vshll.u32 %v4888, 16
        %v5116 = vrot.slane %v5114, 5
        %v5117 = vor.u32 %v5113, %v5116
        %v5118 = vrot.slane %v5117, 4
        %v5120 = vshll.u32 %v4889, 16
        %v5122 = vrot.slane %v5120, 5
        %v5123 = vsel %vm2250, %v5118, %v5122
        %v5124 = vshrl.u32 %v4889, 16
        %v5126 = vrot.slane %v5124, 4
        %v5127 = vor.u32 %v5126, %v5122
        %v5128 = vrot.slane %v5127, 4
        %v5130 = vshll.u32 %v4890, 16
        %v5132 = vrot.slane %v5130, 5
        %v5133 = vsel %vm2250, %v5128, %v5132
        %v5135 = vshrl.u32 %v4891, 16
        %v5137 = vrot.slane %v5135, 4
        %v5138 = vshll.u32 %v4891, 16
        %v5140 = vrot.slane %v5138, 5
        %v5141 = vor.u32 %v5137, %v5140
        %v5142 = vrot.slane %v5141, 4
        %v5144 = vshll.u32 %v4892, 16
        %v5146 = vrot.slane %v5144, 5
        %v5147 = vsel %vm2250, %v5142, %v5146
        %v5148 = vshrl.u32 %v4892, 16
        %v5150 = vrot.slane %v5148, 4
        %v5151 = vor.u32 %v5150, %v5146
        %v5152 = vrot.slane %v5151, 4
        %v5154 = vshll.u32 %v4893, 16
        %v5156 = vrot.slane %v5154, 5
        %v5157 = vsel %vm2250, %v5152, %v5156
        %s5158 = scalar_lea.vmem %s3, 448
        %v5159 = vld [vmem:[%s5158] sm:$0xf]
        %v5160 = vld [vmem:[%s5158 + $0x4] sm:$0xf]
        %v5161 = vld [vmem:[%s5158 + $0x8] sm:$0xf]
        %v5162 = vld [vmem:[%s5158 + $0xc] sm:$0xf]
        %v5163 = vld [vmem:[%s5158 + $0x10] sm:$0xf]
        %v5164 = vld [vmem:[%s5158 + $0x14] sm:$0xf]
        %v5165 = vld [vmem:[%s5158 + $0x18] sm:$0xf]
        %v5166 = vld [vmem:[%s5158 + $0x1c] sm:$0xf]
        %v5167 = vld [vmem:[%s5158 + $0x20] sm:$0xf]
        %v5168 = vld [vmem:[%s5158 + $0x24] sm:$0xf]
        %v5169 = vld [vmem:[%s5158 + $0x28] sm:$0xf]
        %v5170 = vld [vmem:[%s5158 + $0x2c] sm:$0xf]
        %v5171 = vld [vmem:[%s5158 + $0x30] sm:$0xf]
        %v5172 = vld [vmem:[%s5158 + $0x34] sm:$0xf]
        %v5173 = vld [vmem:[%s5158 + $0x38] sm:$0xf]
        %v5174 = vld [vmem:[%s5158 + $0x3c] sm:$0xf]
        %v5175 = vunpack.c.l.b16 %v4907
        %v5176 = vunpack.c.l.b16 %v4917
        %v5177 = vunpack.c.l.b16 %v4931
        %v5178 = vunpack.c.l.b16 %v4941
        %v5179 = vunpack.c.l.b16 %v4955
        %v5180 = vunpack.c.l.b16 %v4965
        %v5181 = vunpack.c.l.b16 %v4979
        %v5182 = vunpack.c.l.b16 %v4989
        %v5183 = vunpack.c.l.b16 %v5003
        %v5184 = vunpack.c.l.b16 %v5013
        %v5185 = vunpack.c.l.b16 %v5027
        %v5186 = vunpack.c.l.b16 %v5037
        %v5187 = vunpack.c.l.b16 %v5051
        %v5188 = vunpack.c.l.b16 %v5061
        %v5189 = vunpack.c.l.b16 %v5075
        %v5190 = vunpack.c.l.b16 %v5085
        %v5191 = vunpack.c.l.b16 %v5099
        %v5192 = vunpack.c.l.b16 %v5109
        %v5193 = vunpack.c.l.b16 %v5123
        %v5194 = vunpack.c.l.b16 %v5133
        %v5195 = vunpack.c.l.b16 %v5147
        %v5196 = vunpack.c.l.b16 %v5157
        %v5197 = vpack.c.b16 %v5176, %v5175
        %v5198 = vpack.c.b16 %v5178, %v5177
        %v5199 = vpack.c.b16 %v5180, %v5179
        %v5200 = vpack.c.b16 %v5182, %v5181
        %v5201 = vpack.c.b16 %v5184, %v5183
        %v5202 = vpack.c.b16 %v5186, %v5185
        %v5203 = vpack.c.b16 %v5188, %v5187
        %v5204 = vpack.c.b16 %v5190, %v5189
        %v5205 = vpack.c.b16 %v5192, %v5191
        %v5206 = vpack.c.b16 %v5194, %v5193
        %v5207 = vpack.c.b16 %v5196, %v5195
        %v5235 = vunpack.c.l.b16 %v5159
        %v5236 = vunpack.c.l.b16 %v5160
        %v5237 = vunpack.c.l.b16 %v5161
        %v5238 = vunpack.c.l.b16 %v5162
        %v5239 = vunpack.c.l.b16 %v5163
        %v5240 = vunpack.c.l.b16 %v5164
        %v5241 = vunpack.c.l.b16 %v5165
        %v5242 = vunpack.c.l.b16 %v5166
        %v5243 = vunpack.c.l.b16 %v5167
        %v5244 = vunpack.c.l.b16 %v5168
        %v5245 = vunpack.c.l.b16 %v5169
        %v5246 = vunpack.c.l.b16 %v5170
        %v5247 = vunpack.c.l.b16 %v5171
        %v5248 = vunpack.c.l.b16 %v5172
        %v5249 = vunpack.c.l.b16 %v5173
        %v5250 = vunpack.c.l.b16 %v5174
        %v5251 = vpack.c.b16 %v5236, %v5235
        %v5252 = vpack.c.b16 %v5238, %v5237
        %v5253 = vpack.c.b16 %v5240, %v5239
        %v5254 = vpack.c.b16 %v5242, %v5241
        %v5255 = vpack.c.b16 %v5244, %v5243
        %v5256 = vpack.c.b16 %v5246, %v5245
        %v5257 = vpack.c.b16 %v5248, %v5247
        %v5258 = vpack.c.b16 %v5250, %v5249
        %5267 = vmatprep.subr.bf16.mxu0 0
        %5268 = vmatpush1.bf16.msra.mxu0 %v5251
        %5269 = vmatprep.subr.bf16.mxu0 0
        %5270 = vmatpush1.bf16.msra.mxu0 %v5252
        %5271 = vmatprep.subr.bf16.mxu0 0
        %5272 = vmatpush1.bf16.msra.mxu0 %v5253
        %5273 = vmatprep.subr.bf16.mxu0 0
        %5274 = vmatpush1.bf16.msra.mxu0 %v5254
        %5275 = vmatprep.subr.bf16.mxu0 0
        %5276 = vmatpush1.bf16.msra.mxu0 %v5255
        %5277 = vmatprep.subr.bf16.mxu0 0
        %5278 = vmatpush1.bf16.msra.mxu0 %v5256
        %5279 = vmatprep.subr.bf16.mxu0 0
        %5280 = vmatpush1.bf16.msra.mxu0 %v5257
        %5281 = vmatprep.subr.bf16.mxu0 0
        %5282 = vmatpush1.bf16.msra.mxu0 %v5258
        %5283 = vmatprep.subr.bf16.mxu0 0
        %5284 = vmatpush1.bf16.msra.mxu0 0
        %5285 = vmatprep.subr.bf16.mxu0 0
        %5286 = vmatpush1.bf16.msra.mxu0 0
        %5287 = vmatprep.subr.bf16.mxu0 0
        %5288 = vmatpush1.bf16.msra.mxu0 0
        %5289 = vmatprep.subr.bf16.mxu0 0
        %5290 = vmatpush1.bf16.msra.mxu0 0
        %5291 = vmatprep.subr.bf16.mxu0 0
        %5292 = vmatpush1.bf16.msra.mxu0 0
        %5293 = vmatprep.subr.bf16.mxu0 0
        %5294 = vmatpush1.bf16.msra.mxu0 0
        %5295 = vmatprep.subr.bf16.mxu0 0
        %5296 = vmatpush1.bf16.msra.mxu0 0
        %5297 = vmatprep.subr.bf16.mxu0 0
        %5298 = vmatpush1.bf16.msra.mxu0 0
        %5299 = vmatprep.mubr.bf16.mxu0 0
        %5300 = vmatmul.mubr.bf16.gmra.mrb[0].mxu0 %v5197
        %v5301 = vpop.f32.mrb[0].mxu0
        %v5302 = vadd.f32 0.0, %v5301
        %v5303 = vpop.f32.mrb[0].mxu0
        %v5304 = vpop.f32.mrb[0].mxu0
        %v5305 = vadd.f32 0.0, %v5304
        %v5306 = vpop.f32.mrb[0].mxu0
        %5307 = vmatprep.mubr.bf16.mxu0 0
        %5308 = vmatmul.mubr.bf16.gmra.mrb[0].mxu0 %v5198
        %v5309 = vpop.f32.mrb[0].mxu0
        %v5310 = vadd.f32 0.0, %v5309
        %v5311 = vpop.f32.mrb[0].mxu0
        %v5312 = vpop.f32.mrb[0].mxu0
        %v5313 = vadd.f32 0.0, %v5312
        %v5314 = vpop.f32.mrb[0].mxu0
        %5315 = vmatprep.mubr.bf16.mxu0 0
        %5316 = vmatmul.mubr.bf16.gmra.mrb[0].mxu0 %v5199
        %v5317 = vpop.f32.mrb[0].mxu0
        %v5318 = vadd.f32 0.0, %v5317
        %v5319 = vpop.f32.mrb[0].mxu0
        %v5320 = vpop.f32.mrb[0].mxu0
        %v5321 = vadd.f32 0.0, %v5320
        %v5322 = vpop.f32.mrb[0].mxu0
        %5323 = vmatprep.mubr.bf16.mxu0 0
        %5324 = vmatmul.mubr.bf16.gmra.mrb[0].mxu0 %v5200
        %v5325 = vpop.f32.mrb[0].mxu0
        %v5326 = vadd.f32 0.0, %v5325
        %v5327 = vpop.f32.mrb[0].mxu0
        %v5328 = vpop.f32.mrb[0].mxu0
        %v5329 = vadd.f32 0.0, %v5328
        %v5330 = vpop.f32.mrb[0].mxu0
        %5331 = vmatprep.mubr.bf16.mxu0 0
        %5332 = vmatmul.mubr.bf16.gmra.mrb[0].mxu0 %v5201
        %v5333 = vpop.f32.mrb[0].mxu0
        %v5334 = vadd.f32 0.0, %v5333
        %v5335 = vpop.f32.mrb[0].mxu0
        %v5336 = vpop.f32.mrb[0].mxu0
        %v5337 = vadd.f32 0.0, %v5336
        %v5338 = vpop.f32.mrb[0].mxu0
        %5339 = vmatprep.mubr.bf16.mxu0 0
        %5340 = vmatmul.mubr.bf16.gmra.mrb[0].mxu0 %v5202
        %v5341 = vpop.f32.mrb[0].mxu0
        %v5342 = vadd.f32 0.0, %v5341
        %v5343 = vpop.f32.mrb[0].mxu0
        %v5344 = vpop.f32.mrb[0].mxu0
        %v5345 = vadd.f32 0.0, %v5344
        %v5346 = vpop.f32.mrb[0].mxu0
        %5347 = vmatprep.mubr.bf16.mxu0 0
        %5348 = vmatmul.mubr.bf16.gmra.mrb[0].mxu0 %v5203
        %v5349 = vpop.f32.mrb[0].mxu0
        %v5350 = vadd.f32 0.0, %v5349
        %v5351 = vpop.f32.mrb[0].mxu0
        %v5352 = vpop.f32.mrb[0].mxu0
        %v5353 = vadd.f32 0.0, %v5352
        %v5354 = vpop.f32.mrb[0].mxu0
        %5355 = vmatprep.mubr.bf16.mxu0 0
        %5356 = vmatmul.mubr.bf16.gmra.mrb[0].mxu0 %v5204
        %v5357 = vpop.f32.mrb[0].mxu0
        %v5358 = vadd.f32 0.0, %v5357
        %v5359 = vpop.f32.mrb[0].mxu0
        %v5360 = vpop.f32.mrb[0].mxu0
        %v5361 = vadd.f32 0.0, %v5360
        %v5362 = vpop.f32.mrb[0].mxu0
        %5363 = vmatprep.mubr.bf16.mxu0 0
        %5364 = vmatmul.mubr.bf16.gmra.mrb[0].mxu0 %v5205
        %v5365 = vpop.f32.mrb[0].mxu0
        %v5366 = vadd.f32 0.0, %v5365
        %v5367 = vpop.f32.mrb[0].mxu0
        %v5368 = vpop.f32.mrb[0].mxu0
        %v5369 = vadd.f32 0.0, %v5368
        %v5370 = vpop.f32.mrb[0].mxu0
        %5371 = vmatprep.mubr.bf16.mxu0 0
        %5372 = vmatmul.mubr.bf16.gmra.mrb[0].mxu0 %v5206
        %v5373 = vpop.f32.mrb[0].mxu0
        %v5374 = vadd.f32 0.0, %v5373
        %v5375 = vpop.f32.mrb[0].mxu0
        %v5376 = vpop.f32.mrb[0].mxu0
        %v5377 = vadd.f32 0.0, %v5376
        %v5378 = vpop.f32.mrb[0].mxu0
        %5379 = vmatprep.mubr.bf16.mxu0 0
        %5380 = vmatmul.mubr.bf16.gmra.mrb[0].mxu0 %v5207
        %v5381 = vpop.f32.mrb[0].mxu0
        %v5382 = vadd.f32 0.0, %v5381
        %v5383 = vpop.f32.mrb[0].mxu0
        %v5384 = vpop.f32.mrb[0].mxu0
        %v5385 = vadd.f32 0.0, %v5384
        %v5386 = vpop.f32.mrb[0].mxu0
        %5387 = vdwg.mxu0
        %v5388 = vadd.f32 %v4839, %v5302
        %v5389 = vadd.f32 %v4840, %v5305
        %v5390 = vadd.f32 %v4841, %v5310
        %v5391 = vadd.f32 %v4842, %v5313
        %v5392 = vadd.f32 %v4843, %v5318
        %v5393 = vadd.f32 %v4844, %v5321
        %v5394 = vadd.f32 %v4845, %v5326
        %v5395 = vadd.f32 %v4846, %v5329
        %v5396 = vadd.f32 %v4847, %v5334
        %v5397 = vadd.f32 %v4848, %v5337
        %v5398 = vadd.f32 %v4849, %v5342
        %v5399 = vadd.f32 %v4850, %v5345
        %v5400 = vadd.f32 %v4851, %v5350
        %v5401 = vadd.f32 %v4852, %v5353
        %v5402 = vadd.f32 %v4853, %v5358
        %v5403 = vadd.f32 %v4854, %v5361
        %v5404 = vadd.f32 %v4855, %v5366
        %v5405 = vadd.f32 %v4856, %v5369
        %v5406 = vadd.f32 %v4857, %v5374
        %v5407 = vadd.f32 %v4858, %v5377
        %v5408 = vadd.f32 %v4859, %v5382
        %v5409 = vadd.f32 %v4860, %v5385
        %v5410 = vld [vmem:[%s4564] sm:$0xe]
        %v5411 = vld [vmem:[%s4564 + $0xc] sm:$0xe]
        %v5412 = vld [vmem:[%s4564 + $0x18] sm:$0xe]
        %v5413 = vld [vmem:[%s4564 + $0x24] sm:$0xe]
        %v5414 = vld [vmem:[%s4564 + $0x30] sm:$0xe]
        %v5415 = vld [vmem:[%s4564 + $0x3c] sm:$0xe]
        %v5416 = vld [vmem:[%s4564 + $0x48] sm:$0xe]
        %v5417 = vld [vmem:[%s4564 + $0x54] sm:$0xe]
        %v5418 = vld [vmem:[%s4564 + $0x60] sm:$0xe]
        %v5419 = vld [vmem:[%s4564 + $0x6c] sm:$0xe]
        %v5420 = vld [vmem:[%s4564 + $0x78] sm:$0xe]
        %v5454 = vrot.slane %v5410, 5
        %v5455 = vrot.slane %v5454, 4
        %v5456 = vrot.slane %v4862, 5
        %v5457 = vsel %vm3015, %v5455, %v5456
        %v5458 = vrot.slane %v5456, 4
        %v5459 = vrot.slane %v4863, 5
        %v5460 = vsel %vm3015, %v5458, %v5459
        %v5461 = vrot.slane %v5411, 5
        %v5462 = vrot.slane %v5461, 4
        %v5463 = vrot.slane %v4865, 5
        %v5464 = vsel %vm3015, %v5462, %v5463
        %v5465 = vrot.slane %v5463, 4
        %v5466 = vrot.slane %v4866, 5
        %v5467 = vsel %vm3015, %v5465, %v5466
        %v5468 = vrot.slane %v5412, 5
        %v5469 = vrot.slane %v5468, 4
        %v5470 = vrot.slane %v4868, 5
        %v5471 = vsel %vm3015, %v5469, %v5470
        %v5472 = vrot.slane %v5470, 4
        %v5473 = vrot.slane %v4869, 5
        %v5474 = vsel %vm3015, %v5472, %v5473
        %v5475 = vrot.slane %v5413, 5
        %v5476 = vrot.slane %v5475, 4
        %v5477 = vrot.slane %v4871, 5
        %v5478 = vsel %vm3015, %v5476, %v5477
        %v5479 = vrot.slane %v5477, 4
        %v5480 = vrot.slane %v4872, 5
        %v5481 = vsel %vm3015, %v5479, %v5480
        %v5482 = vrot.slane %v5414, 5
        %v5483 = vrot.slane %v5482, 4
        %v5484 = vrot.slane %v4874, 5
        %v5485 = vsel %vm3015, %v5483, %v5484
        %v5486 = vrot.slane %v5484, 4
        %v5487 = vrot.slane %v4875, 5
        %v5488 = vsel %vm3015, %v5486, %v5487
        %v5489 = vrot.slane %v5415, 5
        %v5490 = vrot.slane %v5489, 4
        %v5491 = vrot.slane %v4877, 5
        %v5492 = vsel %vm3015, %v5490, %v5491
        %v5493 = vrot.slane %v5491, 4
        %v5494 = vrot.slane %v4878, 5
        %v5495 = vsel %vm3015, %v5493, %v5494
        %v5496 = vrot.slane %v5416, 5
        %v5497 = vrot.slane %v5496, 4
        %v5498 = vrot.slane %v4880, 5
        %v5499 = vsel %vm3015, %v5497, %v5498
        %v5500 = vrot.slane %v5498, 4
        %v5501 = vrot.slane %v4881, 5
        %v5502 = vsel %vm3015, %v5500, %v5501
        %v5503 = vrot.slane %v5417, 5
        %v5504 = vrot.slane %v5503, 4
        %v5505 = vrot.slane %v4883, 5
        %v5506 = vsel %vm3015, %v5504, %v5505
        %v5507 = vrot.slane %v5505, 4
        %v5508 = vrot.slane %v4884, 5
        %v5509 = vsel %vm3015, %v5507, %v5508
        %v5510 = vrot.slane %v5418, 5
        %v5511 = vrot.slane %v5510, 4
        %v5512 = vrot.slane %v4886, 5
        %v5513 = vsel %vm3015, %v5511, %v5512
        %v5514 = vrot.slane %v5512, 4
        %v5515 = vrot.slane %v4887, 5
        %v5516 = vsel %vm3015, %v5514, %v5515
        %v5517 = vrot.slane %v5419, 5
        %v5518 = vrot.slane %v5517, 4
        %v5519 = vrot.slane %v4889, 5
        %v5520 = vsel %vm3015, %v5518, %v5519
        %v5521 = vrot.slane %v5519, 4
        %v5522 = vrot.slane %v4890, 5
        %v5523 = vsel %vm3015, %v5521, %v5522
        %v5524 = vrot.slane %v5420, 5
        %v5525 = vrot.slane %v5524, 4
        %v5526 = vrot.slane %v4892, 5
        %v5527 = vsel %vm3015, %v5525, %v5526
        %v5528 = vrot.slane %v5526, 4
        %v5529 = vrot.slane %v4893, 5
        %v5530 = vsel %vm3015, %v5528, %v5529
        %s5531 = scalar_lea.vmem %s3, 512
        %v5532 = vld [vmem:[%s5531] sm:$0xf]
        %v5533 = vld [vmem:[%s5531 + $0x4] sm:$0xf]
        %v5534 = vld [vmem:[%s5531 + $0x8] sm:$0xf]
        %v5535 = vld [vmem:[%s5531 + $0xc] sm:$0xf]
        %v5536 = vld [vmem:[%s5531 + $0x10] sm:$0xf]
        %v5537 = vld [vmem:[%s5531 + $0x14] sm:$0xf]
        %v5538 = vld [vmem:[%s5531 + $0x18] sm:$0xf]
        %v5539 = vld [vmem:[%s5531 + $0x1c] sm:$0xf]
        %v5540 = vld [vmem:[%s5531 + $0x20] sm:$0xf]
        %v5541 = vld [vmem:[%s5531 + $0x24] sm:$0xf]
        %v5542 = vld [vmem:[%s5531 + $0x28] sm:$0xf]
        %v5543 = vld [vmem:[%s5531 + $0x2c] sm:$0xf]
        %v5544 = vld [vmem:[%s5531 + $0x30] sm:$0xf]
        %v5545 = vld [vmem:[%s5531 + $0x34] sm:$0xf]
        %v5546 = vld [vmem:[%s5531 + $0x38] sm:$0xf]
        %v5547 = vld [vmem:[%s5531 + $0x3c] sm:$0xf]
        %v5548 = vunpack.c.l.b16 %v5457
        %v5549 = vunpack.c.l.b16 %v5460
        %v5550 = vunpack.c.l.b16 %v5464
        %v5551 = vunpack.c.l.b16 %v5467
        %v5552 = vunpack.c.l.b16 %v5471
        %v5553 = vunpack.c.l.b16 %v5474
        %v5554 = vunpack.c.l.b16 %v5478
        %v5555 = vunpack.c.l.b16 %v5481
        %v5556 = vunpack.c.l.b16 %v5485
        %v5557 = vunpack.c.l.b16 %v5488
        %v5558 = vunpack.c.l.b16 %v5492
        %v5559 = vunpack.c.l.b16 %v5495
        %v5560 = vunpack.c.l.b16 %v5499
        %v5561 = vunpack.c.l.b16 %v5502
        %v5562 = vunpack.c.l.b16 %v5506
        %v5563 = vunpack.c.l.b16 %v5509
        %v5564 = vunpack.c.l.b16 %v5513
        %v5565 = vunpack.c.l.b16 %v5516
        %v5566 = vunpack.c.l.b16 %v5520
        %v5567 = vunpack.c.l.b16 %v5523
        %v5568 = vunpack.c.l.b16 %v5527
        %v5569 = vunpack.c.l.b16 %v5530
        %v5570 = vpack.c.b16 %v5549, %v5548
        %v5571 = vpack.c.b16 %v5551, %v5550
        %v5572 = vpack.c.b16 %v5553, %v5552
        %v5573 = vpack.c.b16 %v5555, %v5554
        %v5574 = vpack.c.b16 %v5557, %v5556
        %v5575 = vpack.c.b16 %v5559, %v5558
        %v5576 = vpack.c.b16 %v5561, %v5560
        %v5577 = vpack.c.b16 %v5563, %v5562
        %v5578 = vpack.c.b16 %v5565, %v5564
        %v5579 = vpack.c.b16 %v5567, %v5566
        %v5580 = vpack.c.b16 %v5569, %v5568
        %v5608 = vunpack.c.l.b16 %v5532
        %v5609 = vunpack.c.l.b16 %v5533
        %v5610 = vunpack.c.l.b16 %v5534
        %v5611 = vunpack.c.l.b16 %v5535
        %v5612 = vunpack.c.l.b16 %v5536
        %v5613 = vunpack.c.l.b16 %v5537
        %v5614 = vunpack.c.l.b16 %v5538
        %v5615 = vunpack.c.l.b16 %v5539
        %v5616 = vunpack.c.l.b16 %v5540
        %v5617 = vunpack.c.l.b16 %v5541
        %v5618 = vunpack.c.l.b16 %v5542
        %v5619 = vunpack.c.l.b16 %v5543
        %v5620 = vunpack.c.l.b16 %v5544
        %v5621 = vunpack.c.l.b16 %v5545
        %v5622 = vunpack.c.l.b16 %v5546
        %v5623 = vunpack.c.l.b16 %v5547
        %v5624 = vpack.c.b16 %v5609, %v5608
        %v5625 = vpack.c.b16 %v5611, %v5610
        %v5626 = vpack.c.b16 %v5613, %v5612
        %v5627 = vpack.c.b16 %v5615, %v5614
        %v5628 = vpack.c.b16 %v5617, %v5616
        %v5629 = vpack.c.b16 %v5619, %v5618
        %v5630 = vpack.c.b16 %v5621, %v5620
        %v5631 = vpack.c.b16 %v5623, %v5622
        %5640 = vmatprep.subr.bf16.mxu0 0
        %5641 = vmatpush1.bf16.msra.mxu0 %v5624
        %5642 = vmatprep.subr.bf16.mxu0 0
        %5643 = vmatpush1.bf16.msra.mxu0 %v5625
        %5644 = vmatprep.subr.bf16.mxu0 0
        %5645 = vmatpush1.bf16.msra.mxu0 %v5626
        %5646 = vmatprep.subr.bf16.mxu0 0
        %5647 = vmatpush1.bf16.msra.mxu0 %v5627
        %5648 = vmatprep.subr.bf16.mxu0 0
        %5649 = vmatpush1.bf16.msra.mxu0 %v5628
        %5650 = vmatprep.subr.bf16.mxu0 0
        %5651 = vmatpush1.bf16.msra.mxu0 %v5629
        %5652 = vmatprep.subr.bf16.mxu0 0
        %5653 = vmatpush1.bf16.msra.mxu0 %v5630
        %5654 = vmatprep.subr.bf16.mxu0 0
        %5655 = vmatpush1.bf16.msra.mxu0 %v5631
        %5656 = vmatprep.subr.bf16.mxu0 0
        %5657 = vmatpush1.bf16.msra.mxu0 0
        %5658 = vmatprep.subr.bf16.mxu0 0
        %5659 = vmatpush1.bf16.msra.mxu0 0
        %5660 = vmatprep.subr.bf16.mxu0 0
        %5661 = vmatpush1.bf16.msra.mxu0 0
        %5662 = vmatprep.subr.bf16.mxu0 0
        %5663 = vmatpush1.bf16.msra.mxu0 0
        %5664 = vmatprep.subr.bf16.mxu0 0
        %5665 = vmatpush1.bf16.msra.mxu0 0
        %5666 = vmatprep.subr.bf16.mxu0 0
        %5667 = vmatpush1.bf16.msra.mxu0 0
        %5668 = vmatprep.subr.bf16.mxu0 0
        %5669 = vmatpush1.bf16.msra.mxu0 0
        %5670 = vmatprep.subr.bf16.mxu0 0
        %5671 = vmatpush1.bf16.msra.mxu0 0
        %5672 = vmatprep.mubr.bf16.mxu0 0
        %5673 = vmatmul.mubr.bf16.gmra.mrb[0].mxu0 %v5570
        %v5674 = vpop.f32.mrb[0].mxu0
        %v5675 = vadd.f32 0.0, %v5674
        %v5676 = vpop.f32.mrb[0].mxu0
        %v5677 = vpop.f32.mrb[0].mxu0
        %v5678 = vadd.f32 0.0, %v5677
        %v5679 = vpop.f32.mrb[0].mxu0
        %5680 = vmatprep.mubr.bf16.mxu0 0
        %5681 = vmatmul.mubr.bf16.gmra.mrb[0].mxu0 %v5571
        %v5682 = vpop.f32.mrb[0].mxu0
        %v5683 = vadd.f32 0.0, %v5682
        %v5684 = vpop.f32.mrb[0].mxu0
        %v5685 = vpop.f32.mrb[0].mxu0
        %v5686 = vadd.f32 0.0, %v5685
        %v5687 = vpop.f32.mrb[0].mxu0
        %5688 = vmatprep.mubr.bf16.mxu0 0
        %5689 = vmatmul.mubr.bf16.gmra.mrb[0].mxu0 %v5572
        %v5690 = vpop.f32.mrb[0].mxu0
        %v5691 = vadd.f32 0.0, %v5690
        %v5692 = vpop.f32.mrb[0].mxu0
        %v5693 = vpop.f32.mrb[0].mxu0
        %v5694 = vadd.f32 0.0, %v5693
        %v5695 = vpop.f32.mrb[0].mxu0
        %5696 = vmatprep.mubr.bf16.mxu0 0
        %5697 = vmatmul.mubr.bf16.gmra.mrb[0].mxu0 %v5573
        %v5698 = vpop.f32.mrb[0].mxu0
        %v5699 = vadd.f32 0.0, %v5698
        %v5700 = vpop.f32.mrb[0].mxu0
        %v5701 = vpop.f32.mrb[0].mxu0
        %v5702 = vadd.f32 0.0, %v5701
        %v5703 = vpop.f32.mrb[0].mxu0
        %5704 = vmatprep.mubr.bf16.mxu0 0
        %5705 = vmatmul.mubr.bf16.gmra.mrb[0].mxu0 %v5574
        %v5706 = vpop.f32.mrb[0].mxu0
        %v5707 = vadd.f32 0.0, %v5706
        %v5708 = vpop.f32.mrb[0].mxu0
        %v5709 = vpop.f32.mrb[0].mxu0
        %v5710 = vadd.f32 0.0, %v5709
        %v5711 = vpop.f32.mrb[0].mxu0
        %5712 = vmatprep.mubr.bf16.mxu0 0
        %5713 = vmatmul.mubr.bf16.gmra.mrb[0].mxu0 %v5575
        %v5714 = vpop.f32.mrb[0].mxu0
        %v5715 = vadd.f32 0.0, %v5714
        %v5716 = vpop.f32.mrb[0].mxu0
        %v5717 = vpop.f32.mrb[0].mxu0
        %v5718 = vadd.f32 0.0, %v5717
        %v5719 = vpop.f32.mrb[0].mxu0
        %5720 = vmatprep.mubr.bf16.mxu0 0
        %5721 = vmatmul.mubr.bf16.gmra.mrb[0].mxu0 %v5576
        %v5722 = vpop.f32.mrb[0].mxu0
        %v5723 = vadd.f32 0.0, %v5722
        %v5724 = vpop.f32.mrb[0].mxu0
        %v5725 = vpop.f32.mrb[0].mxu0
        %v5726 = vadd.f32 0.0, %v5725
        %v5727 = vpop.f32.mrb[0].mxu0
        %5728 = vmatprep.mubr.bf16.mxu0 0
        %5729 = vmatmul.mubr.bf16.gmra.mrb[0].mxu0 %v5577
        %v5730 = vpop.f32.mrb[0].mxu0
        %v5731 = vadd.f32 0.0, %v5730
        %v5732 = vpop.f32.mrb[0].mxu0
        %v5733 = vpop.f32.mrb[0].mxu0
        %v5734 = vadd.f32 0.0, %v5733
        %v5735 = vpop.f32.mrb[0].mxu0
        %5736 = vmatprep.mubr.bf16.mxu0 0
        %5737 = vmatmul.mubr.bf16.gmra.mrb[0].mxu0 %v5578
        %v5738 = vpop.f32.mrb[0].mxu0
        %v5739 = vadd.f32 0.0, %v5738
        %v5740 = vpop.f32.mrb[0].mxu0
        %v5741 = vpop.f32.mrb[0].mxu0
        %v5742 = vadd.f32 0.0, %v5741
        %v5743 = vpop.f32.mrb[0].mxu0
        %5744 = vmatprep.mubr.bf16.mxu0 0
        %5745 = vmatmul.mubr.bf16.gmra.mrb[0].mxu0 %v5579
        %v5746 = vpop.f32.mrb[0].mxu0
        %v5747 = vadd.f32 0.0, %v5746
        %v5748 = vpop.f32.mrb[0].mxu0
        %v5749 = vpop.f32.mrb[0].mxu0
        %v5750 = vadd.f32 0.0, %v5749
        %v5751 = vpop.f32.mrb[0].mxu0
        %5752 = vmatprep.mubr.bf16.mxu0 0
        %5753 = vmatmul.mubr.bf16.gmra.mrb[0].mxu0 %v5580
        %v5754 = vpop.f32.mrb[0].mxu0
        %v5755 = vadd.f32 0.0, %v5754
        %v5756 = vpop.f32.mrb[0].mxu0
        %v5757 = vpop.f32.mrb[0].mxu0
        %v5758 = vadd.f32 0.0, %v5757
        %v5759 = vpop.f32.mrb[0].mxu0
        %5760 = vdwg.mxu0
        %v5761 = vadd.f32 %v5388, %v5675
        %v5762 = vadd.f32 %v5389, %v5678
        %v5763 = vadd.f32 %v5390, %v5683
        %v5764 = vadd.f32 %v5391, %v5686
        %v5765 = vadd.f32 %v5392, %v5691
        %v5766 = vadd.f32 %v5393, %v5694
        %v5767 = vadd.f32 %v5394, %v5699
        %v5768 = vadd.f32 %v5395, %v5702
        %v5769 = vadd.f32 %v5396, %v5707
        %v5770 = vadd.f32 %v5397, %v5710
        %v5771 = vadd.f32 %v5398, %v5715
        %v5772 = vadd.f32 %v5399, %v5718
        %v5773 = vadd.f32 %v5400, %v5723
        %v5774 = vadd.f32 %v5401, %v5726
        %v5775 = vadd.f32 %v5402, %v5731
        %v5776 = vadd.f32 %v5403, %v5734
        %v5777 = vadd.f32 %v5404, %v5739
        %v5778 = vadd.f32 %v5405, %v5742
        %v5779 = vadd.f32 %v5406, %v5747
        %v5780 = vadd.f32 %v5407, %v5750
        %v5781 = vadd.f32 %v5408, %v5755
        %v5782 = vadd.f32 %v5409, %v5758
        %v5783 = vld [vmem:[%s4] sm:$0x1]
        %v5785 = vlaneseq
        %v5786 = vshrl.u32 %v5785, 7
        %v5787 = vsub.s32 0, %v5786
        %v5788 = vrot.slane %v5783, %v5787
        %v5790 = vadd.f32 %v5761, %v5788
        %v5791 = vadd.f32 %v5762, %v5788
        %v5792 = vadd.f32 %v5763, %v5788
        %v5793 = vadd.f32 %v5764, %v5788
        %v5794 = vadd.f32 %v5765, %v5788
        %v5795 = vadd.f32 %v5766, %v5788
        %v5796 = vadd.f32 %v5767, %v5788
        %v5797 = vadd.f32 %v5768, %v5788
        %v5798 = vadd.f32 %v5769, %v5788
        %v5799 = vadd.f32 %v5770, %v5788
        %v5800 = vadd.f32 %v5771, %v5788
        %v5801 = vadd.f32 %v5772, %v5788
        %v5802 = vadd.f32 %v5773, %v5788
        %v5803 = vadd.f32 %v5774, %v5788
        %v5804 = vadd.f32 %v5775, %v5788
        %v5805 = vadd.f32 %v5776, %v5788
        %v5806 = vadd.f32 %v5777, %v5788
        %v5807 = vadd.f32 %v5778, %v5788
        %v5808 = vadd.f32 %v5779, %v5788
        %v5809 = vadd.f32 %v5780, %v5788
        %v5810 = vadd.f32 %v5781, %v5788
        %v5811 = vadd.f32 %v5782, %v5788
        %v5812 = vmax.f32 %v5790, 0.0
        %v5813 = vmax.f32 %v5791, 0.0
        %v5814 = vmax.f32 %v5792, 0.0
        %v5815 = vmax.f32 %v5793, 0.0
        %v5816 = vmax.f32 %v5794, 0.0
        %v5817 = vmax.f32 %v5795, 0.0
        %v5818 = vmax.f32 %v5796, 0.0
        %v5819 = vmax.f32 %v5797, 0.0
        %v5820 = vmax.f32 %v5798, 0.0
        %v5821 = vmax.f32 %v5799, 0.0
        %v5822 = vmax.f32 %v5800, 0.0
        %v5823 = vmax.f32 %v5801, 0.0
        %v5824 = vmax.f32 %v5802, 0.0
        %v5825 = vmax.f32 %v5803, 0.0
        %v5826 = vmax.f32 %v5804, 0.0
        %v5827 = vmax.f32 %v5805, 0.0
        %v5828 = vmax.f32 %v5806, 0.0
        %v5829 = vmax.f32 %v5807, 0.0
        %v5830 = vmax.f32 %v5808, 0.0
        %v5831 = vmax.f32 %v5809, 0.0
        %v5832 = vmax.f32 %v5810, 0.0
        %v5833 = vmax.f32 %v5811, 0.0
        %v5834 = vpack.c.bf16 %v5813, %v5812
        %v5835 = vpack.c.bf16 %v5815, %v5814
        %v5836 = vpack.c.bf16 %v5817, %v5816
        %v5837 = vpack.c.bf16 %v5819, %v5818
        %v5838 = vpack.c.bf16 %v5821, %v5820
        %v5839 = vpack.c.bf16 %v5823, %v5822
        %v5840 = vpack.c.bf16 %v5825, %v5824
        %v5841 = vpack.c.bf16 %v5827, %v5826
        %v5842 = vpack.c.bf16 %v5829, %v5828
        %v5843 = vpack.c.bf16 %v5831, %v5830
        %v5844 = vpack.c.bf16 %v5833, %v5832
        %v5856 = vunpack.c.l.b16 %v5834
        %v5857 = vunpack.c.h.b16 %v5834
        %v5858 = vunpack.c.l.b16 %v5835
        %v5859 = vunpack.c.h.b16 %v5835
        %v5860 = vunpack.c.l.b16 %v5836
        %v5861 = vunpack.c.h.b16 %v5836
        %v5862 = vunpack.c.l.b16 %v5837
        %v5863 = vunpack.c.h.b16 %v5837
        %v5864 = vunpack.c.l.b16 %v5838
        %v5865 = vunpack.c.h.b16 %v5838
        %v5866 = vunpack.c.l.b16 %v5839
        %v5867 = vunpack.c.h.b16 %v5839
        %v5868 = vunpack.c.l.b16 %v5840
        %v5869 = vunpack.c.h.b16 %v5840
        %v5870 = vunpack.c.l.b16 %v5841
        %v5871 = vunpack.c.h.b16 %v5841
        %v5872 = vunpack.c.l.b16 %v5842
        %v5873 = vunpack.c.h.b16 %v5842
        %v5874 = vunpack.c.l.b16 %v5843
        %v5875 = vunpack.c.h.b16 %v5843
        %v5876 = vunpack.c.l.b16 %v5844
        %v5877 = vunpack.c.h.b16 %v5844
        %v5878 = vpack.c.b16 %v5856, %v5856
        %v5879 = vpack.c.b16 %v5857, %v5857
        %v5880 = vpack.c.b16 %v5858, %v5858
        %v5881 = vpack.c.b16 %v5859, %v5859
        %v5882 = vpack.c.b16 %v5860, %v5860
        %v5883 = vpack.c.b16 %v5861, %v5861
        %v5884 = vpack.c.b16 %v5862, %v5862
        %v5885 = vpack.c.b16 %v5863, %v5863
        %v5886 = vpack.c.b16 %v5864, %v5864
        %v5887 = vpack.c.b16 %v5865, %v5865
        %v5888 = vpack.c.b16 %v5866, %v5866
        %v5889 = vpack.c.b16 %v5867, %v5867
        %v5890 = vpack.c.b16 %v5868, %v5868
        %v5891 = vpack.c.b16 %v5869, %v5869
        %v5892 = vpack.c.b16 %v5870, %v5870
        %v5893 = vpack.c.b16 %v5871, %v5871
        %v5894 = vpack.c.b16 %v5872, %v5872
        %v5895 = vpack.c.b16 %v5873, %v5873
        %v5896 = vpack.c.b16 %v5874, %v5874
        %v5897 = vpack.c.b16 %v5875, %v5875
        %v5898 = vpack.c.b16 %v5876, %v5876
        %v5899 = vpack.c.b16 %v5877, %v5877
        %5922 = vst [vmem:[#allocation3] sm:$0xf] %v5878
        %5923 = vst [vmem:[#allocation3 + $0x4] sm:$0xf] %v5879
        %5924 = vst [vmem:[#allocation3 + $0xc] sm:$0xf] %v5880
        %5925 = vst [vmem:[#allocation3 + $0x10] sm:$0xf] %v5881
        %5926 = vst [vmem:[#allocation3 + $0x18] sm:$0xf] %v5882
        %5927 = vst [vmem:[#allocation3 + $0x1c] sm:$0xf] %v5883
        %5928 = vst [vmem:[#allocation3 + $0x24] sm:$0xf] %v5884
        %5929 = vst [vmem:[#allocation3 + $0x28] sm:$0xf] %v5885
        %5930 = vst [vmem:[#allocation3 + $0x30] sm:$0xf] %v5886
        %5931 = vst [vmem:[#allocation3 + $0x34] sm:$0xf] %v5887
        %5932 = vst [vmem:[#allocation3 + $0x3c] sm:$0xf] %v5888
        %5933 = vst [vmem:[#allocation3 + $0x40] sm:$0xf] %v5889
        %5934 = vst [vmem:[#allocation3 + $0x48] sm:$0xf] %v5890
        %5935 = vst [vmem:[#allocation3 + $0x4c] sm:$0xf] %v5891
        %5936 = vst [vmem:[#allocation3 + $0x54] sm:$0xf] %v5892
        %5937 = vst [vmem:[#allocation3 + $0x58] sm:$0xf] %v5893
        %5938 = vst [vmem:[#allocation3 + $0x60] sm:$0xf] %v5894
        %5939 = vst [vmem:[#allocation3 + $0x64] sm:$0xf] %v5895
        %5940 = vst [vmem:[#allocation3 + $0x6c] sm:$0xf] %v5896
        %5941 = vst [vmem:[#allocation3 + $0x70] sm:$0xf] %v5897
        %5942 = vst [vmem:[#allocation3 + $0x78] sm:$0xf] %v5898
        %5943 = vst [vmem:[#allocation3 + $0x7c] sm:$0xf] %v5899
        %v5944 = vld [vmem:[#allocation3] sm:$0xf]
        %v5945 = vld [vmem:[#allocation3 + $0x4] sm:$0xf]
        %v5946 = vld [vmem:[#allocation3 + $0xc] sm:$0xf]
        %v5947 = vld [vmem:[#allocation3 + $0x10] sm:$0xf]
        %v5948 = vld [vmem:[#allocation3 + $0x18] sm:$0xf]
        %v5949 = vld [vmem:[#allocation3 + $0x1c] sm:$0xf]
        %v5950 = vld [vmem:[#allocation3 + $0x24] sm:$0xf]
        %v5951 = vld [vmem:[#allocation3 + $0x28] sm:$0xf]
        %v5952 = vld [vmem:[#allocation3 + $0x30] sm:$0xf]
        %v5953 = vld [vmem:[#allocation3 + $0x34] sm:$0xf]
        %v5954 = vld [vmem:[#allocation3 + $0x3c] sm:$0xf]
        %v5955 = vld [vmem:[#allocation3 + $0x40] sm:$0xf]
        %v5956 = vld [vmem:[#allocation3 + $0x48] sm:$0xf]
        %v5957 = vld [vmem:[#allocation3 + $0x4c] sm:$0xf]
        %v5958 = vld [vmem:[#allocation3 + $0x54] sm:$0xf]
        %v5959 = vld [vmem:[#allocation3 + $0x58] sm:$0xf]
        %v5960 = vld [vmem:[#allocation3 + $0x60] sm:$0xf]
        %v5961 = vld [vmem:[#allocation3 + $0x64] sm:$0xf]
        %v5962 = vld [vmem:[%s5] sm:$0xf]
        %v5963 = vld [vmem:[%s5 + $0x4] sm:$0xf]
        %v5964 = vld [vmem:[%s5 + $0x8] sm:$0xf]
        %v5965 = vld [vmem:[%s5 + $0xc] sm:$0xf]
        %v5966 = vld [vmem:[%s5 + $0x10] sm:$0xf]
        %v5967 = vld [vmem:[%s5 + $0x14] sm:$0xf]
        %v5968 = vld [vmem:[%s5 + $0x18] sm:$0xf]
        %v5969 = vld [vmem:[%s5 + $0x1c] sm:$0xf]
        %v5970 = vld [vmem:[%s5 + $0x20] sm:$0xf]
        %v5971 = vld [vmem:[%s5 + $0x24] sm:$0xf]
        %v5972 = vld [vmem:[%s5 + $0x28] sm:$0xf]
        %v5973 = vld [vmem:[%s5 + $0x2c] sm:$0xf]
        %v5974 = vld [vmem:[%s5 + $0x30] sm:$0xf]
        %v5975 = vld [vmem:[%s5 + $0x34] sm:$0xf]
        %v5976 = vld [vmem:[%s5 + $0x38] sm:$0xf]
        %v5977 = vld [vmem:[%s5 + $0x3c] sm:$0xf]
        %v5978 = vld [vmem:[#allocation3 + $0x8] sm:$0x1]
        %v5979 = vld [vmem:[#allocation3 + $0x14] sm:$0x1]
        %v5980 = vld [vmem:[#allocation3 + $0x20] sm:$0x1]
        %v5981 = vld [vmem:[#allocation3 + $0x2c] sm:$0x1]
        %v5982 = vld [vmem:[#allocation3 + $0x38] sm:$0x1]
        %v5983 = vld [vmem:[#allocation3 + $0x44] sm:$0x1]
        %v5984 = vld [vmem:[#allocation3 + $0x50] sm:$0x1]
        %v5985 = vld [vmem:[#allocation3 + $0x5c] sm:$0x1]
        %v5986 = vld [vmem:[#allocation3 + $0x68] sm:$0x1]
        %v5988 = vshrl.u32 %v5944, 16
        %v5990 = vrot.slane %v5988, 4
        %v5991 = vshll.u32 %v5944, 16
        %v5993 = vrot.slane %v5991, 5
        %v5994 = vor.u32 %v5990, %v5993
        %v5995 = vrot.slane %v5994, 4
        %v5997 = vshll.u32 %v5945, 16
        %v5999 = vrot.slane %v5997, 5
        %v6000 = vsel %vm2250, %v5995, %v5999
        %v6001 = vshrl.u32 %v5945, 16
        %v6003 = vrot.slane %v6001, 4
        %v6004 = vor.u32 %v6003, %v5999
        %v6005 = vrot.slane %v6004, 4
        %v6007 = vshll.u32 %v5978, 16
        %v6009 = vrot.slane %v6007, 5
        %v6010 = vsel %vm2250, %v6005, %v6009
        %v6012 = vshrl.u32 %v5946, 16
        %v6014 = vrot.slane %v6012, 4
        %v6015 = vshll.u32 %v5946, 16
        %v6017 = vrot.slane %v6015, 5
        %v6018 = vor.u32 %v6014, %v6017
        %v6019 = vrot.slane %v6018, 4
        %v6021 = vshll.u32 %v5947, 16
        %v6023 = vrot.slane %v6021, 5
        %v6024 = vsel %vm2250, %v6019, %v6023
        %v6025 = vshrl.u32 %v5947, 16
        %v6027 = vrot.slane %v6025, 4
        %v6028 = vor.u32 %v6027, %v6023
        %v6029 = vrot.slane %v6028, 4
        %v6031 = vshll.u32 %v5979, 16
        %v6033 = vrot.slane %v6031, 5
        %v6034 = vsel %vm2250, %v6029, %v6033
        %v6036 = vshrl.u32 %v5948, 16
        %v6038 = vrot.slane %v6036, 4
        %v6039 = vshll.u32 %v5948, 16
        %v6041 = vrot.slane %v6039, 5
        %v6042 = vor.u32 %v6038, %v6041
        %v6043 = vrot.slane %v6042, 4
        %v6045 = vshll.u32 %v5949, 16
        %v6047 = vrot.slane %v6045, 5
        %v6048 = vsel %vm2250, %v6043, %v6047
        %v6049 = vshrl.u32 %v5949, 16
        %v6051 = vrot.slane %v6049, 4
        %v6052 = vor.u32 %v6051, %v6047
        %v6053 = vrot.slane %v6052, 4
        %v6055 = vshll.u32 %v5980, 16
        %v6057 = vrot.slane %v6055, 5
        %v6058 = vsel %vm2250, %v6053, %v6057
        %v6060 = vshrl.u32 %v5950, 16
        %v6062 = vrot.slane %v6060, 4
        %v6063 = vshll.u32 %v5950, 16
        %v6065 = vrot.slane %v6063, 5
        %v6066 = vor.u32 %v6062, %v6065
        %v6067 = vrot.slane %v6066, 4
        %v6069 = vshll.u32 %v5951, 16
        %v6071 = vrot.slane %v6069, 5
        %v6072 = vsel %vm2250, %v6067, %v6071
        %v6073 = vshrl.u32 %v5951, 16
        %v6075 = vrot.slane %v6073, 4
        %v6076 = vor.u32 %v6075, %v6071
        %v6077 = vrot.slane %v6076, 4
        %v6079 = vshll.u32 %v5981, 16
        %v6081 = vrot.slane %v6079, 5
        %v6082 = vsel %vm2250, %v6077, %v6081
        %v6084 = vshrl.u32 %v5952, 16
        %v6086 = vrot.slane %v6084, 4
        %v6087 = vshll.u32 %v5952, 16
        %v6089 = vrot.slane %v6087, 5
        %v6090 = vor.u32 %v6086, %v6089
        %v6091 = vrot.slane %v6090, 4
        %v6093 = vshll.u32 %v5953, 16
        %v6095 = vrot.slane %v6093, 5
        %v6096 = vsel %vm2250, %v6091, %v6095
        %v6097 = vshrl.u32 %v5953, 16
        %v6099 = vrot.slane %v6097, 4
        %v6100 = vor.u32 %v6099, %v6095
        %v6101 = vrot.slane %v6100, 4
        %v6103 = vshll.u32 %v5982, 16
        %v6105 = vrot.slane %v6103, 5
        %v6106 = vsel %vm2250, %v6101, %v6105
        %v6108 = vshrl.u32 %v5954, 16
        %v6110 = vrot.slane %v6108, 4
        %v6111 = vshll.u32 %v5954, 16
        %v6113 = vrot.slane %v6111, 5
        %v6114 = vor.u32 %v6110, %v6113
        %v6115 = vrot.slane %v6114, 4
        %v6117 = vshll.u32 %v5955, 16
        %v6119 = vrot.slane %v6117, 5
        %v6120 = vsel %vm2250, %v6115, %v6119
        %v6121 = vshrl.u32 %v5955, 16
        %v6123 = vrot.slane %v6121, 4
        %v6124 = vor.u32 %v6123, %v6119
        %v6125 = vrot.slane %v6124, 4
        %v6127 = vshll.u32 %v5983, 16
        %v6129 = vrot.slane %v6127, 5
        %v6130 = vsel %vm2250, %v6125, %v6129
        %v6132 = vshrl.u32 %v5956, 16
        %v6134 = vrot.slane %v6132, 4
        %v6135 = vshll.u32 %v5956, 16
        %v6137 = vrot.slane %v6135, 5
        %v6138 = vor.u32 %v6134, %v6137
        %v6139 = vrot.slane %v6138, 4
        %v6141 = vshll.u32 %v5957, 16
        %v6143 = vrot.slane %v6141, 5
        %v6144 = vsel %vm2250, %v6139, %v6143
        %v6145 = vshrl.u32 %v5957, 16
        %v6147 = vrot.slane %v6145, 4
        %v6148 = vor.u32 %v6147, %v6143
        %v6149 = vrot.slane %v6148, 4
        %v6151 = vshll.u32 %v5984, 16
        %v6153 = vrot.slane %v6151, 5
        %v6154 = vsel %vm2250, %v6149, %v6153
        %v6156 = vshrl.u32 %v5958, 16
        %v6158 = vrot.slane %v6156, 4
        %v6159 = vshll.u32 %v5958, 16
        %v6161 = vrot.slane %v6159, 5
        %v6162 = vor.u32 %v6158, %v6161
        %v6163 = vrot.slane %v6162, 4
        %v6165 = vshll.u32 %v5959, 16
        %v6167 = vrot.slane %v6165, 5
        %v6168 = vsel %vm2250, %v6163, %v6167
        %v6169 = vshrl.u32 %v5959, 16
        %v6171 = vrot.slane %v6169, 4
        %v6172 = vor.u32 %v6171, %v6167
        %v6173 = vrot.slane %v6172, 4
        %v6175 = vshll.u32 %v5985, 16
        %v6177 = vrot.slane %v6175, 5
        %v6178 = vsel %vm2250, %v6173, %v6177
        %v6180 = vshrl.u32 %v5960, 16
        %v6182 = vrot.slane %v6180, 4
        %v6183 = vshll.u32 %v5960, 16
        %v6185 = vrot.slane %v6183, 5
        %v6186 = vor.u32 %v6182, %v6185
        %v6187 = vrot.slane %v6186, 4
        %v6189 = vshll.u32 %v5961, 16
        %v6191 = vrot.slane %v6189, 5
        %v6192 = vsel %vm2250, %v6187, %v6191
        %v6193 = vshrl.u32 %v5961, 16
        %v6195 = vrot.slane %v6193, 4
        %v6196 = vor.u32 %v6195, %v6191
        %v6197 = vrot.slane %v6196, 4
        %v6199 = vshll.u32 %v5986, 16
        %v6201 = vrot.slane %v6199, 5
        %v6202 = vsel %vm2250, %v6197, %v6201
        %s6203 = scalar_lea.vmem %s5, 64
        %v6204 = vld [vmem:[%s6203] sm:$0xf]
        %v6205 = vld [vmem:[%s6203 + $0x4] sm:$0xf]
        %v6206 = vld [vmem:[%s6203 + $0x8] sm:$0xf]
        %v6207 = vld [vmem:[%s6203 + $0xc] sm:$0xf]
        %v6208 = vld [vmem:[%s6203 + $0x10] sm:$0xf]
        %v6209 = vld [vmem:[%s6203 + $0x14] sm:$0xf]
        %v6210 = vld [vmem:[%s6203 + $0x18] sm:$0xf]
        %v6211 = vld [vmem:[%s6203 + $0x1c] sm:$0xf]
        %v6212 = vld [vmem:[%s6203 + $0x20] sm:$0xf]
        %v6213 = vld [vmem:[%s6203 + $0x24] sm:$0xf]
        %v6214 = vld [vmem:[%s6203 + $0x28] sm:$0xf]
        %v6215 = vld [vmem:[%s6203 + $0x2c] sm:$0xf]
        %v6216 = vld [vmem:[%s6203 + $0x30] sm:$0xf]
        %v6217 = vld [vmem:[%s6203 + $0x34] sm:$0xf]
        %v6218 = vld [vmem:[%s6203 + $0x38] sm:$0xf]
        %v6219 = vld [vmem:[%s6203 + $0x3c] sm:$0xf]
        %v6220 = vunpack.c.l.b16 %v6000
        %v6221 = vunpack.c.l.b16 %v6010
        %v6222 = vunpack.c.l.b16 %v6024
        %v6223 = vunpack.c.l.b16 %v6034
        %v6224 = vunpack.c.l.b16 %v6048
        %v6225 = vunpack.c.l.b16 %v6058
        %v6226 = vunpack.c.l.b16 %v6072
        %v6227 = vunpack.c.l.b16 %v6082
        %v6228 = vunpack.c.l.b16 %v6096
        %v6229 = vunpack.c.l.b16 %v6106
        %v6230 = vunpack.c.l.b16 %v6120
        %v6231 = vunpack.c.l.b16 %v6130
        %v6232 = vunpack.c.l.b16 %v6144
        %v6233 = vunpack.c.l.b16 %v6154
        %v6234 = vunpack.c.l.b16 %v6168
        %v6235 = vunpack.c.l.b16 %v6178
        %v6236 = vunpack.c.l.b16 %v6192
        %v6237 = vunpack.c.l.b16 %v6202
        %v6238 = vpack.c.b16 %v6221, %v6220
        %v6239 = vpack.c.b16 %v6223, %v6222
        %v6240 = vpack.c.b16 %v6225, %v6224
        %v6241 = vpack.c.b16 %v6227, %v6226
        %v6242 = vpack.c.b16 %v6229, %v6228
        %v6243 = vpack.c.b16 %v6231, %v6230
        %v6244 = vpack.c.b16 %v6233, %v6232
        %v6245 = vpack.c.b16 %v6235, %v6234
        %v6246 = vpack.c.b16 %v6237, %v6236
        %v6272 = vunpack.c.l.b16 %v6204
        %v6273 = vunpack.c.l.b16 %v6205
        %v6274 = vunpack.c.l.b16 %v6206
        %v6275 = vunpack.c.l.b16 %v6207
        %v6276 = vunpack.c.l.b16 %v6208
        %v6277 = vunpack.c.l.b16 %v6209
        %v6278 = vunpack.c.l.b16 %v6210
        %v6279 = vunpack.c.l.b16 %v6211
        %v6280 = vunpack.c.l.b16 %v6212
        %v6281 = vunpack.c.l.b16 %v6213
        %v6282 = vunpack.c.l.b16 %v6214
        %v6283 = vunpack.c.l.b16 %v6215
        %v6284 = vunpack.c.l.b16 %v6216
        %v6285 = vunpack.c.l.b16 %v6217
        %v6286 = vunpack.c.l.b16 %v6218
        %v6287 = vunpack.c.l.b16 %v6219
        %v6288 = vpack.c.b16 %v6273, %v6272
        %v6289 = vpack.c.b16 %v6275, %v6274
        %v6290 = vpack.c.b16 %v6277, %v6276
        %v6291 = vpack.c.b16 %v6279, %v6278
        %v6292 = vpack.c.b16 %v6281, %v6280
        %v6293 = vpack.c.b16 %v6283, %v6282
        %v6294 = vpack.c.b16 %v6285, %v6284
        %v6295 = vpack.c.b16 %v6287, %v6286
        %6304 = vmatprep.subr.bf16.mxu0 0
        %6305 = vmatpush1.bf16.msra.mxu0 %v6288
        %6306 = vmatprep.subr.bf16.mxu0 0
        %6307 = vmatpush1.bf16.msra.mxu0 %v6289
        %6308 = vmatprep.subr.bf16.mxu0 0
        %6309 = vmatpush1.bf16.msra.mxu0 %v6290
        %6310 = vmatprep.subr.bf16.mxu0 0
        %6311 = vmatpush1.bf16.msra.mxu0 %v6291
        %6312 = vmatprep.subr.bf16.mxu0 0
        %6313 = vmatpush1.bf16.msra.mxu0 %v6292
        %6314 = vmatprep.subr.bf16.mxu0 0
        %6315 = vmatpush1.bf16.msra.mxu0 %v6293
        %6316 = vmatprep.subr.bf16.mxu0 0
        %6317 = vmatpush1.bf16.msra.mxu0 %v6294
        %6318 = vmatprep.subr.bf16.mxu0 0
        %6319 = vmatpush1.bf16.msra.mxu0 %v6295
        %6320 = vmatprep.subr.bf16.mxu0 0
        %6321 = vmatpush1.bf16.msra.mxu0 0
        %6322 = vmatprep.subr.bf16.mxu0 0
        %6323 = vmatpush1.bf16.msra.mxu0 0
        %6324 = vmatprep.subr.bf16.mxu0 0
        %6325 = vmatpush1.bf16.msra.mxu0 0
        %6326 = vmatprep.subr.bf16.mxu0 0
        %6327 = vmatpush1.bf16.msra.mxu0 0
        %6328 = vmatprep.subr.bf16.mxu0 0
        %6329 = vmatpush1.bf16.msra.mxu0 0
        %6330 = vmatprep.subr.bf16.mxu0 0
        %6331 = vmatpush1.bf16.msra.mxu0 0
        %6332 = vmatprep.subr.bf16.mxu0 0
        %6333 = vmatpush1.bf16.msra.mxu0 0
        %6334 = vmatprep.subr.bf16.mxu0 0
        %6335 = vmatpush1.bf16.msra.mxu0 0
        %6336 = vmatprep.mubr.bf16.mxu0 0
        %6337 = vmatmul.mubr.bf16.gmra.mrb[0].mxu0 %v6238
        %v6338 = vpop.f32.mrb[0].mxu0
        %v6339 = vadd.f32 0.0, %v6338
        %v6340 = vpop.f32.mrb[0].mxu0
        %v6341 = vpop.f32.mrb[0].mxu0
        %v6342 = vadd.f32 0.0, %v6341
        %v6343 = vpop.f32.mrb[0].mxu0
        %6344 = vmatprep.mubr.bf16.mxu0 0
        %6345 = vmatmul.mubr.bf16.gmra.mrb[0].mxu0 %v6239
        %v6346 = vpop.f32.mrb[0].mxu0
        %v6347 = vadd.f32 0.0, %v6346
        %v6348 = vpop.f32.mrb[0].mxu0
        %v6349 = vpop.f32.mrb[0].mxu0
        %v6350 = vadd.f32 0.0, %v6349
        %v6351 = vpop.f32.mrb[0].mxu0
        %6352 = vmatprep.mubr.bf16.mxu0 0
        %6353 = vmatmul.mubr.bf16.gmra.mrb[0].mxu0 %v6240
        %v6354 = vpop.f32.mrb[0].mxu0
        %v6355 = vadd.f32 0.0, %v6354
        %v6356 = vpop.f32.mrb[0].mxu0
        %v6357 = vpop.f32.mrb[0].mxu0
        %v6358 = vadd.f32 0.0, %v6357
        %v6359 = vpop.f32.mrb[0].mxu0
        %6360 = vmatprep.mubr.bf16.mxu0 0
        %6361 = vmatmul.mubr.bf16.gmra.mrb[0].mxu0 %v6241
        %v6362 = vpop.f32.mrb[0].mxu0
        %v6363 = vadd.f32 0.0, %v6362
        %v6364 = vpop.f32.mrb[0].mxu0
        %v6365 = vpop.f32.mrb[0].mxu0
        %v6366 = vadd.f32 0.0, %v6365
        %v6367 = vpop.f32.mrb[0].mxu0
        %6368 = vmatprep.mubr.bf16.mxu0 0
        %6369 = vmatmul.mubr.bf16.gmra.mrb[0].mxu0 %v6242
        %v6370 = vpop.f32.mrb[0].mxu0
        %v6371 = vadd.f32 0.0, %v6370
        %v6372 = vpop.f32.mrb[0].mxu0
        %v6373 = vpop.f32.mrb[0].mxu0
        %v6374 = vadd.f32 0.0, %v6373
        %v6375 = vpop.f32.mrb[0].mxu0
        %6376 = vmatprep.mubr.bf16.mxu0 0
        %6377 = vmatmul.mubr.bf16.gmra.mrb[0].mxu0 %v6243
        %v6378 = vpop.f32.mrb[0].mxu0
        %v6379 = vadd.f32 0.0, %v6378
        %v6380 = vpop.f32.mrb[0].mxu0
        %v6381 = vpop.f32.mrb[0].mxu0
        %v6382 = vadd.f32 0.0, %v6381
        %v6383 = vpop.f32.mrb[0].mxu0
        %6384 = vmatprep.mubr.bf16.mxu0 0
        %6385 = vmatmul.mubr.bf16.gmra.mrb[0].mxu0 %v6244
        %v6386 = vpop.f32.mrb[0].mxu0
        %v6387 = vadd.f32 0.0, %v6386
        %v6388 = vpop.f32.mrb[0].mxu0
        %v6389 = vpop.f32.mrb[0].mxu0
        %v6390 = vadd.f32 0.0, %v6389
        %v6391 = vpop.f32.mrb[0].mxu0
        %6392 = vmatprep.mubr.bf16.mxu0 0
        %6393 = vmatmul.mubr.bf16.gmra.mrb[0].mxu0 %v6245
        %v6394 = vpop.f32.mrb[0].mxu0
        %v6395 = vadd.f32 0.0, %v6394
        %v6396 = vpop.f32.mrb[0].mxu0
        %v6397 = vpop.f32.mrb[0].mxu0
        %v6398 = vadd.f32 0.0, %v6397
        %v6399 = vpop.f32.mrb[0].mxu0
        %6400 = vmatprep.mubr.bf16.mxu0 0
        %6401 = vmatmul.mubr.bf16.gmra.mrb[0].mxu0 %v6246
        %v6402 = vpop.f32.mrb[0].mxu0
        %v6403 = vadd.f32 0.0, %v6402
        %v6404 = vpop.f32.mrb[0].mxu0
        %v6405 = vpop.f32.mrb[0].mxu0
        %v6406 = vadd.f32 0.0, %v6405
        %v6407 = vpop.f32.mrb[0].mxu0
        %6408 = vdwg.mxu0
        %v6427 = vunpack.c.l.b16 %v5944
        %v6428 = vunpack.c.l.b16 %v5945
        %v6429 = vunpack.c.l.b16 %v5946
        %v6430 = vunpack.c.l.b16 %v5947
        %v6431 = vunpack.c.l.b16 %v5948
        %v6432 = vunpack.c.l.b16 %v5949
        %v6433 = vunpack.c.l.b16 %v5950
        %v6434 = vunpack.c.l.b16 %v5951
        %v6435 = vunpack.c.l.b16 %v5952
        %v6436 = vunpack.c.l.b16 %v5953
        %v6437 = vunpack.c.l.b16 %v5954
        %v6438 = vunpack.c.l.b16 %v5955
        %v6439 = vunpack.c.l.b16 %v5956
        %v6440 = vunpack.c.l.b16 %v5957
        %v6441 = vunpack.c.l.b16 %v5958
        %v6442 = vunpack.c.l.b16 %v5959
        %v6443 = vunpack.c.l.b16 %v5960
        %v6444 = vunpack.c.l.b16 %v5961
        %v6445 = vpack.c.b16 %v6428, %v6427
        %v6446 = vpack.c.b16 %v6430, %v6429
        %v6447 = vpack.c.b16 %v6432, %v6431
        %v6448 = vpack.c.b16 %v6434, %v6433
        %v6449 = vpack.c.b16 %v6436, %v6435
        %v6450 = vpack.c.b16 %v6438, %v6437
        %v6451 = vpack.c.b16 %v6440, %v6439
        %v6452 = vpack.c.b16 %v6442, %v6441
        %v6453 = vpack.c.b16 %v6444, %v6443
        %v6479 = vunpack.c.l.b16 %v5962
        %v6480 = vunpack.c.l.b16 %v5963
        %v6481 = vunpack.c.l.b16 %v5964
        %v6482 = vunpack.c.l.b16 %v5965
        %v6483 = vunpack.c.l.b16 %v5966
        %v6484 = vunpack.c.l.b16 %v5967
        %v6485 = vunpack.c.l.b16 %v5968
        %v6486 = vunpack.c.l.b16 %v5969
        %v6487 = vunpack.c.l.b16 %v5970
        %v6488 = vunpack.c.l.b16 %v5971
        %v6489 = vunpack.c.l.b16 %v5972
        %v6490 = vunpack.c.l.b16 %v5973
        %v6491 = vunpack.c.l.b16 %v5974
        %v6492 = vunpack.c.l.b16 %v5975
        %v6493 = vunpack.c.l.b16 %v5976
        %v6494 = vunpack.c.l.b16 %v5977
        %v6495 = vpack.c.b16 %v6480, %v6479
        %v6496 = vpack.c.b16 %v6482, %v6481
        %v6497 = vpack.c.b16 %v6484, %v6483
        %v6498 = vpack.c.b16 %v6486, %v6485
        %v6499 = vpack.c.b16 %v6488, %v6487
        %v6500 = vpack.c.b16 %v6490, %v6489
        %v6501 = vpack.c.b16 %v6492, %v6491
        %v6502 = vpack.c.b16 %v6494, %v6493
        %6511 = vmatprep.subr.bf16.mxu0 0
        %6512 = vmatpush1.bf16.msra.mxu0 %v6495
        %6513 = vmatprep.subr.bf16.mxu0 0
        %6514 = vmatpush1.bf16.msra.mxu0 %v6496
        %6515 = vmatprep.subr.bf16.mxu0 0
        %6516 = vmatpush1.bf16.msra.mxu0 %v6497
        %6517 = vmatprep.subr.bf16.mxu0 0
        %6518 = vmatpush1.bf16.msra.mxu0 %v6498
        %6519 = vmatprep.subr.bf16.mxu0 0
        %6520 = vmatpush1.bf16.msra.mxu0 %v6499
        %6521 = vmatprep.subr.bf16.mxu0 0
        %6522 = vmatpush1.bf16.msra.mxu0 %v6500
        %6523 = vmatprep.subr.bf16.mxu0 0
        %6524 = vmatpush1.bf16.msra.mxu0 %v6501
        %6525 = vmatprep.subr.bf16.mxu0 0
        %6526 = vmatpush1.bf16.msra.mxu0 %v6502
        %6527 = vmatprep.subr.bf16.mxu0 0
        %6528 = vmatpush1.bf16.msra.mxu0 0
        %6529 = vmatprep.subr.bf16.mxu0 0
        %6530 = vmatpush1.bf16.msra.mxu0 0
        %6531 = vmatprep.subr.bf16.mxu0 0
        %6532 = vmatpush1.bf16.msra.mxu0 0
        %6533 = vmatprep.subr.bf16.mxu0 0
        %6534 = vmatpush1.bf16.msra.mxu0 0
        %6535 = vmatprep.subr.bf16.mxu0 0
        %6536 = vmatpush1.bf16.msra.mxu0 0
        %6537 = vmatprep.subr.bf16.mxu0 0
        %6538 = vmatpush1.bf16.msra.mxu0 0
        %6539 = vmatprep.subr.bf16.mxu0 0
        %6540 = vmatpush1.bf16.msra.mxu0 0
        %6541 = vmatprep.subr.bf16.mxu0 0
        %6542 = vmatpush1.bf16.msra.mxu0 0
        %6543 = vmatprep.mubr.bf16.mxu0 0
        %6544 = vmatmul.mubr.bf16.gmra.mrb[0].mxu0 %v6445
        %v6545 = vpop.f32.mrb[0].mxu0
        %v6546 = vadd.f32 %v6339, %v6545
        %v6547 = vpop.f32.mrb[0].mxu0
        %v6548 = vpop.f32.mrb[0].mxu0
        %v6549 = vadd.f32 %v6342, %v6548
        %v6550 = vpop.f32.mrb[0].mxu0
        %6551 = vmatprep.mubr.bf16.mxu0 0
        %6552 = vmatmul.mubr.bf16.gmra.mrb[0].mxu0 %v6446
        %v6553 = vpop.f32.mrb[0].mxu0
        %v6554 = vadd.f32 %v6347, %v6553
        %v6555 = vpop.f32.mrb[0].mxu0
        %v6556 = vpop.f32.mrb[0].mxu0
        %v6557 = vadd.f32 %v6350, %v6556
        %v6558 = vpop.f32.mrb[0].mxu0
        %6559 = vmatprep.mubr.bf16.mxu0 0
        %6560 = vmatmul.mubr.bf16.gmra.mrb[0].mxu0 %v6447
        %v6561 = vpop.f32.mrb[0].mxu0
        %v6562 = vadd.f32 %v6355, %v6561
        %v6563 = vpop.f32.mrb[0].mxu0
        %v6564 = vpop.f32.mrb[0].mxu0
        %v6565 = vadd.f32 %v6358, %v6564
        %v6566 = vpop.f32.mrb[0].mxu0
        %6567 = vmatprep.mubr.bf16.mxu0 0
        %6568 = vmatmul.mubr.bf16.gmra.mrb[0].mxu0 %v6448
        %v6569 = vpop.f32.mrb[0].mxu0
        %v6570 = vadd.f32 %v6363, %v6569
        %v6571 = vpop.f32.mrb[0].mxu0
        %v6572 = vpop.f32.mrb[0].mxu0
        %v6573 = vadd.f32 %v6366, %v6572
        %v6574 = vpop.f32.mrb[0].mxu0
        %6575 = vmatprep.mubr.bf16.mxu0 0
        %6576 = vmatmul.mubr.bf16.gmra.mrb[0].mxu0 %v6449
        %v6577 = vpop.f32.mrb[0].mxu0
        %v6578 = vadd.f32 %v6371, %v6577
        %v6579 = vpop.f32.mrb[0].mxu0
        %v6580 = vpop.f32.mrb[0].mxu0
        %v6581 = vadd.f32 %v6374, %v6580
        %v6582 = vpop.f32.mrb[0].mxu0
        %6583 = vmatprep.mubr.bf16.mxu0 0
        %6584 = vmatmul.mubr.bf16.gmra.mrb[0].mxu0 %v6450
        %v6585 = vpop.f32.mrb[0].mxu0
        %v6586 = vadd.f32 %v6379, %v6585
        %v6587 = vpop.f32.mrb[0].mxu0
        %v6588 = vpop.f32.mrb[0].mxu0
        %v6589 = vadd.f32 %v6382, %v6588
        %v6590 = vpop.f32.mrb[0].mxu0
        %6591 = vmatprep.mubr.bf16.mxu0 0
        %6592 = vmatmul.mubr.bf16.gmra.mrb[0].mxu0 %v6451
        %v6593 = vpop.f32.mrb[0].mxu0
        %v6594 = vadd.f32 %v6387, %v6593
        %v6595 = vpop.f32.mrb[0].mxu0
        %v6596 = vpop.f32.mrb[0].mxu0
        %v6597 = vadd.f32 %v6390, %v6596
        %v6598 = vpop.f32.mrb[0].mxu0
        %6599 = vmatprep.mubr.bf16.mxu0 0
        %6600 = vmatmul.mubr.bf16.gmra.mrb[0].mxu0 %v6452
        %v6601 = vpop.f32.mrb[0].mxu0
        %v6602 = vadd.f32 %v6395, %v6601
        %v6603 = vpop.f32.mrb[0].mxu0
        %v6604 = vpop.f32.mrb[0].mxu0
        %v6605 = vadd.f32 %v6398, %v6604
        %v6606 = vpop.f32.mrb[0].mxu0
        %6607 = vmatprep.mubr.bf16.mxu0 0
        %6608 = vmatmul.mubr.bf16.gmra.mrb[0].mxu0 %v6453
        %v6609 = vpop.f32.mrb[0].mxu0
        %v6610 = vadd.f32 %v6403, %v6609
        %v6611 = vpop.f32.mrb[0].mxu0
        %v6612 = vpop.f32.mrb[0].mxu0
        %v6613 = vadd.f32 %v6406, %v6612
        %v6614 = vpop.f32.mrb[0].mxu0
        %6615 = vdwg.mxu0
        %v6616 = vld [vmem:[#allocation3] sm:$0xe]
        %v6617 = vld [vmem:[#allocation3 + $0xc] sm:$0xe]
        %v6618 = vld [vmem:[#allocation3 + $0x18] sm:$0xe]
        %v6619 = vld [vmem:[#allocation3 + $0x24] sm:$0xe]
        %v6620 = vld [vmem:[#allocation3 + $0x30] sm:$0xe]
        %v6621 = vld [vmem:[#allocation3 + $0x3c] sm:$0xe]
        %v6622 = vld [vmem:[#allocation3 + $0x48] sm:$0xe]
        %v6623 = vld [vmem:[#allocation3 + $0x54] sm:$0xe]
        %v6624 = vld [vmem:[#allocation3 + $0x60] sm:$0xe]
        %v6643 = vrot.slane %v6616, 5
        %v6644 = vrot.slane %v6643, 4
        %v6645 = vrot.slane %v5945, 5
        %v6646 = vsel %vm3015, %v6644, %v6645
        %v6647 = vrot.slane %v6645, 4
        %v6648 = vrot.slane %v5978, 5
        %v6649 = vsel %vm3015, %v6647, %v6648
        %v6650 = vrot.slane %v6617, 5
        %v6651 = vrot.slane %v6650, 4
        %v6652 = vrot.slane %v5947, 5
        %v6653 = vsel %vm3015, %v6651, %v6652
        %v6654 = vrot.slane %v6652, 4
        %v6655 = vrot.slane %v5979, 5
        %v6656 = vsel %vm3015, %v6654, %v6655
        %v6657 = vrot.slane %v6618, 5
        %v6658 = vrot.slane %v6657, 4
        %v6659 = vrot.slane %v5949, 5
        %v6660 = vsel %vm3015, %v6658, %v6659
        %v6661 = vrot.slane %v6659, 4
        %v6662 = vrot.slane %v5980, 5
        %v6663 = vsel %vm3015, %v6661, %v6662
        %v6664 = vrot.slane %v6619, 5
        %v6665 = vrot.slane %v6664, 4
        %v6666 = vrot.slane %v5951, 5
        %v6667 = vsel %vm3015, %v6665, %v6666
        %v6668 = vrot.slane %v6666, 4
        %v6669 = vrot.slane %v5981, 5
        %v6670 = vsel %vm3015, %v6668, %v6669
        %v6671 = vrot.slane %v6620, 5
        %v6672 = vrot.slane %v6671, 4
        %v6673 = vrot.slane %v5953, 5
        %v6674 = vsel %vm3015, %v6672, %v6673
        %v6675 = vrot.slane %v6673, 4
        %v6676 = vrot.slane %v5982, 5
        %v6677 = vsel %vm3015, %v6675, %v6676
        %v6678 = vrot.slane %v6621, 5
        %v6679 = vrot.slane %v6678, 4
        %v6680 = vrot.slane %v5955, 5
        %v6681 = vsel %vm3015, %v6679, %v6680
        %v6682 = vrot.slane %v6680, 4
        %v6683 = vrot.slane %v5983, 5
        %v6684 = vsel %vm3015, %v6682, %v6683
        %v6685 = vrot.slane %v6622, 5
        %v6686 = vrot.slane %v6685, 4
        %v6687 = vrot.slane %v5957, 5
        %v6688 = vsel %vm3015, %v6686, %v6687
        %v6689 = vrot.slane %v6687, 4
        %v6690 = vrot.slane %v5984, 5
        %v6691 = vsel %vm3015, %v6689, %v6690
        %v6692 = vrot.slane %v6623, 5
        %v6693 = vrot.slane %v6692, 4
        %v6694 = vrot.slane %v5959, 5
        %v6695 = vsel %vm3015, %v6693, %v6694
        %v6696 = vrot.slane %v6694, 4
        %v6697 = vrot.slane %v5985, 5
        %v6698 = vsel %vm3015, %v6696, %v6697
        %v6699 = vrot.slane %v6624, 5
        %v6700 = vrot.slane %v6699, 4
        %v6701 = vrot.slane %v5961, 5
        %v6702 = vsel %vm3015, %v6700, %v6701
        %v6703 = vrot.slane %v6701, 4
        %v6704 = vrot.slane %v5986, 5
        %v6705 = vsel %vm3015, %v6703, %v6704
        %s6706 = scalar_lea.vmem %s5, 128
        %v6707 = vld [vmem:[%s6706] sm:$0xf]
        %v6708 = vld [vmem:[%s6706 + $0x4] sm:$0xf]
        %v6709 = vld [vmem:[%s6706 + $0x8] sm:$0xf]
        %v6710 = vld [vmem:[%s6706 + $0xc] sm:$0xf]
        %v6711 = vld [vmem:[%s6706 + $0x10] sm:$0xf]
        %v6712 = vld [vmem:[%s6706 + $0x14] sm:$0xf]
        %v6713 = vld [vmem:[%s6706 + $0x18] sm:$0xf]
        %v6714 = vld [vmem:[%s6706 + $0x1c] sm:$0xf]
        %v6715 = vld [vmem:[%s6706 + $0x20] sm:$0xf]
        %v6716 = vld [vmem:[%s6706 + $0x24] sm:$0xf]
        %v6717 = vld [vmem:[%s6706 + $0x28] sm:$0xf]
        %v6718 = vld [vmem:[%s6706 + $0x2c] sm:$0xf]
        %v6719 = vld [vmem:[%s6706 + $0x30] sm:$0xf]
        %v6720 = vld [vmem:[%s6706 + $0x34] sm:$0xf]
        %v6721 = vld [vmem:[%s6706 + $0x38] sm:$0xf]
        %v6722 = vld [vmem:[%s6706 + $0x3c] sm:$0xf]
        %v6723 = vunpack.c.l.b16 %v6646
        %v6724 = vunpack.c.l.b16 %v6649
        %v6725 = vunpack.c.l.b16 %v6653
        %v6726 = vunpack.c.l.b16 %v6656
        %v6727 = vunpack.c.l.b16 %v6660
        %v6728 = vunpack.c.l.b16 %v6663
        %v6729 = vunpack.c.l.b16 %v6667
        %v6730 = vunpack.c.l.b16 %v6670
        %v6731 = vunpack.c.l.b16 %v6674
        %v6732 = vunpack.c.l.b16 %v6677
        %v6733 = vunpack.c.l.b16 %v6681
        %v6734 = vunpack.c.l.b16 %v6684
        %v6735 = vunpack.c.l.b16 %v6688
        %v6736 = vunpack.c.l.b16 %v6691
        %v6737 = vunpack.c.l.b16 %v6695
        %v6738 = vunpack.c.l.b16 %v6698
        %v6739 = vunpack.c.l.b16 %v6702
        %v6740 = vunpack.c.l.b16 %v6705
        %v6741 = vpack.c.b16 %v6724, %v6723
        %v6742 = vpack.c.b16 %v6726, %v6725
        %v6743 = vpack.c.b16 %v6728, %v6727
        %v6744 = vpack.c.b16 %v6730, %v6729
        %v6745 = vpack.c.b16 %v6732, %v6731
        %v6746 = vpack.c.b16 %v6734, %v6733
        %v6747 = vpack.c.b16 %v6736, %v6735
        %v6748 = vpack.c.b16 %v6738, %v6737
        %v6749 = vpack.c.b16 %v6740, %v6739
        %v6775 = vunpack.c.l.b16 %v6707
        %v6776 = vunpack.c.l.b16 %v6708
        %v6777 = vunpack.c.l.b16 %v6709
        %v6778 = vunpack.c.l.b16 %v6710
        %v6779 = vunpack.c.l.b16 %v6711
        %v6780 = vunpack.c.l.b16 %v6712
        %v6781 = vunpack.c.l.b16 %v6713
        %v6782 = vunpack.c.l.b16 %v6714
        %v6783 = vunpack.c.l.b16 %v6715
        %v6784 = vunpack.c.l.b16 %v6716
        %v6785 = vunpack.c.l.b16 %v6717
        %v6786 = vunpack.c.l.b16 %v6718
        %v6787 = vunpack.c.l.b16 %v6719
        %v6788 = vunpack.c.l.b16 %v6720
        %v6789 = vunpack.c.l.b16 %v6721
        %v6790 = vunpack.c.l.b16 %v6722
        %v6791 = vpack.c.b16 %v6776, %v6775
        %v6792 = vpack.c.b16 %v6778, %v6777
        %v6793 = vpack.c.b16 %v6780, %v6779
        %v6794 = vpack.c.b16 %v6782, %v6781
        %v6795 = vpack.c.b16 %v6784, %v6783
        %v6796 = vpack.c.b16 %v6786, %v6785
        %v6797 = vpack.c.b16 %v6788, %v6787
        %v6798 = vpack.c.b16 %v6790, %v6789
        %6807 = vmatprep.subr.bf16.mxu0 0
        %6808 = vmatpush1.bf16.msra.mxu0 %v6791
        %6809 = vmatprep.subr.bf16.mxu0 0
        %6810 = vmatpush1.bf16.msra.mxu0 %v6792
        %6811 = vmatprep.subr.bf16.mxu0 0
        %6812 = vmatpush1.bf16.msra.mxu0 %v6793
        %6813 = vmatprep.subr.bf16.mxu0 0
        %6814 = vmatpush1.bf16.msra.mxu0 %v6794
        %6815 = vmatprep.subr.bf16.mxu0 0
        %6816 = vmatpush1.bf16.msra.mxu0 %v6795
        %6817 = vmatprep.subr.bf16.mxu0 0
        %6818 = vmatpush1.bf16.msra.mxu0 %v6796
        %6819 = vmatprep.subr.bf16.mxu0 0
        %6820 = vmatpush1.bf16.msra.mxu0 %v6797
        %6821 = vmatprep.subr.bf16.mxu0 0
        %6822 = vmatpush1.bf16.msra.mxu0 %v6798
        %6823 = vmatprep.subr.bf16.mxu0 0
        %6824 = vmatpush1.bf16.msra.mxu0 0
        %6825 = vmatprep.subr.bf16.mxu0 0
        %6826 = vmatpush1.bf16.msra.mxu0 0
        %6827 = vmatprep.subr.bf16.mxu0 0
        %6828 = vmatpush1.bf16.msra.mxu0 0
        %6829 = vmatprep.subr.bf16.mxu0 0
        %6830 = vmatpush1.bf16.msra.mxu0 0
        %6831 = vmatprep.subr.bf16.mxu0 0
        %6832 = vmatpush1.bf16.msra.mxu0 0
        %6833 = vmatprep.subr.bf16.mxu0 0
        %6834 = vmatpush1.bf16.msra.mxu0 0
        %6835 = vmatprep.subr.bf16.mxu0 0
        %6836 = vmatpush1.bf16.msra.mxu0 0
        %6837 = vmatprep.subr.bf16.mxu0 0
        %6838 = vmatpush1.bf16.msra.mxu0 0
        %6839 = vmatprep.mubr.bf16.mxu0 0
        %6840 = vmatmul.mubr.bf16.gmra.mrb[0].mxu0 %v6741
        %v6841 = vpop.f32.mrb[0].mxu0
        %v6842 = vadd.f32 0.0, %v6841
        %v6843 = vpop.f32.mrb[0].mxu0
        %v6844 = vpop.f32.mrb[0].mxu0
        %v6845 = vadd.f32 0.0, %v6844
        %v6846 = vpop.f32.mrb[0].mxu0
        %6847 = vmatprep.mubr.bf16.mxu0 0
        %6848 = vmatmul.mubr.bf16.gmra.mrb[0].mxu0 %v6742
        %v6849 = vpop.f32.mrb[0].mxu0
        %v6850 = vadd.f32 0.0, %v6849
        %v6851 = vpop.f32.mrb[0].mxu0
        %v6852 = vpop.f32.mrb[0].mxu0
        %v6853 = vadd.f32 0.0, %v6852
        %v6854 = vpop.f32.mrb[0].mxu0
        %6855 = vmatprep.mubr.bf16.mxu0 0
        %6856 = vmatmul.mubr.bf16.gmra.mrb[0].mxu0 %v6743
        %v6857 = vpop.f32.mrb[0].mxu0
        %v6858 = vadd.f32 0.0, %v6857
        %v6859 = vpop.f32.mrb[0].mxu0
        %v6860 = vpop.f32.mrb[0].mxu0
        %v6861 = vadd.f32 0.0, %v6860
        %v6862 = vpop.f32.mrb[0].mxu0
        %6863 = vmatprep.mubr.bf16.mxu0 0
        %6864 = vmatmul.mubr.bf16.gmra.mrb[0].mxu0 %v6744
        %v6865 = vpop.f32.mrb[0].mxu0
        %v6866 = vadd.f32 0.0, %v6865
        %v6867 = vpop.f32.mrb[0].mxu0
        %v6868 = vpop.f32.mrb[0].mxu0
        %v6869 = vadd.f32 0.0, %v6868
        %v6870 = vpop.f32.mrb[0].mxu0
        %6871 = vmatprep.mubr.bf16.mxu0 0
        %6872 = vmatmul.mubr.bf16.gmra.mrb[0].mxu0 %v6745
        %v6873 = vpop.f32.mrb[0].mxu0
        %v6874 = vadd.f32 0.0, %v6873
        %v6875 = vpop.f32.mrb[0].mxu0
        %v6876 = vpop.f32.mrb[0].mxu0
        %v6877 = vadd.f32 0.0, %v6876
        %v6878 = vpop.f32.mrb[0].mxu0
        %6879 = vmatprep.mubr.bf16.mxu0 0
        %6880 = vmatmul.mubr.bf16.gmra.mrb[0].mxu0 %v6746
        %v6881 = vpop.f32.mrb[0].mxu0
        %v6882 = vadd.f32 0.0, %v6881
        %v6883 = vpop.f32.mrb[0].mxu0
        %v6884 = vpop.f32.mrb[0].mxu0
        %v6885 = vadd.f32 0.0, %v6884
        %v6886 = vpop.f32.mrb[0].mxu0
        %6887 = vmatprep.mubr.bf16.mxu0 0
        %6888 = vmatmul.mubr.bf16.gmra.mrb[0].mxu0 %v6747
        %v6889 = vpop.f32.mrb[0].mxu0
        %v6890 = vadd.f32 0.0, %v6889
        %v6891 = vpop.f32.mrb[0].mxu0
        %v6892 = vpop.f32.mrb[0].mxu0
        %v6893 = vadd.f32 0.0, %v6892
        %v6894 = vpop.f32.mrb[0].mxu0
        %6895 = vmatprep.mubr.bf16.mxu0 0
        %6896 = vmatmul.mubr.bf16.gmra.mrb[0].mxu0 %v6748
        %v6897 = vpop.f32.mrb[0].mxu0
        %v6898 = vadd.f32 0.0, %v6897
        %v6899 = vpop.f32.mrb[0].mxu0
        %v6900 = vpop.f32.mrb[0].mxu0
        %v6901 = vadd.f32 0.0, %v6900
        %v6902 = vpop.f32.mrb[0].mxu0
        %6903 = vmatprep.mubr.bf16.mxu0 0
        %6904 = vmatmul.mubr.bf16.gmra.mrb[0].mxu0 %v6749
        %v6905 = vpop.f32.mrb[0].mxu0
        %v6906 = vadd.f32 0.0, %v6905
        %v6907 = vpop.f32.mrb[0].mxu0
        %v6908 = vpop.f32.mrb[0].mxu0
        %v6909 = vadd.f32 0.0, %v6908
        %v6910 = vpop.f32.mrb[0].mxu0
        %6911 = vdwg.mxu0
        %v6912 = vadd.f32 %v6546, %v6842
        %v6913 = vadd.f32 %v6549, %v6845
        %v6914 = vadd.f32 %v6554, %v6850
        %v6915 = vadd.f32 %v6557, %v6853
        %v6916 = vadd.f32 %v6562, %v6858
        %v6917 = vadd.f32 %v6565, %v6861
        %v6918 = vadd.f32 %v6570, %v6866
        %v6919 = vadd.f32 %v6573, %v6869
        %v6920 = vadd.f32 %v6578, %v6874
        %v6921 = vadd.f32 %v6581, %v6877
        %v6922 = vadd.f32 %v6586, %v6882
        %v6923 = vadd.f32 %v6589, %v6885
        %v6924 = vadd.f32 %v6594, %v6890
        %v6925 = vadd.f32 %v6597, %v6893
        %v6926 = vadd.f32 %v6602, %v6898
        %v6927 = vadd.f32 %v6605, %v6901
        %v6928 = vadd.f32 %v6610, %v6906
        %v6929 = vadd.f32 %v6613, %v6909
        %s6930 = scalar_lea.vmem [#allocation3], 12
        %v6931 = vld [vmem:[%s6930] sm:$0xf]
        %v6932 = vld [vmem:[%s6930 + $0x4] sm:$0xf]
        %v6933 = vld [vmem:[%s6930 + $0xc] sm:$0xf]
        %v6934 = vld [vmem:[%s6930 + $0x10] sm:$0xf]
        %v6935 = vld [vmem:[%s6930 + $0x18] sm:$0xf]
        %v6936 = vld [vmem:[%s6930 + $0x1c] sm:$0xf]
        %v6937 = vld [vmem:[%s6930 + $0x24] sm:$0xf]
        %v6938 = vld [vmem:[%s6930 + $0x28] sm:$0xf]
        %v6939 = vld [vmem:[%s6930 + $0x30] sm:$0xf]
        %v6940 = vld [vmem:[%s6930 + $0x34] sm:$0xf]
        %v6941 = vld [vmem:[%s6930 + $0x3c] sm:$0xf]
        %v6942 = vld [vmem:[%s6930 + $0x40] sm:$0xf]
        %v6943 = vld [vmem:[%s6930 + $0x48] sm:$0xf]
        %v6944 = vld [vmem:[%s6930 + $0x4c] sm:$0xf]
        %v6945 = vld [vmem:[%s6930 + $0x54] sm:$0xf]
        %v6946 = vld [vmem:[%s6930 + $0x58] sm:$0xf]
        %v6947 = vld [vmem:[%s6930 + $0x60] sm:$0xf]
        %v6948 = vld [vmem:[%s6930 + $0x64] sm:$0xf]
        %s6949 = scalar_lea.vmem %s5, 192
        %v6950 = vld [vmem:[%s6949] sm:$0xf]
        %v6951 = vld [vmem:[%s6949 + $0x4] sm:$0xf]
        %v6952 = vld [vmem:[%s6949 + $0x8] sm:$0xf]
        %v6953 = vld [vmem:[%s6949 + $0xc] sm:$0xf]
        %v6954 = vld [vmem:[%s6949 + $0x10] sm:$0xf]
        %v6955 = vld [vmem:[%s6949 + $0x14] sm:$0xf]
        %v6956 = vld [vmem:[%s6949 + $0x18] sm:$0xf]
        %v6957 = vld [vmem:[%s6949 + $0x1c] sm:$0xf]
        %v6958 = vld [vmem:[%s6949 + $0x20] sm:$0xf]
        %v6959 = vld [vmem:[%s6949 + $0x24] sm:$0xf]
        %v6960 = vld [vmem:[%s6949 + $0x28] sm:$0xf]
        %v6961 = vld [vmem:[%s6949 + $0x2c] sm:$0xf]
        %v6962 = vld [vmem:[%s6949 + $0x30] sm:$0xf]
        %v6963 = vld [vmem:[%s6949 + $0x34] sm:$0xf]
        %v6964 = vld [vmem:[%s6949 + $0x38] sm:$0xf]
        %v6965 = vld [vmem:[%s6949 + $0x3c] sm:$0xf]
        %v6984 = vunpack.c.l.b16 %v6931
        %v6985 = vunpack.c.l.b16 %v6932
        %v6986 = vunpack.c.l.b16 %v6933
        %v6987 = vunpack.c.l.b16 %v6934
        %v6988 = vunpack.c.l.b16 %v6935
        %v6989 = vunpack.c.l.b16 %v6936
        %v6990 = vunpack.c.l.b16 %v6937
        %v6991 = vunpack.c.l.b16 %v6938
        %v6992 = vunpack.c.l.b16 %v6939
        %v6993 = vunpack.c.l.b16 %v6940
        %v6994 = vunpack.c.l.b16 %v6941
        %v6995 = vunpack.c.l.b16 %v6942
        %v6996 = vunpack.c.l.b16 %v6943
        %v6997 = vunpack.c.l.b16 %v6944
        %v6998 = vunpack.c.l.b16 %v6945
        %v6999 = vunpack.c.l.b16 %v6946
        %v7000 = vunpack.c.l.b16 %v6947
        %v7001 = vunpack.c.l.b16 %v6948
        %v7002 = vpack.c.b16 %v6985, %v6984
        %v7003 = vpack.c.b16 %v6987, %v6986
        %v7004 = vpack.c.b16 %v6989, %v6988
        %v7005 = vpack.c.b16 %v6991, %v6990
        %v7006 = vpack.c.b16 %v6993, %v6992
        %v7007 = vpack.c.b16 %v6995, %v6994
        %v7008 = vpack.c.b16 %v6997, %v6996
        %v7009 = vpack.c.b16 %v6999, %v6998
        %v7010 = vpack.c.b16 %v7001, %v7000
        %v7036 = vunpack.c.l.b16 %v6950
        %v7037 = vunpack.c.l.b16 %v6951
        %v7038 = vunpack.c.l.b16 %v6952
        %v7039 = vunpack.c.l.b16 %v6953
        %v7040 = vunpack.c.l.b16 %v6954
        %v7041 = vunpack.c.l.b16 %v6955
        %v7042 = vunpack.c.l.b16 %v6956
        %v7043 = vunpack.c.l.b16 %v6957
        %v7044 = vunpack.c.l.b16 %v6958
        %v7045 = vunpack.c.l.b16 %v6959
        %v7046 = vunpack.c.l.b16 %v6960
        %v7047 = vunpack.c.l.b16 %v6961
        %v7048 = vunpack.c.l.b16 %v6962
        %v7049 = vunpack.c.l.b16 %v6963
        %v7050 = vunpack.c.l.b16 %v6964
        %v7051 = vunpack.c.l.b16 %v6965
        %v7052 = vpack.c.b16 %v7037, %v7036
        %v7053 = vpack.c.b16 %v7039, %v7038
        %v7054 = vpack.c.b16 %v7041, %v7040
        %v7055 = vpack.c.b16 %v7043, %v7042
        %v7056 = vpack.c.b16 %v7045, %v7044
        %v7057 = vpack.c.b16 %v7047, %v7046
        %v7058 = vpack.c.b16 %v7049, %v7048
        %v7059 = vpack.c.b16 %v7051, %v7050
        %7068 = vmatprep.subr.bf16.mxu0 0
        %7069 = vmatpush1.bf16.msra.mxu0 %v7052
        %7070 = vmatprep.subr.bf16.mxu0 0
        %7071 = vmatpush1.bf16.msra.mxu0 %v7053
        %7072 = vmatprep.subr.bf16.mxu0 0
        %7073 = vmatpush1.bf16.msra.mxu0 %v7054
        %7074 = vmatprep.subr.bf16.mxu0 0
        %7075 = vmatpush1.bf16.msra.mxu0 %v7055
        %7076 = vmatprep.subr.bf16.mxu0 0
        %7077 = vmatpush1.bf16.msra.mxu0 %v7056
        %7078 = vmatprep.subr.bf16.mxu0 0
        %7079 = vmatpush1.bf16.msra.mxu0 %v7057
        %7080 = vmatprep.subr.bf16.mxu0 0
        %7081 = vmatpush1.bf16.msra.mxu0 %v7058
        %7082 = vmatprep.subr.bf16.mxu0 0
        %7083 = vmatpush1.bf16.msra.mxu0 %v7059
        %7084 = vmatprep.subr.bf16.mxu0 0
        %7085 = vmatpush1.bf16.msra.mxu0 0
        %7086 = vmatprep.subr.bf16.mxu0 0
        %7087 = vmatpush1.bf16.msra.mxu0 0
        %7088 = vmatprep.subr.bf16.mxu0 0
        %7089 = vmatpush1.bf16.msra.mxu0 0
        %7090 = vmatprep.subr.bf16.mxu0 0
        %7091 = vmatpush1.bf16.msra.mxu0 0
        %7092 = vmatprep.subr.bf16.mxu0 0
        %7093 = vmatpush1.bf16.msra.mxu0 0
        %7094 = vmatprep.subr.bf16.mxu0 0
        %7095 = vmatpush1.bf16.msra.mxu0 0
        %7096 = vmatprep.subr.bf16.mxu0 0
        %7097 = vmatpush1.bf16.msra.mxu0 0
        %7098 = vmatprep.subr.bf16.mxu0 0
        %7099 = vmatpush1.bf16.msra.mxu0 0
        %7100 = vmatprep.mubr.bf16.mxu0 0
        %7101 = vmatmul.mubr.bf16.gmra.mrb[0].mxu0 %v7002
        %v7102 = vpop.f32.mrb[0].mxu0
        %v7103 = vadd.f32 0.0, %v7102
        %v7104 = vpop.f32.mrb[0].mxu0
        %v7105 = vpop.f32.mrb[0].mxu0
        %v7106 = vadd.f32 0.0, %v7105
        %v7107 = vpop.f32.mrb[0].mxu0
        %7108 = vmatprep.mubr.bf16.mxu0 0
        %7109 = vmatmul.mubr.bf16.gmra.mrb[0].mxu0 %v7003
        %v7110 = vpop.f32.mrb[0].mxu0
        %v7111 = vadd.f32 0.0, %v7110
        %v7112 = vpop.f32.mrb[0].mxu0
        %v7113 = vpop.f32.mrb[0].mxu0
        %v7114 = vadd.f32 0.0, %v7113
        %v7115 = vpop.f32.mrb[0].mxu0
        %7116 = vmatprep.mubr.bf16.mxu0 0
        %7117 = vmatmul.mubr.bf16.gmra.mrb[0].mxu0 %v7004
        %v7118 = vpop.f32.mrb[0].mxu0
        %v7119 = vadd.f32 0.0, %v7118
        %v7120 = vpop.f32.mrb[0].mxu0
        %v7121 = vpop.f32.mrb[0].mxu0
        %v7122 = vadd.f32 0.0, %v7121
        %v7123 = vpop.f32.mrb[0].mxu0
        %7124 = vmatprep.mubr.bf16.mxu0 0
        %7125 = vmatmul.mubr.bf16.gmra.mrb[0].mxu0 %v7005
        %v7126 = vpop.f32.mrb[0].mxu0
        %v7127 = vadd.f32 0.0, %v7126
        %v7128 = vpop.f32.mrb[0].mxu0
        %v7129 = vpop.f32.mrb[0].mxu0
        %v7130 = vadd.f32 0.0, %v7129
        %v7131 = vpop.f32.mrb[0].mxu0
        %7132 = vmatprep.mubr.bf16.mxu0 0
        %7133 = vmatmul.mubr.bf16.gmra.mrb[0].mxu0 %v7006
        %v7134 = vpop.f32.mrb[0].mxu0
        %v7135 = vadd.f32 0.0, %v7134
        %v7136 = vpop.f32.mrb[0].mxu0
        %v7137 = vpop.f32.mrb[0].mxu0
        %v7138 = vadd.f32 0.0, %v7137
        %v7139 = vpop.f32.mrb[0].mxu0
        %7140 = vmatprep.mubr.bf16.mxu0 0
        %7141 = vmatmul.mubr.bf16.gmra.mrb[0].mxu0 %v7007
        %v7142 = vpop.f32.mrb[0].mxu0
        %v7143 = vadd.f32 0.0, %v7142
        %v7144 = vpop.f32.mrb[0].mxu0
        %v7145 = vpop.f32.mrb[0].mxu0
        %v7146 = vadd.f32 0.0, %v7145
        %v7147 = vpop.f32.mrb[0].mxu0
        %7148 = vmatprep.mubr.bf16.mxu0 0
        %7149 = vmatmul.mubr.bf16.gmra.mrb[0].mxu0 %v7008
        %v7150 = vpop.f32.mrb[0].mxu0
        %v7151 = vadd.f32 0.0, %v7150
        %v7152 = vpop.f32.mrb[0].mxu0
        %v7153 = vpop.f32.mrb[0].mxu0
        %v7154 = vadd.f32 0.0, %v7153
        %v7155 = vpop.f32.mrb[0].mxu0
        %7156 = vmatprep.mubr.bf16.mxu0 0
        %7157 = vmatmul.mubr.bf16.gmra.mrb[0].mxu0 %v7009
        %v7158 = vpop.f32.mrb[0].mxu0
        %v7159 = vadd.f32 0.0, %v7158
        %v7160 = vpop.f32.mrb[0].mxu0
        %v7161 = vpop.f32.mrb[0].mxu0
        %v7162 = vadd.f32 0.0, %v7161
        %v7163 = vpop.f32.mrb[0].mxu0
        %7164 = vmatprep.mubr.bf16.mxu0 0
        %7165 = vmatmul.mubr.bf16.gmra.mrb[0].mxu0 %v7010
        %v7166 = vpop.f32.mrb[0].mxu0
        %v7167 = vadd.f32 0.0, %v7166
        %v7168 = vpop.f32.mrb[0].mxu0
        %v7169 = vpop.f32.mrb[0].mxu0
        %v7170 = vadd.f32 0.0, %v7169
        %v7171 = vpop.f32.mrb[0].mxu0
        %7172 = vdwg.mxu0
        %v7173 = vadd.f32 %v6912, %v7103
        %v7174 = vadd.f32 %v6913, %v7106
        %v7175 = vadd.f32 %v6914, %v7111
        %v7176 = vadd.f32 %v6915, %v7114
        %v7177 = vadd.f32 %v6916, %v7119
        %v7178 = vadd.f32 %v6917, %v7122
        %v7179 = vadd.f32 %v6918, %v7127
        %v7180 = vadd.f32 %v6919, %v7130
        %v7181 = vadd.f32 %v6920, %v7135
        %v7182 = vadd.f32 %v6921, %v7138
        %v7183 = vadd.f32 %v6922, %v7143
        %v7184 = vadd.f32 %v6923, %v7146
        %v7185 = vadd.f32 %v6924, %v7151
        %v7186 = vadd.f32 %v6925, %v7154
        %v7187 = vadd.f32 %v6926, %v7159
        %v7188 = vadd.f32 %v6927, %v7162
        %v7189 = vadd.f32 %v6928, %v7167
        %v7190 = vadd.f32 %v6929, %v7170
        %v7191 = vld [vmem:[%s6930] sm:$0xf]
        %v7192 = vld [vmem:[%s6930 + $0x4] sm:$0xf]
        %v7193 = vld [vmem:[%s6930 + $0x8] sm:$0x1]
        %v7194 = vld [vmem:[%s6930 + $0xc] sm:$0xf]
        %v7195 = vld [vmem:[%s6930 + $0x10] sm:$0xf]
        %v7196 = vld [vmem:[%s6930 + $0x14] sm:$0x1]
        %v7197 = vld [vmem:[%s6930 + $0x18] sm:$0xf]
        %v7198 = vld [vmem:[%s6930 + $0x1c] sm:$0xf]
        %v7199 = vld [vmem:[%s6930 + $0x20] sm:$0x1]
        %v7200 = vld [vmem:[%s6930 + $0x24] sm:$0xf]
        %v7201 = vld [vmem:[%s6930 + $0x28] sm:$0xf]
        %v7202 = vld [vmem:[%s6930 + $0x2c] sm:$0x1]
        %v7203 = vld [vmem:[%s6930 + $0x30] sm:$0xf]
        %v7204 = vld [vmem:[%s6930 + $0x34] sm:$0xf]
        %v7205 = vld [vmem:[%s6930 + $0x38] sm:$0x1]
        %v7206 = vld [vmem:[%s6930 + $0x3c] sm:$0xf]
        %v7207 = vld [vmem:[%s6930 + $0x40] sm:$0xf]
        %v7208 = vld [vmem:[%s6930 + $0x44] sm:$0x1]
        %v7209 = vld [vmem:[%s6930 + $0x48] sm:$0xf]
        %v7210 = vld [vmem:[%s6930 + $0x4c] sm:$0xf]
        %v7211 = vld [vmem:[%s6930 + $0x50] sm:$0x1]
        %v7212 = vld [vmem:[%s6930 + $0x54] sm:$0xf]
        %v7213 = vld [vmem:[%s6930 + $0x58] sm:$0xf]
        %v7214 = vld [vmem:[%s6930 + $0x5c] sm:$0x1]
        %v7215 = vld [vmem:[%s6930 + $0x60] sm:$0xf]
        %v7216 = vld [vmem:[%s6930 + $0x64] sm:$0xf]
        %v7217 = vld [vmem:[%s6930 + $0x68] sm:$0x1]
        %v7219 = vshrl.u32 %v7191, 16
        %v7221 = vrot.slane %v7219, 4
        %v7222 = vshll.u32 %v7191, 16
        %v7224 = vrot.slane %v7222, 5
        %v7225 = vor.u32 %v7221, %v7224
        %v7226 = vrot.slane %v7225, 4
        %v7228 = vshll.u32 %v7192, 16
        %v7230 = vrot.slane %v7228, 5
        %v7231 = vsel %vm2250, %v7226, %v7230
        %v7232 = vshrl.u32 %v7192, 16
        %v7234 = vrot.slane %v7232, 4
        %v7235 = vor.u32 %v7234, %v7230
        %v7236 = vrot.slane %v7235, 4
        %v7238 = vshll.u32 %v7193, 16
        %v7240 = vrot.slane %v7238, 5
        %v7241 = vsel %vm2250, %v7236, %v7240
        %v7243 = vshrl.u32 %v7194, 16
        %v7245 = vrot.slane %v7243, 4
        %v7246 = vshll.u32 %v7194, 16
        %v7248 = vrot.slane %v7246, 5
        %v7249 = vor.u32 %v7245, %v7248
        %v7250 = vrot.slane %v7249, 4
        %v7252 = vshll.u32 %v7195, 16
        %v7254 = vrot.slane %v7252, 5
        %v7255 = vsel %vm2250, %v7250, %v7254
        %v7256 = vshrl.u32 %v7195, 16
        %v7258 = vrot.slane %v7256, 4
        %v7259 = vor.u32 %v7258, %v7254
        %v7260 = vrot.slane %v7259, 4
        %v7262 = vshll.u32 %v7196, 16
        %v7264 = vrot.slane %v7262, 5
        %v7265 = vsel %vm2250, %v7260, %v7264
        %v7267 = vshrl.u32 %v7197, 16
        %v7269 = vrot.slane %v7267, 4
        %v7270 = vshll.u32 %v7197, 16
        %v7272 = vrot.slane %v7270, 5
        %v7273 = vor.u32 %v7269, %v7272
        %v7274 = vrot.slane %v7273, 4
        %v7276 = vshll.u32 %v7198, 16
        %v7278 = vrot.slane %v7276, 5
        %v7279 = vsel %vm2250, %v7274, %v7278
        %v7280 = vshrl.u32 %v7198, 16
        %v7282 = vrot.slane %v7280, 4
        %v7283 = vor.u32 %v7282, %v7278
        %v7284 = vrot.slane %v7283, 4
        %v7286 = vshll.u32 %v7199, 16
        %v7288 = vrot.slane %v7286, 5
        %v7289 = vsel %vm2250, %v7284, %v7288
        %v7291 = vshrl.u32 %v7200, 16
        %v7293 = vrot.slane %v7291, 4
        %v7294 = vshll.u32 %v7200, 16
        %v7296 = vrot.slane %v7294, 5
        %v7297 = vor.u32 %v7293, %v7296
        %v7298 = vrot.slane %v7297, 4
        %v7300 = vshll.u32 %v7201, 16
        %v7302 = vrot.slane %v7300, 5
        %v7303 = vsel %vm2250, %v7298, %v7302
        %v7304 = vshrl.u32 %v7201, 16
        %v7306 = vrot.slane %v7304, 4
        %v7307 = vor.u32 %v7306, %v7302
        %v7308 = vrot.slane %v7307, 4
        %v7310 = vshll.u32 %v7202, 16
        %v7312 = vrot.slane %v7310, 5
        %v7313 = vsel %vm2250, %v7308, %v7312
        %v7315 = vshrl.u32 %v7203, 16
        %v7317 = vrot.slane %v7315, 4
        %v7318 = vshll.u32 %v7203, 16
        %v7320 = vrot.slane %v7318, 5
        %v7321 = vor.u32 %v7317, %v7320
        %v7322 = vrot.slane %v7321, 4
        %v7324 = vshll.u32 %v7204, 16
        %v7326 = vrot.slane %v7324, 5
        %v7327 = vsel %vm2250, %v7322, %v7326
        %v7328 = vshrl.u32 %v7204, 16
        %v7330 = vrot.slane %v7328, 4
        %v7331 = vor.u32 %v7330, %v7326
        %v7332 = vrot.slane %v7331, 4
        %v7334 = vshll.u32 %v7205, 16
        %v7336 = vrot.slane %v7334, 5
        %v7337 = vsel %vm2250, %v7332, %v7336
        %v7339 = vshrl.u32 %v7206, 16
        %v7341 = vrot.slane %v7339, 4
        %v7342 = vshll.u32 %v7206, 16
        %v7344 = vrot.slane %v7342, 5
        %v7345 = vor.u32 %v7341, %v7344
        %v7346 = vrot.slane %v7345, 4
        %v7348 = vshll.u32 %v7207, 16
        %v7350 = vrot.slane %v7348, 5
        %v7351 = vsel %vm2250, %v7346, %v7350
        %v7352 = vshrl.u32 %v7207, 16
        %v7354 = vrot.slane %v7352, 4
        %v7355 = vor.u32 %v7354, %v7350
        %v7356 = vrot.slane %v7355, 4
        %v7358 = vshll.u32 %v7208, 16
        %v7360 = vrot.slane %v7358, 5
        %v7361 = vsel %vm2250, %v7356, %v7360
        %v7363 = vshrl.u32 %v7209, 16
        %v7365 = vrot.slane %v7363, 4
        %v7366 = vshll.u32 %v7209, 16
        %v7368 = vrot.slane %v7366, 5
        %v7369 = vor.u32 %v7365, %v7368
        %v7370 = vrot.slane %v7369, 4
        %v7372 = vshll.u32 %v7210, 16
        %v7374 = vrot.slane %v7372, 5
        %v7375 = vsel %vm2250, %v7370, %v7374
        %v7376 = vshrl.u32 %v7210, 16
        %v7378 = vrot.slane %v7376, 4
        %v7379 = vor.u32 %v7378, %v7374
        %v7380 = vrot.slane %v7379, 4
        %v7382 = vshll.u32 %v7211, 16
        %v7384 = vrot.slane %v7382, 5
        %v7385 = vsel %vm2250, %v7380, %v7384
        %v7387 = vshrl.u32 %v7212, 16
        %v7389 = vrot.slane %v7387, 4
        %v7390 = vshll.u32 %v7212, 16
        %v7392 = vrot.slane %v7390, 5
        %v7393 = vor.u32 %v7389, %v7392
        %v7394 = vrot.slane %v7393, 4
        %v7396 = vshll.u32 %v7213, 16
        %v7398 = vrot.slane %v7396, 5
        %v7399 = vsel %vm2250, %v7394, %v7398
        %v7400 = vshrl.u32 %v7213, 16
        %v7402 = vrot.slane %v7400, 4
        %v7403 = vor.u32 %v7402, %v7398
        %v7404 = vrot.slane %v7403, 4
        %v7406 = vshll.u32 %v7214, 16
        %v7408 = vrot.slane %v7406, 5
        %v7409 = vsel %vm2250, %v7404, %v7408
        %v7411 = vshrl.u32 %v7215, 16
        %v7413 = vrot.slane %v7411, 4
        %v7414 = vshll.u32 %v7215, 16
        %v7416 = vrot.slane %v7414, 5
        %v7417 = vor.u32 %v7413, %v7416
        %v7418 = vrot.slane %v7417, 4
        %v7420 = vshll.u32 %v7216, 16
        %v7422 = vrot.slane %v7420, 5
        %v7423 = vsel %vm2250, %v7418, %v7422
        %v7424 = vshrl.u32 %v7216, 16
        %v7426 = vrot.slane %v7424, 4
        %v7427 = vor.u32 %v7426, %v7422
        %v7428 = vrot.slane %v7427, 4
        %v7430 = vshll.u32 %v7217, 16
        %v7432 = vrot.slane %v7430, 5
        %v7433 = vsel %vm2250, %v7428, %v7432
        %s7434 = scalar_lea.vmem %s5, 256
        %v7435 = vld [vmem:[%s7434] sm:$0xf]
        %v7436 = vld [vmem:[%s7434 + $0x4] sm:$0xf]
        %v7437 = vld [vmem:[%s7434 + $0x8] sm:$0xf]
        %v7438 = vld [vmem:[%s7434 + $0xc] sm:$0xf]
        %v7439 = vld [vmem:[%s7434 + $0x10] sm:$0xf]
        %v7440 = vld [vmem:[%s7434 + $0x14] sm:$0xf]
        %v7441 = vld [vmem:[%s7434 + $0x18] sm:$0xf]
        %v7442 = vld [vmem:[%s7434 + $0x1c] sm:$0xf]
        %v7443 = vld [vmem:[%s7434 + $0x20] sm:$0xf]
        %v7444 = vld [vmem:[%s7434 + $0x24] sm:$0xf]
        %v7445 = vld [vmem:[%s7434 + $0x28] sm:$0xf]
        %v7446 = vld [vmem:[%s7434 + $0x2c] sm:$0xf]
        %v7447 = vld [vmem:[%s7434 + $0x30] sm:$0xf]
        %v7448 = vld [vmem:[%s7434 + $0x34] sm:$0xf]
        %v7449 = vld [vmem:[%s7434 + $0x38] sm:$0xf]
        %v7450 = vld [vmem:[%s7434 + $0x3c] sm:$0xf]
        %v7451 = vunpack.c.l.b16 %v7231
        %v7452 = vunpack.c.l.b16 %v7241
        %v7453 = vunpack.c.l.b16 %v7255
        %v7454 = vunpack.c.l.b16 %v7265
        %v7455 = vunpack.c.l.b16 %v7279
        %v7456 = vunpack.c.l.b16 %v7289
        %v7457 = vunpack.c.l.b16 %v7303
        %v7458 = vunpack.c.l.b16 %v7313
        %v7459 = vunpack.c.l.b16 %v7327
        %v7460 = vunpack.c.l.b16 %v7337
        %v7461 = vunpack.c.l.b16 %v7351
        %v7462 = vunpack.c.l.b16 %v7361
        %v7463 = vunpack.c.l.b16 %v7375
        %v7464 = vunpack.c.l.b16 %v7385
        %v7465 = vunpack.c.l.b16 %v7399
        %v7466 = vunpack.c.l.b16 %v7409
        %v7467 = vunpack.c.l.b16 %v7423
        %v7468 = vunpack.c.l.b16 %v7433
        %v7469 = vpack.c.b16 %v7452, %v7451
        %v7470 = vpack.c.b16 %v7454, %v7453
        %v7471 = vpack.c.b16 %v7456, %v7455
        %v7472 = vpack.c.b16 %v7458, %v7457
        %v7473 = vpack.c.b16 %v7460, %v7459
        %v7474 = vpack.c.b16 %v7462, %v7461
        %v7475 = vpack.c.b16 %v7464, %v7463
        %v7476 = vpack.c.b16 %v7466, %v7465
        %v7477 = vpack.c.b16 %v7468, %v7467
        %v7503 = vunpack.c.l.b16 %v7435
        %v7504 = vunpack.c.l.b16 %v7436
        %v7505 = vunpack.c.l.b16 %v7437
        %v7506 = vunpack.c.l.b16 %v7438
        %v7507 = vunpack.c.l.b16 %v7439
        %v7508 = vunpack.c.l.b16 %v7440
        %v7509 = vunpack.c.l.b16 %v7441
        %v7510 = vunpack.c.l.b16 %v7442
        %v7511 = vunpack.c.l.b16 %v7443
        %v7512 = vunpack.c.l.b16 %v7444
        %v7513 = vunpack.c.l.b16 %v7445
        %v7514 = vunpack.c.l.b16 %v7446
        %v7515 = vunpack.c.l.b16 %v7447
        %v7516 = vunpack.c.l.b16 %v7448
        %v7517 = vunpack.c.l.b16 %v7449
        %v7518 = vunpack.c.l.b16 %v7450
        %v7519 = vpack.c.b16 %v7504, %v7503
        %v7520 = vpack.c.b16 %v7506, %v7505
        %v7521 = vpack.c.b16 %v7508, %v7507
        %v7522 = vpack.c.b16 %v7510, %v7509
        %v7523 = vpack.c.b16 %v7512, %v7511
        %v7524 = vpack.c.b16 %v7514, %v7513
        %v7525 = vpack.c.b16 %v7516, %v7515
        %v7526 = vpack.c.b16 %v7518, %v7517
        %7535 = vmatprep.subr.bf16.mxu0 0
        %7536 = vmatpush1.bf16.msra.mxu0 %v7519
        %7537 = vmatprep.subr.bf16.mxu0 0
        %7538 = vmatpush1.bf16.msra.mxu0 %v7520
        %7539 = vmatprep.subr.bf16.mxu0 0
        %7540 = vmatpush1.bf16.msra.mxu0 %v7521
        %7541 = vmatprep.subr.bf16.mxu0 0
        %7542 = vmatpush1.bf16.msra.mxu0 %v7522
        %7543 = vmatprep.subr.bf16.mxu0 0
        %7544 = vmatpush1.bf16.msra.mxu0 %v7523
        %7545 = vmatprep.subr.bf16.mxu0 0
        %7546 = vmatpush1.bf16.msra.mxu0 %v7524
        %7547 = vmatprep.subr.bf16.mxu0 0
        %7548 = vmatpush1.bf16.msra.mxu0 %v7525
        %7549 = vmatprep.subr.bf16.mxu0 0
        %7550 = vmatpush1.bf16.msra.mxu0 %v7526
        %7551 = vmatprep.subr.bf16.mxu0 0
        %7552 = vmatpush1.bf16.msra.mxu0 0
        %7553 = vmatprep.subr.bf16.mxu0 0
        %7554 = vmatpush1.bf16.msra.mxu0 0
        %7555 = vmatprep.subr.bf16.mxu0 0
        %7556 = vmatpush1.bf16.msra.mxu0 0
        %7557 = vmatprep.subr.bf16.mxu0 0
        %7558 = vmatpush1.bf16.msra.mxu0 0
        %7559 = vmatprep.subr.bf16.mxu0 0
        %7560 = vmatpush1.bf16.msra.mxu0 0
        %7561 = vmatprep.subr.bf16.mxu0 0
        %7562 = vmatpush1.bf16.msra.mxu0 0
        %7563 = vmatprep.subr.bf16.mxu0 0
        %7564 = vmatpush1.bf16.msra.mxu0 0
        %7565 = vmatprep.subr.bf16.mxu0 0
        %7566 = vmatpush1.bf16.msra.mxu0 0
        %7567 = vmatprep.mubr.bf16.mxu0 0
        %7568 = vmatmul.mubr.bf16.gmra.mrb[0].mxu0 %v7469
        %v7569 = vpop.f32.mrb[0].mxu0
        %v7570 = vadd.f32 0.0, %v7569
        %v7571 = vpop.f32.mrb[0].mxu0
        %v7572 = vpop.f32.mrb[0].mxu0
        %v7573 = vadd.f32 0.0, %v7572
        %v7574 = vpop.f32.mrb[0].mxu0
        %7575 = vmatprep.mubr.bf16.mxu0 0
        %7576 = vmatmul.mubr.bf16.gmra.mrb[0].mxu0 %v7470
        %v7577 = vpop.f32.mrb[0].mxu0
        %v7578 = vadd.f32 0.0, %v7577
        %v7579 = vpop.f32.mrb[0].mxu0
        %v7580 = vpop.f32.mrb[0].mxu0
        %v7581 = vadd.f32 0.0, %v7580
        %v7582 = vpop.f32.mrb[0].mxu0
        %7583 = vmatprep.mubr.bf16.mxu0 0
        %7584 = vmatmul.mubr.bf16.gmra.mrb[0].mxu0 %v7471
        %v7585 = vpop.f32.mrb[0].mxu0
        %v7586 = vadd.f32 0.0, %v7585
        %v7587 = vpop.f32.mrb[0].mxu0
        %v7588 = vpop.f32.mrb[0].mxu0
        %v7589 = vadd.f32 0.0, %v7588
        %v7590 = vpop.f32.mrb[0].mxu0
        %7591 = vmatprep.mubr.bf16.mxu0 0
        %7592 = vmatmul.mubr.bf16.gmra.mrb[0].mxu0 %v7472
        %v7593 = vpop.f32.mrb[0].mxu0
        %v7594 = vadd.f32 0.0, %v7593
        %v7595 = vpop.f32.mrb[0].mxu0
        %v7596 = vpop.f32.mrb[0].mxu0
        %v7597 = vadd.f32 0.0, %v7596
        %v7598 = vpop.f32.mrb[0].mxu0
        %7599 = vmatprep.mubr.bf16.mxu0 0
        %7600 = vmatmul.mubr.bf16.gmra.mrb[0].mxu0 %v7473
        %v7601 = vpop.f32.mrb[0].mxu0
        %v7602 = vadd.f32 0.0, %v7601
        %v7603 = vpop.f32.mrb[0].mxu0
        %v7604 = vpop.f32.mrb[0].mxu0
        %v7605 = vadd.f32 0.0, %v7604
        %v7606 = vpop.f32.mrb[0].mxu0
        %7607 = vmatprep.mubr.bf16.mxu0 0
        %7608 = vmatmul.mubr.bf16.gmra.mrb[0].mxu0 %v7474
        %v7609 = vpop.f32.mrb[0].mxu0
        %v7610 = vadd.f32 0.0, %v7609
        %v7611 = vpop.f32.mrb[0].mxu0
        %v7612 = vpop.f32.mrb[0].mxu0
        %v7613 = vadd.f32 0.0, %v7612
        %v7614 = vpop.f32.mrb[0].mxu0
        %7615 = vmatprep.mubr.bf16.mxu0 0
        %7616 = vmatmul.mubr.bf16.gmra.mrb[0].mxu0 %v7475
        %v7617 = vpop.f32.mrb[0].mxu0
        %v7618 = vadd.f32 0.0, %v7617
        %v7619 = vpop.f32.mrb[0].mxu0
        %v7620 = vpop.f32.mrb[0].mxu0
        %v7621 = vadd.f32 0.0, %v7620
        %v7622 = vpop.f32.mrb[0].mxu0
        %7623 = vmatprep.mubr.bf16.mxu0 0
        %7624 = vmatmul.mubr.bf16.gmra.mrb[0].mxu0 %v7476
        %v7625 = vpop.f32.mrb[0].mxu0
        %v7626 = vadd.f32 0.0, %v7625
        %v7627 = vpop.f32.mrb[0].mxu0
        %v7628 = vpop.f32.mrb[0].mxu0
        %v7629 = vadd.f32 0.0, %v7628
        %v7630 = vpop.f32.mrb[0].mxu0
        %7631 = vmatprep.mubr.bf16.mxu0 0
        %7632 = vmatmul.mubr.bf16.gmra.mrb[0].mxu0 %v7477
        %v7633 = vpop.f32.mrb[0].mxu0
        %v7634 = vadd.f32 0.0, %v7633
        %v7635 = vpop.f32.mrb[0].mxu0
        %v7636 = vpop.f32.mrb[0].mxu0
        %v7637 = vadd.f32 0.0, %v7636
        %v7638 = vpop.f32.mrb[0].mxu0
        %7639 = vdwg.mxu0
        %v7640 = vadd.f32 %v7173, %v7570
        %v7641 = vadd.f32 %v7174, %v7573
        %v7642 = vadd.f32 %v7175, %v7578
        %v7643 = vadd.f32 %v7176, %v7581
        %v7644 = vadd.f32 %v7177, %v7586
        %v7645 = vadd.f32 %v7178, %v7589
        %v7646 = vadd.f32 %v7179, %v7594
        %v7647 = vadd.f32 %v7180, %v7597
        %v7648 = vadd.f32 %v7181, %v7602
        %v7649 = vadd.f32 %v7182, %v7605
        %v7650 = vadd.f32 %v7183, %v7610
        %v7651 = vadd.f32 %v7184, %v7613
        %v7652 = vadd.f32 %v7185, %v7618
        %v7653 = vadd.f32 %v7186, %v7621
        %v7654 = vadd.f32 %v7187, %v7626
        %v7655 = vadd.f32 %v7188, %v7629
        %v7656 = vadd.f32 %v7189, %v7634
        %v7657 = vadd.f32 %v7190, %v7637
        %v7658 = vld [vmem:[%s6930] sm:$0xe]
        %v7659 = vld [vmem:[%s6930 + $0xc] sm:$0xe]
        %v7660 = vld [vmem:[%s6930 + $0x18] sm:$0xe]
        %v7661 = vld [vmem:[%s6930 + $0x24] sm:$0xe]
        %v7662 = vld [vmem:[%s6930 + $0x30] sm:$0xe]
        %v7663 = vld [vmem:[%s6930 + $0x3c] sm:$0xe]
        %v7664 = vld [vmem:[%s6930 + $0x48] sm:$0xe]
        %v7665 = vld [vmem:[%s6930 + $0x54] sm:$0xe]
        %v7666 = vld [vmem:[%s6930 + $0x60] sm:$0xe]
        %v7694 = vrot.slane %v7658, 5
        %v7695 = vrot.slane %v7694, 4
        %v7696 = vrot.slane %v7192, 5
        %v7697 = vsel %vm3015, %v7695, %v7696
        %v7698 = vrot.slane %v7696, 4
        %v7699 = vrot.slane %v7193, 5
        %v7700 = vsel %vm3015, %v7698, %v7699
        %v7701 = vrot.slane %v7659, 5
        %v7702 = vrot.slane %v7701, 4
        %v7703 = vrot.slane %v7195, 5
        %v7704 = vsel %vm3015, %v7702, %v7703
        %v7705 = vrot.slane %v7703, 4
        %v7706 = vrot.slane %v7196, 5
        %v7707 = vsel %vm3015, %v7705, %v7706
        %v7708 = vrot.slane %v7660, 5
        %v7709 = vrot.slane %v7708, 4
        %v7710 = vrot.slane %v7198, 5
        %v7711 = vsel %vm3015, %v7709, %v7710
        %v7712 = vrot.slane %v7710, 4
        %v7713 = vrot.slane %v7199, 5
        %v7714 = vsel %vm3015, %v7712, %v7713
        %v7715 = vrot.slane %v7661, 5
        %v7716 = vrot.slane %v7715, 4
        %v7717 = vrot.slane %v7201, 5
        %v7718 = vsel %vm3015, %v7716, %v7717
        %v7719 = vrot.slane %v7717, 4
        %v7720 = vrot.slane %v7202, 5
        %v7721 = vsel %vm3015, %v7719, %v7720
        %v7722 = vrot.slane %v7662, 5
        %v7723 = vrot.slane %v7722, 4
        %v7724 = vrot.slane %v7204, 5
        %v7725 = vsel %vm3015, %v7723, %v7724
        %v7726 = vrot.slane %v7724, 4
        %v7727 = vrot.slane %v7205, 5
        %v7728 = vsel %vm3015, %v7726, %v7727
        %v7729 = vrot.slane %v7663, 5
        %v7730 = vrot.slane %v7729, 4
        %v7731 = vrot.slane %v7207, 5
        %v7732 = vsel %vm3015, %v7730, %v7731
        %v7733 = vrot.slane %v7731, 4
        %v7734 = vrot.slane %v7208, 5
        %v7735 = vsel %vm3015, %v7733, %v7734
        %v7736 = vrot.slane %v7664, 5
        %v7737 = vrot.slane %v7736, 4
        %v7738 = vrot.slane %v7210, 5
        %v7739 = vsel %vm3015, %v7737, %v7738
        %v7740 = vrot.slane %v7738, 4
        %v7741 = vrot.slane %v7211, 5
        %v7742 = vsel %vm3015, %v7740, %v7741
        %v7743 = vrot.slane %v7665, 5
        %v7744 = vrot.slane %v7743, 4
        %v7745 = vrot.slane %v7213, 5
        %v7746 = vsel %vm3015, %v7744, %v7745
        %v7747 = vrot.slane %v7745, 4
        %v7748 = vrot.slane %v7214, 5
        %v7749 = vsel %vm3015, %v7747, %v7748
        %v7750 = vrot.slane %v7666, 5
        %v7751 = vrot.slane %v7750, 4
        %v7752 = vrot.slane %v7216, 5
        %v7753 = vsel %vm3015, %v7751, %v7752
        %v7754 = vrot.slane %v7752, 4
        %v7755 = vrot.slane %v7217, 5
        %v7756 = vsel %vm3015, %v7754, %v7755
        %s7757 = scalar_lea.vmem %s5, 320
        %v7758 = vld [vmem:[%s7757] sm:$0xf]
        %v7759 = vld [vmem:[%s7757 + $0x4] sm:$0xf]
        %v7760 = vld [vmem:[%s7757 + $0x8] sm:$0xf]
        %v7761 = vld [vmem:[%s7757 + $0xc] sm:$0xf]
        %v7762 = vld [vmem:[%s7757 + $0x10] sm:$0xf]
        %v7763 = vld [vmem:[%s7757 + $0x14] sm:$0xf]
        %v7764 = vld [vmem:[%s7757 + $0x18] sm:$0xf]
        %v7765 = vld [vmem:[%s7757 + $0x1c] sm:$0xf]
        %v7766 = vld [vmem:[%s7757 + $0x20] sm:$0xf]
        %v7767 = vld [vmem:[%s7757 + $0x24] sm:$0xf]
        %v7768 = vld [vmem:[%s7757 + $0x28] sm:$0xf]
        %v7769 = vld [vmem:[%s7757 + $0x2c] sm:$0xf]
        %v7770 = vld [vmem:[%s7757 + $0x30] sm:$0xf]
        %v7771 = vld [vmem:[%s7757 + $0x34] sm:$0xf]
        %v7772 = vld [vmem:[%s7757 + $0x38] sm:$0xf]
        %v7773 = vld [vmem:[%s7757 + $0x3c] sm:$0xf]
        %v7774 = vunpack.c.l.b16 %v7697
        %v7775 = vunpack.c.l.b16 %v7700
        %v7776 = vunpack.c.l.b16 %v7704
        %v7777 = vunpack.c.l.b16 %v7707
        %v7778 = vunpack.c.l.b16 %v7711
        %v7779 = vunpack.c.l.b16 %v7714
        %v7780 = vunpack.c.l.b16 %v7718
        %v7781 = vunpack.c.l.b16 %v7721
        %v7782 = vunpack.c.l.b16 %v7725
        %v7783 = vunpack.c.l.b16 %v7728
        %v7784 = vunpack.c.l.b16 %v7732
        %v7785 = vunpack.c.l.b16 %v7735
        %v7786 = vunpack.c.l.b16 %v7739
        %v7787 = vunpack.c.l.b16 %v7742
        %v7788 = vunpack.c.l.b16 %v7746
        %v7789 = vunpack.c.l.b16 %v7749
        %v7790 = vunpack.c.l.b16 %v7753
        %v7791 = vunpack.c.l.b16 %v7756
        %v7792 = vpack.c.b16 %v7775, %v7774
        %v7793 = vpack.c.b16 %v7777, %v7776
        %v7794 = vpack.c.b16 %v7779, %v7778
        %v7795 = vpack.c.b16 %v7781, %v7780
        %v7796 = vpack.c.b16 %v7783, %v7782
        %v7797 = vpack.c.b16 %v7785, %v7784
        %v7798 = vpack.c.b16 %v7787, %v7786
        %v7799 = vpack.c.b16 %v7789, %v7788
        %v7800 = vpack.c.b16 %v7791, %v7790
        %v7826 = vunpack.c.l.b16 %v7758
        %v7827 = vunpack.c.l.b16 %v7759
        %v7828 = vunpack.c.l.b16 %v7760
        %v7829 = vunpack.c.l.b16 %v7761
        %v7830 = vunpack.c.l.b16 %v7762
        %v7831 = vunpack.c.l.b16 %v7763
        %v7832 = vunpack.c.l.b16 %v7764
        %v7833 = vunpack.c.l.b16 %v7765
        %v7834 = vunpack.c.l.b16 %v7766
        %v7835 = vunpack.c.l.b16 %v7767
        %v7836 = vunpack.c.l.b16 %v7768
        %v7837 = vunpack.c.l.b16 %v7769
        %v7838 = vunpack.c.l.b16 %v7770
        %v7839 = vunpack.c.l.b16 %v7771
        %v7840 = vunpack.c.l.b16 %v7772
        %v7841 = vunpack.c.l.b16 %v7773
        %v7842 = vpack.c.b16 %v7827, %v7826
        %v7843 = vpack.c.b16 %v7829, %v7828
        %v7844 = vpack.c.b16 %v7831, %v7830
        %v7845 = vpack.c.b16 %v7833, %v7832
        %v7846 = vpack.c.b16 %v7835, %v7834
        %v7847 = vpack.c.b16 %v7837, %v7836
        %v7848 = vpack.c.b16 %v7839, %v7838
        %v7849 = vpack.c.b16 %v7841, %v7840
        %7858 = vmatprep.subr.bf16.mxu0 0
        %7859 = vmatpush1.bf16.msra.mxu0 %v7842
        %7860 = vmatprep.subr.bf16.mxu0 0
        %7861 = vmatpush1.bf16.msra.mxu0 %v7843
        %7862 = vmatprep.subr.bf16.mxu0 0
        %7863 = vmatpush1.bf16.msra.mxu0 %v7844
        %7864 = vmatprep.subr.bf16.mxu0 0
        %7865 = vmatpush1.bf16.msra.mxu0 %v7845
        %7866 = vmatprep.subr.bf16.mxu0 0
        %7867 = vmatpush1.bf16.msra.mxu0 %v7846
        %7868 = vmatprep.subr.bf16.mxu0 0
        %7869 = vmatpush1.bf16.msra.mxu0 %v7847
        %7870 = vmatprep.subr.bf16.mxu0 0
        %7871 = vmatpush1.bf16.msra.mxu0 %v7848
        %7872 = vmatprep.subr.bf16.mxu0 0
        %7873 = vmatpush1.bf16.msra.mxu0 %v7849
        %7874 = vmatprep.subr.bf16.mxu0 0
        %7875 = vmatpush1.bf16.msra.mxu0 0
        %7876 = vmatprep.subr.bf16.mxu0 0
        %7877 = vmatpush1.bf16.msra.mxu0 0
        %7878 = vmatprep.subr.bf16.mxu0 0
        %7879 = vmatpush1.bf16.msra.mxu0 0
        %7880 = vmatprep.subr.bf16.mxu0 0
        %7881 = vmatpush1.bf16.msra.mxu0 0
        %7882 = vmatprep.subr.bf16.mxu0 0
        %7883 = vmatpush1.bf16.msra.mxu0 0
        %7884 = vmatprep.subr.bf16.mxu0 0
        %7885 = vmatpush1.bf16.msra.mxu0 0
        %7886 = vmatprep.subr.bf16.mxu0 0
        %7887 = vmatpush1.bf16.msra.mxu0 0
        %7888 = vmatprep.subr.bf16.mxu0 0
        %7889 = vmatpush1.bf16.msra.mxu0 0
        %7890 = vmatprep.mubr.bf16.mxu0 0
        %7891 = vmatmul.mubr.bf16.gmra.mrb[0].mxu0 %v7792
        %v7892 = vpop.f32.mrb[0].mxu0
        %v7893 = vadd.f32 0.0, %v7892
        %v7894 = vpop.f32.mrb[0].mxu0
        %v7895 = vpop.f32.mrb[0].mxu0
        %v7896 = vadd.f32 0.0, %v7895
        %v7897 = vpop.f32.mrb[0].mxu0
        %7898 = vmatprep.mubr.bf16.mxu0 0
        %7899 = vmatmul.mubr.bf16.gmra.mrb[0].mxu0 %v7793
        %v7900 = vpop.f32.mrb[0].mxu0
        %v7901 = vadd.f32 0.0, %v7900
        %v7902 = vpop.f32.mrb[0].mxu0
        %v7903 = vpop.f32.mrb[0].mxu0
        %v7904 = vadd.f32 0.0, %v7903
        %v7905 = vpop.f32.mrb[0].mxu0
        %7906 = vmatprep.mubr.bf16.mxu0 0
        %7907 = vmatmul.mubr.bf16.gmra.mrb[0].mxu0 %v7794
        %v7908 = vpop.f32.mrb[0].mxu0
        %v7909 = vadd.f32 0.0, %v7908
        %v7910 = vpop.f32.mrb[0].mxu0
        %v7911 = vpop.f32.mrb[0].mxu0
        %v7912 = vadd.f32 0.0, %v7911
        %v7913 = vpop.f32.mrb[0].mxu0
        %7914 = vmatprep.mubr.bf16.mxu0 0
        %7915 = vmatmul.mubr.bf16.gmra.mrb[0].mxu0 %v7795
        %v7916 = vpop.f32.mrb[0].mxu0
        %v7917 = vadd.f32 0.0, %v7916
        %v7918 = vpop.f32.mrb[0].mxu0
        %v7919 = vpop.f32.mrb[0].mxu0
        %v7920 = vadd.f32 0.0, %v7919
        %v7921 = vpop.f32.mrb[0].mxu0
        %7922 = vmatprep.mubr.bf16.mxu0 0
        %7923 = vmatmul.mubr.bf16.gmra.mrb[0].mxu0 %v7796
        %v7924 = vpop.f32.mrb[0].mxu0
        %v7925 = vadd.f32 0.0, %v7924
        %v7926 = vpop.f32.mrb[0].mxu0
        %v7927 = vpop.f32.mrb[0].mxu0
        %v7928 = vadd.f32 0.0, %v7927
        %v7929 = vpop.f32.mrb[0].mxu0
        %7930 = vmatprep.mubr.bf16.mxu0 0
        %7931 = vmatmul.mubr.bf16.gmra.mrb[0].mxu0 %v7797
        %v7932 = vpop.f32.mrb[0].mxu0
        %v7933 = vadd.f32 0.0, %v7932
        %v7934 = vpop.f32.mrb[0].mxu0
        %v7935 = vpop.f32.mrb[0].mxu0
        %v7936 = vadd.f32 0.0, %v7935
        %v7937 = vpop.f32.mrb[0].mxu0
        %7938 = vmatprep.mubr.bf16.mxu0 0
        %7939 = vmatmul.mubr.bf16.gmra.mrb[0].mxu0 %v7798
        %v7940 = vpop.f32.mrb[0].mxu0
        %v7941 = vadd.f32 0.0, %v7940
        %v7942 = vpop.f32.mrb[0].mxu0
        %v7943 = vpop.f32.mrb[0].mxu0
        %v7944 = vadd.f32 0.0, %v7943
        %v7945 = vpop.f32.mrb[0].mxu0
        %7946 = vmatprep.mubr.bf16.mxu0 0
        %7947 = vmatmul.mubr.bf16.gmra.mrb[0].mxu0 %v7799
        %v7948 = vpop.f32.mrb[0].mxu0
        %v7949 = vadd.f32 0.0, %v7948
        %v7950 = vpop.f32.mrb[0].mxu0
        %v7951 = vpop.f32.mrb[0].mxu0
        %v7952 = vadd.f32 0.0, %v7951
        %v7953 = vpop.f32.mrb[0].mxu0
        %7954 = vmatprep.mubr.bf16.mxu0 0
        %7955 = vmatmul.mubr.bf16.gmra.mrb[0].mxu0 %v7800
        %v7956 = vpop.f32.mrb[0].mxu0
        %v7957 = vadd.f32 0.0, %v7956
        %v7958 = vpop.f32.mrb[0].mxu0
        %v7959 = vpop.f32.mrb[0].mxu0
        %v7960 = vadd.f32 0.0, %v7959
        %v7961 = vpop.f32.mrb[0].mxu0
        %7962 = vdwg.mxu0
        %v7963 = vadd.f32 %v7640, %v7893
        %v7964 = vadd.f32 %v7641, %v7896
        %v7965 = vadd.f32 %v7642, %v7901
        %v7966 = vadd.f32 %v7643, %v7904
        %v7967 = vadd.f32 %v7644, %v7909
        %v7968 = vadd.f32 %v7645, %v7912
        %v7969 = vadd.f32 %v7646, %v7917
        %v7970 = vadd.f32 %v7647, %v7920
        %v7971 = vadd.f32 %v7648, %v7925
        %v7972 = vadd.f32 %v7649, %v7928
        %v7973 = vadd.f32 %v7650, %v7933
        %v7974 = vadd.f32 %v7651, %v7936
        %v7975 = vadd.f32 %v7652, %v7941
        %v7976 = vadd.f32 %v7653, %v7944
        %v7977 = vadd.f32 %v7654, %v7949
        %v7978 = vadd.f32 %v7655, %v7952
        %v7979 = vadd.f32 %v7656, %v7957
        %v7980 = vadd.f32 %v7657, %v7960
        %s7981 = scalar_lea.vmem [#allocation3], 24
        %v7982 = vld [vmem:[%s7981] sm:$0xf]
        %v7983 = vld [vmem:[%s7981 + $0x4] sm:$0xf]
        %v7984 = vld [vmem:[%s7981 + $0xc] sm:$0xf]
        %v7985 = vld [vmem:[%s7981 + $0x10] sm:$0xf]
        %v7986 = vld [vmem:[%s7981 + $0x18] sm:$0xf]
        %v7987 = vld [vmem:[%s7981 + $0x1c] sm:$0xf]
        %v7988 = vld [vmem:[%s7981 + $0x24] sm:$0xf]
        %v7989 = vld [vmem:[%s7981 + $0x28] sm:$0xf]
        %v7990 = vld [vmem:[%s7981 + $0x30] sm:$0xf]
        %v7991 = vld [vmem:[%s7981 + $0x34] sm:$0xf]
        %v7992 = vld [vmem:[%s7981 + $0x3c] sm:$0xf]
        %v7993 = vld [vmem:[%s7981 + $0x40] sm:$0xf]
        %v7994 = vld [vmem:[%s7981 + $0x48] sm:$0xf]
        %v7995 = vld [vmem:[%s7981 + $0x4c] sm:$0xf]
        %v7996 = vld [vmem:[%s7981 + $0x54] sm:$0xf]
        %v7997 = vld [vmem:[%s7981 + $0x58] sm:$0xf]
        %v7998 = vld [vmem:[%s7981 + $0x60] sm:$0xf]
        %v7999 = vld [vmem:[%s7981 + $0x64] sm:$0xf]
        %s8000 = scalar_lea.vmem %s5, 384
        %v8001 = vld [vmem:[%s8000] sm:$0xf]
        %v8002 = vld [vmem:[%s8000 + $0x4] sm:$0xf]
        %v8003 = vld [vmem:[%s8000 + $0x8] sm:$0xf]
        %v8004 = vld [vmem:[%s8000 + $0xc] sm:$0xf]
        %v8005 = vld [vmem:[%s8000 + $0x10] sm:$0xf]
        %v8006 = vld [vmem:[%s8000 + $0x14] sm:$0xf]
        %v8007 = vld [vmem:[%s8000 + $0x18] sm:$0xf]
        %v8008 = vld [vmem:[%s8000 + $0x1c] sm:$0xf]
        %v8009 = vld [vmem:[%s8000 + $0x20] sm:$0xf]
        %v8010 = vld [vmem:[%s8000 + $0x24] sm:$0xf]
        %v8011 = vld [vmem:[%s8000 + $0x28] sm:$0xf]
        %v8012 = vld [vmem:[%s8000 + $0x2c] sm:$0xf]
        %v8013 = vld [vmem:[%s8000 + $0x30] sm:$0xf]
        %v8014 = vld [vmem:[%s8000 + $0x34] sm:$0xf]
        %v8015 = vld [vmem:[%s8000 + $0x38] sm:$0xf]
        %v8016 = vld [vmem:[%s8000 + $0x3c] sm:$0xf]
        %v8035 = vunpack.c.l.b16 %v7982
        %v8036 = vunpack.c.l.b16 %v7983
        %v8037 = vunpack.c.l.b16 %v7984
        %v8038 = vunpack.c.l.b16 %v7985
        %v8039 = vunpack.c.l.b16 %v7986
        %v8040 = vunpack.c.l.b16 %v7987
        %v8041 = vunpack.c.l.b16 %v7988
        %v8042 = vunpack.c.l.b16 %v7989
        %v8043 = vunpack.c.l.b16 %v7990
        %v8044 = vunpack.c.l.b16 %v7991
        %v8045 = vunpack.c.l.b16 %v7992
        %v8046 = vunpack.c.l.b16 %v7993
        %v8047 = vunpack.c.l.b16 %v7994
        %v8048 = vunpack.c.l.b16 %v7995
        %v8049 = vunpack.c.l.b16 %v7996
        %v8050 = vunpack.c.l.b16 %v7997
        %v8051 = vunpack.c.l.b16 %v7998
        %v8052 = vunpack.c.l.b16 %v7999
        %v8053 = vpack.c.b16 %v8036, %v8035
        %v8054 = vpack.c.b16 %v8038, %v8037
        %v8055 = vpack.c.b16 %v8040, %v8039
        %v8056 = vpack.c.b16 %v8042, %v8041
        %v8057 = vpack.c.b16 %v8044, %v8043
        %v8058 = vpack.c.b16 %v8046, %v8045
        %v8059 = vpack.c.b16 %v8048, %v8047
        %v8060 = vpack.c.b16 %v8050, %v8049
        %v8061 = vpack.c.b16 %v8052, %v8051
        %v8087 = vunpack.c.l.b16 %v8001
        %v8088 = vunpack.c.l.b16 %v8002
        %v8089 = vunpack.c.l.b16 %v8003
        %v8090 = vunpack.c.l.b16 %v8004
        %v8091 = vunpack.c.l.b16 %v8005
        %v8092 = vunpack.c.l.b16 %v8006
        %v8093 = vunpack.c.l.b16 %v8007
        %v8094 = vunpack.c.l.b16 %v8008
        %v8095 = vunpack.c.l.b16 %v8009
        %v8096 = vunpack.c.l.b16 %v8010
        %v8097 = vunpack.c.l.b16 %v8011
        %v8098 = vunpack.c.l.b16 %v8012
        %v8099 = vunpack.c.l.b16 %v8013
        %v8100 = vunpack.c.l.b16 %v8014
        %v8101 = vunpack.c.l.b16 %v8015
        %v8102 = vunpack.c.l.b16 %v8016
        %v8103 = vpack.c.b16 %v8088, %v8087
        %v8104 = vpack.c.b16 %v8090, %v8089
        %v8105 = vpack.c.b16 %v8092, %v8091
        %v8106 = vpack.c.b16 %v8094, %v8093
        %v8107 = vpack.c.b16 %v8096, %v8095
        %v8108 = vpack.c.b16 %v8098, %v8097
        %v8109 = vpack.c.b16 %v8100, %v8099
        %v8110 = vpack.c.b16 %v8102, %v8101
        %8119 = vmatprep.subr.bf16.mxu0 0
        %8120 = vmatpush1.bf16.msra.mxu0 %v8103
        %8121 = vmatprep.subr.bf16.mxu0 0
        %8122 = vmatpush1.bf16.msra.mxu0 %v8104
        %8123 = vmatprep.subr.bf16.mxu0 0
        %8124 = vmatpush1.bf16.msra.mxu0 %v8105
        %8125 = vmatprep.subr.bf16.mxu0 0
        %8126 = vmatpush1.bf16.msra.mxu0 %v8106
        %8127 = vmatprep.subr.bf16.mxu0 0
        %8128 = vmatpush1.bf16.msra.mxu0 %v8107
        %8129 = vmatprep.subr.bf16.mxu0 0
        %8130 = vmatpush1.bf16.msra.mxu0 %v8108
        %8131 = vmatprep.subr.bf16.mxu0 0
        %8132 = vmatpush1.bf16.msra.mxu0 %v8109
        %8133 = vmatprep.subr.bf16.mxu0 0
        %8134 = vmatpush1.bf16.msra.mxu0 %v8110
        %8135 = vmatprep.subr.bf16.mxu0 0
        %8136 = vmatpush1.bf16.msra.mxu0 0
        %8137 = vmatprep.subr.bf16.mxu0 0
        %8138 = vmatpush1.bf16.msra.mxu0 0
        %8139 = vmatprep.subr.bf16.mxu0 0
        %8140 = vmatpush1.bf16.msra.mxu0 0
        %8141 = vmatprep.subr.bf16.mxu0 0
        %8142 = vmatpush1.bf16.msra.mxu0 0
        %8143 = vmatprep.subr.bf16.mxu0 0
        %8144 = vmatpush1.bf16.msra.mxu0 0
        %8145 = vmatprep.subr.bf16.mxu0 0
        %8146 = vmatpush1.bf16.msra.mxu0 0
        %8147 = vmatprep.subr.bf16.mxu0 0
        %8148 = vmatpush1.bf16.msra.mxu0 0
        %8149 = vmatprep.subr.bf16.mxu0 0
        %8150 = vmatpush1.bf16.msra.mxu0 0
        %8151 = vmatprep.mubr.bf16.mxu0 0
        %8152 = vmatmul.mubr.bf16.gmra.mrb[0].mxu0 %v8053
        %v8153 = vpop.f32.mrb[0].mxu0
        %v8154 = vadd.f32 0.0, %v8153
        %v8155 = vpop.f32.mrb[0].mxu0
        %v8156 = vpop.f32.mrb[0].mxu0
        %v8157 = vadd.f32 0.0, %v8156
        %v8158 = vpop.f32.mrb[0].mxu0
        %8159 = vmatprep.mubr.bf16.mxu0 0
        %8160 = vmatmul.mubr.bf16.gmra.mrb[0].mxu0 %v8054
        %v8161 = vpop.f32.mrb[0].mxu0
        %v8162 = vadd.f32 0.0, %v8161
        %v8163 = vpop.f32.mrb[0].mxu0
        %v8164 = vpop.f32.mrb[0].mxu0
        %v8165 = vadd.f32 0.0, %v8164
        %v8166 = vpop.f32.mrb[0].mxu0
        %8167 = vmatprep.mubr.bf16.mxu0 0
        %8168 = vmatmul.mubr.bf16.gmra.mrb[0].mxu0 %v8055
        %v8169 = vpop.f32.mrb[0].mxu0
        %v8170 = vadd.f32 0.0, %v8169
        %v8171 = vpop.f32.mrb[0].mxu0
        %v8172 = vpop.f32.mrb[0].mxu0
        %v8173 = vadd.f32 0.0, %v8172
        %v8174 = vpop.f32.mrb[0].mxu0
        %8175 = vmatprep.mubr.bf16.mxu0 0
        %8176 = vmatmul.mubr.bf16.gmra.mrb[0].mxu0 %v8056
        %v8177 = vpop.f32.mrb[0].mxu0
        %v8178 = vadd.f32 0.0, %v8177
        %v8179 = vpop.f32.mrb[0].mxu0
        %v8180 = vpop.f32.mrb[0].mxu0
        %v8181 = vadd.f32 0.0, %v8180
        %v8182 = vpop.f32.mrb[0].mxu0
        %8183 = vmatprep.mubr.bf16.mxu0 0
        %8184 = vmatmul.mubr.bf16.gmra.mrb[0].mxu0 %v8057
        %v8185 = vpop.f32.mrb[0].mxu0
        %v8186 = vadd.f32 0.0, %v8185
        %v8187 = vpop.f32.mrb[0].mxu0
        %v8188 = vpop.f32.mrb[0].mxu0
        %v8189 = vadd.f32 0.0, %v8188
        %v8190 = vpop.f32.mrb[0].mxu0
        %8191 = vmatprep.mubr.bf16.mxu0 0
        %8192 = vmatmul.mubr.bf16.gmra.mrb[0].mxu0 %v8058
        %v8193 = vpop.f32.mrb[0].mxu0
        %v8194 = vadd.f32 0.0, %v8193
        %v8195 = vpop.f32.mrb[0].mxu0
        %v8196 = vpop.f32.mrb[0].mxu0
        %v8197 = vadd.f32 0.0, %v8196
        %v8198 = vpop.f32.mrb[0].mxu0
        %8199 = vmatprep.mubr.bf16.mxu0 0
        %8200 = vmatmul.mubr.bf16.gmra.mrb[0].mxu0 %v8059
        %v8201 = vpop.f32.mrb[0].mxu0
        %v8202 = vadd.f32 0.0, %v8201
        %v8203 = vpop.f32.mrb[0].mxu0
        %v8204 = vpop.f32.mrb[0].mxu0
        %v8205 = vadd.f32 0.0, %v8204
        %v8206 = vpop.f32.mrb[0].mxu0
        %8207 = vmatprep.mubr.bf16.mxu0 0
        %8208 = vmatmul.mubr.bf16.gmra.mrb[0].mxu0 %v8060
        %v8209 = vpop.f32.mrb[0].mxu0
        %v8210 = vadd.f32 0.0, %v8209
        %v8211 = vpop.f32.mrb[0].mxu0
        %v8212 = vpop.f32.mrb[0].mxu0
        %v8213 = vadd.f32 0.0, %v8212
        %v8214 = vpop.f32.mrb[0].mxu0
        %8215 = vmatprep.mubr.bf16.mxu0 0
        %8216 = vmatmul.mubr.bf16.gmra.mrb[0].mxu0 %v8061
        %v8217 = vpop.f32.mrb[0].mxu0
        %v8218 = vadd.f32 0.0, %v8217
        %v8219 = vpop.f32.mrb[0].mxu0
        %v8220 = vpop.f32.mrb[0].mxu0
        %v8221 = vadd.f32 0.0, %v8220
        %v8222 = vpop.f32.mrb[0].mxu0
        %8223 = vdwg.mxu0
        %v8224 = vadd.f32 %v7963, %v8154
        %v8225 = vadd.f32 %v7964, %v8157
        %v8226 = vadd.f32 %v7965, %v8162
        %v8227 = vadd.f32 %v7966, %v8165
        %v8228 = vadd.f32 %v7967, %v8170
        %v8229 = vadd.f32 %v7968, %v8173
        %v8230 = vadd.f32 %v7969, %v8178
        %v8231 = vadd.f32 %v7970, %v8181
        %v8232 = vadd.f32 %v7971, %v8186
        %v8233 = vadd.f32 %v7972, %v8189
        %v8234 = vadd.f32 %v7973, %v8194
        %v8235 = vadd.f32 %v7974, %v8197
        %v8236 = vadd.f32 %v7975, %v8202
        %v8237 = vadd.f32 %v7976, %v8205
        %v8238 = vadd.f32 %v7977, %v8210
        %v8239 = vadd.f32 %v7978, %v8213
        %v8240 = vadd.f32 %v7979, %v8218
        %v8241 = vadd.f32 %v7980, %v8221
        %v8242 = vld [vmem:[%s7981] sm:$0xf]
        %v8243 = vld [vmem:[%s7981 + $0x4] sm:$0xf]
        %v8244 = vld [vmem:[%s7981 + $0x8] sm:$0x1]
        %v8245 = vld [vmem:[%s7981 + $0xc] sm:$0xf]
        %v8246 = vld [vmem:[%s7981 + $0x10] sm:$0xf]
        %v8247 = vld [vmem:[%s7981 + $0x14] sm:$0x1]
        %v8248 = vld [vmem:[%s7981 + $0x18] sm:$0xf]
        %v8249 = vld [vmem:[%s7981 + $0x1c] sm:$0xf]
        %v8250 = vld [vmem:[%s7981 + $0x20] sm:$0x1]
        %v8251 = vld [vmem:[%s7981 + $0x24] sm:$0xf]
        %v8252 = vld [vmem:[%s7981 + $0x28] sm:$0xf]
        %v8253 = vld [vmem:[%s7981 + $0x2c] sm:$0x1]
        %v8254 = vld [vmem:[%s7981 + $0x30] sm:$0xf]
        %v8255 = vld [vmem:[%s7981 + $0x34] sm:$0xf]
        %v8256 = vld [vmem:[%s7981 + $0x38] sm:$0x1]
        %v8257 = vld [vmem:[%s7981 + $0x3c] sm:$0xf]
        %v8258 = vld [vmem:[%s7981 + $0x40] sm:$0xf]
        %v8259 = vld [vmem:[%s7981 + $0x44] sm:$0x1]
        %v8260 = vld [vmem:[%s7981 + $0x48] sm:$0xf]
        %v8261 = vld [vmem:[%s7981 + $0x4c] sm:$0xf]
        %v8262 = vld [vmem:[%s7981 + $0x50] sm:$0x1]
        %v8263 = vld [vmem:[%s7981 + $0x54] sm:$0xf]
        %v8264 = vld [vmem:[%s7981 + $0x58] sm:$0xf]
        %v8265 = vld [vmem:[%s7981 + $0x5c] sm:$0x1]
        %v8266 = vld [vmem:[%s7981 + $0x60] sm:$0xf]
        %v8267 = vld [vmem:[%s7981 + $0x64] sm:$0xf]
        %v8268 = vld [vmem:[%s7981 + $0x68] sm:$0x1]
        %v8270 = vshrl.u32 %v8242, 16
        %v8272 = vrot.slane %v8270, 4
        %v8273 = vshll.u32 %v8242, 16
        %v8275 = vrot.slane %v8273, 5
        %v8276 = vor.u32 %v8272, %v8275
        %v8277 = vrot.slane %v8276, 4
        %v8279 = vshll.u32 %v8243, 16
        %v8281 = vrot.slane %v8279, 5
        %v8282 = vsel %vm2250, %v8277, %v8281
        %v8283 = vshrl.u32 %v8243, 16
        %v8285 = vrot.slane %v8283, 4
        %v8286 = vor.u32 %v8285, %v8281
        %v8287 = vrot.slane %v8286, 4
        %v8289 = vshll.u32 %v8244, 16
        %v8291 = vrot.slane %v8289, 5
        %v8292 = vsel %vm2250, %v8287, %v8291
        %v8294 = vshrl.u32 %v8245, 16
        %v8296 = vrot.slane %v8294, 4
        %v8297 = vshll.u32 %v8245, 16
        %v8299 = vrot.slane %v8297, 5
        %v8300 = vor.u32 %v8296, %v8299
        %v8301 = vrot.slane %v8300, 4
        %v8303 = vshll.u32 %v8246, 16
        %v8305 = vrot.slane %v8303, 5
        %v8306 = vsel %vm2250, %v8301, %v8305
        %v8307 = vshrl.u32 %v8246, 16
        %v8309 = vrot.slane %v8307, 4
        %v8310 = vor.u32 %v8309, %v8305
        %v8311 = vrot.slane %v8310, 4
        %v8313 = vshll.u32 %v8247, 16
        %v8315 = vrot.slane %v8313, 5
        %v8316 = vsel %vm2250, %v8311, %v8315
        %v8318 = vshrl.u32 %v8248, 16
        %v8320 = vrot.slane %v8318, 4
        %v8321 = vshll.u32 %v8248, 16
        %v8323 = vrot.slane %v8321, 5
        %v8324 = vor.u32 %v8320, %v8323
        %v8325 = vrot.slane %v8324, 4
        %v8327 = vshll.u32 %v8249, 16
        %v8329 = vrot.slane %v8327, 5
        %v8330 = vsel %vm2250, %v8325, %v8329
        %v8331 = vshrl.u32 %v8249, 16
        %v8333 = vrot.slane %v8331, 4
        %v8334 = vor.u32 %v8333, %v8329
        %v8335 = vrot.slane %v8334, 4
        %v8337 = vshll.u32 %v8250, 16
        %v8339 = vrot.slane %v8337, 5
        %v8340 = vsel %vm2250, %v8335, %v8339
        %v8342 = vshrl.u32 %v8251, 16
        %v8344 = vrot.slane %v8342, 4
        %v8345 = vshll.u32 %v8251, 16
        %v8347 = vrot.slane %v8345, 5
        %v8348 = vor.u32 %v8344, %v8347
        %v8349 = vrot.slane %v8348, 4
        %v8351 = vshll.u32 %v8252, 16
        %v8353 = vrot.slane %v8351, 5
        %v8354 = vsel %vm2250, %v8349, %v8353
        %v8355 = vshrl.u32 %v8252, 16
        %v8357 = vrot.slane %v8355, 4
        %v8358 = vor.u32 %v8357, %v8353
        %v8359 = vrot.slane %v8358, 4
        %v8361 = vshll.u32 %v8253, 16
        %v8363 = vrot.slane %v8361, 5
        %v8364 = vsel %vm2250, %v8359, %v8363
        %v8366 = vshrl.u32 %v8254, 16
        %v8368 = vrot.slane %v8366, 4
        %v8369 = vshll.u32 %v8254, 16
        %v8371 = vrot.slane %v8369, 5
        %v8372 = vor.u32 %v8368, %v8371
        %v8373 = vrot.slane %v8372, 4
        %v8375 = vshll.u32 %v8255, 16
        %v8377 = vrot.slane %v8375, 5
        %v8378 = vsel %vm2250, %v8373, %v8377
        %v8379 = vshrl.u32 %v8255, 16
        %v8381 = vrot.slane %v8379, 4
        %v8382 = vor.u32 %v8381, %v8377
        %v8383 = vrot.slane %v8382, 4
        %v8385 = vshll.u32 %v8256, 16
        %v8387 = vrot.slane %v8385, 5
        %v8388 = vsel %vm2250, %v8383, %v8387
        %v8390 = vshrl.u32 %v8257, 16
        %v8392 = vrot.slane %v8390, 4
        %v8393 = vshll.u32 %v8257, 16
        %v8395 = vrot.slane %v8393, 5
        %v8396 = vor.u32 %v8392, %v8395
        %v8397 = vrot.slane %v8396, 4
        %v8399 = vshll.u32 %v8258, 16
        %v8401 = vrot.slane %v8399, 5
        %v8402 = vsel %vm2250, %v8397, %v8401
        %v8403 = vshrl.u32 %v8258, 16
        %v8405 = vrot.slane %v8403, 4
        %v8406 = vor.u32 %v8405, %v8401
        %v8407 = vrot.slane %v8406, 4
        %v8409 = vshll.u32 %v8259, 16
        %v8411 = vrot.slane %v8409, 5
        %v8412 = vsel %vm2250, %v8407, %v8411
        %v8414 = vshrl.u32 %v8260, 16
        %v8416 = vrot.slane %v8414, 4
        %v8417 = vshll.u32 %v8260, 16
        %v8419 = vrot.slane %v8417, 5
        %v8420 = vor.u32 %v8416, %v8419
        %v8421 = vrot.slane %v8420, 4
        %v8423 = vshll.u32 %v8261, 16
        %v8425 = vrot.slane %v8423, 5
        %v8426 = vsel %vm2250, %v8421, %v8425
        %v8427 = vshrl.u32 %v8261, 16
        %v8429 = vrot.slane %v8427, 4
        %v8430 = vor.u32 %v8429, %v8425
        %v8431 = vrot.slane %v8430, 4
        %v8433 = vshll.u32 %v8262, 16
        %v8435 = vrot.slane %v8433, 5
        %v8436 = vsel %vm2250, %v8431, %v8435
        %v8438 = vshrl.u32 %v8263, 16
        %v8440 = vrot.slane %v8438, 4
        %v8441 = vshll.u32 %v8263, 16
        %v8443 = vrot.slane %v8441, 5
        %v8444 = vor.u32 %v8440, %v8443
        %v8445 = vrot.slane %v8444, 4
        %v8447 = vshll.u32 %v8264, 16
        %v8449 = vrot.slane %v8447, 5
        %v8450 = vsel %vm2250, %v8445, %v8449
        %v8451 = vshrl.u32 %v8264, 16
        %v8453 = vrot.slane %v8451, 4
        %v8454 = vor.u32 %v8453, %v8449
        %v8455 = vrot.slane %v8454, 4
        %v8457 = vshll.u32 %v8265, 16
        %v8459 = vrot.slane %v8457, 5
        %v8460 = vsel %vm2250, %v8455, %v8459
        %v8462 = vshrl.u32 %v8266, 16
        %v8464 = vrot.slane %v8462, 4
        %v8465 = vshll.u32 %v8266, 16
        %v8467 = vrot.slane %v8465, 5
        %v8468 = vor.u32 %v8464, %v8467
        %v8469 = vrot.slane %v8468, 4
        %v8471 = vshll.u32 %v8267, 16
        %v8473 = vrot.slane %v8471, 5
        %v8474 = vsel %vm2250, %v8469, %v8473
        %v8475 = vshrl.u32 %v8267, 16
        %v8477 = vrot.slane %v8475, 4
        %v8478 = vor.u32 %v8477, %v8473
        %v8479 = vrot.slane %v8478, 4
        %v8481 = vshll.u32 %v8268, 16
        %v8483 = vrot.slane %v8481, 5
        %v8484 = vsel %vm2250, %v8479, %v8483
        %s8485 = scalar_lea.vmem %s5, 448
        %v8486 = vld [vmem:[%s8485] sm:$0xf]
        %v8487 = vld [vmem:[%s8485 + $0x4] sm:$0xf]
        %v8488 = vld [vmem:[%s8485 + $0x8] sm:$0xf]
        %v8489 = vld [vmem:[%s8485 + $0xc] sm:$0xf]
        %v8490 = vld [vmem:[%s8485 + $0x10] sm:$0xf]
        %v8491 = vld [vmem:[%s8485 + $0x14] sm:$0xf]
        %v8492 = vld [vmem:[%s8485 + $0x18] sm:$0xf]
        %v8493 = vld [vmem:[%s8485 + $0x1c] sm:$0xf]
        %v8494 = vld [vmem:[%s8485 + $0x20] sm:$0xf]
        %v8495 = vld [vmem:[%s8485 + $0x24] sm:$0xf]
        %v8496 = vld [vmem:[%s8485 + $0x28] sm:$0xf]
        %v8497 = vld [vmem:[%s8485 + $0x2c] sm:$0xf]
        %v8498 = vld [vmem:[%s8485 + $0x30] sm:$0xf]
        %v8499 = vld [vmem:[%s8485 + $0x34] sm:$0xf]
        %v8500 = vld [vmem:[%s8485 + $0x38] sm:$0xf]
        %v8501 = vld [vmem:[%s8485 + $0x3c] sm:$0xf]
        %v8502 = vunpack.c.l.b16 %v8282
        %v8503 = vunpack.c.l.b16 %v8292
        %v8504 = vunpack.c.l.b16 %v8306
        %v8505 = vunpack.c.l.b16 %v8316
        %v8506 = vunpack.c.l.b16 %v8330
        %v8507 = vunpack.c.l.b16 %v8340
        %v8508 = vunpack.c.l.b16 %v8354
        %v8509 = vunpack.c.l.b16 %v8364
        %v8510 = vunpack.c.l.b16 %v8378
        %v8511 = vunpack.c.l.b16 %v8388
        %v8512 = vunpack.c.l.b16 %v8402
        %v8513 = vunpack.c.l.b16 %v8412
        %v8514 = vunpack.c.l.b16 %v8426
        %v8515 = vunpack.c.l.b16 %v8436
        %v8516 = vunpack.c.l.b16 %v8450
        %v8517 = vunpack.c.l.b16 %v8460
        %v8518 = vunpack.c.l.b16 %v8474
        %v8519 = vunpack.c.l.b16 %v8484
        %v8520 = vpack.c.b16 %v8503, %v8502
        %v8521 = vpack.c.b16 %v8505, %v8504
        %v8522 = vpack.c.b16 %v8507, %v8506
        %v8523 = vpack.c.b16 %v8509, %v8508
        %v8524 = vpack.c.b16 %v8511, %v8510
        %v8525 = vpack.c.b16 %v8513, %v8512
        %v8526 = vpack.c.b16 %v8515, %v8514
        %v8527 = vpack.c.b16 %v8517, %v8516
        %v8528 = vpack.c.b16 %v8519, %v8518
        %v8554 = vunpack.c.l.b16 %v8486
        %v8555 = vunpack.c.l.b16 %v8487
        %v8556 = vunpack.c.l.b16 %v8488
        %v8557 = vunpack.c.l.b16 %v8489
        %v8558 = vunpack.c.l.b16 %v8490
        %v8559 = vunpack.c.l.b16 %v8491
        %v8560 = vunpack.c.l.b16 %v8492
        %v8561 = vunpack.c.l.b16 %v8493
        %v8562 = vunpack.c.l.b16 %v8494
        %v8563 = vunpack.c.l.b16 %v8495
        %v8564 = vunpack.c.l.b16 %v8496
        %v8565 = vunpack.c.l.b16 %v8497
        %v8566 = vunpack.c.l.b16 %v8498
        %v8567 = vunpack.c.l.b16 %v8499
        %v8568 = vunpack.c.l.b16 %v8500
        %v8569 = vunpack.c.l.b16 %v8501
        %v8570 = vpack.c.b16 %v8555, %v8554
        %v8571 = vpack.c.b16 %v8557, %v8556
        %v8572 = vpack.c.b16 %v8559, %v8558
        %v8573 = vpack.c.b16 %v8561, %v8560
        %v8574 = vpack.c.b16 %v8563, %v8562
        %v8575 = vpack.c.b16 %v8565, %v8564
        %v8576 = vpack.c.b16 %v8567, %v8566
        %v8577 = vpack.c.b16 %v8569, %v8568
        %8586 = vmatprep.subr.bf16.mxu0 0
        %8587 = vmatpush1.bf16.msra.mxu0 %v8570
        %8588 = vmatprep.subr.bf16.mxu0 0
        %8589 = vmatpush1.bf16.msra.mxu0 %v8571
        %8590 = vmatprep.subr.bf16.mxu0 0
        %8591 = vmatpush1.bf16.msra.mxu0 %v8572
        %8592 = vmatprep.subr.bf16.mxu0 0
        %8593 = vmatpush1.bf16.msra.mxu0 %v8573
        %8594 = vmatprep.subr.bf16.mxu0 0
        %8595 = vmatpush1.bf16.msra.mxu0 %v8574
        %8596 = vmatprep.subr.bf16.mxu0 0
        %8597 = vmatpush1.bf16.msra.mxu0 %v8575
        %8598 = vmatprep.subr.bf16.mxu0 0
        %8599 = vmatpush1.bf16.msra.mxu0 %v8576
        %8600 = vmatprep.subr.bf16.mxu0 0
        %8601 = vmatpush1.bf16.msra.mxu0 %v8577
        %8602 = vmatprep.subr.bf16.mxu0 0
        %8603 = vmatpush1.bf16.msra.mxu0 0
        %8604 = vmatprep.subr.bf16.mxu0 0
        %8605 = vmatpush1.bf16.msra.mxu0 0
        %8606 = vmatprep.subr.bf16.mxu0 0
        %8607 = vmatpush1.bf16.msra.mxu0 0
        %8608 = vmatprep.subr.bf16.mxu0 0
        %8609 = vmatpush1.bf16.msra.mxu0 0
        %8610 = vmatprep.subr.bf16.mxu0 0
        %8611 = vmatpush1.bf16.msra.mxu0 0
        %8612 = vmatprep.subr.bf16.mxu0 0
        %8613 = vmatpush1.bf16.msra.mxu0 0
        %8614 = vmatprep.subr.bf16.mxu0 0
        %8615 = vmatpush1.bf16.msra.mxu0 0
        %8616 = vmatprep.subr.bf16.mxu0 0
        %8617 = vmatpush1.bf16.msra.mxu0 0
        %8618 = vmatprep.mubr.bf16.mxu0 0
        %8619 = vmatmul.mubr.bf16.gmra.mrb[0].mxu0 %v8520
        %v8620 = vpop.f32.mrb[0].mxu0
        %v8621 = vadd.f32 0.0, %v8620
        %v8622 = vpop.f32.mrb[0].mxu0
        %v8623 = vpop.f32.mrb[0].mxu0
        %v8624 = vadd.f32 0.0, %v8623
        %v8625 = vpop.f32.mrb[0].mxu0
        %8626 = vmatprep.mubr.bf16.mxu0 0
        %8627 = vmatmul.mubr.bf16.gmra.mrb[0].mxu0 %v8521
        %v8628 = vpop.f32.mrb[0].mxu0
        %v8629 = vadd.f32 0.0, %v8628
        %v8630 = vpop.f32.mrb[0].mxu0
        %v8631 = vpop.f32.mrb[0].mxu0
        %v8632 = vadd.f32 0.0, %v8631
        %v8633 = vpop.f32.mrb[0].mxu0
        %8634 = vmatprep.mubr.bf16.mxu0 0
        %8635 = vmatmul.mubr.bf16.gmra.mrb[0].mxu0 %v8522
        %v8636 = vpop.f32.mrb[0].mxu0
        %v8637 = vadd.f32 0.0, %v8636
        %v8638 = vpop.f32.mrb[0].mxu0
        %v8639 = vpop.f32.mrb[0].mxu0
        %v8640 = vadd.f32 0.0, %v8639
        %v8641 = vpop.f32.mrb[0].mxu0
        %8642 = vmatprep.mubr.bf16.mxu0 0
        %8643 = vmatmul.mubr.bf16.gmra.mrb[0].mxu0 %v8523
        %v8644 = vpop.f32.mrb[0].mxu0
        %v8645 = vadd.f32 0.0, %v8644
        %v8646 = vpop.f32.mrb[0].mxu0
        %v8647 = vpop.f32.mrb[0].mxu0
        %v8648 = vadd.f32 0.0, %v8647
        %v8649 = vpop.f32.mrb[0].mxu0
        %8650 = vmatprep.mubr.bf16.mxu0 0
        %8651 = vmatmul.mubr.bf16.gmra.mrb[0].mxu0 %v8524
        %v8652 = vpop.f32.mrb[0].mxu0
        %v8653 = vadd.f32 0.0, %v8652
        %v8654 = vpop.f32.mrb[0].mxu0
        %v8655 = vpop.f32.mrb[0].mxu0
        %v8656 = vadd.f32 0.0, %v8655
        %v8657 = vpop.f32.mrb[0].mxu0
        %8658 = vmatprep.mubr.bf16.mxu0 0
        %8659 = vmatmul.mubr.bf16.gmra.mrb[0].mxu0 %v8525
        %v8660 = vpop.f32.mrb[0].mxu0
        %v8661 = vadd.f32 0.0, %v8660
        %v8662 = vpop.f32.mrb[0].mxu0
        %v8663 = vpop.f32.mrb[0].mxu0
        %v8664 = vadd.f32 0.0, %v8663
        %v8665 = vpop.f32.mrb[0].mxu0
        %8666 = vmatprep.mubr.bf16.mxu0 0
        %8667 = vmatmul.mubr.bf16.gmra.mrb[0].mxu0 %v8526
        %v8668 = vpop.f32.mrb[0].mxu0
        %v8669 = vadd.f32 0.0, %v8668
        %v8670 = vpop.f32.mrb[0].mxu0
        %v8671 = vpop.f32.mrb[0].mxu0
        %v8672 = vadd.f32 0.0, %v8671
        %v8673 = vpop.f32.mrb[0].mxu0
        %8674 = vmatprep.mubr.bf16.mxu0 0
        %8675 = vmatmul.mubr.bf16.gmra.mrb[0].mxu0 %v8527
        %v8676 = vpop.f32.mrb[0].mxu0
        %v8677 = vadd.f32 0.0, %v8676
        %v8678 = vpop.f32.mrb[0].mxu0
        %v8679 = vpop.f32.mrb[0].mxu0
        %v8680 = vadd.f32 0.0, %v8679
        %v8681 = vpop.f32.mrb[0].mxu0
        %8682 = vmatprep.mubr.bf16.mxu0 0
        %8683 = vmatmul.mubr.bf16.gmra.mrb[0].mxu0 %v8528
        %v8684 = vpop.f32.mrb[0].mxu0
        %v8685 = vadd.f32 0.0, %v8684
        %v8686 = vpop.f32.mrb[0].mxu0
        %v8687 = vpop.f32.mrb[0].mxu0
        %v8688 = vadd.f32 0.0, %v8687
        %v8689 = vpop.f32.mrb[0].mxu0
        %8690 = vdwg.mxu0
        %v8691 = vadd.f32 %v8224, %v8621
        %v8692 = vadd.f32 %v8225, %v8624
        %v8693 = vadd.f32 %v8226, %v8629
        %v8694 = vadd.f32 %v8227, %v8632
        %v8695 = vadd.f32 %v8228, %v8637
        %v8696 = vadd.f32 %v8229, %v8640
        %v8697 = vadd.f32 %v8230, %v8645
        %v8698 = vadd.f32 %v8231, %v8648
        %v8699 = vadd.f32 %v8232, %v8653
        %v8700 = vadd.f32 %v8233, %v8656
        %v8701 = vadd.f32 %v8234, %v8661
        %v8702 = vadd.f32 %v8235, %v8664
        %v8703 = vadd.f32 %v8236, %v8669
        %v8704 = vadd.f32 %v8237, %v8672
        %v8705 = vadd.f32 %v8238, %v8677
        %v8706 = vadd.f32 %v8239, %v8680
        %v8707 = vadd.f32 %v8240, %v8685
        %v8708 = vadd.f32 %v8241, %v8688
        %v8709 = vld [vmem:[%s7981] sm:$0xe]
        %v8710 = vld [vmem:[%s7981 + $0xc] sm:$0xe]
        %v8711 = vld [vmem:[%s7981 + $0x18] sm:$0xe]
        %v8712 = vld [vmem:[%s7981 + $0x24] sm:$0xe]
        %v8713 = vld [vmem:[%s7981 + $0x30] sm:$0xe]
        %v8714 = vld [vmem:[%s7981 + $0x3c] sm:$0xe]
        %v8715 = vld [vmem:[%s7981 + $0x48] sm:$0xe]
        %v8716 = vld [vmem:[%s7981 + $0x54] sm:$0xe]
        %v8717 = vld [vmem:[%s7981 + $0x60] sm:$0xe]
        %v8745 = vrot.slane %v8709, 5
        %v8746 = vrot.slane %v8745, 4
        %v8747 = vrot.slane %v8243, 5
        %v8748 = vsel %vm3015, %v8746, %v8747
        %v8749 = vrot.slane %v8747, 4
        %v8750 = vrot.slane %v8244, 5
        %v8751 = vsel %vm3015, %v8749, %v8750
        %v8752 = vrot.slane %v8710, 5
        %v8753 = vrot.slane %v8752, 4
        %v8754 = vrot.slane %v8246, 5
        %v8755 = vsel %vm3015, %v8753, %v8754
        %v8756 = vrot.slane %v8754, 4
        %v8757 = vrot.slane %v8247, 5
        %v8758 = vsel %vm3015, %v8756, %v8757
        %v8759 = vrot.slane %v8711, 5
        %v8760 = vrot.slane %v8759, 4
        %v8761 = vrot.slane %v8249, 5
        %v8762 = vsel %vm3015, %v8760, %v8761
        %v8763 = vrot.slane %v8761, 4
        %v8764 = vrot.slane %v8250, 5
        %v8765 = vsel %vm3015, %v8763, %v8764
        %v8766 = vrot.slane %v8712, 5
        %v8767 = vrot.slane %v8766, 4
        %v8768 = vrot.slane %v8252, 5
        %v8769 = vsel %vm3015, %v8767, %v8768
        %v8770 = vrot.slane %v8768, 4
        %v8771 = vrot.slane %v8253, 5
        %v8772 = vsel %vm3015, %v8770, %v8771
        %v8773 = vrot.slane %v8713, 5
        %v8774 = vrot.slane %v8773, 4
        %v8775 = vrot.slane %v8255, 5
        %v8776 = vsel %vm3015, %v8774, %v8775
        %v8777 = vrot.slane %v8775, 4
        %v8778 = vrot.slane %v8256, 5
        %v8779 = vsel %vm3015, %v8777, %v8778
        %v8780 = vrot.slane %v8714, 5
        %v8781 = vrot.slane %v8780, 4
        %v8782 = vrot.slane %v8258, 5
        %v8783 = vsel %vm3015, %v8781, %v8782
        %v8784 = vrot.slane %v8782, 4
        %v8785 = vrot.slane %v8259, 5
        %v8786 = vsel %vm3015, %v8784, %v8785
        %v8787 = vrot.slane %v8715, 5
        %v8788 = vrot.slane %v8787, 4
        %v8789 = vrot.slane %v8261, 5
        %v8790 = vsel %vm3015, %v8788, %v8789
        %v8791 = vrot.slane %v8789, 4
        %v8792 = vrot.slane %v8262, 5
        %v8793 = vsel %vm3015, %v8791, %v8792
        %v8794 = vrot.slane %v8716, 5
        %v8795 = vrot.slane %v8794, 4
        %v8796 = vrot.slane %v8264, 5
        %v8797 = vsel %vm3015, %v8795, %v8796
        %v8798 = vrot.slane %v8796, 4
        %v8799 = vrot.slane %v8265, 5
        %v8800 = vsel %vm3015, %v8798, %v8799
        %v8801 = vrot.slane %v8717, 5
        %v8802 = vrot.slane %v8801, 4
        %v8803 = vrot.slane %v8267, 5
        %v8804 = vsel %vm3015, %v8802, %v8803
        %v8805 = vrot.slane %v8803, 4
        %v8806 = vrot.slane %v8268, 5
        %v8807 = vsel %vm3015, %v8805, %v8806
        %s8808 = scalar_lea.vmem %s5, 512
        %v8809 = vld [vmem:[%s8808] sm:$0xf]
        %v8810 = vld [vmem:[%s8808 + $0x4] sm:$0xf]
        %v8811 = vld [vmem:[%s8808 + $0x8] sm:$0xf]
        %v8812 = vld [vmem:[%s8808 + $0xc] sm:$0xf]
        %v8813 = vld [vmem:[%s8808 + $0x10] sm:$0xf]
        %v8814 = vld [vmem:[%s8808 + $0x14] sm:$0xf]
        %v8815 = vld [vmem:[%s8808 + $0x18] sm:$0xf]
        %v8816 = vld [vmem:[%s8808 + $0x1c] sm:$0xf]
        %v8817 = vld [vmem:[%s8808 + $0x20] sm:$0xf]
        %v8818 = vld [vmem:[%s8808 + $0x24] sm:$0xf]
        %v8819 = vld [vmem:[%s8808 + $0x28] sm:$0xf]
        %v8820 = vld [vmem:[%s8808 + $0x2c] sm:$0xf]
        %v8821 = vld [vmem:[%s8808 + $0x30] sm:$0xf]
        %v8822 = vld [vmem:[%s8808 + $0x34] sm:$0xf]
        %v8823 = vld [vmem:[%s8808 + $0x38] sm:$0xf]
        %v8824 = vld [vmem:[%s8808 + $0x3c] sm:$0xf]
        %v8825 = vunpack.c.l.b16 %v8748
        %v8826 = vunpack.c.l.b16 %v8751
        %v8827 = vunpack.c.l.b16 %v8755
        %v8828 = vunpack.c.l.b16 %v8758
        %v8829 = vunpack.c.l.b16 %v8762
        %v8830 = vunpack.c.l.b16 %v8765
        %v8831 = vunpack.c.l.b16 %v8769
        %v8832 = vunpack.c.l.b16 %v8772
        %v8833 = vunpack.c.l.b16 %v8776
        %v8834 = vunpack.c.l.b16 %v8779
        %v8835 = vunpack.c.l.b16 %v8783
        %v8836 = vunpack.c.l.b16 %v8786
        %v8837 = vunpack.c.l.b16 %v8790
        %v8838 = vunpack.c.l.b16 %v8793
        %v8839 = vunpack.c.l.b16 %v8797
        %v8840 = vunpack.c.l.b16 %v8800
        %v8841 = vunpack.c.l.b16 %v8804
        %v8842 = vunpack.c.l.b16 %v8807
        %v8843 = vpack.c.b16 %v8826, %v8825
        %v8844 = vpack.c.b16 %v8828, %v8827
        %v8845 = vpack.c.b16 %v8830, %v8829
        %v8846 = vpack.c.b16 %v8832, %v8831
        %v8847 = vpack.c.b16 %v8834, %v8833
        %v8848 = vpack.c.b16 %v8836, %v8835
        %v8849 = vpack.c.b16 %v8838, %v8837
        %v8850 = vpack.c.b16 %v8840, %v8839
        %v8851 = vpack.c.b16 %v8842, %v8841
        %v8877 = vunpack.c.l.b16 %v8809
        %v8878 = vunpack.c.l.b16 %v8810
        %v8879 = vunpack.c.l.b16 %v8811
        %v8880 = vunpack.c.l.b16 %v8812
        %v8881 = vunpack.c.l.b16 %v8813
        %v8882 = vunpack.c.l.b16 %v8814
        %v8883 = vunpack.c.l.b16 %v8815
        %v8884 = vunpack.c.l.b16 %v8816
        %v8885 = vunpack.c.l.b16 %v8817
        %v8886 = vunpack.c.l.b16 %v8818
        %v8887 = vunpack.c.l.b16 %v8819
        %v8888 = vunpack.c.l.b16 %v8820
        %v8889 = vunpack.c.l.b16 %v8821
        %v8890 = vunpack.c.l.b16 %v8822
        %v8891 = vunpack.c.l.b16 %v8823
        %v8892 = vunpack.c.l.b16 %v8824
        %v8893 = vpack.c.b16 %v8878, %v8877
        %v8894 = vpack.c.b16 %v8880, %v8879
        %v8895 = vpack.c.b16 %v8882, %v8881
        %v8896 = vpack.c.b16 %v8884, %v8883
        %v8897 = vpack.c.b16 %v8886, %v8885
        %v8898 = vpack.c.b16 %v8888, %v8887
        %v8899 = vpack.c.b16 %v8890, %v8889
        %v8900 = vpack.c.b16 %v8892, %v8891
        %8909 = vmatprep.subr.bf16.mxu0 0
        %8910 = vmatpush1.bf16.msra.mxu0 %v8893
        %8911 = vmatprep.subr.bf16.mxu0 0
        %8912 = vmatpush1.bf16.msra.mxu0 %v8894
        %8913 = vmatprep.subr.bf16.mxu0 0
        %8914 = vmatpush1.bf16.msra.mxu0 %v8895
        %8915 = vmatprep.subr.bf16.mxu0 0
        %8916 = vmatpush1.bf16.msra.mxu0 %v8896
        %8917 = vmatprep.subr.bf16.mxu0 0
        %8918 = vmatpush1.bf16.msra.mxu0 %v8897
        %8919 = vmatprep.subr.bf16.mxu0 0
        %8920 = vmatpush1.bf16.msra.mxu0 %v8898
        %8921 = vmatprep.subr.bf16.mxu0 0
        %8922 = vmatpush1.bf16.msra.mxu0 %v8899
        %8923 = vmatprep.subr.bf16.mxu0 0
        %8924 = vmatpush1.bf16.msra.mxu0 %v8900
        %8925 = vmatprep.subr.bf16.mxu0 0
        %8926 = vmatpush1.bf16.msra.mxu0 0
        %8927 = vmatprep.subr.bf16.mxu0 0
        %8928 = vmatpush1.bf16.msra.mxu0 0
        %8929 = vmatprep.subr.bf16.mxu0 0
        %8930 = vmatpush1.bf16.msra.mxu0 0
        %8931 = vmatprep.subr.bf16.mxu0 0
        %8932 = vmatpush1.bf16.msra.mxu0 0
        %8933 = vmatprep.subr.bf16.mxu0 0
        %8934 = vmatpush1.bf16.msra.mxu0 0
        %8935 = vmatprep.subr.bf16.mxu0 0
        %8936 = vmatpush1.bf16.msra.mxu0 0
        %8937 = vmatprep.subr.bf16.mxu0 0
        %8938 = vmatpush1.bf16.msra.mxu0 0
        %8939 = vmatprep.subr.bf16.mxu0 0
        %8940 = vmatpush1.bf16.msra.mxu0 0
        %8941 = vmatprep.mubr.bf16.mxu0 0
        %8942 = vmatmul.mubr.bf16.gmra.mrb[0].mxu0 %v8843
        %v8943 = vpop.f32.mrb[0].mxu0
        %v8944 = vadd.f32 0.0, %v8943
        %v8945 = vpop.f32.mrb[0].mxu0
        %v8946 = vpop.f32.mrb[0].mxu0
        %v8947 = vadd.f32 0.0, %v8946
        %v8948 = vpop.f32.mrb[0].mxu0
        %8949 = vmatprep.mubr.bf16.mxu0 0
        %8950 = vmatmul.mubr.bf16.gmra.mrb[0].mxu0 %v8844
        %v8951 = vpop.f32.mrb[0].mxu0
        %v8952 = vadd.f32 0.0, %v8951
        %v8953 = vpop.f32.mrb[0].mxu0
        %v8954 = vpop.f32.mrb[0].mxu0
        %v8955 = vadd.f32 0.0, %v8954
        %v8956 = vpop.f32.mrb[0].mxu0
        %8957 = vmatprep.mubr.bf16.mxu0 0
        %8958 = vmatmul.mubr.bf16.gmra.mrb[0].mxu0 %v8845
        %v8959 = vpop.f32.mrb[0].mxu0
        %v8960 = vadd.f32 0.0, %v8959
        %v8961 = vpop.f32.mrb[0].mxu0
        %v8962 = vpop.f32.mrb[0].mxu0
        %v8963 = vadd.f32 0.0, %v8962
        %v8964 = vpop.f32.mrb[0].mxu0
        %8965 = vmatprep.mubr.bf16.mxu0 0
        %8966 = vmatmul.mubr.bf16.gmra.mrb[0].mxu0 %v8846
        %v8967 = vpop.f32.mrb[0].mxu0
        %v8968 = vadd.f32 0.0, %v8967
        %v8969 = vpop.f32.mrb[0].mxu0
        %v8970 = vpop.f32.mrb[0].mxu0
        %v8971 = vadd.f32 0.0, %v8970
        %v8972 = vpop.f32.mrb[0].mxu0
        %8973 = vmatprep.mubr.bf16.mxu0 0
        %8974 = vmatmul.mubr.bf16.gmra.mrb[0].mxu0 %v8847
        %v8975 = vpop.f32.mrb[0].mxu0
        %v8976 = vadd.f32 0.0, %v8975
        %v8977 = vpop.f32.mrb[0].mxu0
        %v8978 = vpop.f32.mrb[0].mxu0
        %v8979 = vadd.f32 0.0, %v8978
        %v8980 = vpop.f32.mrb[0].mxu0
        %8981 = vmatprep.mubr.bf16.mxu0 0
        %8982 = vmatmul.mubr.bf16.gmra.mrb[0].mxu0 %v8848
        %v8983 = vpop.f32.mrb[0].mxu0
        %v8984 = vadd.f32 0.0, %v8983
        %v8985 = vpop.f32.mrb[0].mxu0
        %v8986 = vpop.f32.mrb[0].mxu0
        %v8987 = vadd.f32 0.0, %v8986
        %v8988 = vpop.f32.mrb[0].mxu0
        %8989 = vmatprep.mubr.bf16.mxu0 0
        %8990 = vmatmul.mubr.bf16.gmra.mrb[0].mxu0 %v8849
        %v8991 = vpop.f32.mrb[0].mxu0
        %v8992 = vadd.f32 0.0, %v8991
        %v8993 = vpop.f32.mrb[0].mxu0
        %v8994 = vpop.f32.mrb[0].mxu0
        %v8995 = vadd.f32 0.0, %v8994
        %v8996 = vpop.f32.mrb[0].mxu0
        %8997 = vmatprep.mubr.bf16.mxu0 0
        %8998 = vmatmul.mubr.bf16.gmra.mrb[0].mxu0 %v8850
        %v8999 = vpop.f32.mrb[0].mxu0
        %v9000 = vadd.f32 0.0, %v8999
        %v9001 = vpop.f32.mrb[0].mxu0
        %v9002 = vpop.f32.mrb[0].mxu0
        %v9003 = vadd.f32 0.0, %v9002
        %v9004 = vpop.f32.mrb[0].mxu0
        %9005 = vmatprep.mubr.bf16.mxu0 0
        %9006 = vmatmul.mubr.bf16.gmra.mrb[0].mxu0 %v8851
        %v9007 = vpop.f32.mrb[0].mxu0
        %v9008 = vadd.f32 0.0, %v9007
        %v9009 = vpop.f32.mrb[0].mxu0
        %v9010 = vpop.f32.mrb[0].mxu0
        %v9011 = vadd.f32 0.0, %v9010
        %v9012 = vpop.f32.mrb[0].mxu0
        %9013 = vdwg.mxu0
        %v9014 = vadd.f32 %v8691, %v8944
        %v9015 = vadd.f32 %v8692, %v8947
        %v9016 = vadd.f32 %v8693, %v8952
        %v9017 = vadd.f32 %v8694, %v8955
        %v9018 = vadd.f32 %v8695, %v8960
        %v9019 = vadd.f32 %v8696, %v8963
        %v9020 = vadd.f32 %v8697, %v8968
        %v9021 = vadd.f32 %v8698, %v8971
        %v9022 = vadd.f32 %v8699, %v8976
        %v9023 = vadd.f32 %v8700, %v8979
        %v9024 = vadd.f32 %v8701, %v8984
        %v9025 = vadd.f32 %v8702, %v8987
        %v9026 = vadd.f32 %v8703, %v8992
        %v9027 = vadd.f32 %v8704, %v8995
        %v9028 = vadd.f32 %v8705, %v9000
        %v9029 = vadd.f32 %v8706, %v9003
        %v9030 = vadd.f32 %v8707, %v9008
        %v9031 = vadd.f32 %v8708, %v9011
        %v9032 = vld [vmem:[%s7] sm:$0xff]
        %v9033 = vld [vmem:[%s7 + $0x8] sm:$0xff]
        %v9034 = vld [vmem:[%s7 + $0x10] sm:$0xff]
        %v9035 = vld [vmem:[%s7 + $0x18] sm:$0xff]
        %v9036 = vld [vmem:[%s7 + $0x20] sm:$0xff]
        %v9037 = vld [vmem:[%s7 + $0x28] sm:$0xff]
        %v9038 = vld [vmem:[%s7 + $0x30] sm:$0xff]
        %v9039 = vld [vmem:[%s7 + $0x38] sm:$0xff]
        %v9040 = vld [vmem:[%s7 + $0x40] sm:$0xff]
        %v9041 = vld [vmem:[%s7 + $0x48] sm:$0xff]
        %v9042 = vld [vmem:[%s6] sm:$0x1]
        %v9044 = vlaneseq
        %v9045 = vshrl.u32 %v9044, 7
        %v9046 = vsub.s32 0, %v9045
        %v9047 = vrot.slane %v9042, %v9046
        %vm9049 = vcmask 130048
        %v9051 = vsel %vm9049, %v9033, 0
        %v9054 = vsel %vm9049, %v9035, 0
        %v9057 = vsel %vm9049, %v9037, 0
        %v9060 = vsel %vm9049, %v9039, 0
        %v9063 = vsel %vm9049, %v9041, 0
        %9065 = vmatprep.subr.mxu0 0.0
        %9066 = vmatpush1.msra.mxu0 %v9014
        %9067 = vmatprep.subr.mxu0 0.0
        %9068 = vmatpush1.msra.mxu0 %v9015
        %9069 = vmatprep.subr.mxu0 0.0
        %9070 = vmatpush1.msra.mxu0 %v9016
        %9071 = vmatprep.subr.mxu0 0.0
        %9072 = vmatpush1.msra.mxu0 %v9017
        %9073 = vmatprep.subr.mxu0 0.0
        %9074 = vmatpush1.msra.mxu0 %v9018
        %9075 = vmatprep.subr.mxu0 0.0
        %9076 = vmatpush1.msra.mxu0 %v9019
        %9077 = vmatprep.subr.mxu0 0.0
        %9078 = vmatpush1.msra.mxu0 %v9020
        %9079 = vmatprep.subr.mxu0 0.0
        %9080 = vmatpush1.msra.mxu0 %v9021
        %9081 = vmatprep.subr.mxu0 0.0
        %9082 = vmatpush1.msra.mxu0 %v9022
        %9083 = vmatprep.subr.mxu0 0.0
        %9084 = vmatpush1.msra.mxu0 %v9023
        %9085 = vmatprep.subr.mxu0 0.0
        %9086 = vmatpush1.msra.mxu0 %v9024
        %9087 = vmatprep.subr.mxu0 0.0
        %9088 = vmatpush1.msra.mxu0 %v9025
        %9089 = vmatprep.subr.mxu0 0.0
        %9090 = vmatpush1.msra.mxu0 %v9026
        %9091 = vmatprep.subr.mxu0 0.0
        %9092 = vmatpush1.msra.mxu0 %v9027
        %9093 = vmatprep.subr.mxu0 0.0
        %9094 = vmatpush1.msra.mxu0 %v9028
        %9095 = vmatprep.subr.mxu0 0.0
        %9096 = vmatpush1.msra.mxu0 %v9029
        %9097 = vmatprep.subr.mxu0 0.0
        %9098 = vmatpush1.msra.mxu0 %v9030
        %9099 = vmatprep.subr.mxu0 0.0
        %9100 = vmatpush1.msra.mxu0 %v9031
        %9101 = vmatprep.subr.mxu0 0.0
        %9102 = vmatpush1.msra.mxu0 0.0
        %9103 = vmatprep.subr.mxu0 0.0
        %9104 = vmatpush1.msra.mxu0 0.0
        %9105 = vmatprep.subr.mxu0 0.0
        %9106 = vmatpush1.msra.mxu0 0.0
        %9107 = vmatprep.subr.mxu0 0.0
        %9108 = vmatpush1.msra.mxu0 0.0
        %9109 = vmatprep.subr.mxu0 0.0
        %9110 = vmatpush1.msra.mxu0 0.0
        %9111 = vmatprep.subr.mxu0 0.0
        %9112 = vmatpush1.msra.mxu0 0.0
        %9113 = vmatprep.subr.mxu0 0.0
        %9114 = vmatpush1.msra.mxu0 0.0
        %9115 = vmatprep.subr.mxu0 0.0
        %9116 = vmatpush1.msra.mxu0 0.0
        %9117 = vmatprep.subr.mxu0 0.0
        %9118 = vmatpush1.msra.mxu0 0.0
        %9119 = vmatprep.subr.mxu0 0.0
        %9120 = vmatpush1.msra.mxu0 0.0
        %9121 = vmatprep.subr.mxu0 0.0
        %9122 = vmatpush1.msra.mxu0 0.0
        %9123 = vmatprep.subr.mxu0 0.0
        %9124 = vmatpush1.msra.mxu0 0.0
        %9125 = vmatprep.subr.mxu0 0.0
        %9126 = vmatpush1.msra.mxu0 0.0
        %9127 = vmatprep.subr.mxu0 0.0
        %9128 = vmatpush1.msra.mxu0 0.0
        %9129 = vmatprep.mubr.f32.mxu0 %v9051
        %9130 = vmatmul.mubr.f32.gmra.mrb[0].mxu0 %v9032
        %v9131 = vpop.f32.mrb[0].mxu0
        %v9132 = vadd.f32 %v9047, %v9131
        %v9133 = vpop.f32.mrb[0].mxu0
        %9134 = vmatprep.mubr.f32.mxu0 %v9054
        %9135 = vmatmul.mubr.f32.gmra.mrb[0].mxu0 %v9034
        %v9136 = vpop.f32.mrb[0].mxu0
        %v9137 = vadd.f32 %v9047, %v9136
        %v9138 = vpop.f32.mrb[0].mxu0
        %9139 = vmatprep.mubr.f32.mxu0 %v9057
        %9140 = vmatmul.mubr.f32.gmra.mrb[0].mxu0 %v9036
        %v9141 = vpop.f32.mrb[0].mxu0
        %v9142 = vadd.f32 %v9047, %v9141
        %v9143 = vpop.f32.mrb[0].mxu0
        %9144 = vmatprep.mubr.f32.mxu0 %v9060
        %9145 = vmatmul.mubr.f32.gmra.mrb[0].mxu0 %v9038
        %v9146 = vpop.f32.mrb[0].mxu0
        %v9147 = vadd.f32 %v9047, %v9146
        %v9148 = vpop.f32.mrb[0].mxu0
        %9149 = vmatprep.mubr.f32.mxu0 %v9063
        %9150 = vmatmul.mubr.f32.gmra.mrb[0].mxu0 %v9040
        %v9151 = vpop.f32.mrb[0].mxu0
        %v9152 = vadd.f32 %v9047, %v9151
        %v9153 = vpop.f32.mrb[0].mxu0
        %9154 = vdwg.mxu0
        %v9155 = vmax.f32 %v9132, 0.0
        %v9156 = vmax.f32 %v9137, 0.0
        %v9157 = vmax.f32 %v9142, 0.0
        %v9158 = vmax.f32 %v9147, 0.0
        %v9159 = vmax.f32 %v9152, 0.0
        %v9160 = vpack.c.bf16 %v9155, %v9155
        %v9161 = vpack.c.bf16 %v9156, %v9156
        %v9162 = vpack.c.bf16 %v9157, %v9157
        %v9163 = vpack.c.bf16 %v9158, %v9158
        %v9164 = vpack.c.bf16 %v9159, %v9159
        %9165 = vst [vmem:[#allocation4] sm:$0xf] %v9160
        %9166 = vst [vmem:[#allocation4 + $0x8] sm:$0xf] %v9161
        %9167 = vst [vmem:[#allocation4 + $0x10] sm:$0xf] %v9162
        %9168 = vst [vmem:[#allocation4 + $0x18] sm:$0xf] %v9163
        %9169 = vst [vmem:[#allocation4 + $0x20] sm:$0xf] %v9164
        %v9170 = vld [vmem:[#allocation4] sm:$0xf]
        %v9171 = vld [vmem:[#allocation4 + $0x8] sm:$0xf]
        %v9172 = vld [vmem:[#allocation4 + $0x10] sm:$0xf]
        %v9173 = vld [vmem:[%s8] sm:$0xf]
        %v9174 = vld [vmem:[%s8 + $0x4] sm:$0xf]
        %v9175 = vld [vmem:[%s8 + $0x8] sm:$0xf]
        %v9176 = vld [vmem:[%s8 + $0xc] sm:$0xf]
        %v9177 = vld [vmem:[%s8 + $0x10] sm:$0xf]
        %v9178 = vld [vmem:[%s8 + $0x14] sm:$0xf]
        %v9179 = vld [vmem:[%s8 + $0x18] sm:$0xf]
        %v9180 = vld [vmem:[%s8 + $0x1c] sm:$0xf]
        %v9181 = vld [vmem:[%s8 + $0x20] sm:$0xf]
        %v9182 = vld [vmem:[%s8 + $0x24] sm:$0xf]
        %v9183 = vld [vmem:[%s8 + $0x28] sm:$0xf]
        %v9184 = vld [vmem:[%s8 + $0x2c] sm:$0xf]
        %v9185 = vld [vmem:[%s8 + $0x30] sm:$0xf]
        %v9186 = vld [vmem:[%s8 + $0x34] sm:$0xf]
        %v9187 = vld [vmem:[%s8 + $0x38] sm:$0xf]
        %v9188 = vld [vmem:[%s8 + $0x3c] sm:$0xf]
        %v9189 = vld [vmem:[#allocation4] sm:$0x1f]
        %v9190 = vld [vmem:[#allocation4 + $0x8] sm:$0x1f]
        %v9191 = vld [vmem:[#allocation4 + $0x10] sm:$0x1f]
        %v9195 = vunpack.c.l.b16 %v9189
        %v9196 = vunpack.c.h.b16 %v9189
        %v9197 = vunpack.c.l.b16 %v9190
        %v9198 = vunpack.c.h.b16 %v9190
        %v9199 = vunpack.c.l.b16 %v9191
        %v9200 = vunpack.c.h.b16 %v9191
        %v9201 = vpack.c.b16 %v9195, %v9195
        %v9202 = vpack.c.b16 %v9196, %v9196
        %v9203 = vpack.c.b16 %v9197, %v9197
        %v9204 = vpack.c.b16 %v9198, %v9198
        %v9205 = vpack.c.b16 %v9199, %v9199
        %v9206 = vpack.c.b16 %v9200, %v9200
        %v9208 = vshrl.u32 %v9201, 16
        %v9210 = vrot.slane %v9208, 4
        %v9211 = vshll.u32 %v9201, 16
        %v9213 = vrot.slane %v9211, 5
        %v9214 = vor.u32 %v9210, %v9213
        %v9215 = vrot.slane %v9214, 4
        %v9217 = vshll.u32 %v9202, 16
        %v9219 = vrot.slane %v9217, 5
        %v9220 = vsel %vm2250, %v9215, %v9219
        %v9222 = vshrl.u32 %v9203, 16
        %v9224 = vrot.slane %v9222, 4
        %v9225 = vshll.u32 %v9203, 16
        %v9227 = vrot.slane %v9225, 5
        %v9228 = vor.u32 %v9224, %v9227
        %v9229 = vrot.slane %v9228, 4
        %v9231 = vshll.u32 %v9204, 16
        %v9233 = vrot.slane %v9231, 5
        %v9234 = vsel %vm2250, %v9229, %v9233
        %v9236 = vshrl.u32 %v9205, 16
        %v9238 = vrot.slane %v9236, 4
        %v9239 = vshll.u32 %v9205, 16
        %v9241 = vrot.slane %v9239, 5
        %v9242 = vor.u32 %v9238, %v9241
        %v9243 = vrot.slane %v9242, 4
        %v9245 = vshll.u32 %v9206, 16
        %v9247 = vrot.slane %v9245, 5
        %v9248 = vsel %vm2250, %v9243, %v9247
        %s9249 = scalar_lea.vmem %s8, 64
        %v9250 = vld [vmem:[%s9249] sm:$0xf]
        %v9251 = vld [vmem:[%s9249 + $0x4] sm:$0xf]
        %v9252 = vld [vmem:[%s9249 + $0x8] sm:$0xf]
        %v9253 = vld [vmem:[%s9249 + $0xc] sm:$0xf]
        %v9254 = vld [vmem:[%s9249 + $0x10] sm:$0xf]
        %v9255 = vld [vmem:[%s9249 + $0x14] sm:$0xf]
        %v9256 = vld [vmem:[%s9249 + $0x18] sm:$0xf]
        %v9257 = vld [vmem:[%s9249 + $0x1c] sm:$0xf]
        %v9258 = vld [vmem:[%s9249 + $0x20] sm:$0xf]
        %v9259 = vld [vmem:[%s9249 + $0x24] sm:$0xf]
        %v9260 = vld [vmem:[%s9249 + $0x28] sm:$0xf]
        %v9261 = vld [vmem:[%s9249 + $0x2c] sm:$0xf]
        %v9262 = vld [vmem:[%s9249 + $0x30] sm:$0xf]
        %v9263 = vld [vmem:[%s9249 + $0x34] sm:$0xf]
        %v9264 = vld [vmem:[%s9249 + $0x38] sm:$0xf]
        %v9265 = vld [vmem:[%s9249 + $0x3c] sm:$0xf]
        %v9266 = vunpack.c.l.b16 %v9220
        %v9267 = vunpack.c.l.b16 %v9234
        %v9268 = vunpack.c.l.b16 %v9248
        %v9269 = vpack.c.b16 %v9267, %v9266
        %v9270 = vpack.c.b16 %v9268, %v9268
        %v9289 = vunpack.c.l.b16 %v9250
        %v9290 = vunpack.c.l.b16 %v9251
        %v9291 = vunpack.c.l.b16 %v9252
        %v9292 = vunpack.c.l.b16 %v9253
        %v9293 = vunpack.c.l.b16 %v9254
        %v9294 = vunpack.c.l.b16 %v9255
        %v9295 = vunpack.c.l.b16 %v9256
        %v9296 = vunpack.c.l.b16 %v9257
        %v9297 = vunpack.c.l.b16 %v9258
        %v9298 = vunpack.c.l.b16 %v9259
        %v9299 = vunpack.c.l.b16 %v9260
        %v9300 = vunpack.c.l.b16 %v9261
        %v9301 = vunpack.c.l.b16 %v9262
        %v9302 = vunpack.c.l.b16 %v9263
        %v9303 = vunpack.c.l.b16 %v9264
        %v9304 = vunpack.c.l.b16 %v9265
        %v9305 = vpack.c.b16 %v9290, %v9289
        %v9306 = vpack.c.b16 %v9292, %v9291
        %v9307 = vpack.c.b16 %v9294, %v9293
        %v9308 = vpack.c.b16 %v9296, %v9295
        %v9309 = vpack.c.b16 %v9298, %v9297
        %v9310 = vpack.c.b16 %v9300, %v9299
        %v9311 = vpack.c.b16 %v9302, %v9301
        %v9312 = vpack.c.b16 %v9304, %v9303
        %9321 = vmatprep.subr.bf16.mxu0 0
        %9322 = vmatpush1.bf16.msra.mxu0 %v9305
        %9323 = vmatprep.subr.bf16.mxu0 0
        %9324 = vmatpush1.bf16.msra.mxu0 %v9306
        %9325 = vmatprep.subr.bf16.mxu0 0
        %9326 = vmatpush1.bf16.msra.mxu0 %v9307
        %9327 = vmatprep.subr.bf16.mxu0 0
        %9328 = vmatpush1.bf16.msra.mxu0 %v9308
        %9329 = vmatprep.subr.bf16.mxu0 0
        %9330 = vmatpush1.bf16.msra.mxu0 %v9309
        %9331 = vmatprep.subr.bf16.mxu0 0
        %9332 = vmatpush1.bf16.msra.mxu0 %v9310
        %9333 = vmatprep.subr.bf16.mxu0 0
        %9334 = vmatpush1.bf16.msra.mxu0 %v9311
        %9335 = vmatprep.subr.bf16.mxu0 0
        %9336 = vmatpush1.bf16.msra.mxu0 %v9312
        %9337 = vmatprep.subr.bf16.mxu0 0
        %9338 = vmatpush1.bf16.msra.mxu0 0
        %9339 = vmatprep.subr.bf16.mxu0 0
        %9340 = vmatpush1.bf16.msra.mxu0 0
        %9341 = vmatprep.subr.bf16.mxu0 0
        %9342 = vmatpush1.bf16.msra.mxu0 0
        %9343 = vmatprep.subr.bf16.mxu0 0
        %9344 = vmatpush1.bf16.msra.mxu0 0
        %9345 = vmatprep.subr.bf16.mxu0 0
        %9346 = vmatpush1.bf16.msra.mxu0 0
        %9347 = vmatprep.subr.bf16.mxu0 0
        %9348 = vmatpush1.bf16.msra.mxu0 0
        %9349 = vmatprep.subr.bf16.mxu0 0
        %9350 = vmatpush1.bf16.msra.mxu0 0
        %9351 = vmatprep.subr.bf16.mxu0 0
        %9352 = vmatpush1.bf16.msra.mxu0 0
        %9353 = vmatprep.mubr.bf16.mxu0 0
        %9354 = vmatmul.mubr.bf16.gmra.mrb[0].mxu0 %v9269
        %v9355 = vpop.f32.mrb[0].mxu0
        %v9356 = vadd.f32 0.0, %v9355
        %v9357 = vpop.f32.mrb[0].mxu0
        %v9358 = vpop.f32.mrb[0].mxu0
        %v9359 = vadd.f32 0.0, %v9358
        %v9360 = vpop.f32.mrb[0].mxu0
        %9361 = vmatprep.mubr.bf16.mxu0 0
        %9362 = vmatmul.mubr.bf16.gmra.mrb[0].mxu0 %v9270
        %v9363 = vpop.f32.mrb[0].mxu0
        %v9364 = vadd.f32 0.0, %v9363
        %v9365 = vpop.f32.mrb[0].mxu0
        %v9366 = vpop.f32.mrb[0].mxu0
        %v9367 = vpop.f32.mrb[0].mxu0
        %9368 = vdwg.mxu0
        %v9372 = vunpack.c.l.b16 %v9170
        %v9373 = vunpack.c.l.b16 %v9171
        %v9374 = vunpack.c.l.b16 %v9172
        %v9375 = vpack.c.b16 %v9373, %v9372
        %v9376 = vpack.c.b16 %v9374, %v9374
        %v9395 = vunpack.c.l.b16 %v9173
        %v9396 = vunpack.c.l.b16 %v9174
        %v9397 = vunpack.c.l.b16 %v9175
        %v9398 = vunpack.c.l.b16 %v9176
        %v9399 = vunpack.c.l.b16 %v9177
        %v9400 = vunpack.c.l.b16 %v9178
        %v9401 = vunpack.c.l.b16 %v9179
        %v9402 = vunpack.c.l.b16 %v9180
        %v9403 = vunpack.c.l.b16 %v9181
        %v9404 = vunpack.c.l.b16 %v9182
        %v9405 = vunpack.c.l.b16 %v9183
        %v9406 = vunpack.c.l.b16 %v9184
        %v9407 = vunpack.c.l.b16 %v9185
        %v9408 = vunpack.c.l.b16 %v9186
        %v9409 = vunpack.c.l.b16 %v9187
        %v9410 = vunpack.c.l.b16 %v9188
        %v9411 = vpack.c.b16 %v9396, %v9395
        %v9412 = vpack.c.b16 %v9398, %v9397
        %v9413 = vpack.c.b16 %v9400, %v9399
        %v9414 = vpack.c.b16 %v9402, %v9401
        %v9415 = vpack.c.b16 %v9404, %v9403
        %v9416 = vpack.c.b16 %v9406, %v9405
        %v9417 = vpack.c.b16 %v9408, %v9407
        %v9418 = vpack.c.b16 %v9410, %v9409
        %9427 = vmatprep.subr.bf16.mxu0 0
        %9428 = vmatpush1.bf16.msra.mxu0 %v9411
        %9429 = vmatprep.subr.bf16.mxu0 0
        %9430 = vmatpush1.bf16.msra.mxu0 %v9412
        %9431 = vmatprep.subr.bf16.mxu0 0
        %9432 = vmatpush1.bf16.msra.mxu0 %v9413
        %9433 = vmatprep.subr.bf16.mxu0 0
        %9434 = vmatpush1.bf16.msra.mxu0 %v9414
        %9435 = vmatprep.subr.bf16.mxu0 0
        %9436 = vmatpush1.bf16.msra.mxu0 %v9415
        %9437 = vmatprep.subr.bf16.mxu0 0
        %9438 = vmatpush1.bf16.msra.mxu0 %v9416
        %9439 = vmatprep.subr.bf16.mxu0 0
        %9440 = vmatpush1.bf16.msra.mxu0 %v9417
        %9441 = vmatprep.subr.bf16.mxu0 0
        %9442 = vmatpush1.bf16.msra.mxu0 %v9418
        %9443 = vmatprep.subr.bf16.mxu0 0
        %9444 = vmatpush1.bf16.msra.mxu0 0
        %9445 = vmatprep.subr.bf16.mxu0 0
        %9446 = vmatpush1.bf16.msra.mxu0 0
        %9447 = vmatprep.subr.bf16.mxu0 0
        %9448 = vmatpush1.bf16.msra.mxu0 0
        %9449 = vmatprep.subr.bf16.mxu0 0
        %9450 = vmatpush1.bf16.msra.mxu0 0
        %9451 = vmatprep.subr.bf16.mxu0 0
        %9452 = vmatpush1.bf16.msra.mxu0 0
        %9453 = vmatprep.subr.bf16.mxu0 0
        %9454 = vmatpush1.bf16.msra.mxu0 0
        %9455 = vmatprep.subr.bf16.mxu0 0
        %9456 = vmatpush1.bf16.msra.mxu0 0
        %9457 = vmatprep.subr.bf16.mxu0 0
        %9458 = vmatpush1.bf16.msra.mxu0 0
        %9459 = vmatprep.mubr.bf16.mxu0 0
        %9460 = vmatmul.mubr.bf16.gmra.mrb[0].mxu0 %v9375
        %v9461 = vpop.f32.mrb[0].mxu0
        %v9462 = vadd.f32 %v9356, %v9461
        %v9463 = vpop.f32.mrb[0].mxu0
        %v9464 = vpop.f32.mrb[0].mxu0
        %v9465 = vadd.f32 %v9359, %v9464
        %v9466 = vpop.f32.mrb[0].mxu0
        %9467 = vmatprep.mubr.bf16.mxu0 0
        %9468 = vmatmul.mubr.bf16.gmra.mrb[0].mxu0 %v9376
        %v9469 = vpop.f32.mrb[0].mxu0
        %v9470 = vadd.f32 %v9364, %v9469
        %v9471 = vpop.f32.mrb[0].mxu0
        %v9472 = vpop.f32.mrb[0].mxu0
        %v9473 = vpop.f32.mrb[0].mxu0
        %9474 = vdwg.mxu0
        %v9475 = vld [vmem:[#allocation4] sm:$0x1e]
        %v9476 = vld [vmem:[#allocation4 + $0x8] sm:$0x1e]
        %v9477 = vld [vmem:[#allocation4 + $0x10] sm:$0x1e]
        %v9481 = vunpack.c.l.b16 %v9475
        %v9482 = vunpack.c.h.b16 %v9475
        %v9483 = vunpack.c.l.b16 %v9476
        %v9484 = vunpack.c.h.b16 %v9476
        %v9485 = vunpack.c.l.b16 %v9477
        %v9486 = vunpack.c.h.b16 %v9477
        %v9487 = vpack.c.b16 %v9481, %v9481
        %v9488 = vpack.c.b16 %v9482, %v9482
        %v9489 = vpack.c.b16 %v9483, %v9483
        %v9490 = vpack.c.b16 %v9484, %v9484
        %v9491 = vpack.c.b16 %v9485, %v9485
        %v9492 = vpack.c.b16 %v9486, %v9486
        %v9493 = vrot.slane %v9487, 5
        %v9494 = vrot.slane %v9493, 4
        %v9495 = vrot.slane %v9488, 5
        %v9496 = vsel %vm3015, %v9494, %v9495
        %v9497 = vrot.slane %v9489, 5
        %v9498 = vrot.slane %v9497, 4
        %v9499 = vrot.slane %v9490, 5
        %v9500 = vsel %vm3015, %v9498, %v9499
        %v9501 = vrot.slane %v9491, 5
        %v9502 = vrot.slane %v9501, 4
        %v9503 = vrot.slane %v9492, 5
        %v9504 = vsel %vm3015, %v9502, %v9503
        %s9505 = scalar_lea.vmem %s8, 128
        %v9506 = vld [vmem:[%s9505] sm:$0xf]
        %v9507 = vld [vmem:[%s9505 + $0x4] sm:$0xf]
        %v9508 = vld [vmem:[%s9505 + $0x8] sm:$0xf]
        %v9509 = vld [vmem:[%s9505 + $0xc] sm:$0xf]
        %v9510 = vld [vmem:[%s9505 + $0x10] sm:$0xf]
        %v9511 = vld [vmem:[%s9505 + $0x14] sm:$0xf]
        %v9512 = vld [vmem:[%s9505 + $0x18] sm:$0xf]
        %v9513 = vld [vmem:[%s9505 + $0x1c] sm:$0xf]
        %v9514 = vld [vmem:[%s9505 + $0x20] sm:$0xf]
        %v9515 = vld [vmem:[%s9505 + $0x24] sm:$0xf]
        %v9516 = vld [vmem:[%s9505 + $0x28] sm:$0xf]
        %v9517 = vld [vmem:[%s9505 + $0x2c] sm:$0xf]
        %v9518 = vld [vmem:[%s9505 + $0x30] sm:$0xf]
        %v9519 = vld [vmem:[%s9505 + $0x34] sm:$0xf]
        %v9520 = vld [vmem:[%s9505 + $0x38] sm:$0xf]
        %v9521 = vld [vmem:[%s9505 + $0x3c] sm:$0xf]
        %v9522 = vunpack.c.l.b16 %v9496
        %v9523 = vunpack.c.l.b16 %v9500
        %v9524 = vunpack.c.l.b16 %v9504
        %v9525 = vpack.c.b16 %v9523, %v9522
        %v9526 = vpack.c.b16 %v9524, %v9524
        %v9545 = vunpack.c.l.b16 %v9506
        %v9546 = vunpack.c.l.b16 %v9507
        %v9547 = vunpack.c.l.b16 %v9508
        %v9548 = vunpack.c.l.b16 %v9509
        %v9549 = vunpack.c.l.b16 %v9510
        %v9550 = vunpack.c.l.b16 %v9511
        %v9551 = vunpack.c.l.b16 %v9512
        %v9552 = vunpack.c.l.b16 %v9513
        %v9553 = vunpack.c.l.b16 %v9514
        %v9554 = vunpack.c.l.b16 %v9515
        %v9555 = vunpack.c.l.b16 %v9516
        %v9556 = vunpack.c.l.b16 %v9517
        %v9557 = vunpack.c.l.b16 %v9518
        %v9558 = vunpack.c.l.b16 %v9519
        %v9559 = vunpack.c.l.b16 %v9520
        %v9560 = vunpack.c.l.b16 %v9521
        %v9561 = vpack.c.b16 %v9546, %v9545
        %v9562 = vpack.c.b16 %v9548, %v9547
        %v9563 = vpack.c.b16 %v9550, %v9549
        %v9564 = vpack.c.b16 %v9552, %v9551
        %v9565 = vpack.c.b16 %v9554, %v9553
        %v9566 = vpack.c.b16 %v9556, %v9555
        %v9567 = vpack.c.b16 %v9558, %v9557
        %v9568 = vpack.c.b16 %v9560, %v9559
        %9577 = vmatprep.subr.bf16.mxu0 0
        %9578 = vmatpush1.bf16.msra.mxu0 %v9561
        %9579 = vmatprep.subr.bf16.mxu0 0
        %9580 = vmatpush1.bf16.msra.mxu0 %v9562
        %9581 = vmatprep.subr.bf16.mxu0 0
        %9582 = vmatpush1.bf16.msra.mxu0 %v9563
        %9583 = vmatprep.subr.bf16.mxu0 0
        %9584 = vmatpush1.bf16.msra.mxu0 %v9564
        %9585 = vmatprep.subr.bf16.mxu0 0
        %9586 = vmatpush1.bf16.msra.mxu0 %v9565
        %9587 = vmatprep.subr.bf16.mxu0 0
        %9588 = vmatpush1.bf16.msra.mxu0 %v9566
        %9589 = vmatprep.subr.bf16.mxu0 0
        %9590 = vmatpush1.bf16.msra.mxu0 %v9567
        %9591 = vmatprep.subr.bf16.mxu0 0
        %9592 = vmatpush1.bf16.msra.mxu0 %v9568
        %9593 = vmatprep.subr.bf16.mxu0 0
        %9594 = vmatpush1.bf16.msra.mxu0 0
        %9595 = vmatprep.subr.bf16.mxu0 0
        %9596 = vmatpush1.bf16.msra.mxu0 0
        %9597 = vmatprep.subr.bf16.mxu0 0
        %9598 = vmatpush1.bf16.msra.mxu0 0
        %9599 = vmatprep.subr.bf16.mxu0 0
        %9600 = vmatpush1.bf16.msra.mxu0 0
        %9601 = vmatprep.subr.bf16.mxu0 0
        %9602 = vmatpush1.bf16.msra.mxu0 0
        %9603 = vmatprep.subr.bf16.mxu0 0
        %9604 = vmatpush1.bf16.msra.mxu0 0
        %9605 = vmatprep.subr.bf16.mxu0 0
        %9606 = vmatpush1.bf16.msra.mxu0 0
        %9607 = vmatprep.subr.bf16.mxu0 0
        %9608 = vmatpush1.bf16.msra.mxu0 0
        %9609 = vmatprep.mubr.bf16.mxu0 0
        %9610 = vmatmul.mubr.bf16.gmra.mrb[0].mxu0 %v9525
        %v9611 = vpop.f32.mrb[0].mxu0
        %v9612 = vadd.f32 0.0, %v9611
        %v9613 = vpop.f32.mrb[0].mxu0
        %v9614 = vpop.f32.mrb[0].mxu0
        %v9615 = vadd.f32 0.0, %v9614
        %v9616 = vpop.f32.mrb[0].mxu0
        %9617 = vmatprep.mubr.bf16.mxu0 0
        %9618 = vmatmul.mubr.bf16.gmra.mrb[0].mxu0 %v9526
        %v9619 = vpop.f32.mrb[0].mxu0
        %v9620 = vadd.f32 0.0, %v9619
        %v9621 = vpop.f32.mrb[0].mxu0
        %v9622 = vpop.f32.mrb[0].mxu0
        %v9623 = vpop.f32.mrb[0].mxu0
        %9624 = vdwg.mxu0
        %v9625 = vadd.f32 %v9462, %v9612
        %v9626 = vadd.f32 %v9465, %v9615
        %v9627 = vadd.f32 %v9470, %v9620
        %s9628 = scalar_lea.vmem [#allocation4], 8
        %v9629 = vld [vmem:[%s9628] sm:$0xf]
        %v9630 = vld [vmem:[%s9628 + $0x8] sm:$0xf]
        %v9631 = vld [vmem:[%s9628 + $0x10] sm:$0xf]
        %s9632 = scalar_lea.vmem %s8, 192
        %v9633 = vld [vmem:[%s9632] sm:$0xf]
        %v9634 = vld [vmem:[%s9632 + $0x4] sm:$0xf]
        %v9635 = vld [vmem:[%s9632 + $0x8] sm:$0xf]
        %v9636 = vld [vmem:[%s9632 + $0xc] sm:$0xf]
        %v9637 = vld [vmem:[%s9632 + $0x10] sm:$0xf]
        %v9638 = vld [vmem:[%s9632 + $0x14] sm:$0xf]
        %v9639 = vld [vmem:[%s9632 + $0x18] sm:$0xf]
        %v9640 = vld [vmem:[%s9632 + $0x1c] sm:$0xf]
        %v9641 = vld [vmem:[%s9632 + $0x20] sm:$0xf]
        %v9642 = vld [vmem:[%s9632 + $0x24] sm:$0xf]
        %v9643 = vld [vmem:[%s9632 + $0x28] sm:$0xf]
        %v9644 = vld [vmem:[%s9632 + $0x2c] sm:$0xf]
        %v9645 = vld [vmem:[%s9632 + $0x30] sm:$0xf]
        %v9646 = vld [vmem:[%s9632 + $0x34] sm:$0xf]
        %v9647 = vld [vmem:[%s9632 + $0x38] sm:$0xf]
        %v9648 = vld [vmem:[%s9632 + $0x3c] sm:$0xf]
        %v9652 = vunpack.c.l.b16 %v9629
        %v9653 = vunpack.c.l.b16 %v9630
        %v9654 = vunpack.c.l.b16 %v9631
        %v9655 = vpack.c.b16 %v9653, %v9652
        %v9656 = vpack.c.b16 %v9654, %v9654
        %v9675 = vunpack.c.l.b16 %v9633
        %v9676 = vunpack.c.l.b16 %v9634
        %v9677 = vunpack.c.l.b16 %v9635
        %v9678 = vunpack.c.l.b16 %v9636
        %v9679 = vunpack.c.l.b16 %v9637
        %v9680 = vunpack.c.l.b16 %v9638
        %v9681 = vunpack.c.l.b16 %v9639
        %v9682 = vunpack.c.l.b16 %v9640
        %v9683 = vunpack.c.l.b16 %v9641
        %v9684 = vunpack.c.l.b16 %v9642
        %v9685 = vunpack.c.l.b16 %v9643
        %v9686 = vunpack.c.l.b16 %v9644
        %v9687 = vunpack.c.l.b16 %v9645
        %v9688 = vunpack.c.l.b16 %v9646
        %v9689 = vunpack.c.l.b16 %v9647
        %v9690 = vunpack.c.l.b16 %v9648
        %v9691 = vpack.c.b16 %v9676, %v9675
        %v9692 = vpack.c.b16 %v9678, %v9677
        %v9693 = vpack.c.b16 %v9680, %v9679
        %v9694 = vpack.c.b16 %v9682, %v9681
        %v9695 = vpack.c.b16 %v9684, %v9683
        %v9696 = vpack.c.b16 %v9686, %v9685
        %v9697 = vpack.c.b16 %v9688, %v9687
        %v9698 = vpack.c.b16 %v9690, %v9689
        %9707 = vmatprep.subr.bf16.mxu0 0
        %9708 = vmatpush1.bf16.msra.mxu0 %v9691
        %9709 = vmatprep.subr.bf16.mxu0 0
        %9710 = vmatpush1.bf16.msra.mxu0 %v9692
        %9711 = vmatprep.subr.bf16.mxu0 0
        %9712 = vmatpush1.bf16.msra.mxu0 %v9693
        %9713 = vmatprep.subr.bf16.mxu0 0
        %9714 = vmatpush1.bf16.msra.mxu0 %v9694
        %9715 = vmatprep.subr.bf16.mxu0 0
        %9716 = vmatpush1.bf16.msra.mxu0 %v9695
        %9717 = vmatprep.subr.bf16.mxu0 0
        %9718 = vmatpush1.bf16.msra.mxu0 %v9696
        %9719 = vmatprep.subr.bf16.mxu0 0
        %9720 = vmatpush1.bf16.msra.mxu0 %v9697
        %9721 = vmatprep.subr.bf16.mxu0 0
        %9722 = vmatpush1.bf16.msra.mxu0 %v9698
        %9723 = vmatprep.subr.bf16.mxu0 0
        %9724 = vmatpush1.bf16.msra.mxu0 0
        %9725 = vmatprep.subr.bf16.mxu0 0
        %9726 = vmatpush1.bf16.msra.mxu0 0
        %9727 = vmatprep.subr.bf16.mxu0 0
        %9728 = vmatpush1.bf16.msra.mxu0 0
        %9729 = vmatprep.subr.bf16.mxu0 0
        %9730 = vmatpush1.bf16.msra.mxu0 0
        %9731 = vmatprep.subr.bf16.mxu0 0
        %9732 = vmatpush1.bf16.msra.mxu0 0
        %9733 = vmatprep.subr.bf16.mxu0 0
        %9734 = vmatpush1.bf16.msra.mxu0 0
        %9735 = vmatprep.subr.bf16.mxu0 0
        %9736 = vmatpush1.bf16.msra.mxu0 0
        %9737 = vmatprep.subr.bf16.mxu0 0
        %9738 = vmatpush1.bf16.msra.mxu0 0
        %9739 = vmatprep.mubr.bf16.mxu0 0
        %9740 = vmatmul.mubr.bf16.gmra.mrb[0].mxu0 %v9655
        %v9741 = vpop.f32.mrb[0].mxu0
        %v9742 = vadd.f32 0.0, %v9741
        %v9743 = vpop.f32.mrb[0].mxu0
        %v9744 = vpop.f32.mrb[0].mxu0
        %v9745 = vadd.f32 0.0, %v9744
        %v9746 = vpop.f32.mrb[0].mxu0
        %9747 = vmatprep.mubr.bf16.mxu0 0
        %9748 = vmatmul.mubr.bf16.gmra.mrb[0].mxu0 %v9656
        %v9749 = vpop.f32.mrb[0].mxu0
        %v9750 = vadd.f32 0.0, %v9749
        %v9751 = vpop.f32.mrb[0].mxu0
        %v9752 = vpop.f32.mrb[0].mxu0
        %v9753 = vpop.f32.mrb[0].mxu0
        %9754 = vdwg.mxu0
        %v9755 = vadd.f32 %v9625, %v9742
        %v9756 = vadd.f32 %v9626, %v9745
        %v9757 = vadd.f32 %v9627, %v9750
        %v9758 = vld [vmem:[%s9628] sm:$0x1f]
        %v9759 = vld [vmem:[%s9628 + $0x8] sm:$0x1f]
        %v9760 = vld [vmem:[%s9628 + $0x10] sm:$0x1f]
        %v9764 = vunpack.c.l.b16 %v9758
        %v9765 = vunpack.c.h.b16 %v9758
        %v9766 = vunpack.c.l.b16 %v9759
        %v9767 = vunpack.c.h.b16 %v9759
        %v9768 = vunpack.c.l.b16 %v9760
        %v9769 = vunpack.c.h.b16 %v9760
        %v9770 = vpack.c.b16 %v9764, %v9764
        %v9771 = vpack.c.b16 %v9765, %v9765
        %v9772 = vpack.c.b16 %v9766, %v9766
        %v9773 = vpack.c.b16 %v9767, %v9767
        %v9774 = vpack.c.b16 %v9768, %v9768
        %v9775 = vpack.c.b16 %v9769, %v9769
        %v9777 = vshrl.u32 %v9770, 16
        %v9779 = vrot.slane %v9777, 4
        %v9780 = vshll.u32 %v9770, 16
        %v9782 = vrot.slane %v9780, 5
        %v9783 = vor.u32 %v9779, %v9782
        %v9784 = vrot.slane %v9783, 4
        %v9786 = vshll.u32 %v9771, 16
        %v9788 = vrot.slane %v9786, 5
        %v9789 = vsel %vm2250, %v9784, %v9788
        %v9791 = vshrl.u32 %v9772, 16
        %v9793 = vrot.slane %v9791, 4
        %v9794 = vshll.u32 %v9772, 16
        %v9796 = vrot.slane %v9794, 5
        %v9797 = vor.u32 %v9793, %v9796
        %v9798 = vrot.slane %v9797, 4
        %v9800 = vshll.u32 %v9773, 16
        %v9802 = vrot.slane %v9800, 5
        %v9803 = vsel %vm2250, %v9798, %v9802
        %v9805 = vshrl.u32 %v9774, 16
        %v9807 = vrot.slane %v9805, 4
        %v9808 = vshll.u32 %v9774, 16
        %v9810 = vrot.slane %v9808, 5
        %v9811 = vor.u32 %v9807, %v9810
        %v9812 = vrot.slane %v9811, 4
        %v9814 = vshll.u32 %v9775, 16
        %v9816 = vrot.slane %v9814, 5
        %v9817 = vsel %vm2250, %v9812, %v9816
        %s9818 = scalar_lea.vmem %s8, 256
        %v9819 = vld [vmem:[%s9818] sm:$0xf]
        %v9820 = vld [vmem:[%s9818 + $0x4] sm:$0xf]
        %v9821 = vld [vmem:[%s9818 + $0x8] sm:$0xf]
        %v9822 = vld [vmem:[%s9818 + $0xc] sm:$0xf]
        %v9823 = vld [vmem:[%s9818 + $0x10] sm:$0xf]
        %v9824 = vld [vmem:[%s9818 + $0x14] sm:$0xf]
        %v9825 = vld [vmem:[%s9818 + $0x18] sm:$0xf]
        %v9826 = vld [vmem:[%s9818 + $0x1c] sm:$0xf]
        %v9827 = vld [vmem:[%s9818 + $0x20] sm:$0xf]
        %v9828 = vld [vmem:[%s9818 + $0x24] sm:$0xf]
        %v9829 = vld [vmem:[%s9818 + $0x28] sm:$0xf]
        %v9830 = vld [vmem:[%s9818 + $0x2c] sm:$0xf]
        %v9831 = vld [vmem:[%s9818 + $0x30] sm:$0xf]
        %v9832 = vld [vmem:[%s9818 + $0x34] sm:$0xf]
        %v9833 = vld [vmem:[%s9818 + $0x38] sm:$0xf]
        %v9834 = vld [vmem:[%s9818 + $0x3c] sm:$0xf]
        %v9835 = vunpack.c.l.b16 %v9789
        %v9836 = vunpack.c.l.b16 %v9803
        %v9837 = vunpack.c.l.b16 %v9817
        %v9838 = vpack.c.b16 %v9836, %v9835
        %v9839 = vpack.c.b16 %v9837, %v9837
        %v9858 = vunpack.c.l.b16 %v9819
        %v9859 = vunpack.c.l.b16 %v9820
        %v9860 = vunpack.c.l.b16 %v9821
        %v9861 = vunpack.c.l.b16 %v9822
        %v9862 = vunpack.c.l.b16 %v9823
        %v9863 = vunpack.c.l.b16 %v9824
        %v9864 = vunpack.c.l.b16 %v9825
        %v9865 = vunpack.c.l.b16 %v9826
        %v9866 = vunpack.c.l.b16 %v9827
        %v9867 = vunpack.c.l.b16 %v9828
        %v9868 = vunpack.c.l.b16 %v9829
        %v9869 = vunpack.c.l.b16 %v9830
        %v9870 = vunpack.c.l.b16 %v9831
        %v9871 = vunpack.c.l.b16 %v9832
        %v9872 = vunpack.c.l.b16 %v9833
        %v9873 = vunpack.c.l.b16 %v9834
        %v9874 = vpack.c.b16 %v9859, %v9858
        %v9875 = vpack.c.b16 %v9861, %v9860
        %v9876 = vpack.c.b16 %v9863, %v9862
        %v9877 = vpack.c.b16 %v9865, %v9864
        %v9878 = vpack.c.b16 %v9867, %v9866
        %v9879 = vpack.c.b16 %v9869, %v9868
        %v9880 = vpack.c.b16 %v9871, %v9870
        %v9881 = vpack.c.b16 %v9873, %v9872
        %9890 = vmatprep.subr.bf16.mxu0 0
        %9891 = vmatpush1.bf16.msra.mxu0 %v9874
        %9892 = vmatprep.subr.bf16.mxu0 0
        %9893 = vmatpush1.bf16.msra.mxu0 %v9875
        %9894 = vmatprep.subr.bf16.mxu0 0
        %9895 = vmatpush1.bf16.msra.mxu0 %v9876
        %9896 = vmatprep.subr.bf16.mxu0 0
        %9897 = vmatpush1.bf16.msra.mxu0 %v9877
        %9898 = vmatprep.subr.bf16.mxu0 0
        %9899 = vmatpush1.bf16.msra.mxu0 %v9878
        %9900 = vmatprep.subr.bf16.mxu0 0
        %9901 = vmatpush1.bf16.msra.mxu0 %v9879
        %9902 = vmatprep.subr.bf16.mxu0 0
        %9903 = vmatpush1.bf16.msra.mxu0 %v9880
        %9904 = vmatprep.subr.bf16.mxu0 0
        %9905 = vmatpush1.bf16.msra.mxu0 %v9881
        %9906 = vmatprep.subr.bf16.mxu0 0
        %9907 = vmatpush1.bf16.msra.mxu0 0
        %9908 = vmatprep.subr.bf16.mxu0 0
        %9909 = vmatpush1.bf16.msra.mxu0 0
        %9910 = vmatprep.subr.bf16.mxu0 0
        %9911 = vmatpush1.bf16.msra.mxu0 0
        %9912 = vmatprep.subr.bf16.mxu0 0
        %9913 = vmatpush1.bf16.msra.mxu0 0
        %9914 = vmatprep.subr.bf16.mxu0 0
        %9915 = vmatpush1.bf16.msra.mxu0 0
        %9916 = vmatprep.subr.bf16.mxu0 0
        %9917 = vmatpush1.bf16.msra.mxu0 0
        %9918 = vmatprep.subr.bf16.mxu0 0
        %9919 = vmatpush1.bf16.msra.mxu0 0
        %9920 = vmatprep.subr.bf16.mxu0 0
        %9921 = vmatpush1.bf16.msra.mxu0 0
        %9922 = vmatprep.mubr.bf16.mxu0 0
        %9923 = vmatmul.mubr.bf16.gmra.mrb[0].mxu0 %v9838
        %v9924 = vpop.f32.mrb[0].mxu0
        %v9925 = vadd.f32 0.0, %v9924
        %v9926 = vpop.f32.mrb[0].mxu0
        %v9927 = vpop.f32.mrb[0].mxu0
        %v9928 = vadd.f32 0.0, %v9927
        %v9929 = vpop.f32.mrb[0].mxu0
        %9930 = vmatprep.mubr.bf16.mxu0 0
        %9931 = vmatmul.mubr.bf16.gmra.mrb[0].mxu0 %v9839
        %v9932 = vpop.f32.mrb[0].mxu0
        %v9933 = vadd.f32 0.0, %v9932
        %v9934 = vpop.f32.mrb[0].mxu0
        %v9935 = vpop.f32.mrb[0].mxu0
        %v9936 = vpop.f32.mrb[0].mxu0
        %9937 = vdwg.mxu0
        %v9938 = vadd.f32 %v9755, %v9925
        %v9939 = vadd.f32 %v9756, %v9928
        %v9940 = vadd.f32 %v9757, %v9933
        %v9941 = vld [vmem:[%s9628] sm:$0x1e]
        %v9942 = vld [vmem:[%s9628 + $0x8] sm:$0x1e]
        %v9943 = vld [vmem:[%s9628 + $0x10] sm:$0x1e]
        %v9947 = vunpack.c.l.b16 %v9941
        %v9948 = vunpack.c.h.b16 %v9941
        %v9949 = vunpack.c.l.b16 %v9942
        %v9950 = vunpack.c.h.b16 %v9942
        %v9951 = vunpack.c.l.b16 %v9943
        %v9952 = vunpack.c.h.b16 %v9943
        %v9953 = vpack.c.b16 %v9947, %v9947
        %v9954 = vpack.c.b16 %v9948, %v9948
        %v9955 = vpack.c.b16 %v9949, %v9949
        %v9956 = vpack.c.b16 %v9950, %v9950
        %v9957 = vpack.c.b16 %v9951, %v9951
        %v9958 = vpack.c.b16 %v9952, %v9952
        %v9959 = vrot.slane %v9953, 5
        %v9960 = vrot.slane %v9959, 4
        %v9961 = vrot.slane %v9954, 5
        %v9962 = vsel %vm3015, %v9960, %v9961
        %v9963 = vrot.slane %v9955, 5
        %v9964 = vrot.slane %v9963, 4
        %v9965 = vrot.slane %v9956, 5
        %v9966 = vsel %vm3015, %v9964, %v9965
        %v9967 = vrot.slane %v9957, 5
        %v9968 = vrot.slane %v9967, 4
        %v9969 = vrot.slane %v9958, 5
        %v9970 = vsel %vm3015, %v9968, %v9969
        %s9971 = scalar_lea.vmem %s8, 320
        %v9972 = vld [vmem:[%s9971] sm:$0xf]
        %v9973 = vld [vmem:[%s9971 + $0x4] sm:$0xf]
        %v9974 = vld [vmem:[%s9971 + $0x8] sm:$0xf]
        %v9975 = vld [vmem:[%s9971 + $0xc] sm:$0xf]
        %v9976 = vld [vmem:[%s9971 + $0x10] sm:$0xf]
        %v9977 = vld [vmem:[%s9971 + $0x14] sm:$0xf]
        %v9978 = vld [vmem:[%s9971 + $0x18] sm:$0xf]
        %v9979 = vld [vmem:[%s9971 + $0x1c] sm:$0xf]
        %v9980 = vld [vmem:[%s9971 + $0x20] sm:$0xf]
        %v9981 = vld [vmem:[%s9971 + $0x24] sm:$0xf]
        %v9982 = vld [vmem:[%s9971 + $0x28] sm:$0xf]
        %v9983 = vld [vmem:[%s9971 + $0x2c] sm:$0xf]
        %v9984 = vld [vmem:[%s9971 + $0x30] sm:$0xf]
        %v9985 = vld [vmem:[%s9971 + $0x34] sm:$0xf]
        %v9986 = vld [vmem:[%s9971 + $0x38] sm:$0xf]
        %v9987 = vld [vmem:[%s9971 + $0x3c] sm:$0xf]
        %v9988 = vunpack.c.l.b16 %v9962
        %v9989 = vunpack.c.l.b16 %v9966
        %v9990 = vunpack.c.l.b16 %v9970
        %v9991 = vpack.c.b16 %v9989, %v9988
        %v9992 = vpack.c.b16 %v9990, %v9990
        %v10011 = vunpack.c.l.b16 %v9972
        %v10012 = vunpack.c.l.b16 %v9973
        %v10013 = vunpack.c.l.b16 %v9974
        %v10014 = vunpack.c.l.b16 %v9975
        %v10015 = vunpack.c.l.b16 %v9976
        %v10016 = vunpack.c.l.b16 %v9977
        %v10017 = vunpack.c.l.b16 %v9978
        %v10018 = vunpack.c.l.b16 %v9979
        %v10019 = vunpack.c.l.b16 %v9980
        %v10020 = vunpack.c.l.b16 %v9981
        %v10021 = vunpack.c.l.b16 %v9982
        %v10022 = vunpack.c.l.b16 %v9983
        %v10023 = vunpack.c.l.b16 %v9984
        %v10024 = vunpack.c.l.b16 %v9985
        %v10025 = vunpack.c.l.b16 %v9986
        %v10026 = vunpack.c.l.b16 %v9987
        %v10027 = vpack.c.b16 %v10012, %v10011
        %v10028 = vpack.c.b16 %v10014, %v10013
        %v10029 = vpack.c.b16 %v10016, %v10015
        %v10030 = vpack.c.b16 %v10018, %v10017
        %v10031 = vpack.c.b16 %v10020, %v10019
        %v10032 = vpack.c.b16 %v10022, %v10021
        %v10033 = vpack.c.b16 %v10024, %v10023
        %v10034 = vpack.c.b16 %v10026, %v10025
        %10043 = vmatprep.subr.bf16.mxu0 0
        %10044 = vmatpush1.bf16.msra.mxu0 %v10027
        %10045 = vmatprep.subr.bf16.mxu0 0
        %10046 = vmatpush1.bf16.msra.mxu0 %v10028
        %10047 = vmatprep.subr.bf16.mxu0 0
        %10048 = vmatpush1.bf16.msra.mxu0 %v10029
        %10049 = vmatprep.subr.bf16.mxu0 0
        %10050 = vmatpush1.bf16.msra.mxu0 %v10030
        %10051 = vmatprep.subr.bf16.mxu0 0
        %10052 = vmatpush1.bf16.msra.mxu0 %v10031
        %10053 = vmatprep.subr.bf16.mxu0 0
        %10054 = vmatpush1.bf16.msra.mxu0 %v10032
        %10055 = vmatprep.subr.bf16.mxu0 0
        %10056 = vmatpush1.bf16.msra.mxu0 %v10033
        %10057 = vmatprep.subr.bf16.mxu0 0
        %10058 = vmatpush1.bf16.msra.mxu0 %v10034
        %10059 = vmatprep.subr.bf16.mxu0 0
        %10060 = vmatpush1.bf16.msra.mxu0 0
        %10061 = vmatprep.subr.bf16.mxu0 0
        %10062 = vmatpush1.bf16.msra.mxu0 0
        %10063 = vmatprep.subr.bf16.mxu0 0
        %10064 = vmatpush1.bf16.msra.mxu0 0
        %10065 = vmatprep.subr.bf16.mxu0 0
        %10066 = vmatpush1.bf16.msra.mxu0 0
        %10067 = vmatprep.subr.bf16.mxu0 0
        %10068 = vmatpush1.bf16.msra.mxu0 0
        %10069 = vmatprep.subr.bf16.mxu0 0
        %10070 = vmatpush1.bf16.msra.mxu0 0
        %10071 = vmatprep.subr.bf16.mxu0 0
        %10072 = vmatpush1.bf16.msra.mxu0 0
        %10073 = vmatprep.subr.bf16.mxu0 0
        %10074 = vmatpush1.bf16.msra.mxu0 0
        %10075 = vmatprep.mubr.bf16.mxu0 0
        %10076 = vmatmul.mubr.bf16.gmra.mrb[0].mxu0 %v9991
        %v10077 = vpop.f32.mrb[0].mxu0
        %v10078 = vadd.f32 0.0, %v10077
        %v10079 = vpop.f32.mrb[0].mxu0
        %v10080 = vpop.f32.mrb[0].mxu0
        %v10081 = vadd.f32 0.0, %v10080
        %v10082 = vpop.f32.mrb[0].mxu0
        %10083 = vmatprep.mubr.bf16.mxu0 0
        %10084 = vmatmul.mubr.bf16.gmra.mrb[0].mxu0 %v9992
        %v10085 = vpop.f32.mrb[0].mxu0
        %v10086 = vadd.f32 0.0, %v10085
        %v10087 = vpop.f32.mrb[0].mxu0
        %v10088 = vpop.f32.mrb[0].mxu0
        %v10089 = vpop.f32.mrb[0].mxu0
        %10090 = vdwg.mxu0
        %v10091 = vadd.f32 %v9938, %v10078
        %v10092 = vadd.f32 %v9939, %v10081
        %v10093 = vadd.f32 %v9940, %v10086
        %s10094 = scalar_lea.vmem [#allocation4], 16
        %v10095 = vld [vmem:[%s10094] sm:$0xf]
        %v10096 = vld [vmem:[%s10094 + $0x8] sm:$0xf]
        %v10097 = vld [vmem:[%s10094 + $0x10] sm:$0xf]
        %s10098 = scalar_lea.vmem %s8, 384
        %v10099 = vld [vmem:[%s10098] sm:$0xf]
        %v10100 = vld [vmem:[%s10098 + $0x4] sm:$0xf]
        %v10101 = vld [vmem:[%s10098 + $0x8] sm:$0xf]
        %v10102 = vld [vmem:[%s10098 + $0xc] sm:$0xf]
        %v10103 = vld [vmem:[%s10098 + $0x10] sm:$0xf]
        %v10104 = vld [vmem:[%s10098 + $0x14] sm:$0xf]
        %v10105 = vld [vmem:[%s10098 + $0x18] sm:$0xf]
        %v10106 = vld [vmem:[%s10098 + $0x1c] sm:$0xf]
        %v10107 = vld [vmem:[%s10098 + $0x20] sm:$0xf]
        %v10108 = vld [vmem:[%s10098 + $0x24] sm:$0xf]
        %v10109 = vld [vmem:[%s10098 + $0x28] sm:$0xf]
        %v10110 = vld [vmem:[%s10098 + $0x2c] sm:$0xf]
        %v10111 = vld [vmem:[%s10098 + $0x30] sm:$0xf]
        %v10112 = vld [vmem:[%s10098 + $0x34] sm:$0xf]
        %v10113 = vld [vmem:[%s10098 + $0x38] sm:$0xf]
        %v10114 = vld [vmem:[%s10098 + $0x3c] sm:$0xf]
        %v10118 = vunpack.c.l.b16 %v10095
        %v10119 = vunpack.c.l.b16 %v10096
        %v10120 = vunpack.c.l.b16 %v10097
        %v10121 = vpack.c.b16 %v10119, %v10118
        %v10122 = vpack.c.b16 %v10120, %v10120
        %v10141 = vunpack.c.l.b16 %v10099
        %v10142 = vunpack.c.l.b16 %v10100
        %v10143 = vunpack.c.l.b16 %v10101
        %v10144 = vunpack.c.l.b16 %v10102
        %v10145 = vunpack.c.l.b16 %v10103
        %v10146 = vunpack.c.l.b16 %v10104
        %v10147 = vunpack.c.l.b16 %v10105
        %v10148 = vunpack.c.l.b16 %v10106
        %v10149 = vunpack.c.l.b16 %v10107
        %v10150 = vunpack.c.l.b16 %v10108
        %v10151 = vunpack.c.l.b16 %v10109
        %v10152 = vunpack.c.l.b16 %v10110
        %v10153 = vunpack.c.l.b16 %v10111
        %v10154 = vunpack.c.l.b16 %v10112
        %v10155 = vunpack.c.l.b16 %v10113
        %v10156 = vunpack.c.l.b16 %v10114
        %v10157 = vpack.c.b16 %v10142, %v10141
        %v10158 = vpack.c.b16 %v10144, %v10143
        %v10159 = vpack.c.b16 %v10146, %v10145
        %v10160 = vpack.c.b16 %v10148, %v10147
        %v10161 = vpack.c.b16 %v10150, %v10149
        %v10162 = vpack.c.b16 %v10152, %v10151
        %v10163 = vpack.c.b16 %v10154, %v10153
        %v10164 = vpack.c.b16 %v10156, %v10155
        %10173 = vmatprep.subr.bf16.mxu0 0
        %10174 = vmatpush1.bf16.msra.mxu0 %v10157
        %10175 = vmatprep.subr.bf16.mxu0 0
        %10176 = vmatpush1.bf16.msra.mxu0 %v10158
        %10177 = vmatprep.subr.bf16.mxu0 0
        %10178 = vmatpush1.bf16.msra.mxu0 %v10159
        %10179 = vmatprep.subr.bf16.mxu0 0
        %10180 = vmatpush1.bf16.msra.mxu0 %v10160
        %10181 = vmatprep.subr.bf16.mxu0 0
        %10182 = vmatpush1.bf16.msra.mxu0 %v10161
        %10183 = vmatprep.subr.bf16.mxu0 0
        %10184 = vmatpush1.bf16.msra.mxu0 %v10162
        %10185 = vmatprep.subr.bf16.mxu0 0
        %10186 = vmatpush1.bf16.msra.mxu0 %v10163
        %10187 = vmatprep.subr.bf16.mxu0 0
        %10188 = vmatpush1.bf16.msra.mxu0 %v10164
        %10189 = vmatprep.subr.bf16.mxu0 0
        %10190 = vmatpush1.bf16.msra.mxu0 0
        %10191 = vmatprep.subr.bf16.mxu0 0
        %10192 = vmatpush1.bf16.msra.mxu0 0
        %10193 = vmatprep.subr.bf16.mxu0 0
        %10194 = vmatpush1.bf16.msra.mxu0 0
        %10195 = vmatprep.subr.bf16.mxu0 0
        %10196 = vmatpush1.bf16.msra.mxu0 0
        %10197 = vmatprep.subr.bf16.mxu0 0
        %10198 = vmatpush1.bf16.msra.mxu0 0
        %10199 = vmatprep.subr.bf16.mxu0 0
        %10200 = vmatpush1.bf16.msra.mxu0 0
        %10201 = vmatprep.subr.bf16.mxu0 0
        %10202 = vmatpush1.bf16.msra.mxu0 0
        %10203 = vmatprep.subr.bf16.mxu0 0
        %10204 = vmatpush1.bf16.msra.mxu0 0
        %10205 = vmatprep.mubr.bf16.mxu0 0
        %10206 = vmatmul.mubr.bf16.gmra.mrb[0].mxu0 %v10121
        %v10207 = vpop.f32.mrb[0].mxu0
        %v10208 = vadd.f32 0.0, %v10207
        %v10209 = vpop.f32.mrb[0].mxu0
        %v10210 = vpop.f32.mrb[0].mxu0
        %v10211 = vadd.f32 0.0, %v10210
        %v10212 = vpop.f32.mrb[0].mxu0
        %10213 = vmatprep.mubr.bf16.mxu0 0
        %10214 = vmatmul.mubr.bf16.gmra.mrb[0].mxu0 %v10122
        %v10215 = vpop.f32.mrb[0].mxu0
        %v10216 = vadd.f32 0.0, %v10215
        %v10217 = vpop.f32.mrb[0].mxu0
        %v10218 = vpop.f32.mrb[0].mxu0
        %v10219 = vpop.f32.mrb[0].mxu0
        %10220 = vdwg.mxu0
        %v10221 = vadd.f32 %v10091, %v10208
        %v10222 = vadd.f32 %v10092, %v10211
        %v10223 = vadd.f32 %v10093, %v10216
        %v10224 = vld [vmem:[%s10094] sm:$0x1f]
        %v10225 = vld [vmem:[%s10094 + $0x8] sm:$0x1f]
        %v10226 = vld [vmem:[%s10094 + $0x10] sm:$0x1f]
        %v10230 = vunpack.c.l.b16 %v10224
        %v10231 = vunpack.c.h.b16 %v10224
        %v10232 = vunpack.c.l.b16 %v10225
        %v10233 = vunpack.c.h.b16 %v10225
        %v10234 = vunpack.c.l.b16 %v10226
        %v10235 = vunpack.c.h.b16 %v10226
        %v10236 = vpack.c.b16 %v10230, %v10230
        %v10237 = vpack.c.b16 %v10231, %v10231
        %v10238 = vpack.c.b16 %v10232, %v10232
        %v10239 = vpack.c.b16 %v10233, %v10233
        %v10240 = vpack.c.b16 %v10234, %v10234
        %v10241 = vpack.c.b16 %v10235, %v10235
        %v10243 = vshrl.u32 %v10236, 16
        %v10245 = vrot.slane %v10243, 4
        %v10246 = vshll.u32 %v10236, 16
        %v10248 = vrot.slane %v10246, 5
        %v10249 = vor.u32 %v10245, %v10248
        %v10250 = vrot.slane %v10249, 4
        %v10252 = vshll.u32 %v10237, 16
        %v10254 = vrot.slane %v10252, 5
        %v10255 = vsel %vm2250, %v10250, %v10254
        %v10257 = vshrl.u32 %v10238, 16
        %v10259 = vrot.slane %v10257, 4
        %v10260 = vshll.u32 %v10238, 16
        %v10262 = vrot.slane %v10260, 5
        %v10263 = vor.u32 %v10259, %v10262
        %v10264 = vrot.slane %v10263, 4
        %v10266 = vshll.u32 %v10239, 16
        %v10268 = vrot.slane %v10266, 5
        %v10269 = vsel %vm2250, %v10264, %v10268
        %v10271 = vshrl.u32 %v10240, 16
        %v10273 = vrot.slane %v10271, 4
        %v10274 = vshll.u32 %v10240, 16
        %v10276 = vrot.slane %v10274, 5
        %v10277 = vor.u32 %v10273, %v10276
        %v10278 = vrot.slane %v10277, 4
        %v10280 = vshll.u32 %v10241, 16
        %v10282 = vrot.slane %v10280, 5
        %v10283 = vsel %vm2250, %v10278, %v10282
        %s10284 = scalar_lea.vmem %s8, 448
        %v10285 = vld [vmem:[%s10284] sm:$0xf]
        %v10286 = vld [vmem:[%s10284 + $0x4] sm:$0xf]
        %v10287 = vld [vmem:[%s10284 + $0x8] sm:$0xf]
        %v10288 = vld [vmem:[%s10284 + $0xc] sm:$0xf]
        %v10289 = vld [vmem:[%s10284 + $0x10] sm:$0xf]
        %v10290 = vld [vmem:[%s10284 + $0x14] sm:$0xf]
        %v10291 = vld [vmem:[%s10284 + $0x18] sm:$0xf]
        %v10292 = vld [vmem:[%s10284 + $0x1c] sm:$0xf]
        %v10293 = vld [vmem:[%s10284 + $0x20] sm:$0xf]
        %v10294 = vld [vmem:[%s10284 + $0x24] sm:$0xf]
        %v10295 = vld [vmem:[%s10284 + $0x28] sm:$0xf]
        %v10296 = vld [vmem:[%s10284 + $0x2c] sm:$0xf]
        %v10297 = vld [vmem:[%s10284 + $0x30] sm:$0xf]
        %v10298 = vld [vmem:[%s10284 + $0x34] sm:$0xf]
        %v10299 = vld [vmem:[%s10284 + $0x38] sm:$0xf]
        %v10300 = vld [vmem:[%s10284 + $0x3c] sm:$0xf]
        %v10301 = vunpack.c.l.b16 %v10255
        %v10302 = vunpack.c.l.b16 %v10269
        %v10303 = vunpack.c.l.b16 %v10283
        %v10304 = vpack.c.b16 %v10302, %v10301
        %v10305 = vpack.c.b16 %v10303, %v10303
        %v10324 = vunpack.c.l.b16 %v10285
        %v10325 = vunpack.c.l.b16 %v10286
        %v10326 = vunpack.c.l.b16 %v10287
        %v10327 = vunpack.c.l.b16 %v10288
        %v10328 = vunpack.c.l.b16 %v10289
        %v10329 = vunpack.c.l.b16 %v10290
        %v10330 = vunpack.c.l.b16 %v10291
        %v10331 = vunpack.c.l.b16 %v10292
        %v10332 = vunpack.c.l.b16 %v10293
        %v10333 = vunpack.c.l.b16 %v10294
        %v10334 = vunpack.c.l.b16 %v10295
        %v10335 = vunpack.c.l.b16 %v10296
        %v10336 = vunpack.c.l.b16 %v10297
        %v10337 = vunpack.c.l.b16 %v10298
        %v10338 = vunpack.c.l.b16 %v10299
        %v10339 = vunpack.c.l.b16 %v10300
        %v10340 = vpack.c.b16 %v10325, %v10324
        %v10341 = vpack.c.b16 %v10327, %v10326
        %v10342 = vpack.c.b16 %v10329, %v10328
        %v10343 = vpack.c.b16 %v10331, %v10330
        %v10344 = vpack.c.b16 %v10333, %v10332
        %v10345 = vpack.c.b16 %v10335, %v10334
        %v10346 = vpack.c.b16 %v10337, %v10336
        %v10347 = vpack.c.b16 %v10339, %v10338
        %10356 = vmatprep.subr.bf16.mxu0 0
        %10357 = vmatpush1.bf16.msra.mxu0 %v10340
        %10358 = vmatprep.subr.bf16.mxu0 0
        %10359 = vmatpush1.bf16.msra.mxu0 %v10341
        %10360 = vmatprep.subr.bf16.mxu0 0
        %10361 = vmatpush1.bf16.msra.mxu0 %v10342
        %10362 = vmatprep.subr.bf16.mxu0 0
        %10363 = vmatpush1.bf16.msra.mxu0 %v10343
        %10364 = vmatprep.subr.bf16.mxu0 0
        %10365 = vmatpush1.bf16.msra.mxu0 %v10344
        %10366 = vmatprep.subr.bf16.mxu0 0
        %10367 = vmatpush1.bf16.msra.mxu0 %v10345
        %10368 = vmatprep.subr.bf16.mxu0 0
        %10369 = vmatpush1.bf16.msra.mxu0 %v10346
        %10370 = vmatprep.subr.bf16.mxu0 0
        %10371 = vmatpush1.bf16.msra.mxu0 %v10347
        %10372 = vmatprep.subr.bf16.mxu0 0
        %10373 = vmatpush1.bf16.msra.mxu0 0
        %10374 = vmatprep.subr.bf16.mxu0 0
        %10375 = vmatpush1.bf16.msra.mxu0 0
        %10376 = vmatprep.subr.bf16.mxu0 0
        %10377 = vmatpush1.bf16.msra.mxu0 0
        %10378 = vmatprep.subr.bf16.mxu0 0
        %10379 = vmatpush1.bf16.msra.mxu0 0
        %10380 = vmatprep.subr.bf16.mxu0 0
        %10381 = vmatpush1.bf16.msra.mxu0 0
        %10382 = vmatprep.subr.bf16.mxu0 0
        %10383 = vmatpush1.bf16.msra.mxu0 0
        %10384 = vmatprep.subr.bf16.mxu0 0
        %10385 = vmatpush1.bf16.msra.mxu0 0
        %10386 = vmatprep.subr.bf16.mxu0 0
        %10387 = vmatpush1.bf16.msra.mxu0 0
        %10388 = vmatprep.mubr.bf16.mxu0 0
        %10389 = vmatmul.mubr.bf16.gmra.mrb[0].mxu0 %v10304
        %v10390 = vpop.f32.mrb[0].mxu0
        %v10391 = vadd.f32 0.0, %v10390
        %v10392 = vpop.f32.mrb[0].mxu0
        %v10393 = vpop.f32.mrb[0].mxu0
        %v10394 = vadd.f32 0.0, %v10393
        %v10395 = vpop.f32.mrb[0].mxu0
        %10396 = vmatprep.mubr.bf16.mxu0 0
        %10397 = vmatmul.mubr.bf16.gmra.mrb[0].mxu0 %v10305
        %v10398 = vpop.f32.mrb[0].mxu0
        %v10399 = vadd.f32 0.0, %v10398
        %v10400 = vpop.f32.mrb[0].mxu0
        %v10401 = vpop.f32.mrb[0].mxu0
        %v10402 = vpop.f32.mrb[0].mxu0
        %10403 = vdwg.mxu0
        %v10404 = vadd.f32 %v10221, %v10391
        %v10405 = vadd.f32 %v10222, %v10394
        %v10406 = vadd.f32 %v10223, %v10399
        %v10407 = vld [vmem:[%s10094] sm:$0x1e]
        %v10408 = vld [vmem:[%s10094 + $0x8] sm:$0x1e]
        %v10409 = vld [vmem:[%s10094 + $0x10] sm:$0x1e]
        %v10413 = vunpack.c.l.b16 %v10407
        %v10414 = vunpack.c.h.b16 %v10407
        %v10415 = vunpack.c.l.b16 %v10408
        %v10416 = vunpack.c.h.b16 %v10408
        %v10417 = vunpack.c.l.b16 %v10409
        %v10418 = vunpack.c.h.b16 %v10409
        %v10419 = vpack.c.b16 %v10413, %v10413
        %v10420 = vpack.c.b16 %v10414, %v10414
        %v10421 = vpack.c.b16 %v10415, %v10415
        %v10422 = vpack.c.b16 %v10416, %v10416
        %v10423 = vpack.c.b16 %v10417, %v10417
        %v10424 = vpack.c.b16 %v10418, %v10418
        %v10425 = vrot.slane %v10419, 5
        %v10426 = vrot.slane %v10425, 4
        %v10427 = vrot.slane %v10420, 5
        %v10428 = vsel %vm3015, %v10426, %v10427
        %v10429 = vrot.slane %v10421, 5
        %v10430 = vrot.slane %v10429, 4
        %v10431 = vrot.slane %v10422, 5
        %v10432 = vsel %vm3015, %v10430, %v10431
        %v10433 = vrot.slane %v10423, 5
        %v10434 = vrot.slane %v10433, 4
        %v10435 = vrot.slane %v10424, 5
        %v10436 = vsel %vm3015, %v10434, %v10435
        %s10437 = scalar_lea.vmem %s8, 512
        %v10438 = vld [vmem:[%s10437] sm:$0xf]
        %v10439 = vld [vmem:[%s10437 + $0x4] sm:$0xf]
        %v10440 = vld [vmem:[%s10437 + $0x8] sm:$0xf]
        %v10441 = vld [vmem:[%s10437 + $0xc] sm:$0xf]
        %v10442 = vld [vmem:[%s10437 + $0x10] sm:$0xf]
        %v10443 = vld [vmem:[%s10437 + $0x14] sm:$0xf]
        %v10444 = vld [vmem:[%s10437 + $0x18] sm:$0xf]
        %v10445 = vld [vmem:[%s10437 + $0x1c] sm:$0xf]
        %v10446 = vld [vmem:[%s10437 + $0x20] sm:$0xf]
        %v10447 = vld [vmem:[%s10437 + $0x24] sm:$0xf]
        %v10448 = vld [vmem:[%s10437 + $0x28] sm:$0xf]
        %v10449 = vld [vmem:[%s10437 + $0x2c] sm:$0xf]
        %v10450 = vld [vmem:[%s10437 + $0x30] sm:$0xf]
        %v10451 = vld [vmem:[%s10437 + $0x34] sm:$0xf]
        %v10452 = vld [vmem:[%s10437 + $0x38] sm:$0xf]
        %v10453 = vld [vmem:[%s10437 + $0x3c] sm:$0xf]
        %v10454 = vunpack.c.l.b16 %v10428
        %v10455 = vunpack.c.l.b16 %v10432
        %v10456 = vunpack.c.l.b16 %v10436
        %v10457 = vpack.c.b16 %v10455, %v10454
        %v10458 = vpack.c.b16 %v10456, %v10456
        %v10477 = vunpack.c.l.b16 %v10438
        %v10478 = vunpack.c.l.b16 %v10439
        %v10479 = vunpack.c.l.b16 %v10440
        %v10480 = vunpack.c.l.b16 %v10441
        %v10481 = vunpack.c.l.b16 %v10442
        %v10482 = vunpack.c.l.b16 %v10443
        %v10483 = vunpack.c.l.b16 %v10444
        %v10484 = vunpack.c.l.b16 %v10445
        %v10485 = vunpack.c.l.b16 %v10446
        %v10486 = vunpack.c.l.b16 %v10447
        %v10487 = vunpack.c.l.b16 %v10448
        %v10488 = vunpack.c.l.b16 %v10449
        %v10489 = vunpack.c.l.b16 %v10450
        %v10490 = vunpack.c.l.b16 %v10451
        %v10491 = vunpack.c.l.b16 %v10452
        %v10492 = vunpack.c.l.b16 %v10453
        %v10493 = vpack.c.b16 %v10478, %v10477
        %v10494 = vpack.c.b16 %v10480, %v10479
        %v10495 = vpack.c.b16 %v10482, %v10481
        %v10496 = vpack.c.b16 %v10484, %v10483
        %v10497 = vpack.c.b16 %v10486, %v10485
        %v10498 = vpack.c.b16 %v10488, %v10487
        %v10499 = vpack.c.b16 %v10490, %v10489
        %v10500 = vpack.c.b16 %v10492, %v10491
        %10509 = vmatprep.subr.bf16.mxu0 0
        %10510 = vmatpush1.bf16.msra.mxu0 %v10493
        %10511 = vmatprep.subr.bf16.mxu0 0
        %10512 = vmatpush1.bf16.msra.mxu0 %v10494
        %10513 = vmatprep.subr.bf16.mxu0 0
        %10514 = vmatpush1.bf16.msra.mxu0 %v10495
        %10515 = vmatprep.subr.bf16.mxu0 0
        %10516 = vmatpush1.bf16.msra.mxu0 %v10496
        %10517 = vmatprep.subr.bf16.mxu0 0
        %10518 = vmatpush1.bf16.msra.mxu0 %v10497
        %10519 = vmatprep.subr.bf16.mxu0 0
        %10520 = vmatpush1.bf16.msra.mxu0 %v10498
        %10521 = vmatprep.subr.bf16.mxu0 0
        %10522 = vmatpush1.bf16.msra.mxu0 %v10499
        %10523 = vmatprep.subr.bf16.mxu0 0
        %10524 = vmatpush1.bf16.msra.mxu0 %v10500
        %10525 = vmatprep.subr.bf16.mxu0 0
        %10526 = vmatpush1.bf16.msra.mxu0 0
        %10527 = vmatprep.subr.bf16.mxu0 0
        %10528 = vmatpush1.bf16.msra.mxu0 0
        %10529 = vmatprep.subr.bf16.mxu0 0
        %10530 = vmatpush1.bf16.msra.mxu0 0
        %10531 = vmatprep.subr.bf16.mxu0 0
        %10532 = vmatpush1.bf16.msra.mxu0 0
        %10533 = vmatprep.subr.bf16.mxu0 0
        %10534 = vmatpush1.bf16.msra.mxu0 0
        %10535 = vmatprep.subr.bf16.mxu0 0
        %10536 = vmatpush1.bf16.msra.mxu0 0
        %10537 = vmatprep.subr.bf16.mxu0 0
        %10538 = vmatpush1.bf16.msra.mxu0 0
        %10539 = vmatprep.subr.bf16.mxu0 0
        %10540 = vmatpush1.bf16.msra.mxu0 0
        %10541 = vmatprep.mubr.bf16.mxu0 0
        %10542 = vmatmul.mubr.bf16.gmra.mrb[0].mxu0 %v10457
        %v10543 = vpop.f32.mrb[0].mxu0
        %v10544 = vadd.f32 0.0, %v10543
        %v10545 = vpop.f32.mrb[0].mxu0
        %v10546 = vpop.f32.mrb[0].mxu0
        %v10547 = vadd.f32 0.0, %v10546
        %v10548 = vpop.f32.mrb[0].mxu0
        %10549 = vmatprep.mubr.bf16.mxu0 0
        %10550 = vmatmul.mubr.bf16.gmra.mrb[0].mxu0 %v10458
        %v10551 = vpop.f32.mrb[0].mxu0
        %v10552 = vadd.f32 0.0, %v10551
        %v10553 = vpop.f32.mrb[0].mxu0
        %v10554 = vpop.f32.mrb[0].mxu0
        %v10555 = vpop.f32.mrb[0].mxu0
        %10556 = vdwg.mxu0
        %v10557 = vadd.f32 %v10404, %v10544
        %v10558 = vadd.f32 %v10405, %v10547
        %v10559 = vadd.f32 %v10406, %v10552
        %v10560 = vld [vmem:[%s9] sm:$0x1]
        %v10562 = vlaneseq
        %v10563 = vshrl.u32 %v10562, 7
        %v10564 = vsub.s32 0, %v10563
        %v10565 = vrot.slane %v10560, %v10564
        %v10567 = vadd.f32 %v10557, %v10565
        %v10568 = vadd.f32 %v10558, %v10565
        %v10569 = vadd.f32 %v10559, %v10565
        %v10570 = vmax.f32 %v10567, 0.0
        %v10571 = vmax.f32 %v10568, 0.0
        %v10572 = vmax.f32 %v10569, 0.0
        %v10573 = vld [vmem:[%s10] sm:$0x1]
        %vm10574 = vcmask 195584
        %v10576 = vsel %vm10574, %v10573, 0
        %10578 = vmatprep.subr.mxu0 0.0
        %10579 = vmatpush1.msra.mxu0 %v10570
        %10580 = vmatprep.subr.mxu0 0.0
        %10581 = vmatpush1.msra.mxu0 %v10571
        %10582 = vmatprep.subr.mxu0 0.0
        %10583 = vmatpush1.msra.mxu0 %v10572
        %10584 = vmatprep.subr.mxu0 0.0
        %10585 = vmatpush1.msra.mxu0 0.0
        %10586 = vmatprep.subr.mxu0 0.0
        %10587 = vmatpush1.msra.mxu0 0.0
        %10588 = vmatprep.subr.mxu0 0.0
        %10589 = vmatpush1.msra.mxu0 0.0
        %10590 = vmatprep.subr.mxu0 0.0
        %10591 = vmatpush1.msra.mxu0 0.0
        %10592 = vmatprep.subr.mxu0 0.0
        %10593 = vmatpush1.msra.mxu0 0.0
        %10594 = vmatprep.subr.mxu0 0.0
        %10595 = vmatpush1.msra.mxu0 0.0
        %10596 = vmatprep.subr.mxu0 0.0
        %10597 = vmatpush1.msra.mxu0 0.0
        %10598 = vmatprep.subr.mxu0 0.0
        %10599 = vmatpush1.msra.mxu0 0.0
        %10600 = vmatprep.subr.mxu0 0.0
        %10601 = vmatpush1.msra.mxu0 0.0
        %10602 = vmatprep.subr.mxu0 0.0
        %10603 = vmatpush1.msra.mxu0 0.0
        %10604 = vmatprep.subr.mxu0 0.0
        %10605 = vmatpush1.msra.mxu0 0.0
        %10606 = vmatprep.subr.mxu0 0.0
        %10607 = vmatpush1.msra.mxu0 0.0
        %10608 = vmatprep.subr.mxu0 0.0
        %10609 = vmatpush1.msra.mxu0 0.0
        %10610 = vmatprep.subr.mxu0 0.0
        %10611 = vmatpush1.msra.mxu0 0.0
        %10612 = vmatprep.subr.mxu0 0.0
        %10613 = vmatpush1.msra.mxu0 0.0
        %10614 = vmatprep.subr.mxu0 0.0
        %10615 = vmatpush1.msra.mxu0 0.0
        %10616 = vmatprep.subr.mxu0 0.0
        %10617 = vmatpush1.msra.mxu0 0.0
        %10618 = vmatprep.subr.mxu0 0.0
        %10619 = vmatpush1.msra.mxu0 0.0
        %10620 = vmatprep.subr.mxu0 0.0
        %10621 = vmatpush1.msra.mxu0 0.0
        %10622 = vmatprep.subr.mxu0 0.0
        %10623 = vmatpush1.msra.mxu0 0.0
        %10624 = vmatprep.subr.mxu0 0.0
        %10625 = vmatpush1.msra.mxu0 0.0
        %10626 = vmatprep.subr.mxu0 0.0
        %10627 = vmatpush1.msra.mxu0 0.0
        %10628 = vmatprep.subr.mxu0 0.0
        %10629 = vmatpush1.msra.mxu0 0.0
        %10630 = vmatprep.subr.mxu0 0.0
        %10631 = vmatpush1.msra.mxu0 0.0
        %10632 = vmatprep.subr.mxu0 0.0
        %10633 = vmatpush1.msra.mxu0 0.0
        %10634 = vmatprep.subr.mxu0 0.0
        %10635 = vmatpush1.msra.mxu0 0.0
        %10636 = vmatprep.subr.mxu0 0.0
        %10637 = vmatpush1.msra.mxu0 0.0
        %10638 = vmatprep.subr.mxu0 0.0
        %10639 = vmatpush1.msra.mxu0 0.0
        %10640 = vmatprep.subr.mxu0 0.0
        %10641 = vmatpush1.msra.mxu0 0.0
        %10642 = vmatprep.mubr.f32.mxu0 0.0
        %10643 = vmatmul.mubr.f32.gmra.mrb[0].mxu0 %v10576
        %v10644 = vpop.f32.mrb[0].mxu0
        %v10645 = vadd.f32 0.0, %v10644
        %v10646 = vpop.f32.mrb[0].mxu0
        %10647 = vdwg.mxu0
        %v10648 = vpack.c.bf16 %v10645, %v10645
        %v10649 = vld [vmem:[%s11] sm:$0xf]
        %v10650 = vld [vmem:[%s11 + $0x4] sm:$0xf]
        %v10651 = vld [vmem:[%s11 + $0x8] sm:$0xf]
        %v10652 = vld [vmem:[%s11 + $0xc] sm:$0xf]
        %v10653 = vld [vmem:[%s11 + $0x10] sm:$0xf]
        %v10654 = vld [vmem:[%s11 + $0x14] sm:$0xf]
        %v10655 = vld [vmem:[%s11 + $0x18] sm:$0xf]
        %v10656 = vld [vmem:[%s11 + $0x1c] sm:$0xf]
        %v10657 = vld [vmem:[%s11 + $0x20] sm:$0xf]
        %v10658 = vld [vmem:[%s11 + $0x24] sm:$0xf]
        %v10659 = vld [vmem:[%s11 + $0x28] sm:$0xf]
        %v10660 = vld [vmem:[%s11 + $0x2c] sm:$0xf]
        %v10661 = vld [vmem:[%s11 + $0x30] sm:$0xf]
        %v10662 = vld [vmem:[%s11 + $0x34] sm:$0xf]
        %v10663 = vld [vmem:[%s11 + $0x38] sm:$0xf]
        %v10664 = vld [vmem:[%s11 + $0x3c] sm:$0xf]
        %v10665 = vld [vmem:[%s12] sm:$0x1]
        %v10682 = vunpack.c.l.b16 %v10649
        %v10683 = vunpack.c.l.b16 %v10650
        %v10684 = vunpack.c.l.b16 %v10651
        %v10685 = vunpack.c.l.b16 %v10652
        %v10686 = vunpack.c.l.b16 %v10653
        %v10687 = vunpack.c.l.b16 %v10654
        %v10688 = vunpack.c.l.b16 %v10655
        %v10689 = vunpack.c.l.b16 %v10656
        %v10690 = vunpack.c.l.b16 %v10657
        %v10691 = vunpack.c.l.b16 %v10658
        %v10692 = vunpack.c.l.b16 %v10659
        %v10693 = vunpack.c.l.b16 %v10660
        %v10694 = vunpack.c.l.b16 %v10661
        %v10695 = vunpack.c.l.b16 %v10662
        %v10696 = vunpack.c.l.b16 %v10663
        %v10697 = vunpack.c.l.b16 %v10664
        %v10698 = vpack.c.b16 %v10683, %v10682
        %v10699 = vpack.c.b16 %v10685, %v10684
        %v10700 = vpack.c.b16 %v10687, %v10686
        %v10701 = vpack.c.b16 %v10689, %v10688
        %v10702 = vpack.c.b16 %v10691, %v10690
        %v10703 = vpack.c.b16 %v10693, %v10692
        %v10704 = vpack.c.b16 %v10695, %v10694
        %v10705 = vpack.c.b16 %v10697, %v10696
        %10714 = vmatprep.subr.bf16.mxu0 0
        %10715 = vmatpush1.bf16.msra.mxu0 %v10698
        %10716 = vmatprep.subr.bf16.mxu0 0
        %10717 = vmatpush1.bf16.msra.mxu0 %v10699
        %10718 = vmatprep.subr.bf16.mxu0 0
        %10719 = vmatpush1.bf16.msra.mxu0 %v10700
        %10720 = vmatprep.subr.bf16.mxu0 0
        %10721 = vmatpush1.bf16.msra.mxu0 %v10701
        %10722 = vmatprep.subr.bf16.mxu0 0
        %10723 = vmatpush1.bf16.msra.mxu0 %v10702
        %10724 = vmatprep.subr.bf16.mxu0 0
        %10725 = vmatpush1.bf16.msra.mxu0 %v10703
        %10726 = vmatprep.subr.bf16.mxu0 0
        %10727 = vmatpush1.bf16.msra.mxu0 %v10704
        %10728 = vmatprep.subr.bf16.mxu0 0
        %10729 = vmatpush1.bf16.msra.mxu0 %v10705
        %10730 = vmatprep.subr.bf16.mxu0 0
        %10731 = vmatpush1.bf16.msra.mxu0 0
        %10732 = vmatprep.subr.bf16.mxu0 0
        %10733 = vmatpush1.bf16.msra.mxu0 0
        %10734 = vmatprep.subr.bf16.mxu0 0
        %10735 = vmatpush1.bf16.msra.mxu0 0
        %10736 = vmatprep.subr.bf16.mxu0 0
        %10737 = vmatpush1.bf16.msra.mxu0 0
        %10738 = vmatprep.subr.bf16.mxu0 0
        %10739 = vmatpush1.bf16.msra.mxu0 0
        %10740 = vmatprep.subr.bf16.mxu0 0
        %10741 = vmatpush1.bf16.msra.mxu0 0
        %10742 = vmatprep.subr.bf16.mxu0 0
        %10743 = vmatpush1.bf16.msra.mxu0 0
        %10744 = vmatprep.subr.bf16.mxu0 0
        %10745 = vmatpush1.bf16.msra.mxu0 0
        %10746 = vmatprep.mubr.bf16.mxu0 0
        %10747 = vmatmul.mubr.bf16.gmra.mrb[0].mxu0 %v10648
        %v10748 = vpop.f32.mrb[0].mxu0
        %v10749 = vadd.f32 %v10665, %v10748
        %v10750 = vpop.f32.mrb[0].mxu0
        %v10751 = vpop.f32.mrb[0].mxu0
        %v10752 = vpop.f32.mrb[0].mxu0
        %10753 = vdwg.mxu0
        %10754 = vst [vmem:[%s432] sm:$0x1] %v10749
        %s10755 = sand.u32 %s313, 1
        %s10756 = scalar_lea.sflag [#allocation6], %s10755
        %s10757 = sand.u32 %s313, 1
        %s10758 = scalar_lea.vmem [#allocation5], %s10757
        // Predicated region
        $region73: #{neural_net_forward.1} parent=71 // pred_check
          %p10759 = pneg %p323
        $region74: #{neural_net_forward.1} parent=71 // pred_check_branch
          %10761 = sbr.rel (%p10759) target = $region76
        $region75: #{neural_net_forward.1} parent=71 // pred_region
          %s10763 = ssub.s32 16, 16
          %10764 = vsyncadd %s10756, %s10763
          %s10765 = smul.addr %s27, 16
          %s10766 = scalar_lea.hbm %s13, %s10765
          %s10768 = sshll.u32 %s10758, 4
          %s10769 = int_to_ptr.vmem [resolvable:$true] %s10768
          %10771 = dma.vmem_to_hbm [thread:$0]  %s10769, 16, %s10766, %s10756
        $region76: #{neural_net_forward.1} parent=71 // pred_fallthru
          _
      $region72: #{neural_net_forward.1} parent=5 // pred_fallthru
        _
      %p10772 = scmp.le.s32.totalorder 2, %s22
      // Predicated region
      $region77: #{neural_net_forward.1} parent=5 // pred_check
        %p10773 = pneg %p10772
      $region78: #{neural_net_forward.1} parent=5 // pred_check_branch
        %10775 = sbr.rel (%p10773) target = $region80
      $region79: #{neural_net_forward.1} parent=5 // pred_region
        %s10776 = ssub.s32 %s22, 2
        // Predicated region
        $region81: #{neural_net_forward.1} parent=79 // pred_check
          %p10777 = pneg %p329
        $region82: #{neural_net_forward.1} parent=79 // pred_check_branch
          %10779 = sbr.rel (%p10777) target = $region84
        $region83: #{neural_net_forward.1} parent=79 // pred_region
          %s10780 = sand.u32 %s314, 1
          %s10781 = scalar_lea.sflag [#allocation6], %s10780
          %s10782 = sand.u32 %s314, 1
          %s10783 = scalar_lea.vmem [#allocation5], %s10782
          %10784 = dma.done %s10781, 16
        $region84: #{neural_net_forward.1} parent=79 // pred_fallthru
          _
      $region80: #{neural_net_forward.1} parent=5 // pred_fallthru
        _
    $region6: #{neural_net_forward.1} parent=1 // loop_footer
      %s26 = sadd.s32 1, %s22
    $region7: #{neural_net_forward.1} parent=1 // loop_footer_branch
      %21 = sbr.rel target = $region3
    $region8: #{neural_net_forward.1} parent=1 // loop_exit
      _
    %10785 = vsyncpa [#allocation6], 1
    %s10786 = scalar_lea.sflag [#allocation6], 1
    %10787 = vsyncpa %s10786, 1

</llo_original>
